<compile_context>
chip_gen: v5e
topology: v5e:2x2
jax: 0.10.0
libtpu: 0.0.40
codegen_flags: <defaults>
</compile_context>

<pallas_src>
import math
import functools

import numpy as np
import jax
import jax.numpy as jnp
from jax.experimental import pallas as pl
from jax.experimental.pallas import tpu as pltpu  # noqa: F401  (TPU backend)

# ----------------------------- tiny BART config ------------------------------
D_MODEL = 32
N_HEADS = 4
HEAD_DIM = D_MODEL // N_HEADS
FFN_DIM = 64
N_ENC_LAYERS = 2
N_DEC_LAYERS = 2
VOCAB = 64
MAX_POS = 64
POS_OFFSET = 2          # BART learned-position-embedding offset
PAD_ID = 1
EOS_ID = 2
NUM_LABELS = 3
OUT_PAD = 128           # lane-dense padded logits width
LN_EPS = 1e-5
NEG_INF = -1e9
SCALE = 1.0 / math.sqrt(HEAD_DIM)


# ------------------------------ block-spec helper -----------------------------
def _spec(shape):
    n = len(shape)
    return pl.BlockSpec(shape, lambda: (0,) * n)


# --------------------------- in-kernel trace helpers ---------------------------
def _ln(x, gb):
    """LayerNorm.  x: (M, D);  gb: (2, D) stacked [gamma; beta]."""
    g = gb[0:1, :]
    b = gb[1:2, :]
    mean = jnp.mean(x, axis=-1, keepdims=True)
    var = jnp.mean(jnp.square(x - mean), axis=-1, keepdims=True)
    return (x - mean) * jax.lax.rsqrt(var + LN_EPS) * g + b


def _softmax(s):
    s = s - jnp.max(s, axis=-1, keepdims=True)
    p = jnp.exp(s)
    return p * pl.reciprocal(jnp.sum(p, axis=-1, keepdims=True), approx=True)


def _mha(q_all, k_all, v_all, o_w, o_b, bias_fn, B, S):
    """Multi-head attention + fused output projection.

    q_all/k_all/v_all: (B*S, D_MODEL) with heads packed along the lane dim.
    bias_fn(b) -> (1, S) or (S, S) additive bias for batch b.
    Returns (B*S, D_MODEL).
    """
    outs = []
    for b in range(B):                       # static unroll: B = 2
        rows = slice(b * S, (b + 1) * S)
        bias = bias_fn(b)
        acc = jnp.zeros((S, D_MODEL), jnp.float32)
        for h in range(N_HEADS):             # static unroll: H = 4
            cs = slice(h * HEAD_DIM, (h + 1) * HEAD_DIM)
            q = q_all[rows, cs]              # (S, Dh)
            k = k_all[rows, cs]
            v = v_all[rows, cs]
            s = jnp.einsum("qd,kd->qk", q, k,
                           preferred_element_type=jnp.float32) * SCALE + bias
            p = _softmax(s)
            o = jnp.dot(p, v, preferred_element_type=jnp.float32)   # (S, Dh)
            # fold the output projection per head: sum_h o_h @ o_w[hDh:(h+1)Dh]
            acc = acc + jnp.dot(o, o_w[cs, :], preferred_element_type=jnp.float32)
        outs.append(acc)
    return jnp.concatenate(outs, axis=0) + o_b


# ------------------------------ the fused kernel -------------------------------
def _bart_fwd_kernel(*refs, B, S):
    (h_enc0, h_dec0, enc_bias_r, dec_bias_r, sel_r,
     e_emb_ln, d_emb_ln,
     e_qkv_w, e_qkv_b, e_o_w, e_o_b, e_ln1,
     e_fc1_w, e_fc1_b, e_fc2_w, e_fc2_b, e_ln2,
     d_qkv_w, d_qkv_b, d_so_w, d_so_b, d_ln1,
     d_cq_w, d_cq_b, d_ckv_w, d_ckv_b, d_co_w, d_co_b, d_ln2,
     d_fc1_w, d_fc1_b, d_fc2_w, d_fc2_b, d_ln3,
     hd_dense_w, hd_dense_b, hd_out_w, hd_out_b,
     o_ref) = refs

    enc_bias = enc_bias_r[...]               # (B, S)   key-padding bias
    dec_bias = dec_bias_r[...]               # (B*S, S) causal + padding bias

    def enc_bias_fn(b):
        return enc_bias[b:b + 1, :]          # (1, S) broadcast over queries

    def dec_bias_fn(b):
        return dec_bias[b * S:(b + 1) * S, :]  # (S, S)

    def ffn(x, w1, b1, w2, b2):
        h = jnp.dot(x, w1, preferred_element_type=jnp.float32) + b1
        # TODO(synk): HF BART uses exact (erf) GELU; tanh-approx GELU used here.
        h = jax.nn.gelu(h)
        return jnp.dot(h, w2, preferred_element_type=jnp.float32) + b2

    # ------------------------------- encoder -------------------------------
    x = _ln(h_enc0[...], e_emb_ln[...])
    for l in range(N_ENC_LAYERS):
        qkv = jnp.dot(x, e_qkv_w[l], preferred_element_type=jnp.float32) + e_qkv_b[l]
        attn = _mha(qkv[:, :D_MODEL], qkv[:, D_MODEL:2 * D_MODEL],
                    qkv[:, 2 * D_MODEL:], e_o_w[l], e_o_b[l], enc_bias_fn, B, S)
        x = _ln(x + attn, e_ln1[l])
        f = ffn(x, e_fc1_w[l], e_fc1_b[l], e_fc2_w[l], e_fc2_b[l])
        x = _ln(x + f, e_ln2[l])
    enc_out = x                              # (B*S, D)

    # ------------------------------- decoder -------------------------------
    y = _ln(h_dec0[...], d_emb_ln[...])
    for l in range(N_DEC_LAYERS):
        # masked self-attention (fused QKV)
        qkv = jnp.dot(y, d_qkv_w[l], preferred_element_type=jnp.float32) + d_qkv_b[l]
        a = _mha(qkv[:, :D_MODEL], qkv[:, D_MODEL:2 * D_MODEL],
                 qkv[:, 2 * D_MODEL:], d_so_w[l], d_so_b[l], dec_bias_fn, B, S)
        y = _ln(y + a, d_ln1[l])
        # cross-attention (fused KV over encoder output)
        q = jnp.dot(y, d_cq_w[l], preferred_element_type=jnp.float32) + d_cq_b[l]
        kv = jnp.dot(enc_out, d_ckv_w[l], preferred_element_type=jnp.float32) + d_ckv_b[l]
        c = _mha(q, kv[:, :D_MODEL], kv[:, D_MODEL:],
                 d_co_w[l], d_co_b[l], enc_bias_fn, B, S)
        y = _ln(y + c, d_ln2[l])
        # FFN
        f = ffn(y, d_fc1_w[l], d_fc1_b[l], d_fc2_w[l], d_fc2_b[l])
        y = _ln(y + f, d_ln3[l])

    # ---------------- eos pooling + classification head ----------------
    sent = jnp.dot(sel_r[...], y, preferred_element_type=jnp.float32)     # (B, D)
    h = jnp.tanh(jnp.dot(sent, hd_dense_w[...],
                         preferred_element_type=jnp.float32) + hd_dense_b[...])
    logits = jnp.dot(h, hd_out_w[...],
                     preferred_element_type=jnp.float32) + hd_out_b[...]  # (B, 128)
    o_ref[...] = logits.astype(o_ref.dtype)


# ------------------------------ plain-JAX glue ---------------------------------
def shift_tokens_right(input_ids, pad_id):
    # old-HF BART: move the eos token of each row to the front, shift rest right
    idx_eos = jnp.sum((input_ids != pad_id).astype(jnp.int32), axis=1) - 1
    first = input_ids[jnp.arange(input_ids.shape[0]), idx_eos]
    return jnp.concatenate([first[:, None], input_ids[:, :-1]], axis=1)


def bart_classify(params, input_ids, attention_mask=None):
    B, S = input_ids.shape
    if attention_mask is None:
        attention_mask = (input_ids != PAD_ID).astype(jnp.float32)

    enc_bias = (1.0 - attention_mask) * NEG_INF                        # (B, S)

    dec_ids = shift_tokens_right(input_ids, PAD_ID)
    dec_mask = (dec_ids != PAD_ID).astype(jnp.float32)
    causal = jnp.tril(jnp.ones((S, S), jnp.float32))
    blocked = jnp.maximum(1.0 - dec_mask[:, None, :], (1.0 - causal)[None])
    dec_bias = (blocked * NEG_INF).reshape(B * S, S)                   # (B*S, S)

    # embeddings (token + learned position); LayerNorm happens inside the kernel
    pos = jnp.arange(S) + POS_OFFSET
    h_enc0 = (jnp.take(params["shared_emb"], input_ids, axis=0)
              + jnp.take(params["enc_pos_emb"], pos, axis=0)[None]).reshape(B * S, D_MODEL)
    h_dec0 = (jnp.take(params["shared_emb"], dec_ids, axis=0)
              + jnp.take(params["dec_pos_emb"], pos, axis=0)[None]).reshape(B * S, D_MODEL)

    # last-eos selection matrix: sent_rep = sel @ decoder_hidden  (done in-kernel)
    eos_mask = input_ids == EOS_ID
    eos_counts = jnp.sum(eos_mask.astype(jnp.int32), axis=1)
    rev = eos_mask[:, ::-1]
    last_eos_idx = S - 1 - jnp.argmax(rev.astype(jnp.int32), axis=1)
    sel = jax.nn.one_hot(jnp.arange(B) * S + last_eos_idx, B * S, dtype=jnp.float32)

    inputs = [
        h_enc0.astype(jnp.float32), h_dec0.astype(jnp.float32),
        enc_bias.astype(jnp.float32), dec_bias.astype(jnp.float32), sel,
        params["e_emb_ln"], params["d_emb_ln"],
        params["e_qkv_w"], params["e_qkv_b"], params["e_o_w"], params["e_o_b"], params["e_ln1"],
        params["e_fc1_w"], params["e_fc1_b"], params["e_fc2_w"], params["e_fc2_b"], params["e_ln2"],
        params["d_qkv_w"], params["d_qkv_b"], params["d_so_w"], params["d_so_b"], params["d_ln1"],
        params["d_cq_w"], params["d_cq_b"], params["d_ckv_w"], params["d_ckv_b"],
        params["d_co_w"], params["d_co_b"], params["d_ln2"],
        params["d_fc1_w"], params["d_fc1_b"], params["d_fc2_w"], params["d_fc2_b"], params["d_ln3"],
        params["hd_dense_w"], params["hd_dense_b"], params["hd_out_w"], params["hd_out_b"],
    ]

    kern = functools.partial(_bart_fwd_kernel, B=B, S=S)
    logits_pad = pl.pallas_call(
        kern,
        out_shape=jax.ShapeDtypeStruct((B, OUT_PAD), jnp.float32),
        in_specs=[_spec(a.shape) for a in inputs],
        out_specs=_spec((B, OUT_PAD)),
    )(*inputs)

    return logits_pad[:, :NUM_LABELS], eos_counts


# ------------------------------- param init ------------------------------------
def init_params(key):
    keys = iter(jax.random.split(key, 64))
    nk = lambda: next(keys)
    nrm = lambda shape: jax.random.normal(nk(), shape, jnp.float32) * 0.02
    zeros = lambda shape: jnp.zeros(shape, jnp.float32)

    def ln_stack(L):    # (L, 2, D) stacked [gamma; beta] per layer
        return jnp.stack([jnp.ones((L, D_MODEL), jnp.float32),
                          jnp.zeros((L, D_MODEL), jnp.float32)], axis=1)

    def ln_pair():      # (2, D)
        return jnp.stack([jnp.ones((D_MODEL,), jnp.float32),
                          jnp.zeros((D_MODEL,), jnp.float32)], axis=0)

    Le, Ld = N_ENC_LAYERS, N_DEC_LAYERS
    # classification-head out_proj padded to 128 lanes (lane-dense store)
    hd_out_w = jnp.zeros((D_MODEL, OUT_PAD), jnp.float32).at[:, :NUM_LABELS].set(
        nrm((D_MODEL, NUM_LABELS)))

    params = {
        "shared_emb": nrm((VOCAB, D_MODEL)),
        "enc_pos_emb": nrm((MAX_POS + POS_OFFSET, D_MODEL)),
        "dec_pos_emb": nrm((MAX_POS + POS_OFFSET, D_MODEL)),
        "e_emb_ln": ln_pair(), "d_emb_ln": ln_pair(),
        # encoder layers (stacked along leading layer axis, QKV fused)
        "e_qkv_w": nrm((Le, D_MODEL, 3 * D_MODEL)), "e_qkv_b": zeros((Le, 1, 3 * D_MODEL)),
        "e_o_w": nrm((Le, D_MODEL, D_MODEL)), "e_o_b": zeros((Le, 1, D_MODEL)),
        "e_ln1": ln_stack(Le), "e_ln2": ln_stack(Le),
        "e_fc1_w": nrm((Le, D_MODEL, FFN_DIM)), "e_fc1_b": zeros((Le, 1, FFN_DIM)),
        "e_fc2_w": nrm((Le, FFN_DIM, D_MODEL)), "e_fc2_b": zeros((Le, 1, D_MODEL)),
        # decoder layers
        "d_qkv_w": nrm((Ld, D_MODEL, 3 * D_MODEL)), "d_qkv_b": zeros((Ld, 1, 3 * D_MODEL)),
        "d_so_w": nrm((Ld, D_MODEL, D_MODEL)), "d_so_b": zeros((Ld, 1, D_MODEL)),
        "d_ln1": ln_stack(Ld), "d_ln2": ln_stack(Ld), "d_ln3": ln_stack(Ld),
        "d_cq_w": nrm((Ld, D_MODEL, D_MODEL)), "d_cq_b": zeros((Ld, 1, D_MODEL)),
        "d_ckv_w": nrm((Ld, D_MODEL, 2 * D_MODEL)), "d_ckv_b": zeros((Ld, 1, 2 * D_MODEL)),
        "d_co_w": nrm((Ld, D_MODEL, D_MODEL)), "d_co_b": zeros((Ld, 1, D_MODEL)),
        "d_fc1_w": nrm((Ld, D_MODEL, FFN_DIM)), "d_fc1_b": zeros((Ld, 1, FFN_DIM)),
        "d_fc2_w": nrm((Ld, FFN_DIM, D_MODEL)), "d_fc2_b": zeros((Ld, 1, D_MODEL)),
        # classification head
        "hd_dense_w": nrm((D_MODEL, D_MODEL)), "hd_dense_b": zeros((1, D_MODEL)),
        "hd_out_w": hd_out_w, "hd_out_b": zeros((1, OUT_PAD)),
    }
    return params


# ----------------------------------- main ---------------------------------------
if __name__ == "__main__":
    key = jax.random.PRNGKey(0)
    k_param, k_tok = jax.random.split(key)

    params = init_params(k_param)

    B, S = 2, 8
    input_ids = jax.random.randint(k_tok, (B, S), 4, VOCAB, dtype=jnp.int32)
    # each row ends with exactly one eos token (same count per row, as required)
    input_ids = input_ids.at[:, -1].set(EOS_ID)

    logits, eos_counts = jax.jit(bart_classify)(params, input_ids)
    logits = jax.block_until_ready(logits)

    # "All examples must have the same number of <eos> tokens."
    if np.unique(np.asarray(eos_counts)).size > 1:
        raise ValueError("All examples must have the same number of <eos> tokens.")

    assert logits.shape == (B, NUM_LABELS)
    assert bool(jnp.all(jnp.isfinite(logits)))
    print("KERNEL_OK")
</pallas_src>

<mosaic_0001>
module attributes {stable_mosaic.version = 11 : i64} {
  func.func @_bart_fwd_kernel(%arg0: memref<16x32xf32, #tpu.memory_space<vmem>>, %arg1: memref<16x32xf32, #tpu.memory_space<vmem>>, %arg2: memref<2x8xf32, #tpu.memory_space<vmem>>, %arg3: memref<16x8xf32, #tpu.memory_space<vmem>>, %arg4: memref<2x16xf32, #tpu.memory_space<vmem>>, %arg5: memref<2x32xf32, #tpu.memory_space<vmem>>, %arg6: memref<2x32xf32, #tpu.memory_space<vmem>>, %arg7: memref<2x32x96xf32, #tpu.memory_space<vmem>>, %arg8: memref<2x1x96xf32, #tpu.memory_space<vmem>>, %arg9: memref<2x32x32xf32, #tpu.memory_space<vmem>>, %arg10: memref<2x1x32xf32, #tpu.memory_space<vmem>>, %arg11: memref<2x2x32xf32, #tpu.memory_space<vmem>>, %arg12: memref<2x32x64xf32, #tpu.memory_space<vmem>>, %arg13: memref<2x1x64xf32, #tpu.memory_space<vmem>>, %arg14: memref<2x64x32xf32, #tpu.memory_space<vmem>>, %arg15: memref<2x1x32xf32, #tpu.memory_space<vmem>>, %arg16: memref<2x2x32xf32, #tpu.memory_space<vmem>>, %arg17: memref<2x32x96xf32, #tpu.memory_space<vmem>>, %arg18: memref<2x1x96xf32, #tpu.memory_space<vmem>>, %arg19: memref<2x32x32xf32, #tpu.memory_space<vmem>>, %arg20: memref<2x1x32xf32, #tpu.memory_space<vmem>>, %arg21: memref<2x2x32xf32, #tpu.memory_space<vmem>>, %arg22: memref<2x32x32xf32, #tpu.memory_space<vmem>>, %arg23: memref<2x1x32xf32, #tpu.memory_space<vmem>>, %arg24: memref<2x32x64xf32, #tpu.memory_space<vmem>>, %arg25: memref<2x1x64xf32, #tpu.memory_space<vmem>>, %arg26: memref<2x32x32xf32, #tpu.memory_space<vmem>>, %arg27: memref<2x1x32xf32, #tpu.memory_space<vmem>>, %arg28: memref<2x2x32xf32, #tpu.memory_space<vmem>>, %arg29: memref<2x32x64xf32, #tpu.memory_space<vmem>>, %arg30: memref<2x1x64xf32, #tpu.memory_space<vmem>>, %arg31: memref<2x64x32xf32, #tpu.memory_space<vmem>>, %arg32: memref<2x1x32xf32, #tpu.memory_space<vmem>>, %arg33: memref<2x2x32xf32, #tpu.memory_space<vmem>>, %arg34: memref<32x32xf32, #tpu.memory_space<vmem>>, %arg35: memref<1x32xf32, #tpu.memory_space<vmem>>, %arg36: memref<32x128xf32, #tpu.memory_space<vmem>>, %arg37: memref<1x128xf32, #tpu.memory_space<vmem>>, %arg38: memref<2x128xf32, #tpu.memory_space<vmem>>) attributes {dimension_semantics = [], scalar_prefetch = 0 : i64, scratch_operands = 0 : i64, tpu.core_type = #tpu.core_type<tc>} {
    %c0 = arith.constant 0 : index
    %c0_0 = arith.constant 0 : index
    %0 = vector.load %arg2[%c0, %c0_0] : memref<2x8xf32, #tpu.memory_space<vmem>>, vector<2x8xf32>
    %c0_1 = arith.constant 0 : index
    %c0_2 = arith.constant 0 : index
    %1 = vector.load %arg3[%c0_1, %c0_2] : memref<16x8xf32, #tpu.memory_space<vmem>>, vector<16x8xf32>
    %c0_3 = arith.constant 0 : index
    %c0_4 = arith.constant 0 : index
    %2 = vector.load %arg0[%c0_3, %c0_4] : memref<16x32xf32, #tpu.memory_space<vmem>>, vector<16x32xf32>
    %c0_5 = arith.constant 0 : index
    %c0_6 = arith.constant 0 : index
    %3 = vector.load %arg5[%c0_5, %c0_6] : memref<2x32xf32, #tpu.memory_space<vmem>>, vector<2x32xf32>
    %4 = vector.extract_strided_slice %3 {offsets = [0, 0], sizes = [1, 32], strides = [1, 1]} : vector<2x32xf32> to vector<1x32xf32>
    %5 = vector.extract_strided_slice %3 {offsets = [1, 0], sizes = [1, 32], strides = [1, 1]} : vector<2x32xf32> to vector<1x32xf32>
    %cst = arith.constant dense<0.000000e+00> : vector<16xf32>
    %6 = vector.multi_reduction <add>, %2, %cst [1] : vector<16x32xf32> to vector<16xf32>
    %7 = vector.shape_cast %6 : vector<16xf32> to vector<16x1xf32>
    %cst_7 = arith.constant 3.200000e+01 : f32
    %8 = vector.broadcast %cst_7 : f32 to vector<16x1xf32>
    %9 = arith.divf %7, %8 : vector<16x1xf32>
    %10 = vector.broadcast %9 : vector<16x1xf32> to vector<16x32xf32>
    %11 = arith.subf %2, %10 : vector<16x32xf32>
    %12 = arith.mulf %11, %11 : vector<16x32xf32>
    %cst_8 = arith.constant dense<0.000000e+00> : vector<16xf32>
    %13 = vector.multi_reduction <add>, %12, %cst_8 [1] : vector<16x32xf32> to vector<16xf32>
    %14 = vector.shape_cast %13 : vector<16xf32> to vector<16x1xf32>
    %cst_9 = arith.constant 3.200000e+01 : f32
    %15 = vector.broadcast %cst_9 : f32 to vector<16x1xf32>
    %16 = arith.divf %14, %15 : vector<16x1xf32>
    %17 = vector.broadcast %9 : vector<16x1xf32> to vector<16x32xf32>
    %18 = arith.subf %2, %17 : vector<16x32xf32>
    %cst_10 = arith.constant 9.99999974E-6 : f32
    %19 = vector.broadcast %cst_10 : f32 to vector<16x1xf32>
    %20 = arith.addf %16, %19 : vector<16x1xf32>
    %21 = math.rsqrt %20 : vector<16x1xf32>
    %22 = vector.broadcast %21 : vector<16x1xf32> to vector<16x32xf32>
    %23 = arith.mulf %18, %22 : vector<16x32xf32>
    %24 = vector.broadcast %4 : vector<1x32xf32> to vector<16x32xf32>
    %25 = arith.mulf %23, %24 : vector<16x32xf32>
    %26 = vector.broadcast %5 : vector<1x32xf32> to vector<16x32xf32>
    %27 = arith.addf %25, %26 : vector<16x32xf32>
    %c0_11 = arith.constant 0 : index
    %c0_12 = arith.constant 0 : index
    %c0_13 = arith.constant 0 : index
    %28 = vector.load %arg7[%c0_11, %c0_12, %c0_13] : memref<2x32x96xf32, #tpu.memory_space<vmem>>, vector<1x32x96xf32>
    %29 = vector.shape_cast %28 : vector<1x32x96xf32> to vector<32x96xf32>
    %cst_14 = arith.constant dense<0.000000e+00> : vector<16x96xf32>
    %30 = tpu.matmul %27, %29, %cst_14 {dimension_numbers = #tpu.dot_dimension_numbers<[1], [0], [0], [1], [0, 0, 1, 1], [], []>} : vector<16x32xf32>, vector<32x96xf32>, vector<16x96xf32> -> vector<16x96xf32>
    %c0_15 = arith.constant 0 : index
    %c0_16 = arith.constant 0 : index
    %c0_17 = arith.constant 0 : index
    %31 = vector.load %arg8[%c0_15, %c0_16, %c0_17] : memref<2x1x96xf32, #tpu.memory_space<vmem>>, vector<1x1x96xf32>
    %32 = vector.shape_cast %31 : vector<1x1x96xf32> to vector<1x96xf32>
    %33 = vector.broadcast %32 : vector<1x96xf32> to vector<16x96xf32>
    %34 = arith.addf %30, %33 : vector<16x96xf32>
    %35 = vector.extract_strided_slice %34 {offsets = [0, 0], sizes = [16, 32], strides = [1, 1]} : vector<16x96xf32> to vector<16x32xf32>
    %36 = vector.extract_strided_slice %34 {offsets = [0, 32], sizes = [16, 32], strides = [1, 1]} : vector<16x96xf32> to vector<16x32xf32>
    %37 = vector.extract_strided_slice %34 {offsets = [0, 64], sizes = [16, 32], strides = [1, 1]} : vector<16x96xf32> to vector<16x32xf32>
    %c0_18 = arith.constant 0 : index
    %c0_19 = arith.constant 0 : index
    %c0_20 = arith.constant 0 : index
    %38 = vector.load %arg9[%c0_18, %c0_19, %c0_20] : memref<2x32x32xf32, #tpu.memory_space<vmem>>, vector<1x32x32xf32>
    %39 = vector.shape_cast %38 : vector<1x32x32xf32> to vector<32x32xf32>
    %c0_21 = arith.constant 0 : index
    %c0_22 = arith.constant 0 : index
    %c0_23 = arith.constant 0 : index
    %40 = vector.load %arg10[%c0_21, %c0_22, %c0_23] : memref<2x1x32xf32, #tpu.memory_space<vmem>>, vector<1x1x32xf32>
    %41 = vector.shape_cast %40 : vector<1x1x32xf32> to vector<1x32xf32>
    %42 = vector.extract_strided_slice %0 {offsets = [0, 0], sizes = [1, 8], strides = [1, 1]} : vector<2x8xf32> to vector<1x8xf32>
    %cst_24 = arith.constant 0.000000e+00 : f32
    %43 = vector.broadcast %cst_24 : f32 to vector<8x32xf32>
    %44 = vector.extract_strided_slice %35 {offsets = [0, 0], sizes = [8, 8], strides = [1, 1]} : vector<16x32xf32> to vector<8x8xf32>
    %45 = vector.extract_strided_slice %36 {offsets = [0, 0], sizes = [8, 8], strides = [1, 1]} : vector<16x32xf32> to vector<8x8xf32>
    %46 = vector.extract_strided_slice %37 {offsets = [0, 0], sizes = [8, 8], strides = [1, 1]} : vector<16x32xf32> to vector<8x8xf32>
    "tpu.trace_start"() <{level = 10 : i32, message = "qd,kd->qk"}> : () -> ()
    %cst_25 = arith.constant dense<0.000000e+00> : vector<8x8xf32>
    %47 = tpu.matmul %44, %45, %cst_25 {dimension_numbers = #tpu.dot_dimension_numbers<[1], [1], [0], [0], [0, 0, 1, 0], [], []>} : vector<8x8xf32>, vector<8x8xf32>, vector<8x8xf32> -> vector<8x8xf32>
    "tpu.trace_stop"() : () -> ()
    %cst_26 = arith.constant 0.353553385 : f32
    %48 = vector.broadcast %cst_26 : f32 to vector<8x8xf32>
    %49 = arith.mulf %47, %48 : vector<8x8xf32>
    %50 = vector.broadcast %42 : vector<1x8xf32> to vector<8x8xf32>
    %51 = arith.addf %49, %50 : vector<8x8xf32>
    %cst_27 = arith.constant dense<0xFF800000> : vector<8xf32>
    %52 = vector.multi_reduction <maximumf>, %51, %cst_27 [1] : vector<8x8xf32> to vector<8xf32>
    %53 = vector.shape_cast %52 : vector<8xf32> to vector<8x1xf32>
    %54 = vector.broadcast %53 : vector<8x1xf32> to vector<8x8xf32>
    %55 = arith.subf %51, %54 : vector<8x8xf32>
    %56 = math.exp %55 : vector<8x8xf32>
    %cst_28 = arith.constant dense<0.000000e+00> : vector<8xf32>
    %57 = vector.multi_reduction <add>, %56, %cst_28 [1] : vector<8x8xf32> to vector<8xf32>
    %58 = vector.shape_cast %57 : vector<8xf32> to vector<8x1xf32>
    %59 = tpu.reciprocal %58 {approx = true} : vector<8x1xf32> -> vector<8x1xf32>
    %60 = vector.broadcast %59 : vector<8x1xf32> to vector<8x8xf32>
    %61 = arith.mulf %56, %60 : vector<8x8xf32>
    %cst_29 = arith.constant dense<0.000000e+00> : vector<8x8xf32>
    %62 = tpu.matmul %61, %46, %cst_29 {dimension_numbers = #tpu.dot_dimension_numbers<[1], [0], [0], [1], [0, 0, 1, 1], [], []>} : vector<8x8xf32>, vector<8x8xf32>, vector<8x8xf32> -> vector<8x8xf32>
    %63 = vector.extract_strided_slice %39 {offsets = [0, 0], sizes = [8, 32], strides = [1, 1]} : vector<32x32xf32> to vector<8x32xf32>
    %cst_30 = arith.constant dense<0.000000e+00> : vector<8x32xf32>
    %64 = tpu.matmul %62, %63, %cst_30 {dimension_numbers = #tpu.dot_dimension_numbers<[1], [0], [0], [1], [0, 0, 1, 1], [], []>} : vector<8x8xf32>, vector<8x32xf32>, vector<8x32xf32> -> vector<8x32xf32>
    %65 = arith.addf %43, %64 : vector<8x32xf32>
    %66 = vector.extract_strided_slice %35 {offsets = [0, 8], sizes = [8, 8], strides = [1, 1]} : vector<16x32xf32> to vector<8x8xf32>
    %67 = vector.extract_strided_slice %36 {offsets = [0, 8], sizes = [8, 8], strides = [1, 1]} : vector<16x32xf32> to vector<8x8xf32>
    %68 = vector.extract_strided_slice %37 {offsets = [0, 8], sizes = [8, 8], strides = [1, 1]} : vector<16x32xf32> to vector<8x8xf32>
    "tpu.trace_start"() <{level = 10 : i32, message = "qd,kd->qk"}> : () -> ()
    %cst_31 = arith.constant dense<0.000000e+00> : vector<8x8xf32>
    %69 = tpu.matmul %66, %67, %cst_31 {dimension_numbers = #tpu.dot_dimension_numbers<[1], [1], [0], [0], [0, 0, 1, 0], [], []>} : vector<8x8xf32>, vector<8x8xf32>, vector<8x8xf32> -> vector<8x8xf32>
    "tpu.trace_stop"() : () -> ()
    %cst_32 = arith.constant 0.353553385 : f32
    %70 = vector.broadcast %cst_32 : f32 to vector<8x8xf32>
    %71 = arith.mulf %69, %70 : vector<8x8xf32>
    %72 = vector.broadcast %42 : vector<1x8xf32> to vector<8x8xf32>
    %73 = arith.addf %71, %72 : vector<8x8xf32>
    %cst_33 = arith.constant dense<0xFF800000> : vector<8xf32>
    %74 = vector.multi_reduction <maximumf>, %73, %cst_33 [1] : vector<8x8xf32> to vector<8xf32>
    %75 = vector.shape_cast %74 : vector<8xf32> to vector<8x1xf32>
    %76 = vector.broadcast %75 : vector<8x1xf32> to vector<8x8xf32>
    %77 = arith.subf %73, %76 : vector<8x8xf32>
    %78 = math.exp %77 : vector<8x8xf32>
    %cst_34 = arith.constant dense<0.000000e+00> : vector<8xf32>
    %79 = vector.multi_reduction <add>, %78, %cst_34 [1] : vector<8x8xf32> to vector<8xf32>
    %80 = vector.shape_cast %79 : vector<8xf32> to vector<8x1xf32>
    %81 = tpu.reciprocal %80 {approx = true} : vector<8x1xf32> -> vector<8x1xf32>
    %82 = vector.broadcast %81 : vector<8x1xf32> to vector<8x8xf32>
    %83 = arith.mulf %78, %82 : vector<8x8xf32>
    %cst_35 = arith.constant dense<0.000000e+00> : vector<8x8xf32>
    %84 = tpu.matmul %83, %68, %cst_35 {dimension_numbers = #tpu.dot_dimension_numbers<[1], [0], [0], [1], [0, 0, 1, 1], [], []>} : vector<8x8xf32>, vector<8x8xf32>, vector<8x8xf32> -> vector<8x8xf32>
    %85 = vector.extract_strided_slice %39 {offsets = [8, 0], sizes = [8, 32], strides = [1, 1]} : vector<32x32xf32> to vector<8x32xf32>
    %cst_36 = arith.constant dense<0.000000e+00> : vector<8x32xf32>
    %86 = tpu.matmul %84, %85, %cst_36 {dimension_numbers = #tpu.dot_dimension_numbers<[1], [0], [0], [1], [0, 0, 1, 1], [], []>} : vector<8x8xf32>, vector<8x32xf32>, vector<8x32xf32> -> vector<8x32xf32>
    %87 = arith.addf %65, %86 : vector<8x32xf32>
    %88 = vector.extract_strided_slice %35 {offsets = [0, 16], sizes = [8, 8], strides = [1, 1]} : vector<16x32xf32> to vector<8x8xf32>
    %89 = vector.extract_strided_slice %36 {offsets = [0, 16], sizes = [8, 8], strides = [1, 1]} : vector<16x32xf32> to vector<8x8xf32>
    %90 = vector.extract_strided_slice %37 {offsets = [0, 16], sizes = [8, 8], strides = [1, 1]} : vector<16x32xf32> to vector<8x8xf32>
    "tpu.trace_start"() <{level = 10 : i32, message = "qd,kd->qk"}> : () -> ()
    %cst_37 = arith.constant dense<0.000000e+00> : vector<8x8xf32>
    %91 = tpu.matmul %88, %89, %cst_37 {dimension_numbers = #tpu.dot_dimension_numbers<[1], [1], [0], [0], [0, 0, 1, 0], [], []>} : vector<8x8xf32>, vector<8x8xf32>, vector<8x8xf32> -> vector<8x8xf32>
    "tpu.trace_stop"() : () -> ()
    %cst_38 = arith.constant 0.353553385 : f32
    %92 = vector.broadcast %cst_38 : f32 to vector<8x8xf32>
    %93 = arith.mulf %91, %92 : vector<8x8xf32>
    %94 = vector.broadcast %42 : vector<1x8xf32> to vector<8x8xf32>
    %95 = arith.addf %93, %94 : vector<8x8xf32>
    %cst_39 = arith.constant dense<0xFF800000> : vector<8xf32>
    %96 = vector.multi_reduction <maximumf>, %95, %cst_39 [1] : vector<8x8xf32> to vector<8xf32>
    %97 = vector.shape_cast %96 : vector<8xf32> to vector<8x1xf32>
    %98 = vector.broadcast %97 : vector<8x1xf32> to vector<8x8xf32>
    %99 = arith.subf %95, %98 : vector<8x8xf32>
    %100 = math.exp %99 : vector<8x8xf32>
    %cst_40 = arith.constant dense<0.000000e+00> : vector<8xf32>
    %101 = vector.multi_reduction <add>, %100, %cst_40 [1] : vector<8x8xf32> to vector<8xf32>
    %102 = vector.shape_cast %101 : vector<8xf32> to vector<8x1xf32>
    %103 = tpu.reciprocal %102 {approx = true} : vector<8x1xf32> -> vector<8x1xf32>
    %104 = vector.broadcast %103 : vector<8x1xf32> to vector<8x8xf32>
    %105 = arith.mulf %100, %104 : vector<8x8xf32>
    %cst_41 = arith.constant dense<0.000000e+00> : vector<8x8xf32>
    %106 = tpu.matmul %105, %90, %cst_41 {dimension_numbers = #tpu.dot_dimension_numbers<[1], [0], [0], [1], [0, 0, 1, 1], [], []>} : vector<8x8xf32>, vector<8x8xf32>, vector<8x8xf32> -> vector<8x8xf32>
    %107 = vector.extract_strided_slice %39 {offsets = [16, 0], sizes = [8, 32], strides = [1, 1]} : vector<32x32xf32> to vector<8x32xf32>
    %cst_42 = arith.constant dense<0.000000e+00> : vector<8x32xf32>
    %108 = tpu.matmul %106, %107, %cst_42 {dimension_numbers = #tpu.dot_dimension_numbers<[1], [0], [0], [1], [0, 0, 1, 1], [], []>} : vector<8x8xf32>, vector<8x32xf32>, vector<8x32xf32> -> vector<8x32xf32>
    %109 = arith.addf %87, %108 : vector<8x32xf32>
    %110 = vector.extract_strided_slice %35 {offsets = [0, 24], sizes = [8, 8], strides = [1, 1]} : vector<16x32xf32> to vector<8x8xf32>
    %111 = vector.extract_strided_slice %36 {offsets = [0, 24], sizes = [8, 8], strides = [1, 1]} : vector<16x32xf32> to vector<8x8xf32>
    %112 = vector.extract_strided_slice %37 {offsets = [0, 24], sizes = [8, 8], strides = [1, 1]} : vector<16x32xf32> to vector<8x8xf32>
    "tpu.trace_start"() <{level = 10 : i32, message = "qd,kd->qk"}> : () -> ()
    %cst_43 = arith.constant dense<0.000000e+00> : vector<8x8xf32>
    %113 = tpu.matmul %110, %111, %cst_43 {dimension_numbers = #tpu.dot_dimension_numbers<[1], [1], [0], [0], [0, 0, 1, 0], [], []>} : vector<8x8xf32>, vector<8x8xf32>, vector<8x8xf32> -> vector<8x8xf32>
    "tpu.trace_stop"() : () -> ()
    %cst_44 = arith.constant 0.353553385 : f32
    %114 = vector.broadcast %cst_44 : f32 to vector<8x8xf32>
    %115 = arith.mulf %113, %114 : vector<8x8xf32>
    %116 = vector.broadcast %42 : vector<1x8xf32> to vector<8x8xf32>
    %117 = arith.addf %115, %116 : vector<8x8xf32>
    %cst_45 = arith.constant dense<0xFF800000> : vector<8xf32>
    %118 = vector.multi_reduction <maximumf>, %117, %cst_45 [1] : vector<8x8xf32> to vector<8xf32>
    %119 = vector.shape_cast %118 : vector<8xf32> to vector<8x1xf32>
    %120 = vector.broadcast %119 : vector<8x1xf32> to vector<8x8xf32>
    %121 = arith.subf %117, %120 : vector<8x8xf32>
    %122 = math.exp %121 : vector<8x8xf32>
    %cst_46 = arith.constant dense<0.000000e+00> : vector<8xf32>
    %123 = vector.multi_reduction <add>, %122, %cst_46 [1] : vector<8x8xf32> to vector<8xf32>
    %124 = vector.shape_cast %123 : vector<8xf32> to vector<8x1xf32>
    %125 = tpu.reciprocal %124 {approx = true} : vector<8x1xf32> -> vector<8x1xf32>
    %126 = vector.broadcast %125 : vector<8x1xf32> to vector<8x8xf32>
    %127 = arith.mulf %122, %126 : vector<8x8xf32>
    %cst_47 = arith.constant dense<0.000000e+00> : vector<8x8xf32>
    %128 = tpu.matmul %127, %112, %cst_47 {dimension_numbers = #tpu.dot_dimension_numbers<[1], [0], [0], [1], [0, 0, 1, 1], [], []>} : vector<8x8xf32>, vector<8x8xf32>, vector<8x8xf32> -> vector<8x8xf32>
    %129 = vector.extract_strided_slice %39 {offsets = [24, 0], sizes = [8, 32], strides = [1, 1]} : vector<32x32xf32> to vector<8x32xf32>
    %cst_48 = arith.constant dense<0.000000e+00> : vector<8x32xf32>
    %130 = tpu.matmul %128, %129, %cst_48 {dimension_numbers = #tpu.dot_dimension_numbers<[1], [0], [0], [1], [0, 0, 1, 1], [], []>} : vector<8x8xf32>, vector<8x32xf32>, vector<8x32xf32> -> vector<8x32xf32>
    %131 = arith.addf %109, %130 : vector<8x32xf32>
    %132 = vector.extract_strided_slice %0 {offsets = [1, 0], sizes = [1, 8], strides = [1, 1]} : vector<2x8xf32> to vector<1x8xf32>
    %cst_49 = arith.constant 0.000000e+00 : f32
    %133 = vector.broadcast %cst_49 : f32 to vector<8x32xf32>
    %134 = vector.extract_strided_slice %35 {offsets = [8, 0], sizes = [8, 8], strides = [1, 1]} : vector<16x32xf32> to vector<8x8xf32>
    %135 = vector.extract_strided_slice %36 {offsets = [8, 0], sizes = [8, 8], strides = [1, 1]} : vector<16x32xf32> to vector<8x8xf32>
    %136 = vector.extract_strided_slice %37 {offsets = [8, 0], sizes = [8, 8], strides = [1, 1]} : vector<16x32xf32> to vector<8x8xf32>
    "tpu.trace_start"() <{level = 10 : i32, message = "qd,kd->qk"}> : () -> ()
    %cst_50 = arith.constant dense<0.000000e+00> : vector<8x8xf32>
    %137 = tpu.matmul %134, %135, %cst_50 {dimension_numbers = #tpu.dot_dimension_numbers<[1], [1], [0], [0], [0, 0, 1, 0], [], []>} : vector<8x8xf32>, vector<8x8xf32>, vector<8x8xf32> -> vector<8x8xf32>
    "tpu.trace_stop"() : () -> ()
    %cst_51 = arith.constant 0.353553385 : f32
    %138 = vector.broadcast %cst_51 : f32 to vector<8x8xf32>
    %139 = arith.mulf %137, %138 : vector<8x8xf32>
    %140 = vector.broadcast %132 : vector<1x8xf32> to vector<8x8xf32>
    %141 = arith.addf %139, %140 : vector<8x8xf32>
    %cst_52 = arith.constant dense<0xFF800000> : vector<8xf32>
    %142 = vector.multi_reduction <maximumf>, %141, %cst_52 [1] : vector<8x8xf32> to vector<8xf32>
    %143 = vector.shape_cast %142 : vector<8xf32> to vector<8x1xf32>
    %144 = vector.broadcast %143 : vector<8x1xf32> to vector<8x8xf32>
    %145 = arith.subf %141, %144 : vector<8x8xf32>
    %146 = math.exp %145 : vector<8x8xf32>
    %cst_53 = arith.constant dense<0.000000e+00> : vector<8xf32>
    %147 = vector.multi_reduction <add>, %146, %cst_53 [1] : vector<8x8xf32> to vector<8xf32>
    %148 = vector.shape_cast %147 : vector<8xf32> to vector<8x1xf32>
    %149 = tpu.reciprocal %148 {approx = true} : vector<8x1xf32> -> vector<8x1xf32>
    %150 = vector.broadcast %149 : vector<8x1xf32> to vector<8x8xf32>
    %151 = arith.mulf %146, %150 : vector<8x8xf32>
    %cst_54 = arith.constant dense<0.000000e+00> : vector<8x8xf32>
    %152 = tpu.matmul %151, %136, %cst_54 {dimension_numbers = #tpu.dot_dimension_numbers<[1], [0], [0], [1], [0, 0, 1, 1], [], []>} : vector<8x8xf32>, vector<8x8xf32>, vector<8x8xf32> -> vector<8x8xf32>
    %153 = vector.extract_strided_slice %39 {offsets = [0, 0], sizes = [8, 32], strides = [1, 1]} : vector<32x32xf32> to vector<8x32xf32>
    %cst_55 = arith.constant dense<0.000000e+00> : vector<8x32xf32>
    %154 = tpu.matmul %152, %153, %cst_55 {dimension_numbers = #tpu.dot_dimension_numbers<[1], [0], [0], [1], [0, 0, 1, 1], [], []>} : vector<8x8xf32>, vector<8x32xf32>, vector<8x32xf32> -> vector<8x32xf32>
    %155 = arith.addf %133, %154 : vector<8x32xf32>
    %156 = vector.extract_strided_slice %35 {offsets = [8, 8], sizes = [8, 8], strides = [1, 1]} : vector<16x32xf32> to vector<8x8xf32>
    %157 = vector.extract_strided_slice %36 {offsets = [8, 8], sizes = [8, 8], strides = [1, 1]} : vector<16x32xf32> to vector<8x8xf32>
    %158 = vector.extract_strided_slice %37 {offsets = [8, 8], sizes = [8, 8], strides = [1, 1]} : vector<16x32xf32> to vector<8x8xf32>
    "tpu.trace_start"() <{level = 10 : i32, message = "qd,kd->qk"}> : () -> ()
    %cst_56 = arith.constant dense<0.000000e+00> : vector<8x8xf32>
    %159 = tpu.matmul %156, %157, %cst_56 {dimension_numbers = #tpu.dot_dimension_numbers<[1], [1], [0], [0], [0, 0, 1, 0], [], []>} : vector<8x8xf32>, vector<8x8xf32>, vector<8x8xf32> -> vector<8x8xf32>
    "tpu.trace_stop"() : () -> ()
    %cst_57 = arith.constant 0.353553385 : f32
    %160 = vector.broadcast %cst_57 : f32 to vector<8x8xf32>
    %161 = arith.mulf %159, %160 : vector<8x8xf32>
    %162 = vector.broadcast %132 : vector<1x8xf32> to vector<8x8xf32>
    %163 = arith.addf %161, %162 : vector<8x8xf32>
    %cst_58 = arith.constant dense<0xFF800000> : vector<8xf32>
    %164 = vector.multi_reduction <maximumf>, %163, %cst_58 [1] : vector<8x8xf32> to vector<8xf32>
    %165 = vector.shape_cast %164 : vector<8xf32> to vector<8x1xf32>
    %166 = vector.broadcast %165 : vector<8x1xf32> to vector<8x8xf32>
    %167 = arith.subf %163, %166 : vector<8x8xf32>
    %168 = math.exp %167 : vector<8x8xf32>
    %cst_59 = arith.constant dense<0.000000e+00> : vector<8xf32>
    %169 = vector.multi_reduction <add>, %168, %cst_59 [1] : vector<8x8xf32> to vector<8xf32>
    %170 = vector.shape_cast %169 : vector<8xf32> to vector<8x1xf32>
    %171 = tpu.reciprocal %170 {approx = true} : vector<8x1xf32> -> vector<8x1xf32>
    %172 = vector.broadcast %171 : vector<8x1xf32> to vector<8x8xf32>
    %173 = arith.mulf %168, %172 : vector<8x8xf32>
    %cst_60 = arith.constant dense<0.000000e+00> : vector<8x8xf32>
    %174 = tpu.matmul %173, %158, %cst_60 {dimension_numbers = #tpu.dot_dimension_numbers<[1], [0], [0], [1], [0, 0, 1, 1], [], []>} : vector<8x8xf32>, vector<8x8xf32>, vector<8x8xf32> -> vector<8x8xf32>
    %175 = vector.extract_strided_slice %39 {offsets = [8, 0], sizes = [8, 32], strides = [1, 1]} : vector<32x32xf32> to vector<8x32xf32>
    %cst_61 = arith.constant dense<0.000000e+00> : vector<8x32xf32>
    %176 = tpu.matmul %174, %175, %cst_61 {dimension_numbers = #tpu.dot_dimension_numbers<[1], [0], [0], [1], [0, 0, 1, 1], [], []>} : vector<8x8xf32>, vector<8x32xf32>, vector<8x32xf32> -> vector<8x32xf32>
    %177 = arith.addf %155, %176 : vector<8x32xf32>
    %178 = vector.extract_strided_slice %35 {offsets = [8, 16], sizes = [8, 8], strides = [1, 1]} : vector<16x32xf32> to vector<8x8xf32>
    %179 = vector.extract_strided_slice %36 {offsets = [8, 16], sizes = [8, 8], strides = [1, 1]} : vector<16x32xf32> to vector<8x8xf32>
    %180 = vector.extract_strided_slice %37 {offsets = [8, 16], sizes = [8, 8], strides = [1, 1]} : vector<16x32xf32> to vector<8x8xf32>
    "tpu.trace_start"() <{level = 10 : i32, message = "qd,kd->qk"}> : () -> ()
    %cst_62 = arith.constant dense<0.000000e+00> : vector<8x8xf32>
    %181 = tpu.matmul %178, %179, %cst_62 {dimension_numbers = #tpu.dot_dimension_numbers<[1], [1], [0], [0], [0, 0, 1, 0], [], []>} : vector<8x8xf32>, vector<8x8xf32>, vector<8x8xf32> -> vector<8x8xf32>
    "tpu.trace_stop"() : () -> ()
    %cst_63 = arith.constant 0.353553385 : f32
    %182 = vector.broadcast %cst_63 : f32 to vector<8x8xf32>
    %183 = arith.mulf %181, %182 : vector<8x8xf32>
    %184 = vector.broadcast %132 : vector<1x8xf32> to vector<8x8xf32>
    %185 = arith.addf %183, %184 : vector<8x8xf32>
    %cst_64 = arith.constant dense<0xFF800000> : vector<8xf32>
    %186 = vector.multi_reduction <maximumf>, %185, %cst_64 [1] : vector<8x8xf32> to vector<8xf32>
    %187 = vector.shape_cast %186 : vector<8xf32> to vector<8x1xf32>
    %188 = vector.broadcast %187 : vector<8x1xf32> to vector<8x8xf32>
    %189 = arith.subf %185, %188 : vector<8x8xf32>
    %190 = math.exp %189 : vector<8x8xf32>
    %cst_65 = arith.constant dense<0.000000e+00> : vector<8xf32>
    %191 = vector.multi_reduction <add>, %190, %cst_65 [1] : vector<8x8xf32> to vector<8xf32>
    %192 = vector.shape_cast %191 : vector<8xf32> to vector<8x1xf32>
    %193 = tpu.reciprocal %192 {approx = true} : vector<8x1xf32> -> vector<8x1xf32>
    %194 = vector.broadcast %193 : vector<8x1xf32> to vector<8x8xf32>
    %195 = arith.mulf %190, %194 : vector<8x8xf32>
    %cst_66 = arith.constant dense<0.000000e+00> : vector<8x8xf32>
    %196 = tpu.matmul %195, %180, %cst_66 {dimension_numbers = #tpu.dot_dimension_numbers<[1], [0], [0], [1], [0, 0, 1, 1], [], []>} : vector<8x8xf32>, vector<8x8xf32>, vector<8x8xf32> -> vector<8x8xf32>
    %197 = vector.extract_strided_slice %39 {offsets = [16, 0], sizes = [8, 32], strides = [1, 1]} : vector<32x32xf32> to vector<8x32xf32>
    %cst_67 = arith.constant dense<0.000000e+00> : vector<8x32xf32>
    %198 = tpu.matmul %196, %197, %cst_67 {dimension_numbers = #tpu.dot_dimension_numbers<[1], [0], [0], [1], [0, 0, 1, 1], [], []>} : vector<8x8xf32>, vector<8x32xf32>, vector<8x32xf32> -> vector<8x32xf32>
    %199 = arith.addf %177, %198 : vector<8x32xf32>
    %200 = vector.extract_strided_slice %35 {offsets = [8, 24], sizes = [8, 8], strides = [1, 1]} : vector<16x32xf32> to vector<8x8xf32>
    %201 = vector.extract_strided_slice %36 {offsets = [8, 24], sizes = [8, 8], strides = [1, 1]} : vector<16x32xf32> to vector<8x8xf32>
    %202 = vector.extract_strided_slice %37 {offsets = [8, 24], sizes = [8, 8], strides = [1, 1]} : vector<16x32xf32> to vector<8x8xf32>
    "tpu.trace_start"() <{level = 10 : i32, message = "qd,kd->qk"}> : () -> ()
    %cst_68 = arith.constant dense<0.000000e+00> : vector<8x8xf32>
    %203 = tpu.matmul %200, %201, %cst_68 {dimension_numbers = #tpu.dot_dimension_numbers<[1], [1], [0], [0], [0, 0, 1, 0], [], []>} : vector<8x8xf32>, vector<8x8xf32>, vector<8x8xf32> -> vector<8x8xf32>
    "tpu.trace_stop"() : () -> ()
    %cst_69 = arith.constant 0.353553385 : f32
    %204 = vector.broadcast %cst_69 : f32 to vector<8x8xf32>
    %205 = arith.mulf %203, %204 : vector<8x8xf32>
    %206 = vector.broadcast %132 : vector<1x8xf32> to vector<8x8xf32>
    %207 = arith.addf %205, %206 : vector<8x8xf32>
    %cst_70 = arith.constant dense<0xFF800000> : vector<8xf32>
    %208 = vector.multi_reduction <maximumf>, %207, %cst_70 [1] : vector<8x8xf32> to vector<8xf32>
    %209 = vector.shape_cast %208 : vector<8xf32> to vector<8x1xf32>
    %210 = vector.broadcast %209 : vector<8x1xf32> to vector<8x8xf32>
    %211 = arith.subf %207, %210 : vector<8x8xf32>
    %212 = math.exp %211 : vector<8x8xf32>
    %cst_71 = arith.constant dense<0.000000e+00> : vector<8xf32>
    %213 = vector.multi_reduction <add>, %212, %cst_71 [1] : vector<8x8xf32> to vector<8xf32>
    %214 = vector.shape_cast %213 : vector<8xf32> to vector<8x1xf32>
    %215 = tpu.reciprocal %214 {approx = true} : vector<8x1xf32> -> vector<8x1xf32>
    %216 = vector.broadcast %215 : vector<8x1xf32> to vector<8x8xf32>
    %217 = arith.mulf %212, %216 : vector<8x8xf32>
    %cst_72 = arith.constant dense<0.000000e+00> : vector<8x8xf32>
    %218 = tpu.matmul %217, %202, %cst_72 {dimension_numbers = #tpu.dot_dimension_numbers<[1], [0], [0], [1], [0, 0, 1, 1], [], []>} : vector<8x8xf32>, vector<8x8xf32>, vector<8x8xf32> -> vector<8x8xf32>
    %219 = vector.extract_strided_slice %39 {offsets = [24, 0], sizes = [8, 32], strides = [1, 1]} : vector<32x32xf32> to vector<8x32xf32>
    %cst_73 = arith.constant dense<0.000000e+00> : vector<8x32xf32>
    %220 = tpu.matmul %218, %219, %cst_73 {dimension_numbers = #tpu.dot_dimension_numbers<[1], [0], [0], [1], [0, 0, 1, 1], [], []>} : vector<8x8xf32>, vector<8x32xf32>, vector<8x32xf32> -> vector<8x32xf32>
    %221 = arith.addf %199, %220 : vector<8x32xf32>
    %222 = tpu.concatenate %131, %221 in 0 : vector<8x32xf32>, vector<8x32xf32> -> vector<16x32xf32>
    %223 = vector.broadcast %41 : vector<1x32xf32> to vector<16x32xf32>
    %224 = arith.addf %222, %223 : vector<16x32xf32>
    %225 = arith.addf %27, %224 : vector<16x32xf32>
    %c0_74 = arith.constant 0 : index
    %c0_75 = arith.constant 0 : index
    %c0_76 = arith.constant 0 : index
    %226 = vector.load %arg11[%c0_74, %c0_75, %c0_76] : memref<2x2x32xf32, #tpu.memory_space<vmem>>, vector<1x2x32xf32>
    %227 = vector.shape_cast %226 : vector<1x2x32xf32> to vector<2x32xf32>
    %228 = vector.extract_strided_slice %227 {offsets = [0, 0], sizes = [1, 32], strides = [1, 1]} : vector<2x32xf32> to vector<1x32xf32>
    %229 = vector.extract_strided_slice %227 {offsets = [1, 0], sizes = [1, 32], strides = [1, 1]} : vector<2x32xf32> to vector<1x32xf32>
    %cst_77 = arith.constant dense<0.000000e+00> : vector<16xf32>
    %230 = vector.multi_reduction <add>, %225, %cst_77 [1] : vector<16x32xf32> to vector<16xf32>
    %231 = vector.shape_cast %230 : vector<16xf32> to vector<16x1xf32>
    %cst_78 = arith.constant 3.200000e+01 : f32
    %232 = vector.broadcast %cst_78 : f32 to vector<16x1xf32>
    %233 = arith.divf %231, %232 : vector<16x1xf32>
    %234 = vector.broadcast %233 : vector<16x1xf32> to vector<16x32xf32>
    %235 = arith.subf %225, %234 : vector<16x32xf32>
    %236 = arith.mulf %235, %235 : vector<16x32xf32>
    %cst_79 = arith.constant dense<0.000000e+00> : vector<16xf32>
    %237 = vector.multi_reduction <add>, %236, %cst_79 [1] : vector<16x32xf32> to vector<16xf32>
    %238 = vector.shape_cast %237 : vector<16xf32> to vector<16x1xf32>
    %cst_80 = arith.constant 3.200000e+01 : f32
    %239 = vector.broadcast %cst_80 : f32 to vector<16x1xf32>
    %240 = arith.divf %238, %239 : vector<16x1xf32>
    %241 = vector.broadcast %233 : vector<16x1xf32> to vector<16x32xf32>
    %242 = arith.subf %225, %241 : vector<16x32xf32>
    %cst_81 = arith.constant 9.99999974E-6 : f32
    %243 = vector.broadcast %cst_81 : f32 to vector<16x1xf32>
    %244 = arith.addf %240, %243 : vector<16x1xf32>
    %245 = math.rsqrt %244 : vector<16x1xf32>
    %246 = vector.broadcast %245 : vector<16x1xf32> to vector<16x32xf32>
    %247 = arith.mulf %242, %246 : vector<16x32xf32>
    %248 = vector.broadcast %228 : vector<1x32xf32> to vector<16x32xf32>
    %249 = arith.mulf %247, %248 : vector<16x32xf32>
    %250 = vector.broadcast %229 : vector<1x32xf32> to vector<16x32xf32>
    %251 = arith.addf %249, %250 : vector<16x32xf32>
    %c0_82 = arith.constant 0 : index
    %c0_83 = arith.constant 0 : index
    %c0_84 = arith.constant 0 : index
    %252 = vector.load %arg12[%c0_82, %c0_83, %c0_84] : memref<2x32x64xf32, #tpu.memory_space<vmem>>, vector<1x32x64xf32>
    %253 = vector.shape_cast %252 : vector<1x32x64xf32> to vector<32x64xf32>
    %c0_85 = arith.constant 0 : index
    %c0_86 = arith.constant 0 : index
    %c0_87 = arith.constant 0 : index
    %254 = vector.load %arg13[%c0_85, %c0_86, %c0_87] : memref<2x1x64xf32, #tpu.memory_space<vmem>>, vector<1x1x64xf32>
    %255 = vector.shape_cast %254 : vector<1x1x64xf32> to vector<1x64xf32>
    %c0_88 = arith.constant 0 : index
    %c0_89 = arith.constant 0 : index
    %c0_90 = arith.constant 0 : index
    %256 = vector.load %arg14[%c0_88, %c0_89, %c0_90] : memref<2x64x32xf32, #tpu.memory_space<vmem>>, vector<1x64x32xf32>
    %257 = vector.shape_cast %256 : vector<1x64x32xf32> to vector<64x32xf32>
    %c0_91 = arith.constant 0 : index
    %c0_92 = arith.constant 0 : index
    %c0_93 = arith.constant 0 : index
    %258 = vector.load %arg15[%c0_91, %c0_92, %c0_93] : memref<2x1x32xf32, #tpu.memory_space<vmem>>, vector<1x1x32xf32>
    %259 = vector.shape_cast %258 : vector<1x1x32xf32> to vector<1x32xf32>
    %cst_94 = arith.constant dense<0.000000e+00> : vector<16x64xf32>
    %260 = tpu.matmul %251, %253, %cst_94 {dimension_numbers = #tpu.dot_dimension_numbers<[1], [0], [0], [1], [0, 0, 1, 1], [], []>} : vector<16x32xf32>, vector<32x64xf32>, vector<16x64xf32> -> vector<16x64xf32>
    %261 = vector.broadcast %255 : vector<1x64xf32> to vector<16x64xf32>
    %262 = arith.addf %260, %261 : vector<16x64xf32>
    %263 = arith.mulf %262, %262 : vector<16x64xf32>
    %264 = arith.mulf %262, %263 : vector<16x64xf32>
    %cst_95 = arith.constant 4.471500e-02 : f32
    %265 = vector.broadcast %cst_95 : f32 to vector<16x64xf32>
    %266 = arith.mulf %265, %264 : vector<16x64xf32>
    %267 = arith.addf %262, %266 : vector<16x64xf32>
    %cst_96 = arith.constant 0.797884583 : f32
    %268 = vector.broadcast %cst_96 : f32 to vector<16x64xf32>
    %269 = arith.mulf %268, %267 : vector<16x64xf32>
    %270 = math.tanh %269 : vector<16x64xf32>
    %cst_97 = arith.constant 1.000000e+00 : f32
    %271 = vector.broadcast %cst_97 : f32 to vector<16x64xf32>
    %272 = arith.addf %271, %270 : vector<16x64xf32>
    %cst_98 = arith.constant 5.000000e-01 : f32
    %273 = vector.broadcast %cst_98 : f32 to vector<16x64xf32>
    %274 = arith.mulf %273, %272 : vector<16x64xf32>
    %275 = arith.mulf %262, %274 : vector<16x64xf32>
    %cst_99 = arith.constant dense<0.000000e+00> : vector<16x32xf32>
    %276 = tpu.matmul %275, %257, %cst_99 {dimension_numbers = #tpu.dot_dimension_numbers<[1], [0], [0], [1], [0, 0, 1, 1], [], []>} : vector<16x64xf32>, vector<64x32xf32>, vector<16x32xf32> -> vector<16x32xf32>
    %277 = vector.broadcast %259 : vector<1x32xf32> to vector<16x32xf32>
    %278 = arith.addf %276, %277 : vector<16x32xf32>
    %279 = arith.addf %251, %278 : vector<16x32xf32>
    %c0_100 = arith.constant 0 : index
    %c0_101 = arith.constant 0 : index
    %c0_102 = arith.constant 0 : index
    %280 = vector.load %arg16[%c0_100, %c0_101, %c0_102] : memref<2x2x32xf32, #tpu.memory_space<vmem>>, vector<1x2x32xf32>
    %281 = vector.shape_cast %280 : vector<1x2x32xf32> to vector<2x32xf32>
    %282 = vector.extract_strided_slice %281 {offsets = [0, 0], sizes = [1, 32], strides = [1, 1]} : vector<2x32xf32> to vector<1x32xf32>
    %283 = vector.extract_strided_slice %281 {offsets = [1, 0], sizes = [1, 32], strides = [1, 1]} : vector<2x32xf32> to vector<1x32xf32>
    %cst_103 = arith.constant dense<0.000000e+00> : vector<16xf32>
    %284 = vector.multi_reduction <add>, %279, %cst_103 [1] : vector<16x32xf32> to vector<16xf32>
    %285 = vector.shape_cast %284 : vector<16xf32> to vector<16x1xf32>
    %cst_104 = arith.constant 3.200000e+01 : f32
    %286 = vector.broadcast %cst_104 : f32 to vector<16x1xf32>
    %287 = arith.divf %285, %286 : vector<16x1xf32>
    %288 = vector.broadcast %287 : vector<16x1xf32> to vector<16x32xf32>
    %289 = arith.subf %279, %288 : vector<16x32xf32>
    %290 = arith.mulf %289, %289 : vector<16x32xf32>
    %cst_105 = arith.constant dense<0.000000e+00> : vector<16xf32>
    %291 = vector.multi_reduction <add>, %290, %cst_105 [1] : vector<16x32xf32> to vector<16xf32>
    %292 = vector.shape_cast %291 : vector<16xf32> to vector<16x1xf32>
    %cst_106 = arith.constant 3.200000e+01 : f32
    %293 = vector.broadcast %cst_106 : f32 to vector<16x1xf32>
    %294 = arith.divf %292, %293 : vector<16x1xf32>
    %295 = vector.broadcast %287 : vector<16x1xf32> to vector<16x32xf32>
    %296 = arith.subf %279, %295 : vector<16x32xf32>
    %cst_107 = arith.constant 9.99999974E-6 : f32
    %297 = vector.broadcast %cst_107 : f32 to vector<16x1xf32>
    %298 = arith.addf %294, %297 : vector<16x1xf32>
    %299 = math.rsqrt %298 : vector<16x1xf32>
    %300 = vector.broadcast %299 : vector<16x1xf32> to vector<16x32xf32>
    %301 = arith.mulf %296, %300 : vector<16x32xf32>
    %302 = vector.broadcast %282 : vector<1x32xf32> to vector<16x32xf32>
    %303 = arith.mulf %301, %302 : vector<16x32xf32>
    %304 = vector.broadcast %283 : vector<1x32xf32> to vector<16x32xf32>
    %305 = arith.addf %303, %304 : vector<16x32xf32>
    %c1 = arith.constant 1 : index
    %c0_108 = arith.constant 0 : index
    %c0_109 = arith.constant 0 : index
    %306 = vector.load %arg7[%c1, %c0_108, %c0_109] : memref<2x32x96xf32, #tpu.memory_space<vmem>>, vector<1x32x96xf32>
    %307 = vector.shape_cast %306 : vector<1x32x96xf32> to vector<32x96xf32>
    %cst_110 = arith.constant dense<0.000000e+00> : vector<16x96xf32>
    %308 = tpu.matmul %305, %307, %cst_110 {dimension_numbers = #tpu.dot_dimension_numbers<[1], [0], [0], [1], [0, 0, 1, 1], [], []>} : vector<16x32xf32>, vector<32x96xf32>, vector<16x96xf32> -> vector<16x96xf32>
    %c1_111 = arith.constant 1 : index
    %c0_112 = arith.constant 0 : index
    %c0_113 = arith.constant 0 : index
    %309 = vector.load %arg8[%c1_111, %c0_112, %c0_113] : memref<2x1x96xf32, #tpu.memory_space<vmem>>, vector<1x1x96xf32>
    %310 = vector.shape_cast %309 : vector<1x1x96xf32> to vector<1x96xf32>
    %311 = vector.broadcast %310 : vector<1x96xf32> to vector<16x96xf32>
    %312 = arith.addf %308, %311 : vector<16x96xf32>
    %313 = vector.extract_strided_slice %312 {offsets = [0, 0], sizes = [16, 32], strides = [1, 1]} : vector<16x96xf32> to vector<16x32xf32>
    %314 = vector.extract_strided_slice %312 {offsets = [0, 32], sizes = [16, 32], strides = [1, 1]} : vector<16x96xf32> to vector<16x32xf32>
    %315 = vector.extract_strided_slice %312 {offsets = [0, 64], sizes = [16, 32], strides = [1, 1]} : vector<16x96xf32> to vector<16x32xf32>
    %c1_114 = arith.constant 1 : index
    %c0_115 = arith.constant 0 : index
    %c0_116 = arith.constant 0 : index
    %316 = vector.load %arg9[%c1_114, %c0_115, %c0_116] : memref<2x32x32xf32, #tpu.memory_space<vmem>>, vector<1x32x32xf32>
    %317 = vector.shape_cast %316 : vector<1x32x32xf32> to vector<32x32xf32>
    %c1_117 = arith.constant 1 : index
    %c0_118 = arith.constant 0 : index
    %c0_119 = arith.constant 0 : index
    %318 = vector.load %arg10[%c1_117, %c0_118, %c0_119] : memref<2x1x32xf32, #tpu.memory_space<vmem>>, vector<1x1x32xf32>
    %319 = vector.shape_cast %318 : vector<1x1x32xf32> to vector<1x32xf32>
    %320 = vector.extract_strided_slice %0 {offsets = [0, 0], sizes = [1, 8], strides = [1, 1]} : vector<2x8xf32> to vector<1x8xf32>
    %cst_120 = arith.constant 0.000000e+00 : f32
    %321 = vector.broadcast %cst_120 : f32 to vector<8x32xf32>
    %322 = vector.extract_strided_slice %313 {offsets = [0, 0], sizes = [8, 8], strides = [1, 1]} : vector<16x32xf32> to vector<8x8xf32>
    %323 = vector.extract_strided_slice %314 {offsets = [0, 0], sizes = [8, 8], strides = [1, 1]} : vector<16x32xf32> to vector<8x8xf32>
    %324 = vector.extract_strided_slice %315 {offsets = [0, 0], sizes = [8, 8], strides = [1, 1]} : vector<16x32xf32> to vector<8x8xf32>
    "tpu.trace_start"() <{level = 10 : i32, message = "qd,kd->qk"}> : () -> ()
    %cst_121 = arith.constant dense<0.000000e+00> : vector<8x8xf32>
    %325 = tpu.matmul %322, %323, %cst_121 {dimension_numbers = #tpu.dot_dimension_numbers<[1], [1], [0], [0], [0, 0, 1, 0], [], []>} : vector<8x8xf32>, vector<8x8xf32>, vector<8x8xf32> -> vector<8x8xf32>
    "tpu.trace_stop"() : () -> ()
    %cst_122 = arith.constant 0.353553385 : f32
    %326 = vector.broadcast %cst_122 : f32 to vector<8x8xf32>
    %327 = arith.mulf %325, %326 : vector<8x8xf32>
    %328 = vector.broadcast %320 : vector<1x8xf32> to vector<8x8xf32>
    %329 = arith.addf %327, %328 : vector<8x8xf32>
    %cst_123 = arith.constant dense<0xFF800000> : vector<8xf32>
    %330 = vector.multi_reduction <maximumf>, %329, %cst_123 [1] : vector<8x8xf32> to vector<8xf32>
    %331 = vector.shape_cast %330 : vector<8xf32> to vector<8x1xf32>
    %332 = vector.broadcast %331 : vector<8x1xf32> to vector<8x8xf32>
    %333 = arith.subf %329, %332 : vector<8x8xf32>
    %334 = math.exp %333 : vector<8x8xf32>
    %cst_124 = arith.constant dense<0.000000e+00> : vector<8xf32>
    %335 = vector.multi_reduction <add>, %334, %cst_124 [1] : vector<8x8xf32> to vector<8xf32>
    %336 = vector.shape_cast %335 : vector<8xf32> to vector<8x1xf32>
    %337 = tpu.reciprocal %336 {approx = true} : vector<8x1xf32> -> vector<8x1xf32>
    %338 = vector.broadcast %337 : vector<8x1xf32> to vector<8x8xf32>
    %339 = arith.mulf %334, %338 : vector<8x8xf32>
    %cst_125 = arith.constant dense<0.000000e+00> : vector<8x8xf32>
    %340 = tpu.matmul %339, %324, %cst_125 {dimension_numbers = #tpu.dot_dimension_numbers<[1], [0], [0], [1], [0, 0, 1, 1], [], []>} : vector<8x8xf32>, vector<8x8xf32>, vector<8x8xf32> -> vector<8x8xf32>
    %341 = vector.extract_strided_slice %317 {offsets = [0, 0], sizes = [8, 32], strides = [1, 1]} : vector<32x32xf32> to vector<8x32xf32>
    %cst_126 = arith.constant dense<0.000000e+00> : vector<8x32xf32>
    %342 = tpu.matmul %340, %341, %cst_126 {dimension_numbers = #tpu.dot_dimension_numbers<[1], [0], [0], [1], [0, 0, 1, 1], [], []>} : vector<8x8xf32>, vector<8x32xf32>, vector<8x32xf32> -> vector<8x32xf32>
    %343 = arith.addf %321, %342 : vector<8x32xf32>
    %344 = vector.extract_strided_slice %313 {offsets = [0, 8], sizes = [8, 8], strides = [1, 1]} : vector<16x32xf32> to vector<8x8xf32>
    %345 = vector.extract_strided_slice %314 {offsets = [0, 8], sizes = [8, 8], strides = [1, 1]} : vector<16x32xf32> to vector<8x8xf32>
    %346 = vector.extract_strided_slice %315 {offsets = [0, 8], sizes = [8, 8], strides = [1, 1]} : vector<16x32xf32> to vector<8x8xf32>
    "tpu.trace_start"() <{level = 10 : i32, message = "qd,kd->qk"}> : () -> ()
    %cst_127 = arith.constant dense<0.000000e+00> : vector<8x8xf32>
    %347 = tpu.matmul %344, %345, %cst_127 {dimension_numbers = #tpu.dot_dimension_numbers<[1], [1], [0], [0], [0, 0, 1, 0], [], []>} : vector<8x8xf32>, vector<8x8xf32>, vector<8x8xf32> -> vector<8x8xf32>
    "tpu.trace_stop"() : () -> ()
    %cst_128 = arith.constant 0.353553385 : f32
    %348 = vector.broadcast %cst_128 : f32 to vector<8x8xf32>
    %349 = arith.mulf %347, %348 : vector<8x8xf32>
    %350 = vector.broadcast %320 : vector<1x8xf32> to vector<8x8xf32>
    %351 = arith.addf %349, %350 : vector<8x8xf32>
    %cst_129 = arith.constant dense<0xFF800000> : vector<8xf32>
    %352 = vector.multi_reduction <maximumf>, %351, %cst_129 [1] : vector<8x8xf32> to vector<8xf32>
    %353 = vector.shape_cast %352 : vector<8xf32> to vector<8x1xf32>
    %354 = vector.broadcast %353 : vector<8x1xf32> to vector<8x8xf32>
    %355 = arith.subf %351, %354 : vector<8x8xf32>
    %356 = math.exp %355 : vector<8x8xf32>
    %cst_130 = arith.constant dense<0.000000e+00> : vector<8xf32>
    %357 = vector.multi_reduction <add>, %356, %cst_130 [1] : vector<8x8xf32> to vector<8xf32>
    %358 = vector.shape_cast %357 : vector<8xf32> to vector<8x1xf32>
    %359 = tpu.reciprocal %358 {approx = true} : vector<8x1xf32> -> vector<8x1xf32>
    %360 = vector.broadcast %359 : vector<8x1xf32> to vector<8x8xf32>
    %361 = arith.mulf %356, %360 : vector<8x8xf32>
    %cst_131 = arith.constant dense<0.000000e+00> : vector<8x8xf32>
    %362 = tpu.matmul %361, %346, %cst_131 {dimension_numbers = #tpu.dot_dimension_numbers<[1], [0], [0], [1], [0, 0, 1, 1], [], []>} : vector<8x8xf32>, vector<8x8xf32>, vector<8x8xf32> -> vector<8x8xf32>
    %363 = vector.extract_strided_slice %317 {offsets = [8, 0], sizes = [8, 32], strides = [1, 1]} : vector<32x32xf32> to vector<8x32xf32>
    %cst_132 = arith.constant dense<0.000000e+00> : vector<8x32xf32>
    %364 = tpu.matmul %362, %363, %cst_132 {dimension_numbers = #tpu.dot_dimension_numbers<[1], [0], [0], [1], [0, 0, 1, 1], [], []>} : vector<8x8xf32>, vector<8x32xf32>, vector<8x32xf32> -> vector<8x32xf32>
    %365 = arith.addf %343, %364 : vector<8x32xf32>
    %366 = vector.extract_strided_slice %313 {offsets = [0, 16], sizes = [8, 8], strides = [1, 1]} : vector<16x32xf32> to vector<8x8xf32>
    %367 = vector.extract_strided_slice %314 {offsets = [0, 16], sizes = [8, 8], strides = [1, 1]} : vector<16x32xf32> to vector<8x8xf32>
    %368 = vector.extract_strided_slice %315 {offsets = [0, 16], sizes = [8, 8], strides = [1, 1]} : vector<16x32xf32> to vector<8x8xf32>
    "tpu.trace_start"() <{level = 10 : i32, message = "qd,kd->qk"}> : () -> ()
    %cst_133 = arith.constant dense<0.000000e+00> : vector<8x8xf32>
    %369 = tpu.matmul %366, %367, %cst_133 {dimension_numbers = #tpu.dot_dimension_numbers<[1], [1], [0], [0], [0, 0, 1, 0], [], []>} : vector<8x8xf32>, vector<8x8xf32>, vector<8x8xf32> -> vector<8x8xf32>
    "tpu.trace_stop"() : () -> ()
    %cst_134 = arith.constant 0.353553385 : f32
    %370 = vector.broadcast %cst_134 : f32 to vector<8x8xf32>
    %371 = arith.mulf %369, %370 : vector<8x8xf32>
    %372 = vector.broadcast %320 : vector<1x8xf32> to vector<8x8xf32>
    %373 = arith.addf %371, %372 : vector<8x8xf32>
    %cst_135 = arith.constant dense<0xFF800000> : vector<8xf32>
    %374 = vector.multi_reduction <maximumf>, %373, %cst_135 [1] : vector<8x8xf32> to vector<8xf32>
    %375 = vector.shape_cast %374 : vector<8xf32> to vector<8x1xf32>
    %376 = vector.broadcast %375 : vector<8x1xf32> to vector<8x8xf32>
    %377 = arith.subf %373, %376 : vector<8x8xf32>
    %378 = math.exp %377 : vector<8x8xf32>
    %cst_136 = arith.constant dense<0.000000e+00> : vector<8xf32>
    %379 = vector.multi_reduction <add>, %378, %cst_136 [1] : vector<8x8xf32> to vector<8xf32>
    %380 = vector.shape_cast %379 : vector<8xf32> to vector<8x1xf32>
    %381 = tpu.reciprocal %380 {approx = true} : vector<8x1xf32> -> vector<8x1xf32>
    %382 = vector.broadcast %381 : vector<8x1xf32> to vector<8x8xf32>
    %383 = arith.mulf %378, %382 : vector<8x8xf32>
    %cst_137 = arith.constant dense<0.000000e+00> : vector<8x8xf32>
    %384 = tpu.matmul %383, %368, %cst_137 {dimension_numbers = #tpu.dot_dimension_numbers<[1], [0], [0], [1], [0, 0, 1, 1], [], []>} : vector<8x8xf32>, vector<8x8xf32>, vector<8x8xf32> -> vector<8x8xf32>
    %385 = vector.extract_strided_slice %317 {offsets = [16, 0], sizes = [8, 32], strides = [1, 1]} : vector<32x32xf32> to vector<8x32xf32>
    %cst_138 = arith.constant dense<0.000000e+00> : vector<8x32xf32>
    %386 = tpu.matmul %384, %385, %cst_138 {dimension_numbers = #tpu.dot_dimension_numbers<[1], [0], [0], [1], [0, 0, 1, 1], [], []>} : vector<8x8xf32>, vector<8x32xf32>, vector<8x32xf32> -> vector<8x32xf32>
    %387 = arith.addf %365, %386 : vector<8x32xf32>
    %388 = vector.extract_strided_slice %313 {offsets = [0, 24], sizes = [8, 8], strides = [1, 1]} : vector<16x32xf32> to vector<8x8xf32>
    %389 = vector.extract_strided_slice %314 {offsets = [0, 24], sizes = [8, 8], strides = [1, 1]} : vector<16x32xf32> to vector<8x8xf32>
    %390 = vector.extract_strided_slice %315 {offsets = [0, 24], sizes = [8, 8], strides = [1, 1]} : vector<16x32xf32> to vector<8x8xf32>
    "tpu.trace_start"() <{level = 10 : i32, message = "qd,kd->qk"}> : () -> ()
    %cst_139 = arith.constant dense<0.000000e+00> : vector<8x8xf32>
    %391 = tpu.matmul %388, %389, %cst_139 {dimension_numbers = #tpu.dot_dimension_numbers<[1], [1], [0], [0], [0, 0, 1, 0], [], []>} : vector<8x8xf32>, vector<8x8xf32>, vector<8x8xf32> -> vector<8x8xf32>
    "tpu.trace_stop"() : () -> ()
    %cst_140 = arith.constant 0.353553385 : f32
    %392 = vector.broadcast %cst_140 : f32 to vector<8x8xf32>
    %393 = arith.mulf %391, %392 : vector<8x8xf32>
    %394 = vector.broadcast %320 : vector<1x8xf32> to vector<8x8xf32>
    %395 = arith.addf %393, %394 : vector<8x8xf32>
    %cst_141 = arith.constant dense<0xFF800000> : vector<8xf32>
    %396 = vector.multi_reduction <maximumf>, %395, %cst_141 [1] : vector<8x8xf32> to vector<8xf32>
    %397 = vector.shape_cast %396 : vector<8xf32> to vector<8x1xf32>
    %398 = vector.broadcast %397 : vector<8x1xf32> to vector<8x8xf32>
    %399 = arith.subf %395, %398 : vector<8x8xf32>
    %400 = math.exp %399 : vector<8x8xf32>
    %cst_142 = arith.constant dense<0.000000e+00> : vector<8xf32>
    %401 = vector.multi_reduction <add>, %400, %cst_142 [1] : vector<8x8xf32> to vector<8xf32>
    %402 = vector.shape_cast %401 : vector<8xf32> to vector<8x1xf32>
    %403 = tpu.reciprocal %402 {approx = true} : vector<8x1xf32> -> vector<8x1xf32>
    %404 = vector.broadcast %403 : vector<8x1xf32> to vector<8x8xf32>
    %405 = arith.mulf %400, %404 : vector<8x8xf32>
    %cst_143 = arith.constant dense<0.000000e+00> : vector<8x8xf32>
    %406 = tpu.matmul %405, %390, %cst_143 {dimension_numbers = #tpu.dot_dimension_numbers<[1], [0], [0], [1], [0, 0, 1, 1], [], []>} : vector<8x8xf32>, vector<8x8xf32>, vector<8x8xf32> -> vector<8x8xf32>
    %407 = vector.extract_strided_slice %317 {offsets = [24, 0], sizes = [8, 32], strides = [1, 1]} : vector<32x32xf32> to vector<8x32xf32>
    %cst_144 = arith.constant dense<0.000000e+00> : vector<8x32xf32>
    %408 = tpu.matmul %406, %407, %cst_144 {dimension_numbers = #tpu.dot_dimension_numbers<[1], [0], [0], [1], [0, 0, 1, 1], [], []>} : vector<8x8xf32>, vector<8x32xf32>, vector<8x32xf32> -> vector<8x32xf32>
    %409 = arith.addf %387, %408 : vector<8x32xf32>
    %410 = vector.extract_strided_slice %0 {offsets = [1, 0], sizes = [1, 8], strides = [1, 1]} : vector<2x8xf32> to vector<1x8xf32>
    %cst_145 = arith.constant 0.000000e+00 : f32
    %411 = vector.broadcast %cst_145 : f32 to vector<8x32xf32>
    %412 = vector.extract_strided_slice %313 {offsets = [8, 0], sizes = [8, 8], strides = [1, 1]} : vector<16x32xf32> to vector<8x8xf32>
    %413 = vector.extract_strided_slice %314 {offsets = [8, 0], sizes = [8, 8], strides = [1, 1]} : vector<16x32xf32> to vector<8x8xf32>
    %414 = vector.extract_strided_slice %315 {offsets = [8, 0], sizes = [8, 8], strides = [1, 1]} : vector<16x32xf32> to vector<8x8xf32>
    "tpu.trace_start"() <{level = 10 : i32, message = "qd,kd->qk"}> : () -> ()
    %cst_146 = arith.constant dense<0.000000e+00> : vector<8x8xf32>
    %415 = tpu.matmul %412, %413, %cst_146 {dimension_numbers = #tpu.dot_dimension_numbers<[1], [1], [0], [0], [0, 0, 1, 0], [], []>} : vector<8x8xf32>, vector<8x8xf32>, vector<8x8xf32> -> vector<8x8xf32>
    "tpu.trace_stop"() : () -> ()
    %cst_147 = arith.constant 0.353553385 : f32
    %416 = vector.broadcast %cst_147 : f32 to vector<8x8xf32>
    %417 = arith.mulf %415, %416 : vector<8x8xf32>
    %418 = vector.broadcast %410 : vector<1x8xf32> to vector<8x8xf32>
    %419 = arith.addf %417, %418 : vector<8x8xf32>
    %cst_148 = arith.constant dense<0xFF800000> : vector<8xf32>
    %420 = vector.multi_reduction <maximumf>, %419, %cst_148 [1] : vector<8x8xf32> to vector<8xf32>
    %421 = vector.shape_cast %420 : vector<8xf32> to vector<8x1xf32>
    %422 = vector.broadcast %421 : vector<8x1xf32> to vector<8x8xf32>
    %423 = arith.subf %419, %422 : vector<8x8xf32>
    %424 = math.exp %423 : vector<8x8xf32>
    %cst_149 = arith.constant dense<0.000000e+00> : vector<8xf32>
    %425 = vector.multi_reduction <add>, %424, %cst_149 [1] : vector<8x8xf32> to vector<8xf32>
    %426 = vector.shape_cast %425 : vector<8xf32> to vector<8x1xf32>
    %427 = tpu.reciprocal %426 {approx = true} : vector<8x1xf32> -> vector<8x1xf32>
    %428 = vector.broadcast %427 : vector<8x1xf32> to vector<8x8xf32>
    %429 = arith.mulf %424, %428 : vector<8x8xf32>
    %cst_150 = arith.constant dense<0.000000e+00> : vector<8x8xf32>
    %430 = tpu.matmul %429, %414, %cst_150 {dimension_numbers = #tpu.dot_dimension_numbers<[1], [0], [0], [1], [0, 0, 1, 1], [], []>} : vector<8x8xf32>, vector<8x8xf32>, vector<8x8xf32> -> vector<8x8xf32>
    %431 = vector.extract_strided_slice %317 {offsets = [0, 0], sizes = [8, 32], strides = [1, 1]} : vector<32x32xf32> to vector<8x32xf32>
    %cst_151 = arith.constant dense<0.000000e+00> : vector<8x32xf32>
    %432 = tpu.matmul %430, %431, %cst_151 {dimension_numbers = #tpu.dot_dimension_numbers<[1], [0], [0], [1], [0, 0, 1, 1], [], []>} : vector<8x8xf32>, vector<8x32xf32>, vector<8x32xf32> -> vector<8x32xf32>
    %433 = arith.addf %411, %432 : vector<8x32xf32>
    %434 = vector.extract_strided_slice %313 {offsets = [8, 8], sizes = [8, 8], strides = [1, 1]} : vector<16x32xf32> to vector<8x8xf32>
    %435 = vector.extract_strided_slice %314 {offsets = [8, 8], sizes = [8, 8], strides = [1, 1]} : vector<16x32xf32> to vector<8x8xf32>
    %436 = vector.extract_strided_slice %315 {offsets = [8, 8], sizes = [8, 8], strides = [1, 1]} : vector<16x32xf32> to vector<8x8xf32>
    "tpu.trace_start"() <{level = 10 : i32, message = "qd,kd->qk"}> : () -> ()
    %cst_152 = arith.constant dense<0.000000e+00> : vector<8x8xf32>
    %437 = tpu.matmul %434, %435, %cst_152 {dimension_numbers = #tpu.dot_dimension_numbers<[1], [1], [0], [0], [0, 0, 1, 0], [], []>} : vector<8x8xf32>, vector<8x8xf32>, vector<8x8xf32> -> vector<8x8xf32>
    "tpu.trace_stop"() : () -> ()
    %cst_153 = arith.constant 0.353553385 : f32
    %438 = vector.broadcast %cst_153 : f32 to vector<8x8xf32>
    %439 = arith.mulf %437, %438 : vector<8x8xf32>
    %440 = vector.broadcast %410 : vector<1x8xf32> to vector<8x8xf32>
    %441 = arith.addf %439, %440 : vector<8x8xf32>
    %cst_154 = arith.constant dense<0xFF800000> : vector<8xf32>
    %442 = vector.multi_reduction <maximumf>, %441, %cst_154 [1] : vector<8x8xf32> to vector<8xf32>
    %443 = vector.shape_cast %442 : vector<8xf32> to vector<8x1xf32>
    %444 = vector.broadcast %443 : vector<8x1xf32> to vector<8x8xf32>
    %445 = arith.subf %441, %444 : vector<8x8xf32>
    %446 = math.exp %445 : vector<8x8xf32>
    %cst_155 = arith.constant dense<0.000000e+00> : vector<8xf32>
    %447 = vector.multi_reduction <add>, %446, %cst_155 [1] : vector<8x8xf32> to vector<8xf32>
    %448 = vector.shape_cast %447 : vector<8xf32> to vector<8x1xf32>
    %449 = tpu.reciprocal %448 {approx = true} : vector<8x1xf32> -> vector<8x1xf32>
    %450 = vector.broadcast %449 : vector<8x1xf32> to vector<8x8xf32>
    %451 = arith.mulf %446, %450 : vector<8x8xf32>
    %cst_156 = arith.constant dense<0.000000e+00> : vector<8x8xf32>
    %452 = tpu.matmul %451, %436, %cst_156 {dimension_numbers = #tpu.dot_dimension_numbers<[1], [0], [0], [1], [0, 0, 1, 1], [], []>} : vector<8x8xf32>, vector<8x8xf32>, vector<8x8xf32> -> vector<8x8xf32>
    %453 = vector.extract_strided_slice %317 {offsets = [8, 0], sizes = [8, 32], strides = [1, 1]} : vector<32x32xf32> to vector<8x32xf32>
    %cst_157 = arith.constant dense<0.000000e+00> : vector<8x32xf32>
    %454 = tpu.matmul %452, %453, %cst_157 {dimension_numbers = #tpu.dot_dimension_numbers<[1], [0], [0], [1], [0, 0, 1, 1], [], []>} : vector<8x8xf32>, vector<8x32xf32>, vector<8x32xf32> -> vector<8x32xf32>
    %455 = arith.addf %433, %454 : vector<8x32xf32>
    %456 = vector.extract_strided_slice %313 {offsets = [8, 16], sizes = [8, 8], strides = [1, 1]} : vector<16x32xf32> to vector<8x8xf32>
    %457 = vector.extract_strided_slice %314 {offsets = [8, 16], sizes = [8, 8], strides = [1, 1]} : vector<16x32xf32> to vector<8x8xf32>
    %458 = vector.extract_strided_slice %315 {offsets = [8, 16], sizes = [8, 8], strides = [1, 1]} : vector<16x32xf32> to vector<8x8xf32>
    "tpu.trace_start"() <{level = 10 : i32, message = "qd,kd->qk"}> : () -> ()
    %cst_158 = arith.constant dense<0.000000e+00> : vector<8x8xf32>
    %459 = tpu.matmul %456, %457, %cst_158 {dimension_numbers = #tpu.dot_dimension_numbers<[1], [1], [0], [0], [0, 0, 1, 0], [], []>} : vector<8x8xf32>, vector<8x8xf32>, vector<8x8xf32> -> vector<8x8xf32>
    "tpu.trace_stop"() : () -> ()
    %cst_159 = arith.constant 0.353553385 : f32
    %460 = vector.broadcast %cst_159 : f32 to vector<8x8xf32>
    %461 = arith.mulf %459, %460 : vector<8x8xf32>
    %462 = vector.broadcast %410 : vector<1x8xf32> to vector<8x8xf32>
    %463 = arith.addf %461, %462 : vector<8x8xf32>
    %cst_160 = arith.constant dense<0xFF800000> : vector<8xf32>
    %464 = vector.multi_reduction <maximumf>, %463, %cst_160 [1] : vector<8x8xf32> to vector<8xf32>
    %465 = vector.shape_cast %464 : vector<8xf32> to vector<8x1xf32>
    %466 = vector.broadcast %465 : vector<8x1xf32> to vector<8x8xf32>
    %467 = arith.subf %463, %466 : vector<8x8xf32>
    %468 = math.exp %467 : vector<8x8xf32>
    %cst_161 = arith.constant dense<0.000000e+00> : vector<8xf32>
    %469 = vector.multi_reduction <add>, %468, %cst_161 [1] : vector<8x8xf32> to vector<8xf32>
    %470 = vector.shape_cast %469 : vector<8xf32> to vector<8x1xf32>
    %471 = tpu.reciprocal %470 {approx = true} : vector<8x1xf32> -> vector<8x1xf32>
    %472 = vector.broadcast %471 : vector<8x1xf32> to vector<8x8xf32>
    %473 = arith.mulf %468, %472 : vector<8x8xf32>
    %cst_162 = arith.constant dense<0.000000e+00> : vector<8x8xf32>
    %474 = tpu.matmul %473, %458, %cst_162 {dimension_numbers = #tpu.dot_dimension_numbers<[1], [0], [0], [1], [0, 0, 1, 1], [], []>} : vector<8x8xf32>, vector<8x8xf32>, vector<8x8xf32> -> vector<8x8xf32>
    %475 = vector.extract_strided_slice %317 {offsets = [16, 0], sizes = [8, 32], strides = [1, 1]} : vector<32x32xf32> to vector<8x32xf32>
    %cst_163 = arith.constant dense<0.000000e+00> : vector<8x32xf32>
    %476 = tpu.matmul %474, %475, %cst_163 {dimension_numbers = #tpu.dot_dimension_numbers<[1], [0], [0], [1], [0, 0, 1, 1], [], []>} : vector<8x8xf32>, vector<8x32xf32>, vector<8x32xf32> -> vector<8x32xf32>
    %477 = arith.addf %455, %476 : vector<8x32xf32>
    %478 = vector.extract_strided_slice %313 {offsets = [8, 24], sizes = [8, 8], strides = [1, 1]} : vector<16x32xf32> to vector<8x8xf32>
    %479 = vector.extract_strided_slice %314 {offsets = [8, 24], sizes = [8, 8], strides = [1, 1]} : vector<16x32xf32> to vector<8x8xf32>
    %480 = vector.extract_strided_slice %315 {offsets = [8, 24], sizes = [8, 8], strides = [1, 1]} : vector<16x32xf32> to vector<8x8xf32>
    "tpu.trace_start"() <{level = 10 : i32, message = "qd,kd->qk"}> : () -> ()
    %cst_164 = arith.constant dense<0.000000e+00> : vector<8x8xf32>
    %481 = tpu.matmul %478, %479, %cst_164 {dimension_numbers = #tpu.dot_dimension_numbers<[1], [1], [0], [0], [0, 0, 1, 0], [], []>} : vector<8x8xf32>, vector<8x8xf32>, vector<8x8xf32> -> vector<8x8xf32>
    "tpu.trace_stop"() : () -> ()
    %cst_165 = arith.constant 0.353553385 : f32
    %482 = vector.broadcast %cst_165 : f32 to vector<8x8xf32>
    %483 = arith.mulf %481, %482 : vector<8x8xf32>
    %484 = vector.broadcast %410 : vector<1x8xf32> to vector<8x8xf32>
    %485 = arith.addf %483, %484 : vector<8x8xf32>
    %cst_166 = arith.constant dense<0xFF800000> : vector<8xf32>
    %486 = vector.multi_reduction <maximumf>, %485, %cst_166 [1] : vector<8x8xf32> to vector<8xf32>
    %487 = vector.shape_cast %486 : vector<8xf32> to vector<8x1xf32>
    %488 = vector.broadcast %487 : vector<8x1xf32> to vector<8x8xf32>
    %489 = arith.subf %485, %488 : vector<8x8xf32>
    %490 = math.exp %489 : vector<8x8xf32>
    %cst_167 = arith.constant dense<0.000000e+00> : vector<8xf32>
    %491 = vector.multi_reduction <add>, %490, %cst_167 [1] : vector<8x8xf32> to vector<8xf32>
    %492 = vector.shape_cast %491 : vector<8xf32> to vector<8x1xf32>
    %493 = tpu.reciprocal %492 {approx = true} : vector<8x1xf32> -> vector<8x1xf32>
    %494 = vector.broadcast %493 : vector<8x1xf32> to vector<8x8xf32>
    %495 = arith.mulf %490, %494 : vector<8x8xf32>
    %cst_168 = arith.constant dense<0.000000e+00> : vector<8x8xf32>
    %496 = tpu.matmul %495, %480, %cst_168 {dimension_numbers = #tpu.dot_dimension_numbers<[1], [0], [0], [1], [0, 0, 1, 1], [], []>} : vector<8x8xf32>, vector<8x8xf32>, vector<8x8xf32> -> vector<8x8xf32>
    %497 = vector.extract_strided_slice %317 {offsets = [24, 0], sizes = [8, 32], strides = [1, 1]} : vector<32x32xf32> to vector<8x32xf32>
    %cst_169 = arith.constant dense<0.000000e+00> : vector<8x32xf32>
    %498 = tpu.matmul %496, %497, %cst_169 {dimension_numbers = #tpu.dot_dimension_numbers<[1], [0], [0], [1], [0, 0, 1, 1], [], []>} : vector<8x8xf32>, vector<8x32xf32>, vector<8x32xf32> -> vector<8x32xf32>
    %499 = arith.addf %477, %498 : vector<8x32xf32>
    %500 = tpu.concatenate %409, %499 in 0 : vector<8x32xf32>, vector<8x32xf32> -> vector<16x32xf32>
    %501 = vector.broadcast %319 : vector<1x32xf32> to vector<16x32xf32>
    %502 = arith.addf %500, %501 : vector<16x32xf32>
    %503 = arith.addf %305, %502 : vector<16x32xf32>
    %c1_170 = arith.constant 1 : index
    %c0_171 = arith.constant 0 : index
    %c0_172 = arith.constant 0 : index
    %504 = vector.load %arg11[%c1_170, %c0_171, %c0_172] : memref<2x2x32xf32, #tpu.memory_space<vmem>>, vector<1x2x32xf32>
    %505 = vector.shape_cast %504 : vector<1x2x32xf32> to vector<2x32xf32>
    %506 = vector.extract_strided_slice %505 {offsets = [0, 0], sizes = [1, 32], strides = [1, 1]} : vector<2x32xf32> to vector<1x32xf32>
    %507 = vector.extract_strided_slice %505 {offsets = [1, 0], sizes = [1, 32], strides = [1, 1]} : vector<2x32xf32> to vector<1x32xf32>
    %cst_173 = arith.constant dense<0.000000e+00> : vector<16xf32>
    %508 = vector.multi_reduction <add>, %503, %cst_173 [1] : vector<16x32xf32> to vector<16xf32>
    %509 = vector.shape_cast %508 : vector<16xf32> to vector<16x1xf32>
    %cst_174 = arith.constant 3.200000e+01 : f32
    %510 = vector.broadcast %cst_174 : f32 to vector<16x1xf32>
    %511 = arith.divf %509, %510 : vector<16x1xf32>
    %512 = vector.broadcast %511 : vector<16x1xf32> to vector<16x32xf32>
    %513 = arith.subf %503, %512 : vector<16x32xf32>
    %514 = arith.mulf %513, %513 : vector<16x32xf32>
    %cst_175 = arith.constant dense<0.000000e+00> : vector<16xf32>
    %515 = vector.multi_reduction <add>, %514, %cst_175 [1] : vector<16x32xf32> to vector<16xf32>
    %516 = vector.shape_cast %515 : vector<16xf32> to vector<16x1xf32>
    %cst_176 = arith.constant 3.200000e+01 : f32
    %517 = vector.broadcast %cst_176 : f32 to vector<16x1xf32>
    %518 = arith.divf %516, %517 : vector<16x1xf32>
    %519 = vector.broadcast %511 : vector<16x1xf32> to vector<16x32xf32>
    %520 = arith.subf %503, %519 : vector<16x32xf32>
    %cst_177 = arith.constant 9.99999974E-6 : f32
    %521 = vector.broadcast %cst_177 : f32 to vector<16x1xf32>
    %522 = arith.addf %518, %521 : vector<16x1xf32>
    %523 = math.rsqrt %522 : vector<16x1xf32>
    %524 = vector.broadcast %523 : vector<16x1xf32> to vector<16x32xf32>
    %525 = arith.mulf %520, %524 : vector<16x32xf32>
    %526 = vector.broadcast %506 : vector<1x32xf32> to vector<16x32xf32>
    %527 = arith.mulf %525, %526 : vector<16x32xf32>
    %528 = vector.broadcast %507 : vector<1x32xf32> to vector<16x32xf32>
    %529 = arith.addf %527, %528 : vector<16x32xf32>
    %c1_178 = arith.constant 1 : index
    %c0_179 = arith.constant 0 : index
    %c0_180 = arith.constant 0 : index
    %530 = vector.load %arg12[%c1_178, %c0_179, %c0_180] : memref<2x32x64xf32, #tpu.memory_space<vmem>>, vector<1x32x64xf32>
    %531 = vector.shape_cast %530 : vector<1x32x64xf32> to vector<32x64xf32>
    %c1_181 = arith.constant 1 : index
    %c0_182 = arith.constant 0 : index
    %c0_183 = arith.constant 0 : index
    %532 = vector.load %arg13[%c1_181, %c0_182, %c0_183] : memref<2x1x64xf32, #tpu.memory_space<vmem>>, vector<1x1x64xf32>
    %533 = vector.shape_cast %532 : vector<1x1x64xf32> to vector<1x64xf32>
    %c1_184 = arith.constant 1 : index
    %c0_185 = arith.constant 0 : index
    %c0_186 = arith.constant 0 : index
    %534 = vector.load %arg14[%c1_184, %c0_185, %c0_186] : memref<2x64x32xf32, #tpu.memory_space<vmem>>, vector<1x64x32xf32>
    %535 = vector.shape_cast %534 : vector<1x64x32xf32> to vector<64x32xf32>
    %c1_187 = arith.constant 1 : index
    %c0_188 = arith.constant 0 : index
    %c0_189 = arith.constant 0 : index
    %536 = vector.load %arg15[%c1_187, %c0_188, %c0_189] : memref<2x1x32xf32, #tpu.memory_space<vmem>>, vector<1x1x32xf32>
    %537 = vector.shape_cast %536 : vector<1x1x32xf32> to vector<1x32xf32>
    %cst_190 = arith.constant dense<0.000000e+00> : vector<16x64xf32>
    %538 = tpu.matmul %529, %531, %cst_190 {dimension_numbers = #tpu.dot_dimension_numbers<[1], [0], [0], [1], [0, 0, 1, 1], [], []>} : vector<16x32xf32>, vector<32x64xf32>, vector<16x64xf32> -> vector<16x64xf32>
    %539 = vector.broadcast %533 : vector<1x64xf32> to vector<16x64xf32>
    %540 = arith.addf %538, %539 : vector<16x64xf32>
    %541 = arith.mulf %540, %540 : vector<16x64xf32>
    %542 = arith.mulf %540, %541 : vector<16x64xf32>
    %cst_191 = arith.constant 4.471500e-02 : f32
    %543 = vector.broadcast %cst_191 : f32 to vector<16x64xf32>
    %544 = arith.mulf %543, %542 : vector<16x64xf32>
    %545 = arith.addf %540, %544 : vector<16x64xf32>
    %cst_192 = arith.constant 0.797884583 : f32
    %546 = vector.broadcast %cst_192 : f32 to vector<16x64xf32>
    %547 = arith.mulf %546, %545 : vector<16x64xf32>
    %548 = math.tanh %547 : vector<16x64xf32>
    %cst_193 = arith.constant 1.000000e+00 : f32
    %549 = vector.broadcast %cst_193 : f32 to vector<16x64xf32>
    %550 = arith.addf %549, %548 : vector<16x64xf32>
    %cst_194 = arith.constant 5.000000e-01 : f32
    %551 = vector.broadcast %cst_194 : f32 to vector<16x64xf32>
    %552 = arith.mulf %551, %550 : vector<16x64xf32>
    %553 = arith.mulf %540, %552 : vector<16x64xf32>
    %cst_195 = arith.constant dense<0.000000e+00> : vector<16x32xf32>
    %554 = tpu.matmul %553, %535, %cst_195 {dimension_numbers = #tpu.dot_dimension_numbers<[1], [0], [0], [1], [0, 0, 1, 1], [], []>} : vector<16x64xf32>, vector<64x32xf32>, vector<16x32xf32> -> vector<16x32xf32>
    %555 = vector.broadcast %537 : vector<1x32xf32> to vector<16x32xf32>
    %556 = arith.addf %554, %555 : vector<16x32xf32>
    %557 = arith.addf %529, %556 : vector<16x32xf32>
    %c1_196 = arith.constant 1 : index
    %c0_197 = arith.constant 0 : index
    %c0_198 = arith.constant 0 : index
    %558 = vector.load %arg16[%c1_196, %c0_197, %c0_198] : memref<2x2x32xf32, #tpu.memory_space<vmem>>, vector<1x2x32xf32>
    %559 = vector.shape_cast %558 : vector<1x2x32xf32> to vector<2x32xf32>
    %560 = vector.extract_strided_slice %559 {offsets = [0, 0], sizes = [1, 32], strides = [1, 1]} : vector<2x32xf32> to vector<1x32xf32>
    %561 = vector.extract_strided_slice %559 {offsets = [1, 0], sizes = [1, 32], strides = [1, 1]} : vector<2x32xf32> to vector<1x32xf32>
    %cst_199 = arith.constant dense<0.000000e+00> : vector<16xf32>
    %562 = vector.multi_reduction <add>, %557, %cst_199 [1] : vector<16x32xf32> to vector<16xf32>
    %563 = vector.shape_cast %562 : vector<16xf32> to vector<16x1xf32>
    %cst_200 = arith.constant 3.200000e+01 : f32
    %564 = vector.broadcast %cst_200 : f32 to vector<16x1xf32>
    %565 = arith.divf %563, %564 : vector<16x1xf32>
    %566 = vector.broadcast %565 : vector<16x1xf32> to vector<16x32xf32>
    %567 = arith.subf %557, %566 : vector<16x32xf32>
    %568 = arith.mulf %567, %567 : vector<16x32xf32>
    %cst_201 = arith.constant dense<0.000000e+00> : vector<16xf32>
    %569 = vector.multi_reduction <add>, %568, %cst_201 [1] : vector<16x32xf32> to vector<16xf32>
    %570 = vector.shape_cast %569 : vector<16xf32> to vector<16x1xf32>
    %cst_202 = arith.constant 3.200000e+01 : f32
    %571 = vector.broadcast %cst_202 : f32 to vector<16x1xf32>
    %572 = arith.divf %570, %571 : vector<16x1xf32>
    %573 = vector.broadcast %565 : vector<16x1xf32> to vector<16x32xf32>
    %574 = arith.subf %557, %573 : vector<16x32xf32>
    %cst_203 = arith.constant 9.99999974E-6 : f32
    %575 = vector.broadcast %cst_203 : f32 to vector<16x1xf32>
    %576 = arith.addf %572, %575 : vector<16x1xf32>
    %577 = math.rsqrt %576 : vector<16x1xf32>
    %578 = vector.broadcast %577 : vector<16x1xf32> to vector<16x32xf32>
    %579 = arith.mulf %574, %578 : vector<16x32xf32>
    %580 = vector.broadcast %560 : vector<1x32xf32> to vector<16x32xf32>
    %581 = arith.mulf %579, %580 : vector<16x32xf32>
    %582 = vector.broadcast %561 : vector<1x32xf32> to vector<16x32xf32>
    %583 = arith.addf %581, %582 : vector<16x32xf32>
    %c0_204 = arith.constant 0 : index
    %c0_205 = arith.constant 0 : index
    %584 = vector.load %arg1[%c0_204, %c0_205] : memref<16x32xf32, #tpu.memory_space<vmem>>, vector<16x32xf32>
    %c0_206 = arith.constant 0 : index
    %c0_207 = arith.constant 0 : index
    %585 = vector.load %arg6[%c0_206, %c0_207] : memref<2x32xf32, #tpu.memory_space<vmem>>, vector<2x32xf32>
    %586 = vector.extract_strided_slice %585 {offsets = [0, 0], sizes = [1, 32], strides = [1, 1]} : vector<2x32xf32> to vector<1x32xf32>
    %587 = vector.extract_strided_slice %585 {offsets = [1, 0], sizes = [1, 32], strides = [1, 1]} : vector<2x32xf32> to vector<1x32xf32>
    %cst_208 = arith.constant dense<0.000000e+00> : vector<16xf32>
    %588 = vector.multi_reduction <add>, %584, %cst_208 [1] : vector<16x32xf32> to vector<16xf32>
    %589 = vector.shape_cast %588 : vector<16xf32> to vector<16x1xf32>
    %cst_209 = arith.constant 3.200000e+01 : f32
    %590 = vector.broadcast %cst_209 : f32 to vector<16x1xf32>
    %591 = arith.divf %589, %590 : vector<16x1xf32>
    %592 = vector.broadcast %591 : vector<16x1xf32> to vector<16x32xf32>
    %593 = arith.subf %584, %592 : vector<16x32xf32>
    %594 = arith.mulf %593, %593 : vector<16x32xf32>
    %cst_210 = arith.constant dense<0.000000e+00> : vector<16xf32>
    %595 = vector.multi_reduction <add>, %594, %cst_210 [1] : vector<16x32xf32> to vector<16xf32>
    %596 = vector.shape_cast %595 : vector<16xf32> to vector<16x1xf32>
    %cst_211 = arith.constant 3.200000e+01 : f32
    %597 = vector.broadcast %cst_211 : f32 to vector<16x1xf32>
    %598 = arith.divf %596, %597 : vector<16x1xf32>
    %599 = vector.broadcast %591 : vector<16x1xf32> to vector<16x32xf32>
    %600 = arith.subf %584, %599 : vector<16x32xf32>
    %cst_212 = arith.constant 9.99999974E-6 : f32
    %601 = vector.broadcast %cst_212 : f32 to vector<16x1xf32>
    %602 = arith.addf %598, %601 : vector<16x1xf32>
    %603 = math.rsqrt %602 : vector<16x1xf32>
    %604 = vector.broadcast %603 : vector<16x1xf32> to vector<16x32xf32>
    %605 = arith.mulf %600, %604 : vector<16x32xf32>
    %606 = vector.broadcast %586 : vector<1x32xf32> to vector<16x32xf32>
    %607 = arith.mulf %605, %606 : vector<16x32xf32>
    %608 = vector.broadcast %587 : vector<1x32xf32> to vector<16x32xf32>
    %609 = arith.addf %607, %608 : vector<16x32xf32>
    %c0_213 = arith.constant 0 : index
    %c0_214 = arith.constant 0 : index
    %c0_215 = arith.constant 0 : index
    %610 = vector.load %arg17[%c0_213, %c0_214, %c0_215] : memref<2x32x96xf32, #tpu.memory_space<vmem>>, vector<1x32x96xf32>
    %611 = vector.shape_cast %610 : vector<1x32x96xf32> to vector<32x96xf32>
    %cst_216 = arith.constant dense<0.000000e+00> : vector<16x96xf32>
    %612 = tpu.matmul %609, %611, %cst_216 {dimension_numbers = #tpu.dot_dimension_numbers<[1], [0], [0], [1], [0, 0, 1, 1], [], []>} : vector<16x32xf32>, vector<32x96xf32>, vector<16x96xf32> -> vector<16x96xf32>
    %c0_217 = arith.constant 0 : index
    %c0_218 = arith.constant 0 : index
    %c0_219 = arith.constant 0 : index
    %613 = vector.load %arg18[%c0_217, %c0_218, %c0_219] : memref<2x1x96xf32, #tpu.memory_space<vmem>>, vector<1x1x96xf32>
    %614 = vector.shape_cast %613 : vector<1x1x96xf32> to vector<1x96xf32>
    %615 = vector.broadcast %614 : vector<1x96xf32> to vector<16x96xf32>
    %616 = arith.addf %612, %615 : vector<16x96xf32>
    %617 = vector.extract_strided_slice %616 {offsets = [0, 0], sizes = [16, 32], strides = [1, 1]} : vector<16x96xf32> to vector<16x32xf32>
    %618 = vector.extract_strided_slice %616 {offsets = [0, 32], sizes = [16, 32], strides = [1, 1]} : vector<16x96xf32> to vector<16x32xf32>
    %619 = vector.extract_strided_slice %616 {offsets = [0, 64], sizes = [16, 32], strides = [1, 1]} : vector<16x96xf32> to vector<16x32xf32>
    %c0_220 = arith.constant 0 : index
    %c0_221 = arith.constant 0 : index
    %c0_222 = arith.constant 0 : index
    %620 = vector.load %arg19[%c0_220, %c0_221, %c0_222] : memref<2x32x32xf32, #tpu.memory_space<vmem>>, vector<1x32x32xf32>
    %621 = vector.shape_cast %620 : vector<1x32x32xf32> to vector<32x32xf32>
    %c0_223 = arith.constant 0 : index
    %c0_224 = arith.constant 0 : index
    %c0_225 = arith.constant 0 : index
    %622 = vector.load %arg20[%c0_223, %c0_224, %c0_225] : memref<2x1x32xf32, #tpu.memory_space<vmem>>, vector<1x1x32xf32>
    %623 = vector.shape_cast %622 : vector<1x1x32xf32> to vector<1x32xf32>
    %624 = vector.extract_strided_slice %1 {offsets = [0, 0], sizes = [8, 8], strides = [1, 1]} : vector<16x8xf32> to vector<8x8xf32>
    %cst_226 = arith.constant 0.000000e+00 : f32
    %625 = vector.broadcast %cst_226 : f32 to vector<8x32xf32>
    %626 = vector.extract_strided_slice %617 {offsets = [0, 0], sizes = [8, 8], strides = [1, 1]} : vector<16x32xf32> to vector<8x8xf32>
    %627 = vector.extract_strided_slice %618 {offsets = [0, 0], sizes = [8, 8], strides = [1, 1]} : vector<16x32xf32> to vector<8x8xf32>
    %628 = vector.extract_strided_slice %619 {offsets = [0, 0], sizes = [8, 8], strides = [1, 1]} : vector<16x32xf32> to vector<8x8xf32>
    "tpu.trace_start"() <{level = 10 : i32, message = "qd,kd->qk"}> : () -> ()
    %cst_227 = arith.constant dense<0.000000e+00> : vector<8x8xf32>
    %629 = tpu.matmul %626, %627, %cst_227 {dimension_numbers = #tpu.dot_dimension_numbers<[1], [1], [0], [0], [0, 0, 1, 0], [], []>} : vector<8x8xf32>, vector<8x8xf32>, vector<8x8xf32> -> vector<8x8xf32>
    "tpu.trace_stop"() : () -> ()
    %cst_228 = arith.constant 0.353553385 : f32
    %630 = vector.broadcast %cst_228 : f32 to vector<8x8xf32>
    %631 = arith.mulf %629, %630 : vector<8x8xf32>
    %632 = arith.addf %631, %624 : vector<8x8xf32>
    %cst_229 = arith.constant dense<0xFF800000> : vector<8xf32>
    %633 = vector.multi_reduction <maximumf>, %632, %cst_229 [1] : vector<8x8xf32> to vector<8xf32>
    %634 = vector.shape_cast %633 : vector<8xf32> to vector<8x1xf32>
    %635 = vector.broadcast %634 : vector<8x1xf32> to vector<8x8xf32>
    %636 = arith.subf %632, %635 : vector<8x8xf32>
    %637 = math.exp %636 : vector<8x8xf32>
    %cst_230 = arith.constant dense<0.000000e+00> : vector<8xf32>
    %638 = vector.multi_reduction <add>, %637, %cst_230 [1] : vector<8x8xf32> to vector<8xf32>
    %639 = vector.shape_cast %638 : vector<8xf32> to vector<8x1xf32>
    %640 = tpu.reciprocal %639 {approx = true} : vector<8x1xf32> -> vector<8x1xf32>
    %641 = vector.broadcast %640 : vector<8x1xf32> to vector<8x8xf32>
    %642 = arith.mulf %637, %641 : vector<8x8xf32>
    %cst_231 = arith.constant dense<0.000000e+00> : vector<8x8xf32>
    %643 = tpu.matmul %642, %628, %cst_231 {dimension_numbers = #tpu.dot_dimension_numbers<[1], [0], [0], [1], [0, 0, 1, 1], [], []>} : vector<8x8xf32>, vector<8x8xf32>, vector<8x8xf32> -> vector<8x8xf32>
    %644 = vector.extract_strided_slice %621 {offsets = [0, 0], sizes = [8, 32], strides = [1, 1]} : vector<32x32xf32> to vector<8x32xf32>
    %cst_232 = arith.constant dense<0.000000e+00> : vector<8x32xf32>
    %645 = tpu.matmul %643, %644, %cst_232 {dimension_numbers = #tpu.dot_dimension_numbers<[1], [0], [0], [1], [0, 0, 1, 1], [], []>} : vector<8x8xf32>, vector<8x32xf32>, vector<8x32xf32> -> vector<8x32xf32>
    %646 = arith.addf %625, %645 : vector<8x32xf32>
    %647 = vector.extract_strided_slice %617 {offsets = [0, 8], sizes = [8, 8], strides = [1, 1]} : vector<16x32xf32> to vector<8x8xf32>
    %648 = vector.extract_strided_slice %618 {offsets = [0, 8], sizes = [8, 8], strides = [1, 1]} : vector<16x32xf32> to vector<8x8xf32>
    %649 = vector.extract_strided_slice %619 {offsets = [0, 8], sizes = [8, 8], strides = [1, 1]} : vector<16x32xf32> to vector<8x8xf32>
    "tpu.trace_start"() <{level = 10 : i32, message = "qd,kd->qk"}> : () -> ()
    %cst_233 = arith.constant dense<0.000000e+00> : vector<8x8xf32>
    %650 = tpu.matmul %647, %648, %cst_233 {dimension_numbers = #tpu.dot_dimension_numbers<[1], [1], [0], [0], [0, 0, 1, 0], [], []>} : vector<8x8xf32>, vector<8x8xf32>, vector<8x8xf32> -> vector<8x8xf32>
    "tpu.trace_stop"() : () -> ()
    %cst_234 = arith.constant 0.353553385 : f32
    %651 = vector.broadcast %cst_234 : f32 to vector<8x8xf32>
    %652 = arith.mulf %650, %651 : vector<8x8xf32>
    %653 = arith.addf %652, %624 : vector<8x8xf32>
    %cst_235 = arith.constant dense<0xFF800000> : vector<8xf32>
    %654 = vector.multi_reduction <maximumf>, %653, %cst_235 [1] : vector<8x8xf32> to vector<8xf32>
    %655 = vector.shape_cast %654 : vector<8xf32> to vector<8x1xf32>
    %656 = vector.broadcast %655 : vector<8x1xf32> to vector<8x8xf32>
    %657 = arith.subf %653, %656 : vector<8x8xf32>
    %658 = math.exp %657 : vector<8x8xf32>
    %cst_236 = arith.constant dense<0.000000e+00> : vector<8xf32>
    %659 = vector.multi_reduction <add>, %658, %cst_236 [1] : vector<8x8xf32> to vector<8xf32>
    %660 = vector.shape_cast %659 : vector<8xf32> to vector<8x1xf32>
    %661 = tpu.reciprocal %660 {approx = true} : vector<8x1xf32> -> vector<8x1xf32>
    %662 = vector.broadcast %661 : vector<8x1xf32> to vector<8x8xf32>
    %663 = arith.mulf %658, %662 : vector<8x8xf32>
    %cst_237 = arith.constant dense<0.000000e+00> : vector<8x8xf32>
    %664 = tpu.matmul %663, %649, %cst_237 {dimension_numbers = #tpu.dot_dimension_numbers<[1], [0], [0], [1], [0, 0, 1, 1], [], []>} : vector<8x8xf32>, vector<8x8xf32>, vector<8x8xf32> -> vector<8x8xf32>
    %665 = vector.extract_strided_slice %621 {offsets = [8, 0], sizes = [8, 32], strides = [1, 1]} : vector<32x32xf32> to vector<8x32xf32>
    %cst_238 = arith.constant dense<0.000000e+00> : vector<8x32xf32>
    %666 = tpu.matmul %664, %665, %cst_238 {dimension_numbers = #tpu.dot_dimension_numbers<[1], [0], [0], [1], [0, 0, 1, 1], [], []>} : vector<8x8xf32>, vector<8x32xf32>, vector<8x32xf32> -> vector<8x32xf32>
    %667 = arith.addf %646, %666 : vector<8x32xf32>
    %668 = vector.extract_strided_slice %617 {offsets = [0, 16], sizes = [8, 8], strides = [1, 1]} : vector<16x32xf32> to vector<8x8xf32>
    %669 = vector.extract_strided_slice %618 {offsets = [0, 16], sizes = [8, 8], strides = [1, 1]} : vector<16x32xf32> to vector<8x8xf32>
    %670 = vector.extract_strided_slice %619 {offsets = [0, 16], sizes = [8, 8], strides = [1, 1]} : vector<16x32xf32> to vector<8x8xf32>
    "tpu.trace_start"() <{level = 10 : i32, message = "qd,kd->qk"}> : () -> ()
    %cst_239 = arith.constant dense<0.000000e+00> : vector<8x8xf32>
    %671 = tpu.matmul %668, %669, %cst_239 {dimension_numbers = #tpu.dot_dimension_numbers<[1], [1], [0], [0], [0, 0, 1, 0], [], []>} : vector<8x8xf32>, vector<8x8xf32>, vector<8x8xf32> -> vector<8x8xf32>
    "tpu.trace_stop"() : () -> ()
    %cst_240 = arith.constant 0.353553385 : f32
    %672 = vector.broadcast %cst_240 : f32 to vector<8x8xf32>
    %673 = arith.mulf %671, %672 : vector<8x8xf32>
    %674 = arith.addf %673, %624 : vector<8x8xf32>
    %cst_241 = arith.constant dense<0xFF800000> : vector<8xf32>
    %675 = vector.multi_reduction <maximumf>, %674, %cst_241 [1] : vector<8x8xf32> to vector<8xf32>
    %676 = vector.shape_cast %675 : vector<8xf32> to vector<8x1xf32>
    %677 = vector.broadcast %676 : vector<8x1xf32> to vector<8x8xf32>
    %678 = arith.subf %674, %677 : vector<8x8xf32>
    %679 = math.exp %678 : vector<8x8xf32>
    %cst_242 = arith.constant dense<0.000000e+00> : vector<8xf32>
    %680 = vector.multi_reduction <add>, %679, %cst_242 [1] : vector<8x8xf32> to vector<8xf32>
    %681 = vector.shape_cast %680 : vector<8xf32> to vector<8x1xf32>
    %682 = tpu.reciprocal %681 {approx = true} : vector<8x1xf32> -> vector<8x1xf32>
    %683 = vector.broadcast %682 : vector<8x1xf32> to vector<8x8xf32>
    %684 = arith.mulf %679, %683 : vector<8x8xf32>
    %cst_243 = arith.constant dense<0.000000e+00> : vector<8x8xf32>
    %685 = tpu.matmul %684, %670, %cst_243 {dimension_numbers = #tpu.dot_dimension_numbers<[1], [0], [0], [1], [0, 0, 1, 1], [], []>} : vector<8x8xf32>, vector<8x8xf32>, vector<8x8xf32> -> vector<8x8xf32>
    %686 = vector.extract_strided_slice %621 {offsets = [16, 0], sizes = [8, 32], strides = [1, 1]} : vector<32x32xf32> to vector<8x32xf32>
    %cst_244 = arith.constant dense<0.000000e+00> : vector<8x32xf32>
    %687 = tpu.matmul %685, %686, %cst_244 {dimension_numbers = #tpu.dot_dimension_numbers<[1], [0], [0], [1], [0, 0, 1, 1], [], []>} : vector<8x8xf32>, vector<8x32xf32>, vector<8x32xf32> -> vector<8x32xf32>
    %688 = arith.addf %667, %687 : vector<8x32xf32>
    %689 = vector.extract_strided_slice %617 {offsets = [0, 24], sizes = [8, 8], strides = [1, 1]} : vector<16x32xf32> to vector<8x8xf32>
    %690 = vector.extract_strided_slice %618 {offsets = [0, 24], sizes = [8, 8], strides = [1, 1]} : vector<16x32xf32> to vector<8x8xf32>
    %691 = vector.extract_strided_slice %619 {offsets = [0, 24], sizes = [8, 8], strides = [1, 1]} : vector<16x32xf32> to vector<8x8xf32>
    "tpu.trace_start"() <{level = 10 : i32, message = "qd,kd->qk"}> : () -> ()
    %cst_245 = arith.constant dense<0.000000e+00> : vector<8x8xf32>
    %692 = tpu.matmul %689, %690, %cst_245 {dimension_numbers = #tpu.dot_dimension_numbers<[1], [1], [0], [0], [0, 0, 1, 0], [], []>} : vector<8x8xf32>, vector<8x8xf32>, vector<8x8xf32> -> vector<8x8xf32>
    "tpu.trace_stop"() : () -> ()
    %cst_246 = arith.constant 0.353553385 : f32
    %693 = vector.broadcast %cst_246 : f32 to vector<8x8xf32>
    %694 = arith.mulf %692, %693 : vector<8x8xf32>
    %695 = arith.addf %694, %624 : vector<8x8xf32>
    %cst_247 = arith.constant dense<0xFF800000> : vector<8xf32>
    %696 = vector.multi_reduction <maximumf>, %695, %cst_247 [1] : vector<8x8xf32> to vector<8xf32>
    %697 = vector.shape_cast %696 : vector<8xf32> to vector<8x1xf32>
    %698 = vector.broadcast %697 : vector<8x1xf32> to vector<8x8xf32>
    %699 = arith.subf %695, %698 : vector<8x8xf32>
    %700 = math.exp %699 : vector<8x8xf32>
    %cst_248 = arith.constant dense<0.000000e+00> : vector<8xf32>
    %701 = vector.multi_reduction <add>, %700, %cst_248 [1] : vector<8x8xf32> to vector<8xf32>
    %702 = vector.shape_cast %701 : vector<8xf32> to vector<8x1xf32>
    %703 = tpu.reciprocal %702 {approx = true} : vector<8x1xf32> -> vector<8x1xf32>
    %704 = vector.broadcast %703 : vector<8x1xf32> to vector<8x8xf32>
    %705 = arith.mulf %700, %704 : vector<8x8xf32>
    %cst_249 = arith.constant dense<0.000000e+00> : vector<8x8xf32>
    %706 = tpu.matmul %705, %691, %cst_249 {dimension_numbers = #tpu.dot_dimension_numbers<[1], [0], [0], [1], [0, 0, 1, 1], [], []>} : vector<8x8xf32>, vector<8x8xf32>, vector<8x8xf32> -> vector<8x8xf32>
    %707 = vector.extract_strided_slice %621 {offsets = [24, 0], sizes = [8, 32], strides = [1, 1]} : vector<32x32xf32> to vector<8x32xf32>
    %cst_250 = arith.constant dense<0.000000e+00> : vector<8x32xf32>
    %708 = tpu.matmul %706, %707, %cst_250 {dimension_numbers = #tpu.dot_dimension_numbers<[1], [0], [0], [1], [0, 0, 1, 1], [], []>} : vector<8x8xf32>, vector<8x32xf32>, vector<8x32xf32> -> vector<8x32xf32>
    %709 = arith.addf %688, %708 : vector<8x32xf32>
    %710 = vector.extract_strided_slice %1 {offsets = [8, 0], sizes = [8, 8], strides = [1, 1]} : vector<16x8xf32> to vector<8x8xf32>
    %cst_251 = arith.constant 0.000000e+00 : f32
    %711 = vector.broadcast %cst_251 : f32 to vector<8x32xf32>
    %712 = vector.extract_strided_slice %617 {offsets = [8, 0], sizes = [8, 8], strides = [1, 1]} : vector<16x32xf32> to vector<8x8xf32>
    %713 = vector.extract_strided_slice %618 {offsets = [8, 0], sizes = [8, 8], strides = [1, 1]} : vector<16x32xf32> to vector<8x8xf32>
    %714 = vector.extract_strided_slice %619 {offsets = [8, 0], sizes = [8, 8], strides = [1, 1]} : vector<16x32xf32> to vector<8x8xf32>
    "tpu.trace_start"() <{level = 10 : i32, message = "qd,kd->qk"}> : () -> ()
    %cst_252 = arith.constant dense<0.000000e+00> : vector<8x8xf32>
    %715 = tpu.matmul %712, %713, %cst_252 {dimension_numbers = #tpu.dot_dimension_numbers<[1], [1], [0], [0], [0, 0, 1, 0], [], []>} : vector<8x8xf32>, vector<8x8xf32>, vector<8x8xf32> -> vector<8x8xf32>
    "tpu.trace_stop"() : () -> ()
    %cst_253 = arith.constant 0.353553385 : f32
    %716 = vector.broadcast %cst_253 : f32 to vector<8x8xf32>
    %717 = arith.mulf %715, %716 : vector<8x8xf32>
    %718 = arith.addf %717, %710 : vector<8x8xf32>
    %cst_254 = arith.constant dense<0xFF800000> : vector<8xf32>
    %719 = vector.multi_reduction <maximumf>, %718, %cst_254 [1] : vector<8x8xf32> to vector<8xf32>
    %720 = vector.shape_cast %719 : vector<8xf32> to vector<8x1xf32>
    %721 = vector.broadcast %720 : vector<8x1xf32> to vector<8x8xf32>
    %722 = arith.subf %718, %721 : vector<8x8xf32>
    %723 = math.exp %722 : vector<8x8xf32>
    %cst_255 = arith.constant dense<0.000000e+00> : vector<8xf32>
    %724 = vector.multi_reduction <add>, %723, %cst_255 [1] : vector<8x8xf32> to vector<8xf32>
    %725 = vector.shape_cast %724 : vector<8xf32> to vector<8x1xf32>
    %726 = tpu.reciprocal %725 {approx = true} : vector<8x1xf32> -> vector<8x1xf32>
    %727 = vector.broadcast %726 : vector<8x1xf32> to vector<8x8xf32>
    %728 = arith.mulf %723, %727 : vector<8x8xf32>
    %cst_256 = arith.constant dense<0.000000e+00> : vector<8x8xf32>
    %729 = tpu.matmul %728, %714, %cst_256 {dimension_numbers = #tpu.dot_dimension_numbers<[1], [0], [0], [1], [0, 0, 1, 1], [], []>} : vector<8x8xf32>, vector<8x8xf32>, vector<8x8xf32> -> vector<8x8xf32>
    %730 = vector.extract_strided_slice %621 {offsets = [0, 0], sizes = [8, 32], strides = [1, 1]} : vector<32x32xf32> to vector<8x32xf32>
    %cst_257 = arith.constant dense<0.000000e+00> : vector<8x32xf32>
    %731 = tpu.matmul %729, %730, %cst_257 {dimension_numbers = #tpu.dot_dimension_numbers<[1], [0], [0], [1], [0, 0, 1, 1], [], []>} : vector<8x8xf32>, vector<8x32xf32>, vector<8x32xf32> -> vector<8x32xf32>
    %732 = arith.addf %711, %731 : vector<8x32xf32>
    %733 = vector.extract_strided_slice %617 {offsets = [8, 8], sizes = [8, 8], strides = [1, 1]} : vector<16x32xf32> to vector<8x8xf32>
    %734 = vector.extract_strided_slice %618 {offsets = [8, 8], sizes = [8, 8], strides = [1, 1]} : vector<16x32xf32> to vector<8x8xf32>
    %735 = vector.extract_strided_slice %619 {offsets = [8, 8], sizes = [8, 8], strides = [1, 1]} : vector<16x32xf32> to vector<8x8xf32>
    "tpu.trace_start"() <{level = 10 : i32, message = "qd,kd->qk"}> : () -> ()
    %cst_258 = arith.constant dense<0.000000e+00> : vector<8x8xf32>
    %736 = tpu.matmul %733, %734, %cst_258 {dimension_numbers = #tpu.dot_dimension_numbers<[1], [1], [0], [0], [0, 0, 1, 0], [], []>} : vector<8x8xf32>, vector<8x8xf32>, vector<8x8xf32> -> vector<8x8xf32>
    "tpu.trace_stop"() : () -> ()
    %cst_259 = arith.constant 0.353553385 : f32
    %737 = vector.broadcast %cst_259 : f32 to vector<8x8xf32>
    %738 = arith.mulf %736, %737 : vector<8x8xf32>
    %739 = arith.addf %738, %710 : vector<8x8xf32>
    %cst_260 = arith.constant dense<0xFF800000> : vector<8xf32>
    %740 = vector.multi_reduction <maximumf>, %739, %cst_260 [1] : vector<8x8xf32> to vector<8xf32>
    %741 = vector.shape_cast %740 : vector<8xf32> to vector<8x1xf32>
    %742 = vector.broadcast %741 : vector<8x1xf32> to vector<8x8xf32>
    %743 = arith.subf %739, %742 : vector<8x8xf32>
    %744 = math.exp %743 : vector<8x8xf32>
    %cst_261 = arith.constant dense<0.000000e+00> : vector<8xf32>
    %745 = vector.multi_reduction <add>, %744, %cst_261 [1] : vector<8x8xf32> to vector<8xf32>
    %746 = vector.shape_cast %745 : vector<8xf32> to vector<8x1xf32>
    %747 = tpu.reciprocal %746 {approx = true} : vector<8x1xf32> -> vector<8x1xf32>
    %748 = vector.broadcast %747 : vector<8x1xf32> to vector<8x8xf32>
    %749 = arith.mulf %744, %748 : vector<8x8xf32>
    %cst_262 = arith.constant dense<0.000000e+00> : vector<8x8xf32>
    %750 = tpu.matmul %749, %735, %cst_262 {dimension_numbers = #tpu.dot_dimension_numbers<[1], [0], [0], [1], [0, 0, 1, 1], [], []>} : vector<8x8xf32>, vector<8x8xf32>, vector<8x8xf32> -> vector<8x8xf32>
    %751 = vector.extract_strided_slice %621 {offsets = [8, 0], sizes = [8, 32], strides = [1, 1]} : vector<32x32xf32> to vector<8x32xf32>
    %cst_263 = arith.constant dense<0.000000e+00> : vector<8x32xf32>
    %752 = tpu.matmul %750, %751, %cst_263 {dimension_numbers = #tpu.dot_dimension_numbers<[1], [0], [0], [1], [0, 0, 1, 1], [], []>} : vector<8x8xf32>, vector<8x32xf32>, vector<8x32xf32> -> vector<8x32xf32>
    %753 = arith.addf %732, %752 : vector<8x32xf32>
    %754 = vector.extract_strided_slice %617 {offsets = [8, 16], sizes = [8, 8], strides = [1, 1]} : vector<16x32xf32> to vector<8x8xf32>
    %755 = vector.extract_strided_slice %618 {offsets = [8, 16], sizes = [8, 8], strides = [1, 1]} : vector<16x32xf32> to vector<8x8xf32>
    %756 = vector.extract_strided_slice %619 {offsets = [8, 16], sizes = [8, 8], strides = [1, 1]} : vector<16x32xf32> to vector<8x8xf32>
    "tpu.trace_start"() <{level = 10 : i32, message = "qd,kd->qk"}> : () -> ()
    %cst_264 = arith.constant dense<0.000000e+00> : vector<8x8xf32>
    %757 = tpu.matmul %754, %755, %cst_264 {dimension_numbers = #tpu.dot_dimension_numbers<[1], [1], [0], [0], [0, 0, 1, 0], [], []>} : vector<8x8xf32>, vector<8x8xf32>, vector<8x8xf32> -> vector<8x8xf32>
    "tpu.trace_stop"() : () -> ()
    %cst_265 = arith.constant 0.353553385 : f32
    %758 = vector.broadcast %cst_265 : f32 to vector<8x8xf32>
    %759 = arith.mulf %757, %758 : vector<8x8xf32>
    %760 = arith.addf %759, %710 : vector<8x8xf32>
    %cst_266 = arith.constant dense<0xFF800000> : vector<8xf32>
    %761 = vector.multi_reduction <maximumf>, %760, %cst_266 [1] : vector<8x8xf32> to vector<8xf32>
    %762 = vector.shape_cast %761 : vector<8xf32> to vector<8x1xf32>
    %763 = vector.broadcast %762 : vector<8x1xf32> to vector<8x8xf32>
    %764 = arith.subf %760, %763 : vector<8x8xf32>
    %765 = math.exp %764 : vector<8x8xf32>
    %cst_267 = arith.constant dense<0.000000e+00> : vector<8xf32>
    %766 = vector.multi_reduction <add>, %765, %cst_267 [1] : vector<8x8xf32> to vector<8xf32>
    %767 = vector.shape_cast %766 : vector<8xf32> to vector<8x1xf32>
    %768 = tpu.reciprocal %767 {approx = true} : vector<8x1xf32> -> vector<8x1xf32>
    %769 = vector.broadcast %768 : vector<8x1xf32> to vector<8x8xf32>
    %770 = arith.mulf %765, %769 : vector<8x8xf32>
    %cst_268 = arith.constant dense<0.000000e+00> : vector<8x8xf32>
    %771 = tpu.matmul %770, %756, %cst_268 {dimension_numbers = #tpu.dot_dimension_numbers<[1], [0], [0], [1], [0, 0, 1, 1], [], []>} : vector<8x8xf32>, vector<8x8xf32>, vector<8x8xf32> -> vector<8x8xf32>
    %772 = vector.extract_strided_slice %621 {offsets = [16, 0], sizes = [8, 32], strides = [1, 1]} : vector<32x32xf32> to vector<8x32xf32>
    %cst_269 = arith.constant dense<0.000000e+00> : vector<8x32xf32>
    %773 = tpu.matmul %771, %772, %cst_269 {dimension_numbers = #tpu.dot_dimension_numbers<[1], [0], [0], [1], [0, 0, 1, 1], [], []>} : vector<8x8xf32>, vector<8x32xf32>, vector<8x32xf32> -> vector<8x32xf32>
    %774 = arith.addf %753, %773 : vector<8x32xf32>
    %775 = vector.extract_strided_slice %617 {offsets = [8, 24], sizes = [8, 8], strides = [1, 1]} : vector<16x32xf32> to vector<8x8xf32>
    %776 = vector.extract_strided_slice %618 {offsets = [8, 24], sizes = [8, 8], strides = [1, 1]} : vector<16x32xf32> to vector<8x8xf32>
    %777 = vector.extract_strided_slice %619 {offsets = [8, 24], sizes = [8, 8], strides = [1, 1]} : vector<16x32xf32> to vector<8x8xf32>
    "tpu.trace_start"() <{level = 10 : i32, message = "qd,kd->qk"}> : () -> ()
    %cst_270 = arith.constant dense<0.000000e+00> : vector<8x8xf32>
    %778 = tpu.matmul %775, %776, %cst_270 {dimension_numbers = #tpu.dot_dimension_numbers<[1], [1], [0], [0], [0, 0, 1, 0], [], []>} : vector<8x8xf32>, vector<8x8xf32>, vector<8x8xf32> -> vector<8x8xf32>
    "tpu.trace_stop"() : () -> ()
    %cst_271 = arith.constant 0.353553385 : f32
    %779 = vector.broadcast %cst_271 : f32 to vector<8x8xf32>
    %780 = arith.mulf %778, %779 : vector<8x8xf32>
    %781 = arith.addf %780, %710 : vector<8x8xf32>
    %cst_272 = arith.constant dense<0xFF800000> : vector<8xf32>
    %782 = vector.multi_reduction <maximumf>, %781, %cst_272 [1] : vector<8x8xf32> to vector<8xf32>
    %783 = vector.shape_cast %782 : vector<8xf32> to vector<8x1xf32>
    %784 = vector.broadcast %783 : vector<8x1xf32> to vector<8x8xf32>
    %785 = arith.subf %781, %784 : vector<8x8xf32>
    %786 = math.exp %785 : vector<8x8xf32>
    %cst_273 = arith.constant dense<0.000000e+00> : vector<8xf32>
    %787 = vector.multi_reduction <add>, %786, %cst_273 [1] : vector<8x8xf32> to vector<8xf32>
    %788 = vector.shape_cast %787 : vector<8xf32> to vector<8x1xf32>
    %789 = tpu.reciprocal %788 {approx = true} : vector<8x1xf32> -> vector<8x1xf32>
    %790 = vector.broadcast %789 : vector<8x1xf32> to vector<8x8xf32>
    %791 = arith.mulf %786, %790 : vector<8x8xf32>
    %cst_274 = arith.constant dense<0.000000e+00> : vector<8x8xf32>
    %792 = tpu.matmul %791, %777, %cst_274 {dimension_numbers = #tpu.dot_dimension_numbers<[1], [0], [0], [1], [0, 0, 1, 1], [], []>} : vector<8x8xf32>, vector<8x8xf32>, vector<8x8xf32> -> vector<8x8xf32>
    %793 = vector.extract_strided_slice %621 {offsets = [24, 0], sizes = [8, 32], strides = [1, 1]} : vector<32x32xf32> to vector<8x32xf32>
    %cst_275 = arith.constant dense<0.000000e+00> : vector<8x32xf32>
    %794 = tpu.matmul %792, %793, %cst_275 {dimension_numbers = #tpu.dot_dimension_numbers<[1], [0], [0], [1], [0, 0, 1, 1], [], []>} : vector<8x8xf32>, vector<8x32xf32>, vector<8x32xf32> -> vector<8x32xf32>
    %795 = arith.addf %774, %794 : vector<8x32xf32>
    %796 = tpu.concatenate %709, %795 in 0 : vector<8x32xf32>, vector<8x32xf32> -> vector<16x32xf32>
    %797 = vector.broadcast %623 : vector<1x32xf32> to vector<16x32xf32>
    %798 = arith.addf %796, %797 : vector<16x32xf32>
    %799 = arith.addf %609, %798 : vector<16x32xf32>
    %c0_276 = arith.constant 0 : index
    %c0_277 = arith.constant 0 : index
    %c0_278 = arith.constant 0 : index
    %800 = vector.load %arg21[%c0_276, %c0_277, %c0_278] : memref<2x2x32xf32, #tpu.memory_space<vmem>>, vector<1x2x32xf32>
    %801 = vector.shape_cast %800 : vector<1x2x32xf32> to vector<2x32xf32>
    %802 = vector.extract_strided_slice %801 {offsets = [0, 0], sizes = [1, 32], strides = [1, 1]} : vector<2x32xf32> to vector<1x32xf32>
    %803 = vector.extract_strided_slice %801 {offsets = [1, 0], sizes = [1, 32], strides = [1, 1]} : vector<2x32xf32> to vector<1x32xf32>
    %cst_279 = arith.constant dense<0.000000e+00> : vector<16xf32>
    %804 = vector.multi_reduction <add>, %799, %cst_279 [1] : vector<16x32xf32> to vector<16xf32>
    %805 = vector.shape_cast %804 : vector<16xf32> to vector<16x1xf32>
    %cst_280 = arith.constant 3.200000e+01 : f32
    %806 = vector.broadcast %cst_280 : f32 to vector<16x1xf32>
    %807 = arith.divf %805, %806 : vector<16x1xf32>
    %808 = vector.broadcast %807 : vector<16x1xf32> to vector<16x32xf32>
    %809 = arith.subf %799, %808 : vector<16x32xf32>
    %810 = arith.mulf %809, %809 : vector<16x32xf32>
    %cst_281 = arith.constant dense<0.000000e+00> : vector<16xf32>
    %811 = vector.multi_reduction <add>, %810, %cst_281 [1] : vector<16x32xf32> to vector<16xf32>
    %812 = vector.shape_cast %811 : vector<16xf32> to vector<16x1xf32>
    %cst_282 = arith.constant 3.200000e+01 : f32
    %813 = vector.broadcast %cst_282 : f32 to vector<16x1xf32>
    %814 = arith.divf %812, %813 : vector<16x1xf32>
    %815 = vector.broadcast %807 : vector<16x1xf32> to vector<16x32xf32>
    %816 = arith.subf %799, %815 : vector<16x32xf32>
    %cst_283 = arith.constant 9.99999974E-6 : f32
    %817 = vector.broadcast %cst_283 : f32 to vector<16x1xf32>
    %818 = arith.addf %814, %817 : vector<16x1xf32>
    %819 = math.rsqrt %818 : vector<16x1xf32>
    %820 = vector.broadcast %819 : vector<16x1xf32> to vector<16x32xf32>
    %821 = arith.mulf %816, %820 : vector<16x32xf32>
    %822 = vector.broadcast %802 : vector<1x32xf32> to vector<16x32xf32>
    %823 = arith.mulf %821, %822 : vector<16x32xf32>
    %824 = vector.broadcast %803 : vector<1x32xf32> to vector<16x32xf32>
    %825 = arith.addf %823, %824 : vector<16x32xf32>
    %c0_284 = arith.constant 0 : index
    %c0_285 = arith.constant 0 : index
    %c0_286 = arith.constant 0 : index
    %826 = vector.load %arg22[%c0_284, %c0_285, %c0_286] : memref<2x32x32xf32, #tpu.memory_space<vmem>>, vector<1x32x32xf32>
    %827 = vector.shape_cast %826 : vector<1x32x32xf32> to vector<32x32xf32>
    %cst_287 = arith.constant dense<0.000000e+00> : vector<16x32xf32>
    %828 = tpu.matmul %825, %827, %cst_287 {dimension_numbers = #tpu.dot_dimension_numbers<[1], [0], [0], [1], [0, 0, 1, 1], [], []>} : vector<16x32xf32>, vector<32x32xf32>, vector<16x32xf32> -> vector<16x32xf32>
    %c0_288 = arith.constant 0 : index
    %c0_289 = arith.constant 0 : index
    %c0_290 = arith.constant 0 : index
    %829 = vector.load %arg23[%c0_288, %c0_289, %c0_290] : memref<2x1x32xf32, #tpu.memory_space<vmem>>, vector<1x1x32xf32>
    %830 = vector.shape_cast %829 : vector<1x1x32xf32> to vector<1x32xf32>
    %831 = vector.broadcast %830 : vector<1x32xf32> to vector<16x32xf32>
    %832 = arith.addf %828, %831 : vector<16x32xf32>
    %c0_291 = arith.constant 0 : index
    %c0_292 = arith.constant 0 : index
    %c0_293 = arith.constant 0 : index
    %833 = vector.load %arg24[%c0_291, %c0_292, %c0_293] : memref<2x32x64xf32, #tpu.memory_space<vmem>>, vector<1x32x64xf32>
    %834 = vector.shape_cast %833 : vector<1x32x64xf32> to vector<32x64xf32>
    %cst_294 = arith.constant dense<0.000000e+00> : vector<16x64xf32>
    %835 = tpu.matmul %583, %834, %cst_294 {dimension_numbers = #tpu.dot_dimension_numbers<[1], [0], [0], [1], [0, 0, 1, 1], [], []>} : vector<16x32xf32>, vector<32x64xf32>, vector<16x64xf32> -> vector<16x64xf32>
    %c0_295 = arith.constant 0 : index
    %c0_296 = arith.constant 0 : index
    %c0_297 = arith.constant 0 : index
    %836 = vector.load %arg25[%c0_295, %c0_296, %c0_297] : memref<2x1x64xf32, #tpu.memory_space<vmem>>, vector<1x1x64xf32>
    %837 = vector.shape_cast %836 : vector<1x1x64xf32> to vector<1x64xf32>
    %838 = vector.broadcast %837 : vector<1x64xf32> to vector<16x64xf32>
    %839 = arith.addf %835, %838 : vector<16x64xf32>
    %840 = vector.extract_strided_slice %839 {offsets = [0, 0], sizes = [16, 32], strides = [1, 1]} : vector<16x64xf32> to vector<16x32xf32>
    %841 = vector.extract_strided_slice %839 {offsets = [0, 32], sizes = [16, 32], strides = [1, 1]} : vector<16x64xf32> to vector<16x32xf32>
    %c0_298 = arith.constant 0 : index
    %c0_299 = arith.constant 0 : index
    %c0_300 = arith.constant 0 : index
    %842 = vector.load %arg26[%c0_298, %c0_299, %c0_300] : memref<2x32x32xf32, #tpu.memory_space<vmem>>, vector<1x32x32xf32>
    %843 = vector.shape_cast %842 : vector<1x32x32xf32> to vector<32x32xf32>
    %c0_301 = arith.constant 0 : index
    %c0_302 = arith.constant 0 : index
    %c0_303 = arith.constant 0 : index
    %844 = vector.load %arg27[%c0_301, %c0_302, %c0_303] : memref<2x1x32xf32, #tpu.memory_space<vmem>>, vector<1x1x32xf32>
    %845 = vector.shape_cast %844 : vector<1x1x32xf32> to vector<1x32xf32>
    %846 = vector.extract_strided_slice %0 {offsets = [0, 0], sizes = [1, 8], strides = [1, 1]} : vector<2x8xf32> to vector<1x8xf32>
    %cst_304 = arith.constant 0.000000e+00 : f32
    %847 = vector.broadcast %cst_304 : f32 to vector<8x32xf32>
    %848 = vector.extract_strided_slice %832 {offsets = [0, 0], sizes = [8, 8], strides = [1, 1]} : vector<16x32xf32> to vector<8x8xf32>
    %849 = vector.extract_strided_slice %840 {offsets = [0, 0], sizes = [8, 8], strides = [1, 1]} : vector<16x32xf32> to vector<8x8xf32>
    %850 = vector.extract_strided_slice %841 {offsets = [0, 0], sizes = [8, 8], strides = [1, 1]} : vector<16x32xf32> to vector<8x8xf32>
    "tpu.trace_start"() <{level = 10 : i32, message = "qd,kd->qk"}> : () -> ()
    %cst_305 = arith.constant dense<0.000000e+00> : vector<8x8xf32>
    %851 = tpu.matmul %848, %849, %cst_305 {dimension_numbers = #tpu.dot_dimension_numbers<[1], [1], [0], [0], [0, 0, 1, 0], [], []>} : vector<8x8xf32>, vector<8x8xf32>, vector<8x8xf32> -> vector<8x8xf32>
    "tpu.trace_stop"() : () -> ()
    %cst_306 = arith.constant 0.353553385 : f32
    %852 = vector.broadcast %cst_306 : f32 to vector<8x8xf32>
    %853 = arith.mulf %851, %852 : vector<8x8xf32>
    %854 = vector.broadcast %846 : vector<1x8xf32> to vector<8x8xf32>
    %855 = arith.addf %853, %854 : vector<8x8xf32>
    %cst_307 = arith.constant dense<0xFF800000> : vector<8xf32>
    %856 = vector.multi_reduction <maximumf>, %855, %cst_307 [1] : vector<8x8xf32> to vector<8xf32>
    %857 = vector.shape_cast %856 : vector<8xf32> to vector<8x1xf32>
    %858 = vector.broadcast %857 : vector<8x1xf32> to vector<8x8xf32>
    %859 = arith.subf %855, %858 : vector<8x8xf32>
    %860 = math.exp %859 : vector<8x8xf32>
    %cst_308 = arith.constant dense<0.000000e+00> : vector<8xf32>
    %861 = vector.multi_reduction <add>, %860, %cst_308 [1] : vector<8x8xf32> to vector<8xf32>
    %862 = vector.shape_cast %861 : vector<8xf32> to vector<8x1xf32>
    %863 = tpu.reciprocal %862 {approx = true} : vector<8x1xf32> -> vector<8x1xf32>
    %864 = vector.broadcast %863 : vector<8x1xf32> to vector<8x8xf32>
    %865 = arith.mulf %860, %864 : vector<8x8xf32>
    %cst_309 = arith.constant dense<0.000000e+00> : vector<8x8xf32>
    %866 = tpu.matmul %865, %850, %cst_309 {dimension_numbers = #tpu.dot_dimension_numbers<[1], [0], [0], [1], [0, 0, 1, 1], [], []>} : vector<8x8xf32>, vector<8x8xf32>, vector<8x8xf32> -> vector<8x8xf32>
    %867 = vector.extract_strided_slice %843 {offsets = [0, 0], sizes = [8, 32], strides = [1, 1]} : vector<32x32xf32> to vector<8x32xf32>
    %cst_310 = arith.constant dense<0.000000e+00> : vector<8x32xf32>
    %868 = tpu.matmul %866, %867, %cst_310 {dimension_numbers = #tpu.dot_dimension_numbers<[1], [0], [0], [1], [0, 0, 1, 1], [], []>} : vector<8x8xf32>, vector<8x32xf32>, vector<8x32xf32> -> vector<8x32xf32>
    %869 = arith.addf %847, %868 : vector<8x32xf32>
    %870 = vector.extract_strided_slice %832 {offsets = [0, 8], sizes = [8, 8], strides = [1, 1]} : vector<16x32xf32> to vector<8x8xf32>
    %871 = vector.extract_strided_slice %840 {offsets = [0, 8], sizes = [8, 8], strides = [1, 1]} : vector<16x32xf32> to vector<8x8xf32>
    %872 = vector.extract_strided_slice %841 {offsets = [0, 8], sizes = [8, 8], strides = [1, 1]} : vector<16x32xf32> to vector<8x8xf32>
    "tpu.trace_start"() <{level = 10 : i32, message = "qd,kd->qk"}> : () -> ()
    %cst_311 = arith.constant dense<0.000000e+00> : vector<8x8xf32>
    %873 = tpu.matmul %870, %871, %cst_311 {dimension_numbers = #tpu.dot_dimension_numbers<[1], [1], [0], [0], [0, 0, 1, 0], [], []>} : vector<8x8xf32>, vector<8x8xf32>, vector<8x8xf32> -> vector<8x8xf32>
    "tpu.trace_stop"() : () -> ()
    %cst_312 = arith.constant 0.353553385 : f32
    %874 = vector.broadcast %cst_312 : f32 to vector<8x8xf32>
    %875 = arith.mulf %873, %874 : vector<8x8xf32>
    %876 = vector.broadcast %846 : vector<1x8xf32> to vector<8x8xf32>
    %877 = arith.addf %875, %876 : vector<8x8xf32>
    %cst_313 = arith.constant dense<0xFF800000> : vector<8xf32>
    %878 = vector.multi_reduction <maximumf>, %877, %cst_313 [1] : vector<8x8xf32> to vector<8xf32>
    %879 = vector.shape_cast %878 : vector<8xf32> to vector<8x1xf32>
    %880 = vector.broadcast %879 : vector<8x1xf32> to vector<8x8xf32>
    %881 = arith.subf %877, %880 : vector<8x8xf32>
    %882 = math.exp %881 : vector<8x8xf32>
    %cst_314 = arith.constant dense<0.000000e+00> : vector<8xf32>
    %883 = vector.multi_reduction <add>, %882, %cst_314 [1] : vector<8x8xf32> to vector<8xf32>
    %884 = vector.shape_cast %883 : vector<8xf32> to vector<8x1xf32>
    %885 = tpu.reciprocal %884 {approx = true} : vector<8x1xf32> -> vector<8x1xf32>
    %886 = vector.broadcast %885 : vector<8x1xf32> to vector<8x8xf32>
    %887 = arith.mulf %882, %886 : vector<8x8xf32>
    %cst_315 = arith.constant dense<0.000000e+00> : vector<8x8xf32>
    %888 = tpu.matmul %887, %872, %cst_315 {dimension_numbers = #tpu.dot_dimension_numbers<[1], [0], [0], [1], [0, 0, 1, 1], [], []>} : vector<8x8xf32>, vector<8x8xf32>, vector<8x8xf32> -> vector<8x8xf32>
    %889 = vector.extract_strided_slice %843 {offsets = [8, 0], sizes = [8, 32], strides = [1, 1]} : vector<32x32xf32> to vector<8x32xf32>
    %cst_316 = arith.constant dense<0.000000e+00> : vector<8x32xf32>
    %890 = tpu.matmul %888, %889, %cst_316 {dimension_numbers = #tpu.dot_dimension_numbers<[1], [0], [0], [1], [0, 0, 1, 1], [], []>} : vector<8x8xf32>, vector<8x32xf32>, vector<8x32xf32> -> vector<8x32xf32>
    %891 = arith.addf %869, %890 : vector<8x32xf32>
    %892 = vector.extract_strided_slice %832 {offsets = [0, 16], sizes = [8, 8], strides = [1, 1]} : vector<16x32xf32> to vector<8x8xf32>
    %893 = vector.extract_strided_slice %840 {offsets = [0, 16], sizes = [8, 8], strides = [1, 1]} : vector<16x32xf32> to vector<8x8xf32>
    %894 = vector.extract_strided_slice %841 {offsets = [0, 16], sizes = [8, 8], strides = [1, 1]} : vector<16x32xf32> to vector<8x8xf32>
    "tpu.trace_start"() <{level = 10 : i32, message = "qd,kd->qk"}> : () -> ()
    %cst_317 = arith.constant dense<0.000000e+00> : vector<8x8xf32>
    %895 = tpu.matmul %892, %893, %cst_317 {dimension_numbers = #tpu.dot_dimension_numbers<[1], [1], [0], [0], [0, 0, 1, 0], [], []>} : vector<8x8xf32>, vector<8x8xf32>, vector<8x8xf32> -> vector<8x8xf32>
    "tpu.trace_stop"() : () -> ()
    %cst_318 = arith.constant 0.353553385 : f32
    %896 = vector.broadcast %cst_318 : f32 to vector<8x8xf32>
    %897 = arith.mulf %895, %896 : vector<8x8xf32>
    %898 = vector.broadcast %846 : vector<1x8xf32> to vector<8x8xf32>
    %899 = arith.addf %897, %898 : vector<8x8xf32>
    %cst_319 = arith.constant dense<0xFF800000> : vector<8xf32>
    %900 = vector.multi_reduction <maximumf>, %899, %cst_319 [1] : vector<8x8xf32> to vector<8xf32>
    %901 = vector.shape_cast %900 : vector<8xf32> to vector<8x1xf32>
    %902 = vector.broadcast %901 : vector<8x1xf32> to vector<8x8xf32>
    %903 = arith.subf %899, %902 : vector<8x8xf32>
    %904 = math.exp %903 : vector<8x8xf32>
    %cst_320 = arith.constant dense<0.000000e+00> : vector<8xf32>
    %905 = vector.multi_reduction <add>, %904, %cst_320 [1] : vector<8x8xf32> to vector<8xf32>
    %906 = vector.shape_cast %905 : vector<8xf32> to vector<8x1xf32>
    %907 = tpu.reciprocal %906 {approx = true} : vector<8x1xf32> -> vector<8x1xf32>
    %908 = vector.broadcast %907 : vector<8x1xf32> to vector<8x8xf32>
    %909 = arith.mulf %904, %908 : vector<8x8xf32>
    %cst_321 = arith.constant dense<0.000000e+00> : vector<8x8xf32>
    %910 = tpu.matmul %909, %894, %cst_321 {dimension_numbers = #tpu.dot_dimension_numbers<[1], [0], [0], [1], [0, 0, 1, 1], [], []>} : vector<8x8xf32>, vector<8x8xf32>, vector<8x8xf32> -> vector<8x8xf32>
    %911 = vector.extract_strided_slice %843 {offsets = [16, 0], sizes = [8, 32], strides = [1, 1]} : vector<32x32xf32> to vector<8x32xf32>
    %cst_322 = arith.constant dense<0.000000e+00> : vector<8x32xf32>
    %912 = tpu.matmul %910, %911, %cst_322 {dimension_numbers = #tpu.dot_dimension_numbers<[1], [0], [0], [1], [0, 0, 1, 1], [], []>} : vector<8x8xf32>, vector<8x32xf32>, vector<8x32xf32> -> vector<8x32xf32>
    %913 = arith.addf %891, %912 : vector<8x32xf32>
    %914 = vector.extract_strided_slice %832 {offsets = [0, 24], sizes = [8, 8], strides = [1, 1]} : vector<16x32xf32> to vector<8x8xf32>
    %915 = vector.extract_strided_slice %840 {offsets = [0, 24], sizes = [8, 8], strides = [1, 1]} : vector<16x32xf32> to vector<8x8xf32>
    %916 = vector.extract_strided_slice %841 {offsets = [0, 24], sizes = [8, 8], strides = [1, 1]} : vector<16x32xf32> to vector<8x8xf32>
    "tpu.trace_start"() <{level = 10 : i32, message = "qd,kd->qk"}> : () -> ()
    %cst_323 = arith.constant dense<0.000000e+00> : vector<8x8xf32>
    %917 = tpu.matmul %914, %915, %cst_323 {dimension_numbers = #tpu.dot_dimension_numbers<[1], [1], [0], [0], [0, 0, 1, 0], [], []>} : vector<8x8xf32>, vector<8x8xf32>, vector<8x8xf32> -> vector<8x8xf32>
    "tpu.trace_stop"() : () -> ()
    %cst_324 = arith.constant 0.353553385 : f32
    %918 = vector.broadcast %cst_324 : f32 to vector<8x8xf32>
    %919 = arith.mulf %917, %918 : vector<8x8xf32>
    %920 = vector.broadcast %846 : vector<1x8xf32> to vector<8x8xf32>
    %921 = arith.addf %919, %920 : vector<8x8xf32>
    %cst_325 = arith.constant dense<0xFF800000> : vector<8xf32>
    %922 = vector.multi_reduction <maximumf>, %921, %cst_325 [1] : vector<8x8xf32> to vector<8xf32>
    %923 = vector.shape_cast %922 : vector<8xf32> to vector<8x1xf32>
    %924 = vector.broadcast %923 : vector<8x1xf32> to vector<8x8xf32>
    %925 = arith.subf %921, %924 : vector<8x8xf32>
    %926 = math.exp %925 : vector<8x8xf32>
    %cst_326 = arith.constant dense<0.000000e+00> : vector<8xf32>
    %927 = vector.multi_reduction <add>, %926, %cst_326 [1] : vector<8x8xf32> to vector<8xf32>
    %928 = vector.shape_cast %927 : vector<8xf32> to vector<8x1xf32>
    %929 = tpu.reciprocal %928 {approx = true} : vector<8x1xf32> -> vector<8x1xf32>
    %930 = vector.broadcast %929 : vector<8x1xf32> to vector<8x8xf32>
    %931 = arith.mulf %926, %930 : vector<8x8xf32>
    %cst_327 = arith.constant dense<0.000000e+00> : vector<8x8xf32>
    %932 = tpu.matmul %931, %916, %cst_327 {dimension_numbers = #tpu.dot_dimension_numbers<[1], [0], [0], [1], [0, 0, 1, 1], [], []>} : vector<8x8xf32>, vector<8x8xf32>, vector<8x8xf32> -> vector<8x8xf32>
    %933 = vector.extract_strided_slice %843 {offsets = [24, 0], sizes = [8, 32], strides = [1, 1]} : vector<32x32xf32> to vector<8x32xf32>
    %cst_328 = arith.constant dense<0.000000e+00> : vector<8x32xf32>
    %934 = tpu.matmul %932, %933, %cst_328 {dimension_numbers = #tpu.dot_dimension_numbers<[1], [0], [0], [1], [0, 0, 1, 1], [], []>} : vector<8x8xf32>, vector<8x32xf32>, vector<8x32xf32> -> vector<8x32xf32>
    %935 = arith.addf %913, %934 : vector<8x32xf32>
    %936 = vector.extract_strided_slice %0 {offsets = [1, 0], sizes = [1, 8], strides = [1, 1]} : vector<2x8xf32> to vector<1x8xf32>
    %cst_329 = arith.constant 0.000000e+00 : f32
    %937 = vector.broadcast %cst_329 : f32 to vector<8x32xf32>
    %938 = vector.extract_strided_slice %832 {offsets = [8, 0], sizes = [8, 8], strides = [1, 1]} : vector<16x32xf32> to vector<8x8xf32>
    %939 = vector.extract_strided_slice %840 {offsets = [8, 0], sizes = [8, 8], strides = [1, 1]} : vector<16x32xf32> to vector<8x8xf32>
    %940 = vector.extract_strided_slice %841 {offsets = [8, 0], sizes = [8, 8], strides = [1, 1]} : vector<16x32xf32> to vector<8x8xf32>
    "tpu.trace_start"() <{level = 10 : i32, message = "qd,kd->qk"}> : () -> ()
    %cst_330 = arith.constant dense<0.000000e+00> : vector<8x8xf32>
    %941 = tpu.matmul %938, %939, %cst_330 {dimension_numbers = #tpu.dot_dimension_numbers<[1], [1], [0], [0], [0, 0, 1, 0], [], []>} : vector<8x8xf32>, vector<8x8xf32>, vector<8x8xf32> -> vector<8x8xf32>
    "tpu.trace_stop"() : () -> ()
    %cst_331 = arith.constant 0.353553385 : f32
    %942 = vector.broadcast %cst_331 : f32 to vector<8x8xf32>
    %943 = arith.mulf %941, %942 : vector<8x8xf32>
    %944 = vector.broadcast %936 : vector<1x8xf32> to vector<8x8xf32>
    %945 = arith.addf %943, %944 : vector<8x8xf32>
    %cst_332 = arith.constant dense<0xFF800000> : vector<8xf32>
    %946 = vector.multi_reduction <maximumf>, %945, %cst_332 [1] : vector<8x8xf32> to vector<8xf32>
    %947 = vector.shape_cast %946 : vector<8xf32> to vector<8x1xf32>
    %948 = vector.broadcast %947 : vector<8x1xf32> to vector<8x8xf32>
    %949 = arith.subf %945, %948 : vector<8x8xf32>
    %950 = math.exp %949 : vector<8x8xf32>
    %cst_333 = arith.constant dense<0.000000e+00> : vector<8xf32>
    %951 = vector.multi_reduction <add>, %950, %cst_333 [1] : vector<8x8xf32> to vector<8xf32>
    %952 = vector.shape_cast %951 : vector<8xf32> to vector<8x1xf32>
    %953 = tpu.reciprocal %952 {approx = true} : vector<8x1xf32> -> vector<8x1xf32>
    %954 = vector.broadcast %953 : vector<8x1xf32> to vector<8x8xf32>
    %955 = arith.mulf %950, %954 : vector<8x8xf32>
    %cst_334 = arith.constant dense<0.000000e+00> : vector<8x8xf32>
    %956 = tpu.matmul %955, %940, %cst_334 {dimension_numbers = #tpu.dot_dimension_numbers<[1], [0], [0], [1], [0, 0, 1, 1], [], []>} : vector<8x8xf32>, vector<8x8xf32>, vector<8x8xf32> -> vector<8x8xf32>
    %957 = vector.extract_strided_slice %843 {offsets = [0, 0], sizes = [8, 32], strides = [1, 1]} : vector<32x32xf32> to vector<8x32xf32>
    %cst_335 = arith.constant dense<0.000000e+00> : vector<8x32xf32>
    %958 = tpu.matmul %956, %957, %cst_335 {dimension_numbers = #tpu.dot_dimension_numbers<[1], [0], [0], [1], [0, 0, 1, 1], [], []>} : vector<8x8xf32>, vector<8x32xf32>, vector<8x32xf32> -> vector<8x32xf32>
    %959 = arith.addf %937, %958 : vector<8x32xf32>
    %960 = vector.extract_strided_slice %832 {offsets = [8, 8], sizes = [8, 8], strides = [1, 1]} : vector<16x32xf32> to vector<8x8xf32>
    %961 = vector.extract_strided_slice %840 {offsets = [8, 8], sizes = [8, 8], strides = [1, 1]} : vector<16x32xf32> to vector<8x8xf32>
    %962 = vector.extract_strided_slice %841 {offsets = [8, 8], sizes = [8, 8], strides = [1, 1]} : vector<16x32xf32> to vector<8x8xf32>
    "tpu.trace_start"() <{level = 10 : i32, message = "qd,kd->qk"}> : () -> ()
    %cst_336 = arith.constant dense<0.000000e+00> : vector<8x8xf32>
    %963 = tpu.matmul %960, %961, %cst_336 {dimension_numbers = #tpu.dot_dimension_numbers<[1], [1], [0], [0], [0, 0, 1, 0], [], []>} : vector<8x8xf32>, vector<8x8xf32>, vector<8x8xf32> -> vector<8x8xf32>
    "tpu.trace_stop"() : () -> ()
    %cst_337 = arith.constant 0.353553385 : f32
    %964 = vector.broadcast %cst_337 : f32 to vector<8x8xf32>
    %965 = arith.mulf %963, %964 : vector<8x8xf32>
    %966 = vector.broadcast %936 : vector<1x8xf32> to vector<8x8xf32>
    %967 = arith.addf %965, %966 : vector<8x8xf32>
    %cst_338 = arith.constant dense<0xFF800000> : vector<8xf32>
    %968 = vector.multi_reduction <maximumf>, %967, %cst_338 [1] : vector<8x8xf32> to vector<8xf32>
    %969 = vector.shape_cast %968 : vector<8xf32> to vector<8x1xf32>
    %970 = vector.broadcast %969 : vector<8x1xf32> to vector<8x8xf32>
    %971 = arith.subf %967, %970 : vector<8x8xf32>
    %972 = math.exp %971 : vector<8x8xf32>
    %cst_339 = arith.constant dense<0.000000e+00> : vector<8xf32>
    %973 = vector.multi_reduction <add>, %972, %cst_339 [1] : vector<8x8xf32> to vector<8xf32>
    %974 = vector.shape_cast %973 : vector<8xf32> to vector<8x1xf32>
    %975 = tpu.reciprocal %974 {approx = true} : vector<8x1xf32> -> vector<8x1xf32>
    %976 = vector.broadcast %975 : vector<8x1xf32> to vector<8x8xf32>
    %977 = arith.mulf %972, %976 : vector<8x8xf32>
    %cst_340 = arith.constant dense<0.000000e+00> : vector<8x8xf32>
    %978 = tpu.matmul %977, %962, %cst_340 {dimension_numbers = #tpu.dot_dimension_numbers<[1], [0], [0], [1], [0, 0, 1, 1], [], []>} : vector<8x8xf32>, vector<8x8xf32>, vector<8x8xf32> -> vector<8x8xf32>
    %979 = vector.extract_strided_slice %843 {offsets = [8, 0], sizes = [8, 32], strides = [1, 1]} : vector<32x32xf32> to vector<8x32xf32>
    %cst_341 = arith.constant dense<0.000000e+00> : vector<8x32xf32>
    %980 = tpu.matmul %978, %979, %cst_341 {dimension_numbers = #tpu.dot_dimension_numbers<[1], [0], [0], [1], [0, 0, 1, 1], [], []>} : vector<8x8xf32>, vector<8x32xf32>, vector<8x32xf32> -> vector<8x32xf32>
    %981 = arith.addf %959, %980 : vector<8x32xf32>
    %982 = vector.extract_strided_slice %832 {offsets = [8, 16], sizes = [8, 8], strides = [1, 1]} : vector<16x32xf32> to vector<8x8xf32>
    %983 = vector.extract_strided_slice %840 {offsets = [8, 16], sizes = [8, 8], strides = [1, 1]} : vector<16x32xf32> to vector<8x8xf32>
    %984 = vector.extract_strided_slice %841 {offsets = [8, 16], sizes = [8, 8], strides = [1, 1]} : vector<16x32xf32> to vector<8x8xf32>
    "tpu.trace_start"() <{level = 10 : i32, message = "qd,kd->qk"}> : () -> ()
    %cst_342 = arith.constant dense<0.000000e+00> : vector<8x8xf32>
    %985 = tpu.matmul %982, %983, %cst_342 {dimension_numbers = #tpu.dot_dimension_numbers<[1], [1], [0], [0], [0, 0, 1, 0], [], []>} : vector<8x8xf32>, vector<8x8xf32>, vector<8x8xf32> -> vector<8x8xf32>
    "tpu.trace_stop"() : () -> ()
    %cst_343 = arith.constant 0.353553385 : f32
    %986 = vector.broadcast %cst_343 : f32 to vector<8x8xf32>
    %987 = arith.mulf %985, %986 : vector<8x8xf32>
    %988 = vector.broadcast %936 : vector<1x8xf32> to vector<8x8xf32>
    %989 = arith.addf %987, %988 : vector<8x8xf32>
    %cst_344 = arith.constant dense<0xFF800000> : vector<8xf32>
    %990 = vector.multi_reduction <maximumf>, %989, %cst_344 [1] : vector<8x8xf32> to vector<8xf32>
    %991 = vector.shape_cast %990 : vector<8xf32> to vector<8x1xf32>
    %992 = vector.broadcast %991 : vector<8x1xf32> to vector<8x8xf32>
    %993 = arith.subf %989, %992 : vector<8x8xf32>
    %994 = math.exp %993 : vector<8x8xf32>
    %cst_345 = arith.constant dense<0.000000e+00> : vector<8xf32>
    %995 = vector.multi_reduction <add>, %994, %cst_345 [1] : vector<8x8xf32> to vector<8xf32>
    %996 = vector.shape_cast %995 : vector<8xf32> to vector<8x1xf32>
    %997 = tpu.reciprocal %996 {approx = true} : vector<8x1xf32> -> vector<8x1xf32>
    %998 = vector.broadcast %997 : vector<8x1xf32> to vector<8x8xf32>
    %999 = arith.mulf %994, %998 : vector<8x8xf32>
    %cst_346 = arith.constant dense<0.000000e+00> : vector<8x8xf32>
    %1000 = tpu.matmul %999, %984, %cst_346 {dimension_numbers = #tpu.dot_dimension_numbers<[1], [0], [0], [1], [0, 0, 1, 1], [], []>} : vector<8x8xf32>, vector<8x8xf32>, vector<8x8xf32> -> vector<8x8xf32>
    %1001 = vector.extract_strided_slice %843 {offsets = [16, 0], sizes = [8, 32], strides = [1, 1]} : vector<32x32xf32> to vector<8x32xf32>
    %cst_347 = arith.constant dense<0.000000e+00> : vector<8x32xf32>
    %1002 = tpu.matmul %1000, %1001, %cst_347 {dimension_numbers = #tpu.dot_dimension_numbers<[1], [0], [0], [1], [0, 0, 1, 1], [], []>} : vector<8x8xf32>, vector<8x32xf32>, vector<8x32xf32> -> vector<8x32xf32>
    %1003 = arith.addf %981, %1002 : vector<8x32xf32>
    %1004 = vector.extract_strided_slice %832 {offsets = [8, 24], sizes = [8, 8], strides = [1, 1]} : vector<16x32xf32> to vector<8x8xf32>
    %1005 = vector.extract_strided_slice %840 {offsets = [8, 24], sizes = [8, 8], strides = [1, 1]} : vector<16x32xf32> to vector<8x8xf32>
    %1006 = vector.extract_strided_slice %841 {offsets = [8, 24], sizes = [8, 8], strides = [1, 1]} : vector<16x32xf32> to vector<8x8xf32>
    "tpu.trace_start"() <{level = 10 : i32, message = "qd,kd->qk"}> : () -> ()
    %cst_348 = arith.constant dense<0.000000e+00> : vector<8x8xf32>
    %1007 = tpu.matmul %1004, %1005, %cst_348 {dimension_numbers = #tpu.dot_dimension_numbers<[1], [1], [0], [0], [0, 0, 1, 0], [], []>} : vector<8x8xf32>, vector<8x8xf32>, vector<8x8xf32> -> vector<8x8xf32>
    "tpu.trace_stop"() : () -> ()
    %cst_349 = arith.constant 0.353553385 : f32
    %1008 = vector.broadcast %cst_349 : f32 to vector<8x8xf32>
    %1009 = arith.mulf %1007, %1008 : vector<8x8xf32>
    %1010 = vector.broadcast %936 : vector<1x8xf32> to vector<8x8xf32>
    %1011 = arith.addf %1009, %1010 : vector<8x8xf32>
    %cst_350 = arith.constant dense<0xFF800000> : vector<8xf32>
    %1012 = vector.multi_reduction <maximumf>, %1011, %cst_350 [1] : vector<8x8xf32> to vector<8xf32>
    %1013 = vector.shape_cast %1012 : vector<8xf32> to vector<8x1xf32>
    %1014 = vector.broadcast %1013 : vector<8x1xf32> to vector<8x8xf32>
    %1015 = arith.subf %1011, %1014 : vector<8x8xf32>
    %1016 = math.exp %1015 : vector<8x8xf32>
    %cst_351 = arith.constant dense<0.000000e+00> : vector<8xf32>
    %1017 = vector.multi_reduction <add>, %1016, %cst_351 [1] : vector<8x8xf32> to vector<8xf32>
    %1018 = vector.shape_cast %1017 : vector<8xf32> to vector<8x1xf32>
    %1019 = tpu.reciprocal %1018 {approx = true} : vector<8x1xf32> -> vector<8x1xf32>
    %1020 = vector.broadcast %1019 : vector<8x1xf32> to vector<8x8xf32>
    %1021 = arith.mulf %1016, %1020 : vector<8x8xf32>
    %cst_352 = arith.constant dense<0.000000e+00> : vector<8x8xf32>
    %1022 = tpu.matmul %1021, %1006, %cst_352 {dimension_numbers = #tpu.dot_dimension_numbers<[1], [0], [0], [1], [0, 0, 1, 1], [], []>} : vector<8x8xf32>, vector<8x8xf32>, vector<8x8xf32> -> vector<8x8xf32>
    %1023 = vector.extract_strided_slice %843 {offsets = [24, 0], sizes = [8, 32], strides = [1, 1]} : vector<32x32xf32> to vector<8x32xf32>
    %cst_353 = arith.constant dense<0.000000e+00> : vector<8x32xf32>
    %1024 = tpu.matmul %1022, %1023, %cst_353 {dimension_numbers = #tpu.dot_dimension_numbers<[1], [0], [0], [1], [0, 0, 1, 1], [], []>} : vector<8x8xf32>, vector<8x32xf32>, vector<8x32xf32> -> vector<8x32xf32>
    %1025 = arith.addf %1003, %1024 : vector<8x32xf32>
    %1026 = tpu.concatenate %935, %1025 in 0 : vector<8x32xf32>, vector<8x32xf32> -> vector<16x32xf32>
    %1027 = vector.broadcast %845 : vector<1x32xf32> to vector<16x32xf32>
    %1028 = arith.addf %1026, %1027 : vector<16x32xf32>
    %1029 = arith.addf %825, %1028 : vector<16x32xf32>
    %c0_354 = arith.constant 0 : index
    %c0_355 = arith.constant 0 : index
    %c0_356 = arith.constant 0 : index
    %1030 = vector.load %arg28[%c0_354, %c0_355, %c0_356] : memref<2x2x32xf32, #tpu.memory_space<vmem>>, vector<1x2x32xf32>
    %1031 = vector.shape_cast %1030 : vector<1x2x32xf32> to vector<2x32xf32>
    %1032 = vector.extract_strided_slice %1031 {offsets = [0, 0], sizes = [1, 32], strides = [1, 1]} : vector<2x32xf32> to vector<1x32xf32>
    %1033 = vector.extract_strided_slice %1031 {offsets = [1, 0], sizes = [1, 32], strides = [1, 1]} : vector<2x32xf32> to vector<1x32xf32>
    %cst_357 = arith.constant dense<0.000000e+00> : vector<16xf32>
    %1034 = vector.multi_reduction <add>, %1029, %cst_357 [1] : vector<16x32xf32> to vector<16xf32>
    %1035 = vector.shape_cast %1034 : vector<16xf32> to vector<16x1xf32>
    %cst_358 = arith.constant 3.200000e+01 : f32
    %1036 = vector.broadcast %cst_358 : f32 to vector<16x1xf32>
    %1037 = arith.divf %1035, %1036 : vector<16x1xf32>
    %1038 = vector.broadcast %1037 : vector<16x1xf32> to vector<16x32xf32>
    %1039 = arith.subf %1029, %1038 : vector<16x32xf32>
    %1040 = arith.mulf %1039, %1039 : vector<16x32xf32>
    %cst_359 = arith.constant dense<0.000000e+00> : vector<16xf32>
    %1041 = vector.multi_reduction <add>, %1040, %cst_359 [1] : vector<16x32xf32> to vector<16xf32>
    %1042 = vector.shape_cast %1041 : vector<16xf32> to vector<16x1xf32>
    %cst_360 = arith.constant 3.200000e+01 : f32
    %1043 = vector.broadcast %cst_360 : f32 to vector<16x1xf32>
    %1044 = arith.divf %1042, %1043 : vector<16x1xf32>
    %1045 = vector.broadcast %1037 : vector<16x1xf32> to vector<16x32xf32>
    %1046 = arith.subf %1029, %1045 : vector<16x32xf32>
    %cst_361 = arith.constant 9.99999974E-6 : f32
    %1047 = vector.broadcast %cst_361 : f32 to vector<16x1xf32>
    %1048 = arith.addf %1044, %1047 : vector<16x1xf32>
    %1049 = math.rsqrt %1048 : vector<16x1xf32>
    %1050 = vector.broadcast %1049 : vector<16x1xf32> to vector<16x32xf32>
    %1051 = arith.mulf %1046, %1050 : vector<16x32xf32>
    %1052 = vector.broadcast %1032 : vector<1x32xf32> to vector<16x32xf32>
    %1053 = arith.mulf %1051, %1052 : vector<16x32xf32>
    %1054 = vector.broadcast %1033 : vector<1x32xf32> to vector<16x32xf32>
    %1055 = arith.addf %1053, %1054 : vector<16x32xf32>
    %c0_362 = arith.constant 0 : index
    %c0_363 = arith.constant 0 : index
    %c0_364 = arith.constant 0 : index
    %1056 = vector.load %arg29[%c0_362, %c0_363, %c0_364] : memref<2x32x64xf32, #tpu.memory_space<vmem>>, vector<1x32x64xf32>
    %1057 = vector.shape_cast %1056 : vector<1x32x64xf32> to vector<32x64xf32>
    %c0_365 = arith.constant 0 : index
    %c0_366 = arith.constant 0 : index
    %c0_367 = arith.constant 0 : index
    %1058 = vector.load %arg30[%c0_365, %c0_366, %c0_367] : memref<2x1x64xf32, #tpu.memory_space<vmem>>, vector<1x1x64xf32>
    %1059 = vector.shape_cast %1058 : vector<1x1x64xf32> to vector<1x64xf32>
    %c0_368 = arith.constant 0 : index
    %c0_369 = arith.constant 0 : index
    %c0_370 = arith.constant 0 : index
    %1060 = vector.load %arg31[%c0_368, %c0_369, %c0_370] : memref<2x64x32xf32, #tpu.memory_space<vmem>>, vector<1x64x32xf32>
    %1061 = vector.shape_cast %1060 : vector<1x64x32xf32> to vector<64x32xf32>
    %c0_371 = arith.constant 0 : index
    %c0_372 = arith.constant 0 : index
    %c0_373 = arith.constant 0 : index
    %1062 = vector.load %arg32[%c0_371, %c0_372, %c0_373] : memref<2x1x32xf32, #tpu.memory_space<vmem>>, vector<1x1x32xf32>
    %1063 = vector.shape_cast %1062 : vector<1x1x32xf32> to vector<1x32xf32>
    %cst_374 = arith.constant dense<0.000000e+00> : vector<16x64xf32>
    %1064 = tpu.matmul %1055, %1057, %cst_374 {dimension_numbers = #tpu.dot_dimension_numbers<[1], [0], [0], [1], [0, 0, 1, 1], [], []>} : vector<16x32xf32>, vector<32x64xf32>, vector<16x64xf32> -> vector<16x64xf32>
    %1065 = vector.broadcast %1059 : vector<1x64xf32> to vector<16x64xf32>
    %1066 = arith.addf %1064, %1065 : vector<16x64xf32>
    %1067 = arith.mulf %1066, %1066 : vector<16x64xf32>
    %1068 = arith.mulf %1066, %1067 : vector<16x64xf32>
    %cst_375 = arith.constant 4.471500e-02 : f32
    %1069 = vector.broadcast %cst_375 : f32 to vector<16x64xf32>
    %1070 = arith.mulf %1069, %1068 : vector<16x64xf32>
    %1071 = arith.addf %1066, %1070 : vector<16x64xf32>
    %cst_376 = arith.constant 0.797884583 : f32
    %1072 = vector.broadcast %cst_376 : f32 to vector<16x64xf32>
    %1073 = arith.mulf %1072, %1071 : vector<16x64xf32>
    %1074 = math.tanh %1073 : vector<16x64xf32>
    %cst_377 = arith.constant 1.000000e+00 : f32
    %1075 = vector.broadcast %cst_377 : f32 to vector<16x64xf32>
    %1076 = arith.addf %1075, %1074 : vector<16x64xf32>
    %cst_378 = arith.constant 5.000000e-01 : f32
    %1077 = vector.broadcast %cst_378 : f32 to vector<16x64xf32>
    %1078 = arith.mulf %1077, %1076 : vector<16x64xf32>
    %1079 = arith.mulf %1066, %1078 : vector<16x64xf32>
    %cst_379 = arith.constant dense<0.000000e+00> : vector<16x32xf32>
    %1080 = tpu.matmul %1079, %1061, %cst_379 {dimension_numbers = #tpu.dot_dimension_numbers<[1], [0], [0], [1], [0, 0, 1, 1], [], []>} : vector<16x64xf32>, vector<64x32xf32>, vector<16x32xf32> -> vector<16x32xf32>
    %1081 = vector.broadcast %1063 : vector<1x32xf32> to vector<16x32xf32>
    %1082 = arith.addf %1080, %1081 : vector<16x32xf32>
    %1083 = arith.addf %1055, %1082 : vector<16x32xf32>
    %c0_380 = arith.constant 0 : index
    %c0_381 = arith.constant 0 : index
    %c0_382 = arith.constant 0 : index
    %1084 = vector.load %arg33[%c0_380, %c0_381, %c0_382] : memref<2x2x32xf32, #tpu.memory_space<vmem>>, vector<1x2x32xf32>
    %1085 = vector.shape_cast %1084 : vector<1x2x32xf32> to vector<2x32xf32>
    %1086 = vector.extract_strided_slice %1085 {offsets = [0, 0], sizes = [1, 32], strides = [1, 1]} : vector<2x32xf32> to vector<1x32xf32>
    %1087 = vector.extract_strided_slice %1085 {offsets = [1, 0], sizes = [1, 32], strides = [1, 1]} : vector<2x32xf32> to vector<1x32xf32>
    %cst_383 = arith.constant dense<0.000000e+00> : vector<16xf32>
    %1088 = vector.multi_reduction <add>, %1083, %cst_383 [1] : vector<16x32xf32> to vector<16xf32>
    %1089 = vector.shape_cast %1088 : vector<16xf32> to vector<16x1xf32>
    %cst_384 = arith.constant 3.200000e+01 : f32
    %1090 = vector.broadcast %cst_384 : f32 to vector<16x1xf32>
    %1091 = arith.divf %1089, %1090 : vector<16x1xf32>
    %1092 = vector.broadcast %1091 : vector<16x1xf32> to vector<16x32xf32>
    %1093 = arith.subf %1083, %1092 : vector<16x32xf32>
    %1094 = arith.mulf %1093, %1093 : vector<16x32xf32>
    %cst_385 = arith.constant dense<0.000000e+00> : vector<16xf32>
    %1095 = vector.multi_reduction <add>, %1094, %cst_385 [1] : vector<16x32xf32> to vector<16xf32>
    %1096 = vector.shape_cast %1095 : vector<16xf32> to vector<16x1xf32>
    %cst_386 = arith.constant 3.200000e+01 : f32
    %1097 = vector.broadcast %cst_386 : f32 to vector<16x1xf32>
    %1098 = arith.divf %1096, %1097 : vector<16x1xf32>
    %1099 = vector.broadcast %1091 : vector<16x1xf32> to vector<16x32xf32>
    %1100 = arith.subf %1083, %1099 : vector<16x32xf32>
    %cst_387 = arith.constant 9.99999974E-6 : f32
    %1101 = vector.broadcast %cst_387 : f32 to vector<16x1xf32>
    %1102 = arith.addf %1098, %1101 : vector<16x1xf32>
    %1103 = math.rsqrt %1102 : vector<16x1xf32>
    %1104 = vector.broadcast %1103 : vector<16x1xf32> to vector<16x32xf32>
    %1105 = arith.mulf %1100, %1104 : vector<16x32xf32>
    %1106 = vector.broadcast %1086 : vector<1x32xf32> to vector<16x32xf32>
    %1107 = arith.mulf %1105, %1106 : vector<16x32xf32>
    %1108 = vector.broadcast %1087 : vector<1x32xf32> to vector<16x32xf32>
    %1109 = arith.addf %1107, %1108 : vector<16x32xf32>
    %c1_388 = arith.constant 1 : index
    %c0_389 = arith.constant 0 : index
    %c0_390 = arith.constant 0 : index
    %1110 = vector.load %arg17[%c1_388, %c0_389, %c0_390] : memref<2x32x96xf32, #tpu.memory_space<vmem>>, vector<1x32x96xf32>
    %1111 = vector.shape_cast %1110 : vector<1x32x96xf32> to vector<32x96xf32>
    %cst_391 = arith.constant dense<0.000000e+00> : vector<16x96xf32>
    %1112 = tpu.matmul %1109, %1111, %cst_391 {dimension_numbers = #tpu.dot_dimension_numbers<[1], [0], [0], [1], [0, 0, 1, 1], [], []>} : vector<16x32xf32>, vector<32x96xf32>, vector<16x96xf32> -> vector<16x96xf32>
    %c1_392 = arith.constant 1 : index
    %c0_393 = arith.constant 0 : index
    %c0_394 = arith.constant 0 : index
    %1113 = vector.load %arg18[%c1_392, %c0_393, %c0_394] : memref<2x1x96xf32, #tpu.memory_space<vmem>>, vector<1x1x96xf32>
    %1114 = vector.shape_cast %1113 : vector<1x1x96xf32> to vector<1x96xf32>
    %1115 = vector.broadcast %1114 : vector<1x96xf32> to vector<16x96xf32>
    %1116 = arith.addf %1112, %1115 : vector<16x96xf32>
    %1117 = vector.extract_strided_slice %1116 {offsets = [0, 0], sizes = [16, 32], strides = [1, 1]} : vector<16x96xf32> to vector<16x32xf32>
    %1118 = vector.extract_strided_slice %1116 {offsets = [0, 32], sizes = [16, 32], strides = [1, 1]} : vector<16x96xf32> to vector<16x32xf32>
    %1119 = vector.extract_strided_slice %1116 {offsets = [0, 64], sizes = [16, 32], strides = [1, 1]} : vector<16x96xf32> to vector<16x32xf32>
    %c1_395 = arith.constant 1 : index
    %c0_396 = arith.constant 0 : index
    %c0_397 = arith.constant 0 : index
    %1120 = vector.load %arg19[%c1_395, %c0_396, %c0_397] : memref<2x32x32xf32, #tpu.memory_space<vmem>>, vector<1x32x32xf32>
    %1121 = vector.shape_cast %1120 : vector<1x32x32xf32> to vector<32x32xf32>
    %c1_398 = arith.constant 1 : index
    %c0_399 = arith.constant 0 : index
    %c0_400 = arith.constant 0 : index
    %1122 = vector.load %arg20[%c1_398, %c0_399, %c0_400] : memref<2x1x32xf32, #tpu.memory_space<vmem>>, vector<1x1x32xf32>
    %1123 = vector.shape_cast %1122 : vector<1x1x32xf32> to vector<1x32xf32>
    %1124 = vector.extract_strided_slice %1 {offsets = [0, 0], sizes = [8, 8], strides = [1, 1]} : vector<16x8xf32> to vector<8x8xf32>
    %cst_401 = arith.constant 0.000000e+00 : f32
    %1125 = vector.broadcast %cst_401 : f32 to vector<8x32xf32>
    %1126 = vector.extract_strided_slice %1117 {offsets = [0, 0], sizes = [8, 8], strides = [1, 1]} : vector<16x32xf32> to vector<8x8xf32>
    %1127 = vector.extract_strided_slice %1118 {offsets = [0, 0], sizes = [8, 8], strides = [1, 1]} : vector<16x32xf32> to vector<8x8xf32>
    %1128 = vector.extract_strided_slice %1119 {offsets = [0, 0], sizes = [8, 8], strides = [1, 1]} : vector<16x32xf32> to vector<8x8xf32>
    "tpu.trace_start"() <{level = 10 : i32, message = "qd,kd->qk"}> : () -> ()
    %cst_402 = arith.constant dense<0.000000e+00> : vector<8x8xf32>
    %1129 = tpu.matmul %1126, %1127, %cst_402 {dimension_numbers = #tpu.dot_dimension_numbers<[1], [1], [0], [0], [0, 0, 1, 0], [], []>} : vector<8x8xf32>, vector<8x8xf32>, vector<8x8xf32> -> vector<8x8xf32>
    "tpu.trace_stop"() : () -> ()
    %cst_403 = arith.constant 0.353553385 : f32
    %1130 = vector.broadcast %cst_403 : f32 to vector<8x8xf32>
    %1131 = arith.mulf %1129, %1130 : vector<8x8xf32>
    %1132 = arith.addf %1131, %1124 : vector<8x8xf32>
    %cst_404 = arith.constant dense<0xFF800000> : vector<8xf32>
    %1133 = vector.multi_reduction <maximumf>, %1132, %cst_404 [1] : vector<8x8xf32> to vector<8xf32>
    %1134 = vector.shape_cast %1133 : vector<8xf32> to vector<8x1xf32>
    %1135 = vector.broadcast %1134 : vector<8x1xf32> to vector<8x8xf32>
    %1136 = arith.subf %1132, %1135 : vector<8x8xf32>
    %1137 = math.exp %1136 : vector<8x8xf32>
    %cst_405 = arith.constant dense<0.000000e+00> : vector<8xf32>
    %1138 = vector.multi_reduction <add>, %1137, %cst_405 [1] : vector<8x8xf32> to vector<8xf32>
    %1139 = vector.shape_cast %1138 : vector<8xf32> to vector<8x1xf32>
    %1140 = tpu.reciprocal %1139 {approx = true} : vector<8x1xf32> -> vector<8x1xf32>
    %1141 = vector.broadcast %1140 : vector<8x1xf32> to vector<8x8xf32>
    %1142 = arith.mulf %1137, %1141 : vector<8x8xf32>
    %cst_406 = arith.constant dense<0.000000e+00> : vector<8x8xf32>
    %1143 = tpu.matmul %1142, %1128, %cst_406 {dimension_numbers = #tpu.dot_dimension_numbers<[1], [0], [0], [1], [0, 0, 1, 1], [], []>} : vector<8x8xf32>, vector<8x8xf32>, vector<8x8xf32> -> vector<8x8xf32>
    %1144 = vector.extract_strided_slice %1121 {offsets = [0, 0], sizes = [8, 32], strides = [1, 1]} : vector<32x32xf32> to vector<8x32xf32>
    %cst_407 = arith.constant dense<0.000000e+00> : vector<8x32xf32>
    %1145 = tpu.matmul %1143, %1144, %cst_407 {dimension_numbers = #tpu.dot_dimension_numbers<[1], [0], [0], [1], [0, 0, 1, 1], [], []>} : vector<8x8xf32>, vector<8x32xf32>, vector<8x32xf32> -> vector<8x32xf32>
    %1146 = arith.addf %1125, %1145 : vector<8x32xf32>
    %1147 = vector.extract_strided_slice %1117 {offsets = [0, 8], sizes = [8, 8], strides = [1, 1]} : vector<16x32xf32> to vector<8x8xf32>
    %1148 = vector.extract_strided_slice %1118 {offsets = [0, 8], sizes = [8, 8], strides = [1, 1]} : vector<16x32xf32> to vector<8x8xf32>
    %1149 = vector.extract_strided_slice %1119 {offsets = [0, 8], sizes = [8, 8], strides = [1, 1]} : vector<16x32xf32> to vector<8x8xf32>
    "tpu.trace_start"() <{level = 10 : i32, message = "qd,kd->qk"}> : () -> ()
    %cst_408 = arith.constant dense<0.000000e+00> : vector<8x8xf32>
    %1150 = tpu.matmul %1147, %1148, %cst_408 {dimension_numbers = #tpu.dot_dimension_numbers<[1], [1], [0], [0], [0, 0, 1, 0], [], []>} : vector<8x8xf32>, vector<8x8xf32>, vector<8x8xf32> -> vector<8x8xf32>
    "tpu.trace_stop"() : () -> ()
    %cst_409 = arith.constant 0.353553385 : f32
    %1151 = vector.broadcast %cst_409 : f32 to vector<8x8xf32>
    %1152 = arith.mulf %1150, %1151 : vector<8x8xf32>
    %1153 = arith.addf %1152, %1124 : vector<8x8xf32>
    %cst_410 = arith.constant dense<0xFF800000> : vector<8xf32>
    %1154 = vector.multi_reduction <maximumf>, %1153, %cst_410 [1] : vector<8x8xf32> to vector<8xf32>
    %1155 = vector.shape_cast %1154 : vector<8xf32> to vector<8x1xf32>
    %1156 = vector.broadcast %1155 : vector<8x1xf32> to vector<8x8xf32>
    %1157 = arith.subf %1153, %1156 : vector<8x8xf32>
    %1158 = math.exp %1157 : vector<8x8xf32>
    %cst_411 = arith.constant dense<0.000000e+00> : vector<8xf32>
    %1159 = vector.multi_reduction <add>, %1158, %cst_411 [1] : vector<8x8xf32> to vector<8xf32>
    %1160 = vector.shape_cast %1159 : vector<8xf32> to vector<8x1xf32>
    %1161 = tpu.reciprocal %1160 {approx = true} : vector<8x1xf32> -> vector<8x1xf32>
    %1162 = vector.broadcast %1161 : vector<8x1xf32> to vector<8x8xf32>
    %1163 = arith.mulf %1158, %1162 : vector<8x8xf32>
    %cst_412 = arith.constant dense<0.000000e+00> : vector<8x8xf32>
    %1164 = tpu.matmul %1163, %1149, %cst_412 {dimension_numbers = #tpu.dot_dimension_numbers<[1], [0], [0], [1], [0, 0, 1, 1], [], []>} : vector<8x8xf32>, vector<8x8xf32>, vector<8x8xf32> -> vector<8x8xf32>
    %1165 = vector.extract_strided_slice %1121 {offsets = [8, 0], sizes = [8, 32], strides = [1, 1]} : vector<32x32xf32> to vector<8x32xf32>
    %cst_413 = arith.constant dense<0.000000e+00> : vector<8x32xf32>
    %1166 = tpu.matmul %1164, %1165, %cst_413 {dimension_numbers = #tpu.dot_dimension_numbers<[1], [0], [0], [1], [0, 0, 1, 1], [], []>} : vector<8x8xf32>, vector<8x32xf32>, vector<8x32xf32> -> vector<8x32xf32>
    %1167 = arith.addf %1146, %1166 : vector<8x32xf32>
    %1168 = vector.extract_strided_slice %1117 {offsets = [0, 16], sizes = [8, 8], strides = [1, 1]} : vector<16x32xf32> to vector<8x8xf32>
    %1169 = vector.extract_strided_slice %1118 {offsets = [0, 16], sizes = [8, 8], strides = [1, 1]} : vector<16x32xf32> to vector<8x8xf32>
    %1170 = vector.extract_strided_slice %1119 {offsets = [0, 16], sizes = [8, 8], strides = [1, 1]} : vector<16x32xf32> to vector<8x8xf32>
    "tpu.trace_start"() <{level = 10 : i32, message = "qd,kd->qk"}> : () -> ()
    %cst_414 = arith.constant dense<0.000000e+00> : vector<8x8xf32>
    %1171 = tpu.matmul %1168, %1169, %cst_414 {dimension_numbers = #tpu.dot_dimension_numbers<[1], [1], [0], [0], [0, 0, 1, 0], [], []>} : vector<8x8xf32>, vector<8x8xf32>, vector<8x8xf32> -> vector<8x8xf32>
    "tpu.trace_stop"() : () -> ()
    %cst_415 = arith.constant 0.353553385 : f32
    %1172 = vector.broadcast %cst_415 : f32 to vector<8x8xf32>
    %1173 = arith.mulf %1171, %1172 : vector<8x8xf32>
    %1174 = arith.addf %1173, %1124 : vector<8x8xf32>
    %cst_416 = arith.constant dense<0xFF800000> : vector<8xf32>
    %1175 = vector.multi_reduction <maximumf>, %1174, %cst_416 [1] : vector<8x8xf32> to vector<8xf32>
    %1176 = vector.shape_cast %1175 : vector<8xf32> to vector<8x1xf32>
    %1177 = vector.broadcast %1176 : vector<8x1xf32> to vector<8x8xf32>
    %1178 = arith.subf %1174, %1177 : vector<8x8xf32>
    %1179 = math.exp %1178 : vector<8x8xf32>
    %cst_417 = arith.constant dense<0.000000e+00> : vector<8xf32>
    %1180 = vector.multi_reduction <add>, %1179, %cst_417 [1] : vector<8x8xf32> to vector<8xf32>
    %1181 = vector.shape_cast %1180 : vector<8xf32> to vector<8x1xf32>
    %1182 = tpu.reciprocal %1181 {approx = true} : vector<8x1xf32> -> vector<8x1xf32>
    %1183 = vector.broadcast %1182 : vector<8x1xf32> to vector<8x8xf32>
    %1184 = arith.mulf %1179, %1183 : vector<8x8xf32>
    %cst_418 = arith.constant dense<0.000000e+00> : vector<8x8xf32>
    %1185 = tpu.matmul %1184, %1170, %cst_418 {dimension_numbers = #tpu.dot_dimension_numbers<[1], [0], [0], [1], [0, 0, 1, 1], [], []>} : vector<8x8xf32>, vector<8x8xf32>, vector<8x8xf32> -> vector<8x8xf32>
    %1186 = vector.extract_strided_slice %1121 {offsets = [16, 0], sizes = [8, 32], strides = [1, 1]} : vector<32x32xf32> to vector<8x32xf32>
    %cst_419 = arith.constant dense<0.000000e+00> : vector<8x32xf32>
    %1187 = tpu.matmul %1185, %1186, %cst_419 {dimension_numbers = #tpu.dot_dimension_numbers<[1], [0], [0], [1], [0, 0, 1, 1], [], []>} : vector<8x8xf32>, vector<8x32xf32>, vector<8x32xf32> -> vector<8x32xf32>
    %1188 = arith.addf %1167, %1187 : vector<8x32xf32>
    %1189 = vector.extract_strided_slice %1117 {offsets = [0, 24], sizes = [8, 8], strides = [1, 1]} : vector<16x32xf32> to vector<8x8xf32>
    %1190 = vector.extract_strided_slice %1118 {offsets = [0, 24], sizes = [8, 8], strides = [1, 1]} : vector<16x32xf32> to vector<8x8xf32>
    %1191 = vector.extract_strided_slice %1119 {offsets = [0, 24], sizes = [8, 8], strides = [1, 1]} : vector<16x32xf32> to vector<8x8xf32>
    "tpu.trace_start"() <{level = 10 : i32, message = "qd,kd->qk"}> : () -> ()
    %cst_420 = arith.constant dense<0.000000e+00> : vector<8x8xf32>
    %1192 = tpu.matmul %1189, %1190, %cst_420 {dimension_numbers = #tpu.dot_dimension_numbers<[1], [1], [0], [0], [0, 0, 1, 0], [], []>} : vector<8x8xf32>, vector<8x8xf32>, vector<8x8xf32> -> vector<8x8xf32>
    "tpu.trace_stop"() : () -> ()
    %cst_421 = arith.constant 0.353553385 : f32
    %1193 = vector.broadcast %cst_421 : f32 to vector<8x8xf32>
    %1194 = arith.mulf %1192, %1193 : vector<8x8xf32>
    %1195 = arith.addf %1194, %1124 : vector<8x8xf32>
    %cst_422 = arith.constant dense<0xFF800000> : vector<8xf32>
    %1196 = vector.multi_reduction <maximumf>, %1195, %cst_422 [1] : vector<8x8xf32> to vector<8xf32>
    %1197 = vector.shape_cast %1196 : vector<8xf32> to vector<8x1xf32>
    %1198 = vector.broadcast %1197 : vector<8x1xf32> to vector<8x8xf32>
    %1199 = arith.subf %1195, %1198 : vector<8x8xf32>
    %1200 = math.exp %1199 : vector<8x8xf32>
    %cst_423 = arith.constant dense<0.000000e+00> : vector<8xf32>
    %1201 = vector.multi_reduction <add>, %1200, %cst_423 [1] : vector<8x8xf32> to vector<8xf32>
    %1202 = vector.shape_cast %1201 : vector<8xf32> to vector<8x1xf32>
    %1203 = tpu.reciprocal %1202 {approx = true} : vector<8x1xf32> -> vector<8x1xf32>
    %1204 = vector.broadcast %1203 : vector<8x1xf32> to vector<8x8xf32>
    %1205 = arith.mulf %1200, %1204 : vector<8x8xf32>
    %cst_424 = arith.constant dense<0.000000e+00> : vector<8x8xf32>
    %1206 = tpu.matmul %1205, %1191, %cst_424 {dimension_numbers = #tpu.dot_dimension_numbers<[1], [0], [0], [1], [0, 0, 1, 1], [], []>} : vector<8x8xf32>, vector<8x8xf32>, vector<8x8xf32> -> vector<8x8xf32>
    %1207 = vector.extract_strided_slice %1121 {offsets = [24, 0], sizes = [8, 32], strides = [1, 1]} : vector<32x32xf32> to vector<8x32xf32>
    %cst_425 = arith.constant dense<0.000000e+00> : vector<8x32xf32>
    %1208 = tpu.matmul %1206, %1207, %cst_425 {dimension_numbers = #tpu.dot_dimension_numbers<[1], [0], [0], [1], [0, 0, 1, 1], [], []>} : vector<8x8xf32>, vector<8x32xf32>, vector<8x32xf32> -> vector<8x32xf32>
    %1209 = arith.addf %1188, %1208 : vector<8x32xf32>
    %1210 = vector.extract_strided_slice %1 {offsets = [8, 0], sizes = [8, 8], strides = [1, 1]} : vector<16x8xf32> to vector<8x8xf32>
    %cst_426 = arith.constant 0.000000e+00 : f32
    %1211 = vector.broadcast %cst_426 : f32 to vector<8x32xf32>
    %1212 = vector.extract_strided_slice %1117 {offsets = [8, 0], sizes = [8, 8], strides = [1, 1]} : vector<16x32xf32> to vector<8x8xf32>
    %1213 = vector.extract_strided_slice %1118 {offsets = [8, 0], sizes = [8, 8], strides = [1, 1]} : vector<16x32xf32> to vector<8x8xf32>
    %1214 = vector.extract_strided_slice %1119 {offsets = [8, 0], sizes = [8, 8], strides = [1, 1]} : vector<16x32xf32> to vector<8x8xf32>
    "tpu.trace_start"() <{level = 10 : i32, message = "qd,kd->qk"}> : () -> ()
    %cst_427 = arith.constant dense<0.000000e+00> : vector<8x8xf32>
    %1215 = tpu.matmul %1212, %1213, %cst_427 {dimension_numbers = #tpu.dot_dimension_numbers<[1], [1], [0], [0], [0, 0, 1, 0], [], []>} : vector<8x8xf32>, vector<8x8xf32>, vector<8x8xf32> -> vector<8x8xf32>
    "tpu.trace_stop"() : () -> ()
    %cst_428 = arith.constant 0.353553385 : f32
    %1216 = vector.broadcast %cst_428 : f32 to vector<8x8xf32>
    %1217 = arith.mulf %1215, %1216 : vector<8x8xf32>
    %1218 = arith.addf %1217, %1210 : vector<8x8xf32>
    %cst_429 = arith.constant dense<0xFF800000> : vector<8xf32>
    %1219 = vector.multi_reduction <maximumf>, %1218, %cst_429 [1] : vector<8x8xf32> to vector<8xf32>
    %1220 = vector.shape_cast %1219 : vector<8xf32> to vector<8x1xf32>
    %1221 = vector.broadcast %1220 : vector<8x1xf32> to vector<8x8xf32>
    %1222 = arith.subf %1218, %1221 : vector<8x8xf32>
    %1223 = math.exp %1222 : vector<8x8xf32>
    %cst_430 = arith.constant dense<0.000000e+00> : vector<8xf32>
    %1224 = vector.multi_reduction <add>, %1223, %cst_430 [1] : vector<8x8xf32> to vector<8xf32>
    %1225 = vector.shape_cast %1224 : vector<8xf32> to vector<8x1xf32>
    %1226 = tpu.reciprocal %1225 {approx = true} : vector<8x1xf32> -> vector<8x1xf32>
    %1227 = vector.broadcast %1226 : vector<8x1xf32> to vector<8x8xf32>
    %1228 = arith.mulf %1223, %1227 : vector<8x8xf32>
    %cst_431 = arith.constant dense<0.000000e+00> : vector<8x8xf32>
    %1229 = tpu.matmul %1228, %1214, %cst_431 {dimension_numbers = #tpu.dot_dimension_numbers<[1], [0], [0], [1], [0, 0, 1, 1], [], []>} : vector<8x8xf32>, vector<8x8xf32>, vector<8x8xf32> -> vector<8x8xf32>
    %1230 = vector.extract_strided_slice %1121 {offsets = [0, 0], sizes = [8, 32], strides = [1, 1]} : vector<32x32xf32> to vector<8x32xf32>
    %cst_432 = arith.constant dense<0.000000e+00> : vector<8x32xf32>
    %1231 = tpu.matmul %1229, %1230, %cst_432 {dimension_numbers = #tpu.dot_dimension_numbers<[1], [0], [0], [1], [0, 0, 1, 1], [], []>} : vector<8x8xf32>, vector<8x32xf32>, vector<8x32xf32> -> vector<8x32xf32>
    %1232 = arith.addf %1211, %1231 : vector<8x32xf32>
    %1233 = vector.extract_strided_slice %1117 {offsets = [8, 8], sizes = [8, 8], strides = [1, 1]} : vector<16x32xf32> to vector<8x8xf32>
    %1234 = vector.extract_strided_slice %1118 {offsets = [8, 8], sizes = [8, 8], strides = [1, 1]} : vector<16x32xf32> to vector<8x8xf32>
    %1235 = vector.extract_strided_slice %1119 {offsets = [8, 8], sizes = [8, 8], strides = [1, 1]} : vector<16x32xf32> to vector<8x8xf32>
    "tpu.trace_start"() <{level = 10 : i32, message = "qd,kd->qk"}> : () -> ()
    %cst_433 = arith.constant dense<0.000000e+00> : vector<8x8xf32>
    %1236 = tpu.matmul %1233, %1234, %cst_433 {dimension_numbers = #tpu.dot_dimension_numbers<[1], [1], [0], [0], [0, 0, 1, 0], [], []>} : vector<8x8xf32>, vector<8x8xf32>, vector<8x8xf32> -> vector<8x8xf32>
    "tpu.trace_stop"() : () -> ()
    %cst_434 = arith.constant 0.353553385 : f32
    %1237 = vector.broadcast %cst_434 : f32 to vector<8x8xf32>
    %1238 = arith.mulf %1236, %1237 : vector<8x8xf32>
    %1239 = arith.addf %1238, %1210 : vector<8x8xf32>
    %cst_435 = arith.constant dense<0xFF800000> : vector<8xf32>
    %1240 = vector.multi_reduction <maximumf>, %1239, %cst_435 [1] : vector<8x8xf32> to vector<8xf32>
    %1241 = vector.shape_cast %1240 : vector<8xf32> to vector<8x1xf32>
    %1242 = vector.broadcast %1241 : vector<8x1xf32> to vector<8x8xf32>
    %1243 = arith.subf %1239, %1242 : vector<8x8xf32>
    %1244 = math.exp %1243 : vector<8x8xf32>
    %cst_436 = arith.constant dense<0.000000e+00> : vector<8xf32>
    %1245 = vector.multi_reduction <add>, %1244, %cst_436 [1] : vector<8x8xf32> to vector<8xf32>
    %1246 = vector.shape_cast %1245 : vector<8xf32> to vector<8x1xf32>
    %1247 = tpu.reciprocal %1246 {approx = true} : vector<8x1xf32> -> vector<8x1xf32>
    %1248 = vector.broadcast %1247 : vector<8x1xf32> to vector<8x8xf32>
    %1249 = arith.mulf %1244, %1248 : vector<8x8xf32>
    %cst_437 = arith.constant dense<0.000000e+00> : vector<8x8xf32>
    %1250 = tpu.matmul %1249, %1235, %cst_437 {dimension_numbers = #tpu.dot_dimension_numbers<[1], [0], [0], [1], [0, 0, 1, 1], [], []>} : vector<8x8xf32>, vector<8x8xf32>, vector<8x8xf32> -> vector<8x8xf32>
    %1251 = vector.extract_strided_slice %1121 {offsets = [8, 0], sizes = [8, 32], strides = [1, 1]} : vector<32x32xf32> to vector<8x32xf32>
    %cst_438 = arith.constant dense<0.000000e+00> : vector<8x32xf32>
    %1252 = tpu.matmul %1250, %1251, %cst_438 {dimension_numbers = #tpu.dot_dimension_numbers<[1], [0], [0], [1], [0, 0, 1, 1], [], []>} : vector<8x8xf32>, vector<8x32xf32>, vector<8x32xf32> -> vector<8x32xf32>
    %1253 = arith.addf %1232, %1252 : vector<8x32xf32>
    %1254 = vector.extract_strided_slice %1117 {offsets = [8, 16], sizes = [8, 8], strides = [1, 1]} : vector<16x32xf32> to vector<8x8xf32>
    %1255 = vector.extract_strided_slice %1118 {offsets = [8, 16], sizes = [8, 8], strides = [1, 1]} : vector<16x32xf32> to vector<8x8xf32>
    %1256 = vector.extract_strided_slice %1119 {offsets = [8, 16], sizes = [8, 8], strides = [1, 1]} : vector<16x32xf32> to vector<8x8xf32>
    "tpu.trace_start"() <{level = 10 : i32, message = "qd,kd->qk"}> : () -> ()
    %cst_439 = arith.constant dense<0.000000e+00> : vector<8x8xf32>
    %1257 = tpu.matmul %1254, %1255, %cst_439 {dimension_numbers = #tpu.dot_dimension_numbers<[1], [1], [0], [0], [0, 0, 1, 0], [], []>} : vector<8x8xf32>, vector<8x8xf32>, vector<8x8xf32> -> vector<8x8xf32>
    "tpu.trace_stop"() : () -> ()
    %cst_440 = arith.constant 0.353553385 : f32
    %1258 = vector.broadcast %cst_440 : f32 to vector<8x8xf32>
    %1259 = arith.mulf %1257, %1258 : vector<8x8xf32>
    %1260 = arith.addf %1259, %1210 : vector<8x8xf32>
    %cst_441 = arith.constant dense<0xFF800000> : vector<8xf32>
    %1261 = vector.multi_reduction <maximumf>, %1260, %cst_441 [1] : vector<8x8xf32> to vector<8xf32>
    %1262 = vector.shape_cast %1261 : vector<8xf32> to vector<8x1xf32>
    %1263 = vector.broadcast %1262 : vector<8x1xf32> to vector<8x8xf32>
    %1264 = arith.subf %1260, %1263 : vector<8x8xf32>
    %1265 = math.exp %1264 : vector<8x8xf32>
    %cst_442 = arith.constant dense<0.000000e+00> : vector<8xf32>
    %1266 = vector.multi_reduction <add>, %1265, %cst_442 [1] : vector<8x8xf32> to vector<8xf32>
    %1267 = vector.shape_cast %1266 : vector<8xf32> to vector<8x1xf32>
    %1268 = tpu.reciprocal %1267 {approx = true} : vector<8x1xf32> -> vector<8x1xf32>
    %1269 = vector.broadcast %1268 : vector<8x1xf32> to vector<8x8xf32>
    %1270 = arith.mulf %1265, %1269 : vector<8x8xf32>
    %cst_443 = arith.constant dense<0.000000e+00> : vector<8x8xf32>
    %1271 = tpu.matmul %1270, %1256, %cst_443 {dimension_numbers = #tpu.dot_dimension_numbers<[1], [0], [0], [1], [0, 0, 1, 1], [], []>} : vector<8x8xf32>, vector<8x8xf32>, vector<8x8xf32> -> vector<8x8xf32>
    %1272 = vector.extract_strided_slice %1121 {offsets = [16, 0], sizes = [8, 32], strides = [1, 1]} : vector<32x32xf32> to vector<8x32xf32>
    %cst_444 = arith.constant dense<0.000000e+00> : vector<8x32xf32>
    %1273 = tpu.matmul %1271, %1272, %cst_444 {dimension_numbers = #tpu.dot_dimension_numbers<[1], [0], [0], [1], [0, 0, 1, 1], [], []>} : vector<8x8xf32>, vector<8x32xf32>, vector<8x32xf32> -> vector<8x32xf32>
    %1274 = arith.addf %1253, %1273 : vector<8x32xf32>
    %1275 = vector.extract_strided_slice %1117 {offsets = [8, 24], sizes = [8, 8], strides = [1, 1]} : vector<16x32xf32> to vector<8x8xf32>
    %1276 = vector.extract_strided_slice %1118 {offsets = [8, 24], sizes = [8, 8], strides = [1, 1]} : vector<16x32xf32> to vector<8x8xf32>
    %1277 = vector.extract_strided_slice %1119 {offsets = [8, 24], sizes = [8, 8], strides = [1, 1]} : vector<16x32xf32> to vector<8x8xf32>
    "tpu.trace_start"() <{level = 10 : i32, message = "qd,kd->qk"}> : () -> ()
    %cst_445 = arith.constant dense<0.000000e+00> : vector<8x8xf32>
    %1278 = tpu.matmul %1275, %1276, %cst_445 {dimension_numbers = #tpu.dot_dimension_numbers<[1], [1], [0], [0], [0, 0, 1, 0], [], []>} : vector<8x8xf32>, vector<8x8xf32>, vector<8x8xf32> -> vector<8x8xf32>
    "tpu.trace_stop"() : () -> ()
    %cst_446 = arith.constant 0.353553385 : f32
    %1279 = vector.broadcast %cst_446 : f32 to vector<8x8xf32>
    %1280 = arith.mulf %1278, %1279 : vector<8x8xf32>
    %1281 = arith.addf %1280, %1210 : vector<8x8xf32>
    %cst_447 = arith.constant dense<0xFF800000> : vector<8xf32>
    %1282 = vector.multi_reduction <maximumf>, %1281, %cst_447 [1] : vector<8x8xf32> to vector<8xf32>
    %1283 = vector.shape_cast %1282 : vector<8xf32> to vector<8x1xf32>
    %1284 = vector.broadcast %1283 : vector<8x1xf32> to vector<8x8xf32>
    %1285 = arith.subf %1281, %1284 : vector<8x8xf32>
    %1286 = math.exp %1285 : vector<8x8xf32>
    %cst_448 = arith.constant dense<0.000000e+00> : vector<8xf32>
    %1287 = vector.multi_reduction <add>, %1286, %cst_448 [1] : vector<8x8xf32> to vector<8xf32>
    %1288 = vector.shape_cast %1287 : vector<8xf32> to vector<8x1xf32>
    %1289 = tpu.reciprocal %1288 {approx = true} : vector<8x1xf32> -> vector<8x1xf32>
    %1290 = vector.broadcast %1289 : vector<8x1xf32> to vector<8x8xf32>
    %1291 = arith.mulf %1286, %1290 : vector<8x8xf32>
    %cst_449 = arith.constant dense<0.000000e+00> : vector<8x8xf32>
    %1292 = tpu.matmul %1291, %1277, %cst_449 {dimension_numbers = #tpu.dot_dimension_numbers<[1], [0], [0], [1], [0, 0, 1, 1], [], []>} : vector<8x8xf32>, vector<8x8xf32>, vector<8x8xf32> -> vector<8x8xf32>
    %1293 = vector.extract_strided_slice %1121 {offsets = [24, 0], sizes = [8, 32], strides = [1, 1]} : vector<32x32xf32> to vector<8x32xf32>
    %cst_450 = arith.constant dense<0.000000e+00> : vector<8x32xf32>
    %1294 = tpu.matmul %1292, %1293, %cst_450 {dimension_numbers = #tpu.dot_dimension_numbers<[1], [0], [0], [1], [0, 0, 1, 1], [], []>} : vector<8x8xf32>, vector<8x32xf32>, vector<8x32xf32> -> vector<8x32xf32>
    %1295 = arith.addf %1274, %1294 : vector<8x32xf32>
    %1296 = tpu.concatenate %1209, %1295 in 0 : vector<8x32xf32>, vector<8x32xf32> -> vector<16x32xf32>
    %1297 = vector.broadcast %1123 : vector<1x32xf32> to vector<16x32xf32>
    %1298 = arith.addf %1296, %1297 : vector<16x32xf32>
    %1299 = arith.addf %1109, %1298 : vector<16x32xf32>
    %c1_451 = arith.constant 1 : index
    %c0_452 = arith.constant 0 : index
    %c0_453 = arith.constant 0 : index
    %1300 = vector.load %arg21[%c1_451, %c0_452, %c0_453] : memref<2x2x32xf32, #tpu.memory_space<vmem>>, vector<1x2x32xf32>
    %1301 = vector.shape_cast %1300 : vector<1x2x32xf32> to vector<2x32xf32>
    %1302 = vector.extract_strided_slice %1301 {offsets = [0, 0], sizes = [1, 32], strides = [1, 1]} : vector<2x32xf32> to vector<1x32xf32>
    %1303 = vector.extract_strided_slice %1301 {offsets = [1, 0], sizes = [1, 32], strides = [1, 1]} : vector<2x32xf32> to vector<1x32xf32>
    %cst_454 = arith.constant dense<0.000000e+00> : vector<16xf32>
    %1304 = vector.multi_reduction <add>, %1299, %cst_454 [1] : vector<16x32xf32> to vector<16xf32>
    %1305 = vector.shape_cast %1304 : vector<16xf32> to vector<16x1xf32>
    %cst_455 = arith.constant 3.200000e+01 : f32
    %1306 = vector.broadcast %cst_455 : f32 to vector<16x1xf32>
    %1307 = arith.divf %1305, %1306 : vector<16x1xf32>
    %1308 = vector.broadcast %1307 : vector<16x1xf32> to vector<16x32xf32>
    %1309 = arith.subf %1299, %1308 : vector<16x32xf32>
    %1310 = arith.mulf %1309, %1309 : vector<16x32xf32>
    %cst_456 = arith.constant dense<0.000000e+00> : vector<16xf32>
    %1311 = vector.multi_reduction <add>, %1310, %cst_456 [1] : vector<16x32xf32> to vector<16xf32>
    %1312 = vector.shape_cast %1311 : vector<16xf32> to vector<16x1xf32>
    %cst_457 = arith.constant 3.200000e+01 : f32
    %1313 = vector.broadcast %cst_457 : f32 to vector<16x1xf32>
    %1314 = arith.divf %1312, %1313 : vector<16x1xf32>
    %1315 = vector.broadcast %1307 : vector<16x1xf32> to vector<16x32xf32>
    %1316 = arith.subf %1299, %1315 : vector<16x32xf32>
    %cst_458 = arith.constant 9.99999974E-6 : f32
    %1317 = vector.broadcast %cst_458 : f32 to vector<16x1xf32>
    %1318 = arith.addf %1314, %1317 : vector<16x1xf32>
    %1319 = math.rsqrt %1318 : vector<16x1xf32>
    %1320 = vector.broadcast %1319 : vector<16x1xf32> to vector<16x32xf32>
    %1321 = arith.mulf %1316, %1320 : vector<16x32xf32>
    %1322 = vector.broadcast %1302 : vector<1x32xf32> to vector<16x32xf32>
    %1323 = arith.mulf %1321, %1322 : vector<16x32xf32>
    %1324 = vector.broadcast %1303 : vector<1x32xf32> to vector<16x32xf32>
    %1325 = arith.addf %1323, %1324 : vector<16x32xf32>
    %c1_459 = arith.constant 1 : index
    %c0_460 = arith.constant 0 : index
    %c0_461 = arith.constant 0 : index
    %1326 = vector.load %arg22[%c1_459, %c0_460, %c0_461] : memref<2x32x32xf32, #tpu.memory_space<vmem>>, vector<1x32x32xf32>
    %1327 = vector.shape_cast %1326 : vector<1x32x32xf32> to vector<32x32xf32>
    %cst_462 = arith.constant dense<0.000000e+00> : vector<16x32xf32>
    %1328 = tpu.matmul %1325, %1327, %cst_462 {dimension_numbers = #tpu.dot_dimension_numbers<[1], [0], [0], [1], [0, 0, 1, 1], [], []>} : vector<16x32xf32>, vector<32x32xf32>, vector<16x32xf32> -> vector<16x32xf32>
    %c1_463 = arith.constant 1 : index
    %c0_464 = arith.constant 0 : index
    %c0_465 = arith.constant 0 : index
    %1329 = vector.load %arg23[%c1_463, %c0_464, %c0_465] : memref<2x1x32xf32, #tpu.memory_space<vmem>>, vector<1x1x32xf32>
    %1330 = vector.shape_cast %1329 : vector<1x1x32xf32> to vector<1x32xf32>
    %1331 = vector.broadcast %1330 : vector<1x32xf32> to vector<16x32xf32>
    %1332 = arith.addf %1328, %1331 : vector<16x32xf32>
    %c1_466 = arith.constant 1 : index
    %c0_467 = arith.constant 0 : index
    %c0_468 = arith.constant 0 : index
    %1333 = vector.load %arg24[%c1_466, %c0_467, %c0_468] : memref<2x32x64xf32, #tpu.memory_space<vmem>>, vector<1x32x64xf32>
    %1334 = vector.shape_cast %1333 : vector<1x32x64xf32> to vector<32x64xf32>
    %cst_469 = arith.constant dense<0.000000e+00> : vector<16x64xf32>
    %1335 = tpu.matmul %583, %1334, %cst_469 {dimension_numbers = #tpu.dot_dimension_numbers<[1], [0], [0], [1], [0, 0, 1, 1], [], []>} : vector<16x32xf32>, vector<32x64xf32>, vector<16x64xf32> -> vector<16x64xf32>
    %c1_470 = arith.constant 1 : index
    %c0_471 = arith.constant 0 : index
    %c0_472 = arith.constant 0 : index
    %1336 = vector.load %arg25[%c1_470, %c0_471, %c0_472] : memref<2x1x64xf32, #tpu.memory_space<vmem>>, vector<1x1x64xf32>
    %1337 = vector.shape_cast %1336 : vector<1x1x64xf32> to vector<1x64xf32>
    %1338 = vector.broadcast %1337 : vector<1x64xf32> to vector<16x64xf32>
    %1339 = arith.addf %1335, %1338 : vector<16x64xf32>
    %1340 = vector.extract_strided_slice %1339 {offsets = [0, 0], sizes = [16, 32], strides = [1, 1]} : vector<16x64xf32> to vector<16x32xf32>
    %1341 = vector.extract_strided_slice %1339 {offsets = [0, 32], sizes = [16, 32], strides = [1, 1]} : vector<16x64xf32> to vector<16x32xf32>
    %c1_473 = arith.constant 1 : index
    %c0_474 = arith.constant 0 : index
    %c0_475 = arith.constant 0 : index
    %1342 = vector.load %arg26[%c1_473, %c0_474, %c0_475] : memref<2x32x32xf32, #tpu.memory_space<vmem>>, vector<1x32x32xf32>
    %1343 = vector.shape_cast %1342 : vector<1x32x32xf32> to vector<32x32xf32>
    %c1_476 = arith.constant 1 : index
    %c0_477 = arith.constant 0 : index
    %c0_478 = arith.constant 0 : index
    %1344 = vector.load %arg27[%c1_476, %c0_477, %c0_478] : memref<2x1x32xf32, #tpu.memory_space<vmem>>, vector<1x1x32xf32>
    %1345 = vector.shape_cast %1344 : vector<1x1x32xf32> to vector<1x32xf32>
    %1346 = vector.extract_strided_slice %0 {offsets = [0, 0], sizes = [1, 8], strides = [1, 1]} : vector<2x8xf32> to vector<1x8xf32>
    %cst_479 = arith.constant 0.000000e+00 : f32
    %1347 = vector.broadcast %cst_479 : f32 to vector<8x32xf32>
    %1348 = vector.extract_strided_slice %1332 {offsets = [0, 0], sizes = [8, 8], strides = [1, 1]} : vector<16x32xf32> to vector<8x8xf32>
    %1349 = vector.extract_strided_slice %1340 {offsets = [0, 0], sizes = [8, 8], strides = [1, 1]} : vector<16x32xf32> to vector<8x8xf32>
    %1350 = vector.extract_strided_slice %1341 {offsets = [0, 0], sizes = [8, 8], strides = [1, 1]} : vector<16x32xf32> to vector<8x8xf32>
    "tpu.trace_start"() <{level = 10 : i32, message = "qd,kd->qk"}> : () -> ()
    %cst_480 = arith.constant dense<0.000000e+00> : vector<8x8xf32>
    %1351 = tpu.matmul %1348, %1349, %cst_480 {dimension_numbers = #tpu.dot_dimension_numbers<[1], [1], [0], [0], [0, 0, 1, 0], [], []>} : vector<8x8xf32>, vector<8x8xf32>, vector<8x8xf32> -> vector<8x8xf32>
    "tpu.trace_stop"() : () -> ()
    %cst_481 = arith.constant 0.353553385 : f32
    %1352 = vector.broadcast %cst_481 : f32 to vector<8x8xf32>
    %1353 = arith.mulf %1351, %1352 : vector<8x8xf32>
    %1354 = vector.broadcast %1346 : vector<1x8xf32> to vector<8x8xf32>
    %1355 = arith.addf %1353, %1354 : vector<8x8xf32>
    %cst_482 = arith.constant dense<0xFF800000> : vector<8xf32>
    %1356 = vector.multi_reduction <maximumf>, %1355, %cst_482 [1] : vector<8x8xf32> to vector<8xf32>
    %1357 = vector.shape_cast %1356 : vector<8xf32> to vector<8x1xf32>
    %1358 = vector.broadcast %1357 : vector<8x1xf32> to vector<8x8xf32>
    %1359 = arith.subf %1355, %1358 : vector<8x8xf32>
    %1360 = math.exp %1359 : vector<8x8xf32>
    %cst_483 = arith.constant dense<0.000000e+00> : vector<8xf32>
    %1361 = vector.multi_reduction <add>, %1360, %cst_483 [1] : vector<8x8xf32> to vector<8xf32>
    %1362 = vector.shape_cast %1361 : vector<8xf32> to vector<8x1xf32>
    %1363 = tpu.reciprocal %1362 {approx = true} : vector<8x1xf32> -> vector<8x1xf32>
    %1364 = vector.broadcast %1363 : vector<8x1xf32> to vector<8x8xf32>
    %1365 = arith.mulf %1360, %1364 : vector<8x8xf32>
    %cst_484 = arith.constant dense<0.000000e+00> : vector<8x8xf32>
    %1366 = tpu.matmul %1365, %1350, %cst_484 {dimension_numbers = #tpu.dot_dimension_numbers<[1], [0], [0], [1], [0, 0, 1, 1], [], []>} : vector<8x8xf32>, vector<8x8xf32>, vector<8x8xf32> -> vector<8x8xf32>
    %1367 = vector.extract_strided_slice %1343 {offsets = [0, 0], sizes = [8, 32], strides = [1, 1]} : vector<32x32xf32> to vector<8x32xf32>
    %cst_485 = arith.constant dense<0.000000e+00> : vector<8x32xf32>
    %1368 = tpu.matmul %1366, %1367, %cst_485 {dimension_numbers = #tpu.dot_dimension_numbers<[1], [0], [0], [1], [0, 0, 1, 1], [], []>} : vector<8x8xf32>, vector<8x32xf32>, vector<8x32xf32> -> vector<8x32xf32>
    %1369 = arith.addf %1347, %1368 : vector<8x32xf32>
    %1370 = vector.extract_strided_slice %1332 {offsets = [0, 8], sizes = [8, 8], strides = [1, 1]} : vector<16x32xf32> to vector<8x8xf32>
    %1371 = vector.extract_strided_slice %1340 {offsets = [0, 8], sizes = [8, 8], strides = [1, 1]} : vector<16x32xf32> to vector<8x8xf32>
    %1372 = vector.extract_strided_slice %1341 {offsets = [0, 8], sizes = [8, 8], strides = [1, 1]} : vector<16x32xf32> to vector<8x8xf32>
    "tpu.trace_start"() <{level = 10 : i32, message = "qd,kd->qk"}> : () -> ()
    %cst_486 = arith.constant dense<0.000000e+00> : vector<8x8xf32>
    %1373 = tpu.matmul %1370, %1371, %cst_486 {dimension_numbers = #tpu.dot_dimension_numbers<[1], [1], [0], [0], [0, 0, 1, 0], [], []>} : vector<8x8xf32>, vector<8x8xf32>, vector<8x8xf32> -> vector<8x8xf32>
    "tpu.trace_stop"() : () -> ()
    %cst_487 = arith.constant 0.353553385 : f32
    %1374 = vector.broadcast %cst_487 : f32 to vector<8x8xf32>
    %1375 = arith.mulf %1373, %1374 : vector<8x8xf32>
    %1376 = vector.broadcast %1346 : vector<1x8xf32> to vector<8x8xf32>
    %1377 = arith.addf %1375, %1376 : vector<8x8xf32>
    %cst_488 = arith.constant dense<0xFF800000> : vector<8xf32>
    %1378 = vector.multi_reduction <maximumf>, %1377, %cst_488 [1] : vector<8x8xf32> to vector<8xf32>
    %1379 = vector.shape_cast %1378 : vector<8xf32> to vector<8x1xf32>
    %1380 = vector.broadcast %1379 : vector<8x1xf32> to vector<8x8xf32>
    %1381 = arith.subf %1377, %1380 : vector<8x8xf32>
    %1382 = math.exp %1381 : vector<8x8xf32>
    %cst_489 = arith.constant dense<0.000000e+00> : vector<8xf32>
    %1383 = vector.multi_reduction <add>, %1382, %cst_489 [1] : vector<8x8xf32> to vector<8xf32>
    %1384 = vector.shape_cast %1383 : vector<8xf32> to vector<8x1xf32>
    %1385 = tpu.reciprocal %1384 {approx = true} : vector<8x1xf32> -> vector<8x1xf32>
    %1386 = vector.broadcast %1385 : vector<8x1xf32> to vector<8x8xf32>
    %1387 = arith.mulf %1382, %1386 : vector<8x8xf32>
    %cst_490 = arith.constant dense<0.000000e+00> : vector<8x8xf32>
    %1388 = tpu.matmul %1387, %1372, %cst_490 {dimension_numbers = #tpu.dot_dimension_numbers<[1], [0], [0], [1], [0, 0, 1, 1], [], []>} : vector<8x8xf32>, vector<8x8xf32>, vector<8x8xf32> -> vector<8x8xf32>
    %1389 = vector.extract_strided_slice %1343 {offsets = [8, 0], sizes = [8, 32], strides = [1, 1]} : vector<32x32xf32> to vector<8x32xf32>
    %cst_491 = arith.constant dense<0.000000e+00> : vector<8x32xf32>
    %1390 = tpu.matmul %1388, %1389, %cst_491 {dimension_numbers = #tpu.dot_dimension_numbers<[1], [0], [0], [1], [0, 0, 1, 1], [], []>} : vector<8x8xf32>, vector<8x32xf32>, vector<8x32xf32> -> vector<8x32xf32>
    %1391 = arith.addf %1369, %1390 : vector<8x32xf32>
    %1392 = vector.extract_strided_slice %1332 {offsets = [0, 16], sizes = [8, 8], strides = [1, 1]} : vector<16x32xf32> to vector<8x8xf32>
    %1393 = vector.extract_strided_slice %1340 {offsets = [0, 16], sizes = [8, 8], strides = [1, 1]} : vector<16x32xf32> to vector<8x8xf32>
    %1394 = vector.extract_strided_slice %1341 {offsets = [0, 16], sizes = [8, 8], strides = [1, 1]} : vector<16x32xf32> to vector<8x8xf32>
    "tpu.trace_start"() <{level = 10 : i32, message = "qd,kd->qk"}> : () -> ()
    %cst_492 = arith.constant dense<0.000000e+00> : vector<8x8xf32>
    %1395 = tpu.matmul %1392, %1393, %cst_492 {dimension_numbers = #tpu.dot_dimension_numbers<[1], [1], [0], [0], [0, 0, 1, 0], [], []>} : vector<8x8xf32>, vector<8x8xf32>, vector<8x8xf32> -> vector<8x8xf32>
    "tpu.trace_stop"() : () -> ()
    %cst_493 = arith.constant 0.353553385 : f32
    %1396 = vector.broadcast %cst_493 : f32 to vector<8x8xf32>
    %1397 = arith.mulf %1395, %1396 : vector<8x8xf32>
    %1398 = vector.broadcast %1346 : vector<1x8xf32> to vector<8x8xf32>
    %1399 = arith.addf %1397, %1398 : vector<8x8xf32>
    %cst_494 = arith.constant dense<0xFF800000> : vector<8xf32>
    %1400 = vector.multi_reduction <maximumf>, %1399, %cst_494 [1] : vector<8x8xf32> to vector<8xf32>
    %1401 = vector.shape_cast %1400 : vector<8xf32> to vector<8x1xf32>
    %1402 = vector.broadcast %1401 : vector<8x1xf32> to vector<8x8xf32>
    %1403 = arith.subf %1399, %1402 : vector<8x8xf32>
    %1404 = math.exp %1403 : vector<8x8xf32>
    %cst_495 = arith.constant dense<0.000000e+00> : vector<8xf32>
    %1405 = vector.multi_reduction <add>, %1404, %cst_495 [1] : vector<8x8xf32> to vector<8xf32>
    %1406 = vector.shape_cast %1405 : vector<8xf32> to vector<8x1xf32>
    %1407 = tpu.reciprocal %1406 {approx = true} : vector<8x1xf32> -> vector<8x1xf32>
    %1408 = vector.broadcast %1407 : vector<8x1xf32> to vector<8x8xf32>
    %1409 = arith.mulf %1404, %1408 : vector<8x8xf32>
    %cst_496 = arith.constant dense<0.000000e+00> : vector<8x8xf32>
    %1410 = tpu.matmul %1409, %1394, %cst_496 {dimension_numbers = #tpu.dot_dimension_numbers<[1], [0], [0], [1], [0, 0, 1, 1], [], []>} : vector<8x8xf32>, vector<8x8xf32>, vector<8x8xf32> -> vector<8x8xf32>
    %1411 = vector.extract_strided_slice %1343 {offsets = [16, 0], sizes = [8, 32], strides = [1, 1]} : vector<32x32xf32> to vector<8x32xf32>
    %cst_497 = arith.constant dense<0.000000e+00> : vector<8x32xf32>
    %1412 = tpu.matmul %1410, %1411, %cst_497 {dimension_numbers = #tpu.dot_dimension_numbers<[1], [0], [0], [1], [0, 0, 1, 1], [], []>} : vector<8x8xf32>, vector<8x32xf32>, vector<8x32xf32> -> vector<8x32xf32>
    %1413 = arith.addf %1391, %1412 : vector<8x32xf32>
    %1414 = vector.extract_strided_slice %1332 {offsets = [0, 24], sizes = [8, 8], strides = [1, 1]} : vector<16x32xf32> to vector<8x8xf32>
    %1415 = vector.extract_strided_slice %1340 {offsets = [0, 24], sizes = [8, 8], strides = [1, 1]} : vector<16x32xf32> to vector<8x8xf32>
    %1416 = vector.extract_strided_slice %1341 {offsets = [0, 24], sizes = [8, 8], strides = [1, 1]} : vector<16x32xf32> to vector<8x8xf32>
    "tpu.trace_start"() <{level = 10 : i32, message = "qd,kd->qk"}> : () -> ()
    %cst_498 = arith.constant dense<0.000000e+00> : vector<8x8xf32>
    %1417 = tpu.matmul %1414, %1415, %cst_498 {dimension_numbers = #tpu.dot_dimension_numbers<[1], [1], [0], [0], [0, 0, 1, 0], [], []>} : vector<8x8xf32>, vector<8x8xf32>, vector<8x8xf32> -> vector<8x8xf32>
    "tpu.trace_stop"() : () -> ()
    %cst_499 = arith.constant 0.353553385 : f32
    %1418 = vector.broadcast %cst_499 : f32 to vector<8x8xf32>
    %1419 = arith.mulf %1417, %1418 : vector<8x8xf32>
    %1420 = vector.broadcast %1346 : vector<1x8xf32> to vector<8x8xf32>
    %1421 = arith.addf %1419, %1420 : vector<8x8xf32>
    %cst_500 = arith.constant dense<0xFF800000> : vector<8xf32>
    %1422 = vector.multi_reduction <maximumf>, %1421, %cst_500 [1] : vector<8x8xf32> to vector<8xf32>
    %1423 = vector.shape_cast %1422 : vector<8xf32> to vector<8x1xf32>
    %1424 = vector.broadcast %1423 : vector<8x1xf32> to vector<8x8xf32>
    %1425 = arith.subf %1421, %1424 : vector<8x8xf32>
    %1426 = math.exp %1425 : vector<8x8xf32>
    %cst_501 = arith.constant dense<0.000000e+00> : vector<8xf32>
    %1427 = vector.multi_reduction <add>, %1426, %cst_501 [1] : vector<8x8xf32> to vector<8xf32>
    %1428 = vector.shape_cast %1427 : vector<8xf32> to vector<8x1xf32>
    %1429 = tpu.reciprocal %1428 {approx = true} : vector<8x1xf32> -> vector<8x1xf32>
    %1430 = vector.broadcast %1429 : vector<8x1xf32> to vector<8x8xf32>
    %1431 = arith.mulf %1426, %1430 : vector<8x8xf32>
    %cst_502 = arith.constant dense<0.000000e+00> : vector<8x8xf32>
    %1432 = tpu.matmul %1431, %1416, %cst_502 {dimension_numbers = #tpu.dot_dimension_numbers<[1], [0], [0], [1], [0, 0, 1, 1], [], []>} : vector<8x8xf32>, vector<8x8xf32>, vector<8x8xf32> -> vector<8x8xf32>
    %1433 = vector.extract_strided_slice %1343 {offsets = [24, 0], sizes = [8, 32], strides = [1, 1]} : vector<32x32xf32> to vector<8x32xf32>
    %cst_503 = arith.constant dense<0.000000e+00> : vector<8x32xf32>
    %1434 = tpu.matmul %1432, %1433, %cst_503 {dimension_numbers = #tpu.dot_dimension_numbers<[1], [0], [0], [1], [0, 0, 1, 1], [], []>} : vector<8x8xf32>, vector<8x32xf32>, vector<8x32xf32> -> vector<8x32xf32>
    %1435 = arith.addf %1413, %1434 : vector<8x32xf32>
    %1436 = vector.extract_strided_slice %0 {offsets = [1, 0], sizes = [1, 8], strides = [1, 1]} : vector<2x8xf32> to vector<1x8xf32>
    %cst_504 = arith.constant 0.000000e+00 : f32
    %1437 = vector.broadcast %cst_504 : f32 to vector<8x32xf32>
    %1438 = vector.extract_strided_slice %1332 {offsets = [8, 0], sizes = [8, 8], strides = [1, 1]} : vector<16x32xf32> to vector<8x8xf32>
    %1439 = vector.extract_strided_slice %1340 {offsets = [8, 0], sizes = [8, 8], strides = [1, 1]} : vector<16x32xf32> to vector<8x8xf32>
    %1440 = vector.extract_strided_slice %1341 {offsets = [8, 0], sizes = [8, 8], strides = [1, 1]} : vector<16x32xf32> to vector<8x8xf32>
    "tpu.trace_start"() <{level = 10 : i32, message = "qd,kd->qk"}> : () -> ()
    %cst_505 = arith.constant dense<0.000000e+00> : vector<8x8xf32>
    %1441 = tpu.matmul %1438, %1439, %cst_505 {dimension_numbers = #tpu.dot_dimension_numbers<[1], [1], [0], [0], [0, 0, 1, 0], [], []>} : vector<8x8xf32>, vector<8x8xf32>, vector<8x8xf32> -> vector<8x8xf32>
    "tpu.trace_stop"() : () -> ()
    %cst_506 = arith.constant 0.353553385 : f32
    %1442 = vector.broadcast %cst_506 : f32 to vector<8x8xf32>
    %1443 = arith.mulf %1441, %1442 : vector<8x8xf32>
    %1444 = vector.broadcast %1436 : vector<1x8xf32> to vector<8x8xf32>
    %1445 = arith.addf %1443, %1444 : vector<8x8xf32>
    %cst_507 = arith.constant dense<0xFF800000> : vector<8xf32>
    %1446 = vector.multi_reduction <maximumf>, %1445, %cst_507 [1] : vector<8x8xf32> to vector<8xf32>
    %1447 = vector.shape_cast %1446 : vector<8xf32> to vector<8x1xf32>
    %1448 = vector.broadcast %1447 : vector<8x1xf32> to vector<8x8xf32>
    %1449 = arith.subf %1445, %1448 : vector<8x8xf32>
    %1450 = math.exp %1449 : vector<8x8xf32>
    %cst_508 = arith.constant dense<0.000000e+00> : vector<8xf32>
    %1451 = vector.multi_reduction <add>, %1450, %cst_508 [1] : vector<8x8xf32> to vector<8xf32>
    %1452 = vector.shape_cast %1451 : vector<8xf32> to vector<8x1xf32>
    %1453 = tpu.reciprocal %1452 {approx = true} : vector<8x1xf32> -> vector<8x1xf32>
    %1454 = vector.broadcast %1453 : vector<8x1xf32> to vector<8x8xf32>
    %1455 = arith.mulf %1450, %1454 : vector<8x8xf32>
    %cst_509 = arith.constant dense<0.000000e+00> : vector<8x8xf32>
    %1456 = tpu.matmul %1455, %1440, %cst_509 {dimension_numbers = #tpu.dot_dimension_numbers<[1], [0], [0], [1], [0, 0, 1, 1], [], []>} : vector<8x8xf32>, vector<8x8xf32>, vector<8x8xf32> -> vector<8x8xf32>
    %1457 = vector.extract_strided_slice %1343 {offsets = [0, 0], sizes = [8, 32], strides = [1, 1]} : vector<32x32xf32> to vector<8x32xf32>
    %cst_510 = arith.constant dense<0.000000e+00> : vector<8x32xf32>
    %1458 = tpu.matmul %1456, %1457, %cst_510 {dimension_numbers = #tpu.dot_dimension_numbers<[1], [0], [0], [1], [0, 0, 1, 1], [], []>} : vector<8x8xf32>, vector<8x32xf32>, vector<8x32xf32> -> vector<8x32xf32>
    %1459 = arith.addf %1437, %1458 : vector<8x32xf32>
    %1460 = vector.extract_strided_slice %1332 {offsets = [8, 8], sizes = [8, 8], strides = [1, 1]} : vector<16x32xf32> to vector<8x8xf32>
    %1461 = vector.extract_strided_slice %1340 {offsets = [8, 8], sizes = [8, 8], strides = [1, 1]} : vector<16x32xf32> to vector<8x8xf32>
    %1462 = vector.extract_strided_slice %1341 {offsets = [8, 8], sizes = [8, 8], strides = [1, 1]} : vector<16x32xf32> to vector<8x8xf32>
    "tpu.trace_start"() <{level = 10 : i32, message = "qd,kd->qk"}> : () -> ()
    %cst_511 = arith.constant dense<0.000000e+00> : vector<8x8xf32>
    %1463 = tpu.matmul %1460, %1461, %cst_511 {dimension_numbers = #tpu.dot_dimension_numbers<[1], [1], [0], [0], [0, 0, 1, 0], [], []>} : vector<8x8xf32>, vector<8x8xf32>, vector<8x8xf32> -> vector<8x8xf32>
    "tpu.trace_stop"() : () -> ()
    %cst_512 = arith.constant 0.353553385 : f32
    %1464 = vector.broadcast %cst_512 : f32 to vector<8x8xf32>
    %1465 = arith.mulf %1463, %1464 : vector<8x8xf32>
    %1466 = vector.broadcast %1436 : vector<1x8xf32> to vector<8x8xf32>
    %1467 = arith.addf %1465, %1466 : vector<8x8xf32>
    %cst_513 = arith.constant dense<0xFF800000> : vector<8xf32>
    %1468 = vector.multi_reduction <maximumf>, %1467, %cst_513 [1] : vector<8x8xf32> to vector<8xf32>
    %1469 = vector.shape_cast %1468 : vector<8xf32> to vector<8x1xf32>
    %1470 = vector.broadcast %1469 : vector<8x1xf32> to vector<8x8xf32>
    %1471 = arith.subf %1467, %1470 : vector<8x8xf32>
    %1472 = math.exp %1471 : vector<8x8xf32>
    %cst_514 = arith.constant dense<0.000000e+00> : vector<8xf32>
    %1473 = vector.multi_reduction <add>, %1472, %cst_514 [1] : vector<8x8xf32> to vector<8xf32>
    %1474 = vector.shape_cast %1473 : vector<8xf32> to vector<8x1xf32>
    %1475 = tpu.reciprocal %1474 {approx = true} : vector<8x1xf32> -> vector<8x1xf32>
    %1476 = vector.broadcast %1475 : vector<8x1xf32> to vector<8x8xf32>
    %1477 = arith.mulf %1472, %1476 : vector<8x8xf32>
    %cst_515 = arith.constant dense<0.000000e+00> : vector<8x8xf32>
    %1478 = tpu.matmul %1477, %1462, %cst_515 {dimension_numbers = #tpu.dot_dimension_numbers<[1], [0], [0], [1], [0, 0, 1, 1], [], []>} : vector<8x8xf32>, vector<8x8xf32>, vector<8x8xf32> -> vector<8x8xf32>
    %1479 = vector.extract_strided_slice %1343 {offsets = [8, 0], sizes = [8, 32], strides = [1, 1]} : vector<32x32xf32> to vector<8x32xf32>
    %cst_516 = arith.constant dense<0.000000e+00> : vector<8x32xf32>
    %1480 = tpu.matmul %1478, %1479, %cst_516 {dimension_numbers = #tpu.dot_dimension_numbers<[1], [0], [0], [1], [0, 0, 1, 1], [], []>} : vector<8x8xf32>, vector<8x32xf32>, vector<8x32xf32> -> vector<8x32xf32>
    %1481 = arith.addf %1459, %1480 : vector<8x32xf32>
    %1482 = vector.extract_strided_slice %1332 {offsets = [8, 16], sizes = [8, 8], strides = [1, 1]} : vector<16x32xf32> to vector<8x8xf32>
    %1483 = vector.extract_strided_slice %1340 {offsets = [8, 16], sizes = [8, 8], strides = [1, 1]} : vector<16x32xf32> to vector<8x8xf32>
    %1484 = vector.extract_strided_slice %1341 {offsets = [8, 16], sizes = [8, 8], strides = [1, 1]} : vector<16x32xf32> to vector<8x8xf32>
    "tpu.trace_start"() <{level = 10 : i32, message = "qd,kd->qk"}> : () -> ()
    %cst_517 = arith.constant dense<0.000000e+00> : vector<8x8xf32>
    %1485 = tpu.matmul %1482, %1483, %cst_517 {dimension_numbers = #tpu.dot_dimension_numbers<[1], [1], [0], [0], [0, 0, 1, 0], [], []>} : vector<8x8xf32>, vector<8x8xf32>, vector<8x8xf32> -> vector<8x8xf32>
    "tpu.trace_stop"() : () -> ()
    %cst_518 = arith.constant 0.353553385 : f32
    %1486 = vector.broadcast %cst_518 : f32 to vector<8x8xf32>
    %1487 = arith.mulf %1485, %1486 : vector<8x8xf32>
    %1488 = vector.broadcast %1436 : vector<1x8xf32> to vector<8x8xf32>
    %1489 = arith.addf %1487, %1488 : vector<8x8xf32>
    %cst_519 = arith.constant dense<0xFF800000> : vector<8xf32>
    %1490 = vector.multi_reduction <maximumf>, %1489, %cst_519 [1] : vector<8x8xf32> to vector<8xf32>
    %1491 = vector.shape_cast %1490 : vector<8xf32> to vector<8x1xf32>
    %1492 = vector.broadcast %1491 : vector<8x1xf32> to vector<8x8xf32>
    %1493 = arith.subf %1489, %1492 : vector<8x8xf32>
    %1494 = math.exp %1493 : vector<8x8xf32>
    %cst_520 = arith.constant dense<0.000000e+00> : vector<8xf32>
    %1495 = vector.multi_reduction <add>, %1494, %cst_520 [1] : vector<8x8xf32> to vector<8xf32>
    %1496 = vector.shape_cast %1495 : vector<8xf32> to vector<8x1xf32>
    %1497 = tpu.reciprocal %1496 {approx = true} : vector<8x1xf32> -> vector<8x1xf32>
    %1498 = vector.broadcast %1497 : vector<8x1xf32> to vector<8x8xf32>
    %1499 = arith.mulf %1494, %1498 : vector<8x8xf32>
    %cst_521 = arith.constant dense<0.000000e+00> : vector<8x8xf32>
    %1500 = tpu.matmul %1499, %1484, %cst_521 {dimension_numbers = #tpu.dot_dimension_numbers<[1], [0], [0], [1], [0, 0, 1, 1], [], []>} : vector<8x8xf32>, vector<8x8xf32>, vector<8x8xf32> -> vector<8x8xf32>
    %1501 = vector.extract_strided_slice %1343 {offsets = [16, 0], sizes = [8, 32], strides = [1, 1]} : vector<32x32xf32> to vector<8x32xf32>
    %cst_522 = arith.constant dense<0.000000e+00> : vector<8x32xf32>
    %1502 = tpu.matmul %1500, %1501, %cst_522 {dimension_numbers = #tpu.dot_dimension_numbers<[1], [0], [0], [1], [0, 0, 1, 1], [], []>} : vector<8x8xf32>, vector<8x32xf32>, vector<8x32xf32> -> vector<8x32xf32>
    %1503 = arith.addf %1481, %1502 : vector<8x32xf32>
    %1504 = vector.extract_strided_slice %1332 {offsets = [8, 24], sizes = [8, 8], strides = [1, 1]} : vector<16x32xf32> to vector<8x8xf32>
    %1505 = vector.extract_strided_slice %1340 {offsets = [8, 24], sizes = [8, 8], strides = [1, 1]} : vector<16x32xf32> to vector<8x8xf32>
    %1506 = vector.extract_strided_slice %1341 {offsets = [8, 24], sizes = [8, 8], strides = [1, 1]} : vector<16x32xf32> to vector<8x8xf32>
    "tpu.trace_start"() <{level = 10 : i32, message = "qd,kd->qk"}> : () -> ()
    %cst_523 = arith.constant dense<0.000000e+00> : vector<8x8xf32>
    %1507 = tpu.matmul %1504, %1505, %cst_523 {dimension_numbers = #tpu.dot_dimension_numbers<[1], [1], [0], [0], [0, 0, 1, 0], [], []>} : vector<8x8xf32>, vector<8x8xf32>, vector<8x8xf32> -> vector<8x8xf32>
    "tpu.trace_stop"() : () -> ()
    %cst_524 = arith.constant 0.353553385 : f32
    %1508 = vector.broadcast %cst_524 : f32 to vector<8x8xf32>
    %1509 = arith.mulf %1507, %1508 : vector<8x8xf32>
    %1510 = vector.broadcast %1436 : vector<1x8xf32> to vector<8x8xf32>
    %1511 = arith.addf %1509, %1510 : vector<8x8xf32>
    %cst_525 = arith.constant dense<0xFF800000> : vector<8xf32>
    %1512 = vector.multi_reduction <maximumf>, %1511, %cst_525 [1] : vector<8x8xf32> to vector<8xf32>
    %1513 = vector.shape_cast %1512 : vector<8xf32> to vector<8x1xf32>
    %1514 = vector.broadcast %1513 : vector<8x1xf32> to vector<8x8xf32>
    %1515 = arith.subf %1511, %1514 : vector<8x8xf32>
    %1516 = math.exp %1515 : vector<8x8xf32>
    %cst_526 = arith.constant dense<0.000000e+00> : vector<8xf32>
    %1517 = vector.multi_reduction <add>, %1516, %cst_526 [1] : vector<8x8xf32> to vector<8xf32>
    %1518 = vector.shape_cast %1517 : vector<8xf32> to vector<8x1xf32>
    %1519 = tpu.reciprocal %1518 {approx = true} : vector<8x1xf32> -> vector<8x1xf32>
    %1520 = vector.broadcast %1519 : vector<8x1xf32> to vector<8x8xf32>
    %1521 = arith.mulf %1516, %1520 : vector<8x8xf32>
    %cst_527 = arith.constant dense<0.000000e+00> : vector<8x8xf32>
    %1522 = tpu.matmul %1521, %1506, %cst_527 {dimension_numbers = #tpu.dot_dimension_numbers<[1], [0], [0], [1], [0, 0, 1, 1], [], []>} : vector<8x8xf32>, vector<8x8xf32>, vector<8x8xf32> -> vector<8x8xf32>
    %1523 = vector.extract_strided_slice %1343 {offsets = [24, 0], sizes = [8, 32], strides = [1, 1]} : vector<32x32xf32> to vector<8x32xf32>
    %cst_528 = arith.constant dense<0.000000e+00> : vector<8x32xf32>
    %1524 = tpu.matmul %1522, %1523, %cst_528 {dimension_numbers = #tpu.dot_dimension_numbers<[1], [0], [0], [1], [0, 0, 1, 1], [], []>} : vector<8x8xf32>, vector<8x32xf32>, vector<8x32xf32> -> vector<8x32xf32>
    %1525 = arith.addf %1503, %1524 : vector<8x32xf32>
    %1526 = tpu.concatenate %1435, %1525 in 0 : vector<8x32xf32>, vector<8x32xf32> -> vector<16x32xf32>
    %1527 = vector.broadcast %1345 : vector<1x32xf32> to vector<16x32xf32>
    %1528 = arith.addf %1526, %1527 : vector<16x32xf32>
    %1529 = arith.addf %1325, %1528 : vector<16x32xf32>
    %c1_529 = arith.constant 1 : index
    %c0_530 = arith.constant 0 : index
    %c0_531 = arith.constant 0 : index
    %1530 = vector.load %arg28[%c1_529, %c0_530, %c0_531] : memref<2x2x32xf32, #tpu.memory_space<vmem>>, vector<1x2x32xf32>
    %1531 = vector.shape_cast %1530 : vector<1x2x32xf32> to vector<2x32xf32>
    %1532 = vector.extract_strided_slice %1531 {offsets = [0, 0], sizes = [1, 32], strides = [1, 1]} : vector<2x32xf32> to vector<1x32xf32>
    %1533 = vector.extract_strided_slice %1531 {offsets = [1, 0], sizes = [1, 32], strides = [1, 1]} : vector<2x32xf32> to vector<1x32xf32>
    %cst_532 = arith.constant dense<0.000000e+00> : vector<16xf32>
    %1534 = vector.multi_reduction <add>, %1529, %cst_532 [1] : vector<16x32xf32> to vector<16xf32>
    %1535 = vector.shape_cast %1534 : vector<16xf32> to vector<16x1xf32>
    %cst_533 = arith.constant 3.200000e+01 : f32
    %1536 = vector.broadcast %cst_533 : f32 to vector<16x1xf32>
    %1537 = arith.divf %1535, %1536 : vector<16x1xf32>
    %1538 = vector.broadcast %1537 : vector<16x1xf32> to vector<16x32xf32>
    %1539 = arith.subf %1529, %1538 : vector<16x32xf32>
    %1540 = arith.mulf %1539, %1539 : vector<16x32xf32>
    %cst_534 = arith.constant dense<0.000000e+00> : vector<16xf32>
    %1541 = vector.multi_reduction <add>, %1540, %cst_534 [1] : vector<16x32xf32> to vector<16xf32>
    %1542 = vector.shape_cast %1541 : vector<16xf32> to vector<16x1xf32>
    %cst_535 = arith.constant 3.200000e+01 : f32
    %1543 = vector.broadcast %cst_535 : f32 to vector<16x1xf32>
    %1544 = arith.divf %1542, %1543 : vector<16x1xf32>
    %1545 = vector.broadcast %1537 : vector<16x1xf32> to vector<16x32xf32>
    %1546 = arith.subf %1529, %1545 : vector<16x32xf32>
    %cst_536 = arith.constant 9.99999974E-6 : f32
    %1547 = vector.broadcast %cst_536 : f32 to vector<16x1xf32>
    %1548 = arith.addf %1544, %1547 : vector<16x1xf32>
    %1549 = math.rsqrt %1548 : vector<16x1xf32>
    %1550 = vector.broadcast %1549 : vector<16x1xf32> to vector<16x32xf32>
    %1551 = arith.mulf %1546, %1550 : vector<16x32xf32>
    %1552 = vector.broadcast %1532 : vector<1x32xf32> to vector<16x32xf32>
    %1553 = arith.mulf %1551, %1552 : vector<16x32xf32>
    %1554 = vector.broadcast %1533 : vector<1x32xf32> to vector<16x32xf32>
    %1555 = arith.addf %1553, %1554 : vector<16x32xf32>
    %c1_537 = arith.constant 1 : index
    %c0_538 = arith.constant 0 : index
    %c0_539 = arith.constant 0 : index
    %1556 = vector.load %arg29[%c1_537, %c0_538, %c0_539] : memref<2x32x64xf32, #tpu.memory_space<vmem>>, vector<1x32x64xf32>
    %1557 = vector.shape_cast %1556 : vector<1x32x64xf32> to vector<32x64xf32>
    %c1_540 = arith.constant 1 : index
    %c0_541 = arith.constant 0 : index
    %c0_542 = arith.constant 0 : index
    %1558 = vector.load %arg30[%c1_540, %c0_541, %c0_542] : memref<2x1x64xf32, #tpu.memory_space<vmem>>, vector<1x1x64xf32>
    %1559 = vector.shape_cast %1558 : vector<1x1x64xf32> to vector<1x64xf32>
    %c1_543 = arith.constant 1 : index
    %c0_544 = arith.constant 0 : index
    %c0_545 = arith.constant 0 : index
    %1560 = vector.load %arg31[%c1_543, %c0_544, %c0_545] : memref<2x64x32xf32, #tpu.memory_space<vmem>>, vector<1x64x32xf32>
    %1561 = vector.shape_cast %1560 : vector<1x64x32xf32> to vector<64x32xf32>
    %c1_546 = arith.constant 1 : index
    %c0_547 = arith.constant 0 : index
    %c0_548 = arith.constant 0 : index
    %1562 = vector.load %arg32[%c1_546, %c0_547, %c0_548] : memref<2x1x32xf32, #tpu.memory_space<vmem>>, vector<1x1x32xf32>
    %1563 = vector.shape_cast %1562 : vector<1x1x32xf32> to vector<1x32xf32>
    %cst_549 = arith.constant dense<0.000000e+00> : vector<16x64xf32>
    %1564 = tpu.matmul %1555, %1557, %cst_549 {dimension_numbers = #tpu.dot_dimension_numbers<[1], [0], [0], [1], [0, 0, 1, 1], [], []>} : vector<16x32xf32>, vector<32x64xf32>, vector<16x64xf32> -> vector<16x64xf32>
    %1565 = vector.broadcast %1559 : vector<1x64xf32> to vector<16x64xf32>
    %1566 = arith.addf %1564, %1565 : vector<16x64xf32>
    %1567 = arith.mulf %1566, %1566 : vector<16x64xf32>
    %1568 = arith.mulf %1566, %1567 : vector<16x64xf32>
    %cst_550 = arith.constant 4.471500e-02 : f32
    %1569 = vector.broadcast %cst_550 : f32 to vector<16x64xf32>
    %1570 = arith.mulf %1569, %1568 : vector<16x64xf32>
    %1571 = arith.addf %1566, %1570 : vector<16x64xf32>
    %cst_551 = arith.constant 0.797884583 : f32
    %1572 = vector.broadcast %cst_551 : f32 to vector<16x64xf32>
    %1573 = arith.mulf %1572, %1571 : vector<16x64xf32>
    %1574 = math.tanh %1573 : vector<16x64xf32>
    %cst_552 = arith.constant 1.000000e+00 : f32
    %1575 = vector.broadcast %cst_552 : f32 to vector<16x64xf32>
    %1576 = arith.addf %1575, %1574 : vector<16x64xf32>
    %cst_553 = arith.constant 5.000000e-01 : f32
    %1577 = vector.broadcast %cst_553 : f32 to vector<16x64xf32>
    %1578 = arith.mulf %1577, %1576 : vector<16x64xf32>
    %1579 = arith.mulf %1566, %1578 : vector<16x64xf32>
    %cst_554 = arith.constant dense<0.000000e+00> : vector<16x32xf32>
    %1580 = tpu.matmul %1579, %1561, %cst_554 {dimension_numbers = #tpu.dot_dimension_numbers<[1], [0], [0], [1], [0, 0, 1, 1], [], []>} : vector<16x64xf32>, vector<64x32xf32>, vector<16x32xf32> -> vector<16x32xf32>
    %1581 = vector.broadcast %1563 : vector<1x32xf32> to vector<16x32xf32>
    %1582 = arith.addf %1580, %1581 : vector<16x32xf32>
    %1583 = arith.addf %1555, %1582 : vector<16x32xf32>
    %c1_555 = arith.constant 1 : index
    %c0_556 = arith.constant 0 : index
    %c0_557 = arith.constant 0 : index
    %1584 = vector.load %arg33[%c1_555, %c0_556, %c0_557] : memref<2x2x32xf32, #tpu.memory_space<vmem>>, vector<1x2x32xf32>
    %1585 = vector.shape_cast %1584 : vector<1x2x32xf32> to vector<2x32xf32>
    %1586 = vector.extract_strided_slice %1585 {offsets = [0, 0], sizes = [1, 32], strides = [1, 1]} : vector<2x32xf32> to vector<1x32xf32>
    %1587 = vector.extract_strided_slice %1585 {offsets = [1, 0], sizes = [1, 32], strides = [1, 1]} : vector<2x32xf32> to vector<1x32xf32>
    %cst_558 = arith.constant dense<0.000000e+00> : vector<16xf32>
    %1588 = vector.multi_reduction <add>, %1583, %cst_558 [1] : vector<16x32xf32> to vector<16xf32>
    %1589 = vector.shape_cast %1588 : vector<16xf32> to vector<16x1xf32>
    %cst_559 = arith.constant 3.200000e+01 : f32
    %1590 = vector.broadcast %cst_559 : f32 to vector<16x1xf32>
    %1591 = arith.divf %1589, %1590 : vector<16x1xf32>
    %1592 = vector.broadcast %1591 : vector<16x1xf32> to vector<16x32xf32>
    %1593 = arith.subf %1583, %1592 : vector<16x32xf32>
    %1594 = arith.mulf %1593, %1593 : vector<16x32xf32>
    %cst_560 = arith.constant dense<0.000000e+00> : vector<16xf32>
    %1595 = vector.multi_reduction <add>, %1594, %cst_560 [1] : vector<16x32xf32> to vector<16xf32>
    %1596 = vector.shape_cast %1595 : vector<16xf32> to vector<16x1xf32>
    %cst_561 = arith.constant 3.200000e+01 : f32
    %1597 = vector.broadcast %cst_561 : f32 to vector<16x1xf32>
    %1598 = arith.divf %1596, %1597 : vector<16x1xf32>
    %1599 = vector.broadcast %1591 : vector<16x1xf32> to vector<16x32xf32>
    %1600 = arith.subf %1583, %1599 : vector<16x32xf32>
    %cst_562 = arith.constant 9.99999974E-6 : f32
    %1601 = vector.broadcast %cst_562 : f32 to vector<16x1xf32>
    %1602 = arith.addf %1598, %1601 : vector<16x1xf32>
    %1603 = math.rsqrt %1602 : vector<16x1xf32>
    %1604 = vector.broadcast %1603 : vector<16x1xf32> to vector<16x32xf32>
    %1605 = arith.mulf %1600, %1604 : vector<16x32xf32>
    %1606 = vector.broadcast %1586 : vector<1x32xf32> to vector<16x32xf32>
    %1607 = arith.mulf %1605, %1606 : vector<16x32xf32>
    %1608 = vector.broadcast %1587 : vector<1x32xf32> to vector<16x32xf32>
    %1609 = arith.addf %1607, %1608 : vector<16x32xf32>
    %c0_563 = arith.constant 0 : index
    %c0_564 = arith.constant 0 : index
    %1610 = vector.load %arg4[%c0_563, %c0_564] : memref<2x16xf32, #tpu.memory_space<vmem>>, vector<2x16xf32>
    %cst_565 = arith.constant dense<0.000000e+00> : vector<2x32xf32>
    %1611 = tpu.matmul %1610, %1609, %cst_565 {dimension_numbers = #tpu.dot_dimension_numbers<[1], [0], [0], [1], [0, 0, 1, 1], [], []>} : vector<2x16xf32>, vector<16x32xf32>, vector<2x32xf32> -> vector<2x32xf32>
    %c0_566 = arith.constant 0 : index
    %c0_567 = arith.constant 0 : index
    %1612 = vector.load %arg34[%c0_566, %c0_567] : memref<32x32xf32, #tpu.memory_space<vmem>>, vector<32x32xf32>
    %cst_568 = arith.constant dense<0.000000e+00> : vector<2x32xf32>
    %1613 = tpu.matmul %1611, %1612, %cst_568 {dimension_numbers = #tpu.dot_dimension_numbers<[1], [0], [0], [1], [0, 0, 1, 1], [], []>} : vector<2x32xf32>, vector<32x32xf32>, vector<2x32xf32> -> vector<2x32xf32>
    %c0_569 = arith.constant 0 : index
    %c0_570 = arith.constant 0 : index
    %1614 = vector.load %arg35[%c0_569, %c0_570] : memref<1x32xf32, #tpu.memory_space<vmem>>, vector<1x32xf32>
    %1615 = vector.broadcast %1614 : vector<1x32xf32> to vector<2x32xf32>
    %1616 = arith.addf %1613, %1615 : vector<2x32xf32>
    %1617 = math.tanh %1616 : vector<2x32xf32>
    %c0_571 = arith.constant 0 : index
    %c0_572 = arith.constant 0 : index
    %1618 = vector.load %arg36[%c0_571, %c0_572] : memref<32x128xf32, #tpu.memory_space<vmem>>, vector<32x128xf32>
    %cst_573 = arith.constant dense<0.000000e+00> : vector<2x128xf32>
    %1619 = tpu.matmul %1617, %1618, %cst_573 {dimension_numbers = #tpu.dot_dimension_numbers<[1], [0], [0], [1], [0, 0, 1, 1], [], []>} : vector<2x32xf32>, vector<32x128xf32>, vector<2x128xf32> -> vector<2x128xf32>
    %c0_574 = arith.constant 0 : index
    %c0_575 = arith.constant 0 : index
    %1620 = vector.load %arg37[%c0_574, %c0_575] : memref<1x128xf32, #tpu.memory_space<vmem>>, vector<1x128xf32>
    %1621 = vector.broadcast %1620 : vector<1x128xf32> to vector<2x128xf32>
    %1622 = arith.addf %1619, %1621 : vector<2x128xf32>
    %c0_576 = arith.constant 0 : index
    %c0_577 = arith.constant 0 : index
    %1623 = vector.load %arg38[%c0_576, %c0_577] : memref<2x128xf32, #tpu.memory_space<vmem>>, vector<2x128xf32>
    tpu.vector_store %arg38[%c0_576, %c0_577], %1622 {strides = array<i32>} : memref<2x128xf32, #tpu.memory_space<vmem>>, vector<2x128xf32>,
    return
  }
}

</mosaic_0001>

<llo_original>
// kernel: bart_classify.1
$region0: #{bart_classify.1}
  #allocation0 [shape = 'u32[]', space=smem, size = 0x4, offset = 0x4, fixed_abs, tag = 'smem constant byte address 0x4 - core index']
  #allocation1 [shape = 'u32[72,128]{1,0:T(1,128)}', space=vmem, size = 0x9000, scoped, tag = 'internal scratch']
  %s0 = inlined_call_operand.smem [shape: u32[39], index: -1, kind: input, shape index: {}]
  %s1 = sld [smem:[%s0]]
  %s2 = scalar_lea.smem %s0, 1
  %s3 = sld [smem:[%s2]]
  %s4 = scalar_lea.smem %s0, 2
  %s5 = sld [smem:[%s4]]
  %s6 = scalar_lea.smem %s0, 3
  %s7 = sld [smem:[%s6]]
  %s8 = scalar_lea.smem %s0, 4
  %s9 = sld [smem:[%s8]]
  %s10 = scalar_lea.smem %s0, 5
  %s11 = sld [smem:[%s10]]
  %s12 = scalar_lea.smem %s0, 6
  %s13 = sld [smem:[%s12]]
  %s14 = scalar_lea.smem %s0, 7
  %s15 = sld [smem:[%s14]]
  %s16 = scalar_lea.smem %s0, 8
  %s17 = sld [smem:[%s16]]
  %s18 = scalar_lea.smem %s0, 9
  %s19 = sld [smem:[%s18]]
  %s20 = scalar_lea.smem %s0, 10
  %s21 = sld [smem:[%s20]]
  %s22 = scalar_lea.smem %s0, 11
  %s23 = sld [smem:[%s22]]
  %s24 = scalar_lea.smem %s0, 12
  %s25 = sld [smem:[%s24]]
  %s26 = scalar_lea.smem %s0, 13
  %s27 = sld [smem:[%s26]]
  %s28 = scalar_lea.smem %s0, 14
  %s29 = sld [smem:[%s28]]
  %s30 = scalar_lea.smem %s0, 15
  %s31 = sld [smem:[%s30]]
  %s32 = scalar_lea.smem %s0, 16
  %s33 = sld [smem:[%s32]]
  %s34 = scalar_lea.smem %s0, 17
  %s35 = sld [smem:[%s34]]
  %s36 = scalar_lea.smem %s0, 18
  %s37 = sld [smem:[%s36]]
  %s38 = scalar_lea.smem %s0, 19
  %s39 = sld [smem:[%s38]]
  %s40 = scalar_lea.smem %s0, 20
  %s41 = sld [smem:[%s40]]
  %s42 = scalar_lea.smem %s0, 21
  %s43 = sld [smem:[%s42]]
  %s44 = scalar_lea.smem %s0, 22
  %s45 = sld [smem:[%s44]]
  %s46 = scalar_lea.smem %s0, 23
  %s47 = sld [smem:[%s46]]
  %s48 = scalar_lea.smem %s0, 24
  %s49 = sld [smem:[%s48]]
  %s50 = scalar_lea.smem %s0, 25
  %s51 = sld [smem:[%s50]]
  %s52 = scalar_lea.smem %s0, 26
  %s53 = sld [smem:[%s52]]
  %s54 = scalar_lea.smem %s0, 27
  %s55 = sld [smem:[%s54]]
  %s56 = scalar_lea.smem %s0, 28
  %s57 = sld [smem:[%s56]]
  %s58 = scalar_lea.smem %s0, 29
  %s59 = sld [smem:[%s58]]
  %s60 = scalar_lea.smem %s0, 30
  %s61 = sld [smem:[%s60]]
  %s62 = scalar_lea.smem %s0, 31
  %s63 = sld [smem:[%s62]]
  %s64 = scalar_lea.smem %s0, 32
  %s65 = sld [smem:[%s64]]
  %s66 = scalar_lea.smem %s0, 33
  %s67 = sld [smem:[%s66]]
  %s68 = scalar_lea.smem %s0, 34
  %s69 = sld [smem:[%s68]]
  %s70 = scalar_lea.smem %s0, 35
  %s71 = sld [smem:[%s70]]
  %s72 = scalar_lea.smem %s0, 36
  %s73 = sld [smem:[%s72]]
  %s74 = scalar_lea.smem %s0, 37
  %s75 = sld [smem:[%s74]]
  %s76 = scalar_lea.smem %s0, 38
  %s77 = sld [smem:[%s76]]
  %s78 = sld [smem:[#allocation0]]
  $region162: #{bart_classify.1} parent=0
    _
  %s80 = ssub.s32 1, %s78
  %s81 = scalar_select 0, %s80, %s78
  $region1: #{bart_classify.1} parent=0
    #allocation2 [shape = 'u8[1024]{0}', space=vmem, size = 0x400, scoped, tag = 'output window, operand 0, single buffered']
    #allocation3 [shape = 's32[1]{0}', space=sflag, size = 0x4, scoped, tag = 'scoped memory for bart_classify.1']
    %82 = vsyncpa [#allocation3], 0
    // Predicated region
    $region2: #{bart_classify.1} parent=1 // pred_check
      _
    $region3: #{bart_classify.1} parent=1 // pred_check_branch
      %84 = sbr.rel (0) target = $region5
    $region4: #{bart_classify.1} parent=1 // pred_region
      _
    $region5: #{bart_classify.1} parent=1 // pred_fallthru
      _
    // Predicated region
    $region6: #{bart_classify.1} parent=1 // pred_check
      _
    $region7: #{bart_classify.1} parent=1 // pred_check_branch
      %86 = sbr.rel (0) target = $region9
    $region8: #{bart_classify.1} parent=1 // pred_region
      _
    $region9: #{bart_classify.1} parent=1 // pred_fallthru
      _
    // Predicated region
    $region10: #{bart_classify.1} parent=1 // pred_check
      _
    $region11: #{bart_classify.1} parent=1 // pred_check_branch
      %88 = sbr.rel (0) target = $region13
    $region12: #{bart_classify.1} parent=1 // pred_region
      _
    $region13: #{bart_classify.1} parent=1 // pred_fallthru
      _
    // Predicated region
    $region14: #{bart_classify.1} parent=1 // pred_check
      _
    $region15: #{bart_classify.1} parent=1 // pred_check_branch
      %90 = sbr.rel (0) target = $region17
    $region16: #{bart_classify.1} parent=1 // pred_region
      _
    $region17: #{bart_classify.1} parent=1 // pred_fallthru
      _
    // Predicated region
    $region18: #{bart_classify.1} parent=1 // pred_check
      _
    $region19: #{bart_classify.1} parent=1 // pred_check_branch
      %92 = sbr.rel (0) target = $region21
    $region20: #{bart_classify.1} parent=1 // pred_region
      _
    $region21: #{bart_classify.1} parent=1 // pred_fallthru
      _
    // Predicated region
    $region22: #{bart_classify.1} parent=1 // pred_check
      _
    $region23: #{bart_classify.1} parent=1 // pred_check_branch
      %94 = sbr.rel (0) target = $region25
    $region24: #{bart_classify.1} parent=1 // pred_region
      _
    $region25: #{bart_classify.1} parent=1 // pred_fallthru
      _
    // Predicated region
    $region26: #{bart_classify.1} parent=1 // pred_check
      _
    $region27: #{bart_classify.1} parent=1 // pred_check_branch
      %96 = sbr.rel (0) target = $region29
    $region28: #{bart_classify.1} parent=1 // pred_region
      _
    $region29: #{bart_classify.1} parent=1 // pred_fallthru
      _
    // Predicated region
    $region30: #{bart_classify.1} parent=1 // pred_check
      _
    $region31: #{bart_classify.1} parent=1 // pred_check_branch
      %98 = sbr.rel (0) target = $region33
    $region32: #{bart_classify.1} parent=1 // pred_region
      _
    $region33: #{bart_classify.1} parent=1 // pred_fallthru
      _
    // Predicated region
    $region34: #{bart_classify.1} parent=1 // pred_check
      _
    $region35: #{bart_classify.1} parent=1 // pred_check_branch
      %100 = sbr.rel (0) target = $region37
    $region36: #{bart_classify.1} parent=1 // pred_region
      _
    $region37: #{bart_classify.1} parent=1 // pred_fallthru
      _
    // Predicated region
    $region38: #{bart_classify.1} parent=1 // pred_check
      _
    $region39: #{bart_classify.1} parent=1 // pred_check_branch
      %102 = sbr.rel (0) target = $region41
    $region40: #{bart_classify.1} parent=1 // pred_region
      _
    $region41: #{bart_classify.1} parent=1 // pred_fallthru
      _
    // Predicated region
    $region42: #{bart_classify.1} parent=1 // pred_check
      _
    $region43: #{bart_classify.1} parent=1 // pred_check_branch
      %104 = sbr.rel (0) target = $region45
    $region44: #{bart_classify.1} parent=1 // pred_region
      _
    $region45: #{bart_classify.1} parent=1 // pred_fallthru
      _
    // Predicated region
    $region46: #{bart_classify.1} parent=1 // pred_check
      _
    $region47: #{bart_classify.1} parent=1 // pred_check_branch
      %106 = sbr.rel (0) target = $region49
    $region48: #{bart_classify.1} parent=1 // pred_region
      _
    $region49: #{bart_classify.1} parent=1 // pred_fallthru
      _
    // Predicated region
    $region50: #{bart_classify.1} parent=1 // pred_check
      _
    $region51: #{bart_classify.1} parent=1 // pred_check_branch
      %108 = sbr.rel (0) target = $region53
    $region52: #{bart_classify.1} parent=1 // pred_region
      _
    $region53: #{bart_classify.1} parent=1 // pred_fallthru
      _
    // Predicated region
    $region54: #{bart_classify.1} parent=1 // pred_check
      _
    $region55: #{bart_classify.1} parent=1 // pred_check_branch
      %110 = sbr.rel (0) target = $region57
    $region56: #{bart_classify.1} parent=1 // pred_region
      _
    $region57: #{bart_classify.1} parent=1 // pred_fallthru
      _
    // Predicated region
    $region58: #{bart_classify.1} parent=1 // pred_check
      _
    $region59: #{bart_classify.1} parent=1 // pred_check_branch
      %112 = sbr.rel (0) target = $region61
    $region60: #{bart_classify.1} parent=1 // pred_region
      _
    $region61: #{bart_classify.1} parent=1 // pred_fallthru
      _
    // Predicated region
    $region62: #{bart_classify.1} parent=1 // pred_check
      _
    $region63: #{bart_classify.1} parent=1 // pred_check_branch
      %114 = sbr.rel (0) target = $region65
    $region64: #{bart_classify.1} parent=1 // pred_region
      _
    $region65: #{bart_classify.1} parent=1 // pred_fallthru
      _
    // Predicated region
    $region66: #{bart_classify.1} parent=1 // pred_check
      _
    $region67: #{bart_classify.1} parent=1 // pred_check_branch
      %116 = sbr.rel (0) target = $region69
    $region68: #{bart_classify.1} parent=1 // pred_region
      _
    $region69: #{bart_classify.1} parent=1 // pred_fallthru
      _
    // Predicated region
    $region70: #{bart_classify.1} parent=1 // pred_check
      _
    $region71: #{bart_classify.1} parent=1 // pred_check_branch
      %118 = sbr.rel (0) target = $region73
    $region72: #{bart_classify.1} parent=1 // pred_region
      _
    $region73: #{bart_classify.1} parent=1 // pred_fallthru
      _
    // Predicated region
    $region74: #{bart_classify.1} parent=1 // pred_check
      _
    $region75: #{bart_classify.1} parent=1 // pred_check_branch
      %120 = sbr.rel (0) target = $region77
    $region76: #{bart_classify.1} parent=1 // pred_region
      _
    $region77: #{bart_classify.1} parent=1 // pred_fallthru
      _
    // Predicated region
    $region78: #{bart_classify.1} parent=1 // pred_check
      _
    $region79: #{bart_classify.1} parent=1 // pred_check_branch
      %122 = sbr.rel (0) target = $region81
    $region80: #{bart_classify.1} parent=1 // pred_region
      _
    $region81: #{bart_classify.1} parent=1 // pred_fallthru
      _
    // Predicated region
    $region82: #{bart_classify.1} parent=1 // pred_check
      _
    $region83: #{bart_classify.1} parent=1 // pred_check_branch
      %124 = sbr.rel (0) target = $region85
    $region84: #{bart_classify.1} parent=1 // pred_region
      _
    $region85: #{bart_classify.1} parent=1 // pred_fallthru
      _
    // Predicated region
    $region86: #{bart_classify.1} parent=1 // pred_check
      _
    $region87: #{bart_classify.1} parent=1 // pred_check_branch
      %126 = sbr.rel (0) target = $region89
    $region88: #{bart_classify.1} parent=1 // pred_region
      _
    $region89: #{bart_classify.1} parent=1 // pred_fallthru
      _
    // Predicated region
    $region90: #{bart_classify.1} parent=1 // pred_check
      _
    $region91: #{bart_classify.1} parent=1 // pred_check_branch
      %128 = sbr.rel (0) target = $region93
    $region92: #{bart_classify.1} parent=1 // pred_region
      _
    $region93: #{bart_classify.1} parent=1 // pred_fallthru
      _
    // Predicated region
    $region94: #{bart_classify.1} parent=1 // pred_check
      _
    $region95: #{bart_classify.1} parent=1 // pred_check_branch
      %130 = sbr.rel (0) target = $region97
    $region96: #{bart_classify.1} parent=1 // pred_region
      _
    $region97: #{bart_classify.1} parent=1 // pred_fallthru
      _
    // Predicated region
    $region98: #{bart_classify.1} parent=1 // pred_check
      _
    $region99: #{bart_classify.1} parent=1 // pred_check_branch
      %132 = sbr.rel (0) target = $region101
    $region100: #{bart_classify.1} parent=1 // pred_region
      _
    $region101: #{bart_classify.1} parent=1 // pred_fallthru
      _
    // Predicated region
    $region102: #{bart_classify.1} parent=1 // pred_check
      _
    $region103: #{bart_classify.1} parent=1 // pred_check_branch
      %134 = sbr.rel (0) target = $region105
    $region104: #{bart_classify.1} parent=1 // pred_region
      _
    $region105: #{bart_classify.1} parent=1 // pred_fallthru
      _
    // Predicated region
    $region106: #{bart_classify.1} parent=1 // pred_check
      _
    $region107: #{bart_classify.1} parent=1 // pred_check_branch
      %136 = sbr.rel (0) target = $region109
    $region108: #{bart_classify.1} parent=1 // pred_region
      _
    $region109: #{bart_classify.1} parent=1 // pred_fallthru
      _
    // Predicated region
    $region110: #{bart_classify.1} parent=1 // pred_check
      _
    $region111: #{bart_classify.1} parent=1 // pred_check_branch
      %138 = sbr.rel (0) target = $region113
    $region112: #{bart_classify.1} parent=1 // pred_region
      _
    $region113: #{bart_classify.1} parent=1 // pred_fallthru
      _
    // Predicated region
    $region114: #{bart_classify.1} parent=1 // pred_check
      _
    $region115: #{bart_classify.1} parent=1 // pred_check_branch
      %140 = sbr.rel (0) target = $region117
    $region116: #{bart_classify.1} parent=1 // pred_region
      _
    $region117: #{bart_classify.1} parent=1 // pred_fallthru
      _
    // Predicated region
    $region118: #{bart_classify.1} parent=1 // pred_check
      _
    $region119: #{bart_classify.1} parent=1 // pred_check_branch
      %142 = sbr.rel (0) target = $region121
    $region120: #{bart_classify.1} parent=1 // pred_region
      _
    $region121: #{bart_classify.1} parent=1 // pred_fallthru
      _
    // Predicated region
    $region122: #{bart_classify.1} parent=1 // pred_check
      _
    $region123: #{bart_classify.1} parent=1 // pred_check_branch
      %144 = sbr.rel (0) target = $region125
    $region124: #{bart_classify.1} parent=1 // pred_region
      _
    $region125: #{bart_classify.1} parent=1 // pred_fallthru
      _
    // Predicated region
    $region126: #{bart_classify.1} parent=1 // pred_check
      _
    $region127: #{bart_classify.1} parent=1 // pred_check_branch
      %146 = sbr.rel (0) target = $region129
    $region128: #{bart_classify.1} parent=1 // pred_region
      _
    $region129: #{bart_classify.1} parent=1 // pred_fallthru
      _
    // Predicated region
    $region130: #{bart_classify.1} parent=1 // pred_check
      _
    $region131: #{bart_classify.1} parent=1 // pred_check_branch
      %148 = sbr.rel (0) target = $region133
    $region132: #{bart_classify.1} parent=1 // pred_region
      _
    $region133: #{bart_classify.1} parent=1 // pred_fallthru
      _
    // Predicated region
    $region134: #{bart_classify.1} parent=1 // pred_check
      _
    $region135: #{bart_classify.1} parent=1 // pred_check_branch
      %150 = sbr.rel (0) target = $region137
    $region136: #{bart_classify.1} parent=1 // pred_region
      _
    $region137: #{bart_classify.1} parent=1 // pred_fallthru
      _
    // Predicated region
    $region138: #{bart_classify.1} parent=1 // pred_check
      _
    $region139: #{bart_classify.1} parent=1 // pred_check_branch
      %152 = sbr.rel (0) target = $region141
    $region140: #{bart_classify.1} parent=1 // pred_region
      _
    $region141: #{bart_classify.1} parent=1 // pred_fallthru
      _
    // Predicated region
    $region142: #{bart_classify.1} parent=1 // pred_check
      _
    $region143: #{bart_classify.1} parent=1 // pred_check_branch
      %154 = sbr.rel (0) target = $region145
    $region144: #{bart_classify.1} parent=1 // pred_region
      _
    $region145: #{bart_classify.1} parent=1 // pred_fallthru
      _
    // Predicated region
    $region146: #{bart_classify.1} parent=1 // pred_check
      _
    $region147: #{bart_classify.1} parent=1 // pred_check_branch
      %156 = sbr.rel (0) target = $region149
    $region148: #{bart_classify.1} parent=1 // pred_region
      _
    $region149: #{bart_classify.1} parent=1 // pred_fallthru
      _
    // Predicated region
    $region150: #{bart_classify.1} parent=1 // pred_check
      _
    $region151: #{bart_classify.1} parent=1 // pred_check_branch
      %158 = sbr.rel (0) target = $region153
    $region152: #{bart_classify.1} parent=1 // pred_region
      _
    $region153: #{bart_classify.1} parent=1 // pred_fallthru
      _
    %v159 = vld [vmem:[%s5] sm:$0x3]
    %v160 = vld [vmem:[%s7] sm:$0xff]
    %v161 = vld [vmem:[%s7 + $0x8] sm:$0xff]
    %v162 = vld [vmem:[%s1] sm:$0xff]
    %v163 = vld [vmem:[%s1 + $0x8] sm:$0xff]
    %v164 = vld [vmem:[%s11] sm:$0x3]
    %vm165 = vcmask 261120
    %v166 = vsel %vm165, %v162, 0.0
    %167 = vadd.xlane.f32.xlu0 %v166
    %v168 = vpop.xlane.xlu0 %167
    %v169 = vsel %vm165, %v163, 0.0
    %170 = vadd.xlane.f32.xlu0 %v169
    %v171 = vpop.xlane.xlu0 %170
    %v172 = vrcp.pop 32.0
    %v173 = vmul.f32 32.0, %v172
    %v174 = vsub.f32 1.0, %v173
    %v175 = vmul.f32 %v172, %v174
    %v176 = vadd.f32 %v172, %v175
    %vm177 = vweird.f32 %v172
    %v178 = vsel %vm177, %v172, %v176
    %v179 = vmul.f32 %v168, %v178
    %v180 = vmul.f32 %v171, %v178
    %v181 = vsub.f32 %v162, %v179
    %v182 = vsub.f32 %v163, %v180
    %v183 = vmul.f32 %v181, %v181
    %v184 = vmul.f32 %v182, %v182
    %v185 = vsel %vm165, %v183, 0.0
    %186 = vadd.xlane.f32.xlu0 %v185
    %v187 = vpop.xlane.xlu0 %186
    %v188 = vsel %vm165, %v184, 0.0
    %189 = vadd.xlane.f32.xlu0 %v188
    %v190 = vpop.xlane.xlu0 %189
    %v191 = vmul.f32 %v187, %v178
    %v192 = vmul.f32 %v190, %v178
    %v193 = vadd.f32 %v191, 1e-05
    %v194 = vadd.f32 %v192, 1e-05
    %v195 = vrsqrt.pop %v193
    %v196 = vmul.f32 %v195, %v193
    %v197 = vmul.f32 %v196, %v195
    %v198 = vmul.f32 0.5, %v197
    %v199 = vsub.f32 1.5, %v198
    %v200 = vmul.f32 %v195, %v199
    %vm201 = vweird.f32 %v193
    %vm202 = vweird.f32 %v195
    %vm203 = vmor %vm201, %vm202
    %v204 = vsel %vm203, %v195, %v200
    %v205 = vrsqrt.pop %v194
    %v206 = vmul.f32 %v205, %v194
    %v207 = vmul.f32 %v206, %v205
    %v208 = vmul.f32 0.5, %v207
    %v209 = vsub.f32 1.5, %v208
    %v210 = vmul.f32 %v205, %v209
    %vm211 = vweird.f32 %v194
    %vm212 = vweird.f32 %v205
    %vm213 = vmor %vm211, %vm212
    %v214 = vsel %vm213, %v205, %v210
    %v215 = vmul.f32 %v181, %v204
    %v216 = vmul.f32 %v182, %v214
    %v217 = vperm.slane %v164, 0
    %v218 = vmul.f32 %v215, %v217
    %v219 = vmul.f32 %v216, %v217
    %v220 = vperm.slane %v164, 1
    %v221 = vadd.f32 %v218, %v220
    %v222 = vadd.f32 %v219, %v220
    %v223 = vld [vmem:[%s15] sm:$0xff]
    %v224 = vld [vmem:[%s15 + $0x8] sm:$0xff]
    %v225 = vld [vmem:[%s15 + $0x10] sm:$0xff]
    %v226 = vld [vmem:[%s15 + $0x18] sm:$0xff]
    %v227 = vld [vmem:[%s17] sm:$0x1]
    %v229 = vperm.slane %v227, 0
    %v232 = vsel %vm165, %v221, 0
    %v235 = vsel %vm165, %v222, 0
    %237 = vmatpush.msra.mxu0 0.0
    %238 = vmatpush.msra.mxu0 0.0
    %239 = vmatpush.msra.mxu0 0.0
    %240 = vmatpush.msra.mxu0 0.0
    %241 = vmatpush.msra.mxu0 0.0
    %242 = vmatpush.msra.mxu0 0.0
    %243 = vmatpush.msra.mxu0 0.0
    %244 = vmatpush.msra.mxu0 0.0
    %245 = vmatpush.msra.mxu0 0.0
    %246 = vmatpush.msra.mxu0 0.0
    %247 = vmatpush.msra.mxu0 0.0
    %248 = vmatpush.msra.mxu0 0.0
    %249 = vmatpush.msra.mxu0 %v226
    %250 = vmatpush.msra.mxu0 %v225
    %251 = vmatpush.msra.mxu0 %v224
    %252 = vmatpush.msra.mxu0 %v223
    %253 = vmatmul.f32.gmra.mxu0 %v232
    %v254 = vpop.f32.mrf.mxu0
    %v255 = vadd.f32 %v229, %v254
    %256 = vmatmul.f32.gmra.mxu0 %v235
    %v257 = vpop.f32.mrf.mxu0
    %v258 = vadd.f32 %v229, %v257
    %259 = vdwg.mxu0
    %v260 = vld [vmem:[%s19] sm:$0xff]
    %v261 = vld [vmem:[%s19 + $0x8] sm:$0xff]
    %v262 = vld [vmem:[%s19 + $0x10] sm:$0xff]
    %v263 = vld [vmem:[%s19 + $0x18] sm:$0xff]
    %v264 = vld [vmem:[%s21] sm:$0x1]
    %266 = vrot.lane.b32.xlu0 %v255, 96
    %v267 = vpop.permute.xlu0 %266
    %vm268 = vcmask 64512
    %v269 = vsel %vm268, %v255, 0
    %v271 = vsel %vm268, %v267, 0
    %273 = vmatpush.xpose.msra.mxu0 0.0
    %274 = vmatpush.xpose.msra.mxu0 0.0
    %275 = vmatpush.xpose.msra.mxu0 0.0
    %276 = vmatpush.xpose.msra.mxu0 0.0
    %277 = vmatpush.xpose.msra.mxu0 0.0
    %278 = vmatpush.xpose.msra.mxu0 0.0
    %279 = vmatpush.xpose.msra.mxu0 0.0
    %280 = vmatpush.xpose.msra.mxu0 0.0
    %281 = vmatpush.xpose.msra.mxu0 0.0
    %282 = vmatpush.xpose.msra.mxu0 0.0
    %283 = vmatpush.xpose.msra.mxu0 0.0
    %284 = vmatpush.xpose.msra.mxu0 0.0
    %285 = vmatpush.xpose.msra.mxu0 0.0
    %286 = vmatpush.xpose.msra.mxu0 0.0
    %287 = vmatpush.xpose.msra.mxu0 0.0
    %288 = vmatpush.xpose.msra.mxu0 %v271
    %289 = vmatmul.f32.gmra.mxu0 %v269
    %v290 = vpop.f32.mrf.mxu0
    %v291 = vadd.f32 0.0, %v290
    %292 = vdwg.mxu0
    %v293 = vmul.f32 %v291, 0.35355338
    %v294 = vperm.slane %v159, 0
    %v295 = vadd.f32 %v293, %v294
    %v296 = vsel %vm268, %v295, -inf
    %297 = vmax.xlane.f32.xlu0 %v296
    %v298 = vpop.xlane.xlu0 %297
    %v299 = vsub.f32 %v295, %v298
    %v300 = vmul.f32 %v299, 1.442695
    %v301 = vpow.pop %v300
    %v302 = vsel %vm268, %v301, 0.0
    %303 = vadd.xlane.f32.xlu0 %v302
    %v304 = vpop.xlane.xlu0 %303
    %v305 = vrcp.pop %v304
    %v306 = vmul.f32 %v301, %v305
    %307 = vrot.lane.b32.xlu0 %v255, 64
    %v308 = vpop.permute.xlu0 %307
    %v311 = vsel %vm268, %v306, 0
    %313 = vmatpush.msra.mxu0 0.0
    %314 = vmatpush.msra.mxu0 0.0
    %315 = vmatpush.msra.mxu0 0.0
    %316 = vmatpush.msra.mxu0 0.0
    %317 = vmatpush.msra.mxu0 0.0
    %318 = vmatpush.msra.mxu0 0.0
    %319 = vmatpush.msra.mxu0 0.0
    %320 = vmatpush.msra.mxu0 0.0
    %321 = vmatpush.msra.mxu0 0.0
    %322 = vmatpush.msra.mxu0 0.0
    %323 = vmatpush.msra.mxu0 0.0
    %324 = vmatpush.msra.mxu0 0.0
    %325 = vmatpush.msra.mxu0 0.0
    %326 = vmatpush.msra.mxu0 0.0
    %327 = vmatpush.msra.mxu0 0.0
    %328 = vmatpush.msra.mxu0 %v308
    %329 = vmatmul.f32.gmra.mxu0 %v311
    %v330 = vpop.f32.mrf.mxu0
    %v331 = vadd.f32 0.0, %v330
    %332 = vdwg.mxu0
    %333 = vrot.lane.b32.xlu0 %v255, 120
    %v334 = vpop.permute.xlu0 %333
    %335 = vrot.lane.b32.xlu0 %v255, 88
    %v336 = vpop.permute.xlu0 %335
    %v337 = vsel %vm268, %v334, 0
    %v339 = vsel %vm268, %v336, 0
    %341 = vmatpush.xpose.msra.mxu0 0.0
    %342 = vmatpush.xpose.msra.mxu0 0.0
    %343 = vmatpush.xpose.msra.mxu0 0.0
    %344 = vmatpush.xpose.msra.mxu0 0.0
    %345 = vmatpush.xpose.msra.mxu0 0.0
    %346 = vmatpush.xpose.msra.mxu0 0.0
    %347 = vmatpush.xpose.msra.mxu0 0.0
    %348 = vmatpush.xpose.msra.mxu0 0.0
    %349 = vmatpush.xpose.msra.mxu0 0.0
    %350 = vmatpush.xpose.msra.mxu0 0.0
    %351 = vmatpush.xpose.msra.mxu0 0.0
    %352 = vmatpush.xpose.msra.mxu0 0.0
    %353 = vmatpush.xpose.msra.mxu0 0.0
    %354 = vmatpush.xpose.msra.mxu0 0.0
    %355 = vmatpush.xpose.msra.mxu0 0.0
    %356 = vmatpush.xpose.msra.mxu0 %v339
    %357 = vmatmul.f32.gmra.mxu0 %v337
    %v358 = vpop.f32.mrf.mxu0
    %v359 = vadd.f32 0.0, %v358
    %360 = vdwg.mxu0
    %v361 = vmul.f32 %v359, 0.35355338
    %v362 = vadd.f32 %v361, %v294
    %v363 = vsel %vm268, %v362, -inf
    %364 = vmax.xlane.f32.xlu0 %v363
    %v365 = vpop.xlane.xlu0 %364
    %v366 = vsub.f32 %v362, %v365
    %v367 = vmul.f32 %v366, 1.442695
    %v368 = vpow.pop %v367
    %v369 = vsel %vm268, %v368, 0.0
    %370 = vadd.xlane.f32.xlu0 %v369
    %v371 = vpop.xlane.xlu0 %370
    %v372 = vrcp.pop %v371
    %v373 = vmul.f32 %v368, %v372
    %374 = vrot.lane.b32.xlu0 %v255, 56
    %v375 = vpop.permute.xlu0 %374
    %v378 = vsel %vm268, %v373, 0
    %380 = vmatpush.msra.mxu0 0.0
    %381 = vmatpush.msra.mxu0 0.0
    %382 = vmatpush.msra.mxu0 0.0
    %383 = vmatpush.msra.mxu0 0.0
    %384 = vmatpush.msra.mxu0 0.0
    %385 = vmatpush.msra.mxu0 0.0
    %386 = vmatpush.msra.mxu0 0.0
    %387 = vmatpush.msra.mxu0 0.0
    %388 = vmatpush.msra.mxu0 0.0
    %389 = vmatpush.msra.mxu0 0.0
    %390 = vmatpush.msra.mxu0 0.0
    %391 = vmatpush.msra.mxu0 0.0
    %392 = vmatpush.msra.mxu0 0.0
    %393 = vmatpush.msra.mxu0 0.0
    %394 = vmatpush.msra.mxu0 0.0
    %395 = vmatpush.msra.mxu0 %v375
    %396 = vmatmul.f32.gmra.mxu0 %v378
    %v397 = vpop.f32.mrf.mxu0
    %v398 = vadd.f32 0.0, %v397
    %399 = vdwg.mxu0
    %v401 = vsel %vm268, %v398, 0
    %403 = vmatpush.msra.mxu0 0.0
    %404 = vmatpush.msra.mxu0 0.0
    %405 = vmatpush.msra.mxu0 0.0
    %406 = vmatpush.msra.mxu0 0.0
    %407 = vmatpush.msra.mxu0 0.0
    %408 = vmatpush.msra.mxu0 0.0
    %409 = vmatpush.msra.mxu0 0.0
    %410 = vmatpush.msra.mxu0 0.0
    %411 = vmatpush.msra.mxu0 0.0
    %412 = vmatpush.msra.mxu0 0.0
    %413 = vmatpush.msra.mxu0 0.0
    %414 = vmatpush.msra.mxu0 0.0
    %415 = vmatpush.msra.mxu0 0.0
    %416 = vmatpush.msra.mxu0 0.0
    %417 = vmatpush.msra.mxu0 0.0
    %418 = vmatpush.msra.mxu0 %v261
    %419 = vmatmul.f32.gmra.mxu0 %v401
    %v420 = vpop.f32.mrf.mxu0
    %v421 = vadd.f32 0.0, %v420
    %422 = vdwg.mxu0
    %v424 = vsel %vm268, %v331, 0
    %426 = vmatpush.msra.mxu0 0.0
    %427 = vmatpush.msra.mxu0 0.0
    %428 = vmatpush.msra.mxu0 0.0
    %429 = vmatpush.msra.mxu0 0.0
    %430 = vmatpush.msra.mxu0 0.0
    %431 = vmatpush.msra.mxu0 0.0
    %432 = vmatpush.msra.mxu0 0.0
    %433 = vmatpush.msra.mxu0 0.0
    %434 = vmatpush.msra.mxu0 0.0
    %435 = vmatpush.msra.mxu0 0.0
    %436 = vmatpush.msra.mxu0 0.0
    %437 = vmatpush.msra.mxu0 0.0
    %438 = vmatpush.msra.mxu0 0.0
    %439 = vmatpush.msra.mxu0 0.0
    %440 = vmatpush.msra.mxu0 0.0
    %441 = vmatpush.msra.mxu0 %v260
    %442 = vmatmul.f32.gmra.mxu0 %v424
    %v443 = vpop.f32.mrf.mxu0
    %v444 = vadd.f32 %v421, %v443
    %445 = vdwg.mxu0
    %446 = vrot.lane.b32.xlu0 %v255, 112
    %v447 = vpop.permute.xlu0 %446
    %448 = vrot.lane.b32.xlu0 %v255, 80
    %v449 = vpop.permute.xlu0 %448
    %v450 = vsel %vm268, %v447, 0
    %v452 = vsel %vm268, %v449, 0
    %454 = vmatpush.xpose.msra.mxu0 0.0
    %455 = vmatpush.xpose.msra.mxu0 0.0
    %456 = vmatpush.xpose.msra.mxu0 0.0
    %457 = vmatpush.xpose.msra.mxu0 0.0
    %458 = vmatpush.xpose.msra.mxu0 0.0
    %459 = vmatpush.xpose.msra.mxu0 0.0
    %460 = vmatpush.xpose.msra.mxu0 0.0
    %461 = vmatpush.xpose.msra.mxu0 0.0
    %462 = vmatpush.xpose.msra.mxu0 0.0
    %463 = vmatpush.xpose.msra.mxu0 0.0
    %464 = vmatpush.xpose.msra.mxu0 0.0
    %465 = vmatpush.xpose.msra.mxu0 0.0
    %466 = vmatpush.xpose.msra.mxu0 0.0
    %467 = vmatpush.xpose.msra.mxu0 0.0
    %468 = vmatpush.xpose.msra.mxu0 0.0
    %469 = vmatpush.xpose.msra.mxu0 %v452
    %470 = vmatmul.f32.gmra.mxu0 %v450
    %v471 = vpop.f32.mrf.mxu0
    %v472 = vadd.f32 0.0, %v471
    %473 = vdwg.mxu0
    %v474 = vmul.f32 %v472, 0.35355338
    %v475 = vadd.f32 %v474, %v294
    %v476 = vsel %vm268, %v475, -inf
    %477 = vmax.xlane.f32.xlu0 %v476
    %v478 = vpop.xlane.xlu0 %477
    %v479 = vsub.f32 %v475, %v478
    %v480 = vmul.f32 %v479, 1.442695
    %v481 = vpow.pop %v480
    %v482 = vsel %vm268, %v481, 0.0
    %483 = vadd.xlane.f32.xlu0 %v482
    %v484 = vpop.xlane.xlu0 %483
    %v485 = vrcp.pop %v484
    %v486 = vmul.f32 %v481, %v485
    %487 = vrot.lane.b32.xlu0 %v255, 48
    %v488 = vpop.permute.xlu0 %487
    %v491 = vsel %vm268, %v486, 0
    %493 = vmatpush.msra.mxu0 0.0
    %494 = vmatpush.msra.mxu0 0.0
    %495 = vmatpush.msra.mxu0 0.0
    %496 = vmatpush.msra.mxu0 0.0
    %497 = vmatpush.msra.mxu0 0.0
    %498 = vmatpush.msra.mxu0 0.0
    %499 = vmatpush.msra.mxu0 0.0
    %500 = vmatpush.msra.mxu0 0.0
    %501 = vmatpush.msra.mxu0 0.0
    %502 = vmatpush.msra.mxu0 0.0
    %503 = vmatpush.msra.mxu0 0.0
    %504 = vmatpush.msra.mxu0 0.0
    %505 = vmatpush.msra.mxu0 0.0
    %506 = vmatpush.msra.mxu0 0.0
    %507 = vmatpush.msra.mxu0 0.0
    %508 = vmatpush.msra.mxu0 %v488
    %509 = vmatmul.f32.gmra.mxu0 %v491
    %v510 = vpop.f32.mrf.mxu0
    %v511 = vadd.f32 0.0, %v510
    %512 = vdwg.mxu0
    %v514 = vsel %vm268, %v511, 0
    %516 = vmatpush.msra.mxu0 0.0
    %517 = vmatpush.msra.mxu0 0.0
    %518 = vmatpush.msra.mxu0 0.0
    %519 = vmatpush.msra.mxu0 0.0
    %520 = vmatpush.msra.mxu0 0.0
    %521 = vmatpush.msra.mxu0 0.0
    %522 = vmatpush.msra.mxu0 0.0
    %523 = vmatpush.msra.mxu0 0.0
    %524 = vmatpush.msra.mxu0 0.0
    %525 = vmatpush.msra.mxu0 0.0
    %526 = vmatpush.msra.mxu0 0.0
    %527 = vmatpush.msra.mxu0 0.0
    %528 = vmatpush.msra.mxu0 0.0
    %529 = vmatpush.msra.mxu0 0.0
    %530 = vmatpush.msra.mxu0 0.0
    %531 = vmatpush.msra.mxu0 %v262
    %532 = vmatmul.f32.gmra.mxu0 %v514
    %v533 = vpop.f32.mrf.mxu0
    %v534 = vadd.f32 0.0, %v533
    %535 = vdwg.mxu0
    %v536 = vadd.f32 %v444, %v534
    %537 = vrot.lane.b32.xlu0 %v255, 104
    %v538 = vpop.permute.xlu0 %537
    %539 = vrot.lane.b32.xlu0 %v255, 72
    %v540 = vpop.permute.xlu0 %539
    %v541 = vsel %vm268, %v538, 0
    %v543 = vsel %vm268, %v540, 0
    %545 = vmatpush.xpose.msra.mxu0 0.0
    %546 = vmatpush.xpose.msra.mxu0 0.0
    %547 = vmatpush.xpose.msra.mxu0 0.0
    %548 = vmatpush.xpose.msra.mxu0 0.0
    %549 = vmatpush.xpose.msra.mxu0 0.0
    %550 = vmatpush.xpose.msra.mxu0 0.0
    %551 = vmatpush.xpose.msra.mxu0 0.0
    %552 = vmatpush.xpose.msra.mxu0 0.0
    %553 = vmatpush.xpose.msra.mxu0 0.0
    %554 = vmatpush.xpose.msra.mxu0 0.0
    %555 = vmatpush.xpose.msra.mxu0 0.0
    %556 = vmatpush.xpose.msra.mxu0 0.0
    %557 = vmatpush.xpose.msra.mxu0 0.0
    %558 = vmatpush.xpose.msra.mxu0 0.0
    %559 = vmatpush.xpose.msra.mxu0 0.0
    %560 = vmatpush.xpose.msra.mxu0 %v543
    %561 = vmatmul.f32.gmra.mxu0 %v541
    %v562 = vpop.f32.mrf.mxu0
    %v563 = vadd.f32 0.0, %v562
    %564 = vdwg.mxu0
    %v565 = vmul.f32 %v563, 0.35355338
    %v566 = vadd.f32 %v565, %v294
    %v567 = vsel %vm268, %v566, -inf
    %568 = vmax.xlane.f32.xlu0 %v567
    %v569 = vpop.xlane.xlu0 %568
    %v570 = vsub.f32 %v566, %v569
    %v571 = vmul.f32 %v570, 1.442695
    %v572 = vpow.pop %v571
    %v573 = vsel %vm268, %v572, 0.0
    %574 = vadd.xlane.f32.xlu0 %v573
    %v575 = vpop.xlane.xlu0 %574
    %v576 = vrcp.pop %v575
    %v577 = vmul.f32 %v572, %v576
    %578 = vrot.lane.b32.xlu0 %v255, 40
    %v579 = vpop.permute.xlu0 %578
    %v582 = vsel %vm268, %v577, 0
    %584 = vmatpush.msra.mxu0 0.0
    %585 = vmatpush.msra.mxu0 0.0
    %586 = vmatpush.msra.mxu0 0.0
    %587 = vmatpush.msra.mxu0 0.0
    %588 = vmatpush.msra.mxu0 0.0
    %589 = vmatpush.msra.mxu0 0.0
    %590 = vmatpush.msra.mxu0 0.0
    %591 = vmatpush.msra.mxu0 0.0
    %592 = vmatpush.msra.mxu0 0.0
    %593 = vmatpush.msra.mxu0 0.0
    %594 = vmatpush.msra.mxu0 0.0
    %595 = vmatpush.msra.mxu0 0.0
    %596 = vmatpush.msra.mxu0 0.0
    %597 = vmatpush.msra.mxu0 0.0
    %598 = vmatpush.msra.mxu0 0.0
    %599 = vmatpush.msra.mxu0 %v579
    %600 = vmatmul.f32.gmra.mxu0 %v582
    %v601 = vpop.f32.mrf.mxu0
    %v602 = vadd.f32 0.0, %v601
    %603 = vdwg.mxu0
    %v605 = vsel %vm268, %v602, 0
    %607 = vmatpush.msra.mxu0 0.0
    %608 = vmatpush.msra.mxu0 0.0
    %609 = vmatpush.msra.mxu0 0.0
    %610 = vmatpush.msra.mxu0 0.0
    %611 = vmatpush.msra.mxu0 0.0
    %612 = vmatpush.msra.mxu0 0.0
    %613 = vmatpush.msra.mxu0 0.0
    %614 = vmatpush.msra.mxu0 0.0
    %615 = vmatpush.msra.mxu0 0.0
    %616 = vmatpush.msra.mxu0 0.0
    %617 = vmatpush.msra.mxu0 0.0
    %618 = vmatpush.msra.mxu0 0.0
    %619 = vmatpush.msra.mxu0 0.0
    %620 = vmatpush.msra.mxu0 0.0
    %621 = vmatpush.msra.mxu0 0.0
    %622 = vmatpush.msra.mxu0 %v263
    %623 = vmatmul.f32.gmra.mxu0 %v605
    %v624 = vpop.f32.mrf.mxu0
    %v625 = vadd.f32 0.0, %v624
    %626 = vdwg.mxu0
    %v627 = vadd.f32 %v536, %v625
    %629 = vrot.lane.b32.xlu0 %v258, 96
    %v630 = vpop.permute.xlu0 %629
    %v631 = vsel %vm268, %v258, 0
    %v633 = vsel %vm268, %v630, 0
    %635 = vmatpush.xpose.msra.mxu0 0.0
    %636 = vmatpush.xpose.msra.mxu0 0.0
    %637 = vmatpush.xpose.msra.mxu0 0.0
    %638 = vmatpush.xpose.msra.mxu0 0.0
    %639 = vmatpush.xpose.msra.mxu0 0.0
    %640 = vmatpush.xpose.msra.mxu0 0.0
    %641 = vmatpush.xpose.msra.mxu0 0.0
    %642 = vmatpush.xpose.msra.mxu0 0.0
    %643 = vmatpush.xpose.msra.mxu0 0.0
    %644 = vmatpush.xpose.msra.mxu0 0.0
    %645 = vmatpush.xpose.msra.mxu0 0.0
    %646 = vmatpush.xpose.msra.mxu0 0.0
    %647 = vmatpush.xpose.msra.mxu0 0.0
    %648 = vmatpush.xpose.msra.mxu0 0.0
    %649 = vmatpush.xpose.msra.mxu0 0.0
    %650 = vmatpush.xpose.msra.mxu0 %v633
    %651 = vmatmul.f32.gmra.mxu0 %v631
    %v652 = vpop.f32.mrf.mxu0
    %v653 = vadd.f32 0.0, %v652
    %654 = vdwg.mxu0
    %v655 = vmul.f32 %v653, 0.35355338
    %v656 = vperm.slane %v159, 1
    %v657 = vadd.f32 %v655, %v656
    %v658 = vsel %vm268, %v657, -inf
    %659 = vmax.xlane.f32.xlu0 %v658
    %v660 = vpop.xlane.xlu0 %659
    %v661 = vsub.f32 %v657, %v660
    %v662 = vmul.f32 %v661, 1.442695
    %v663 = vpow.pop %v662
    %v664 = vsel %vm268, %v663, 0.0
    %665 = vadd.xlane.f32.xlu0 %v664
    %v666 = vpop.xlane.xlu0 %665
    %v667 = vrcp.pop %v666
    %v668 = vmul.f32 %v663, %v667
    %669 = vrot.lane.b32.xlu0 %v258, 64
    %v670 = vpop.permute.xlu0 %669
    %v673 = vsel %vm268, %v668, 0
    %675 = vmatpush.msra.mxu0 0.0
    %676 = vmatpush.msra.mxu0 0.0
    %677 = vmatpush.msra.mxu0 0.0
    %678 = vmatpush.msra.mxu0 0.0
    %679 = vmatpush.msra.mxu0 0.0
    %680 = vmatpush.msra.mxu0 0.0
    %681 = vmatpush.msra.mxu0 0.0
    %682 = vmatpush.msra.mxu0 0.0
    %683 = vmatpush.msra.mxu0 0.0
    %684 = vmatpush.msra.mxu0 0.0
    %685 = vmatpush.msra.mxu0 0.0
    %686 = vmatpush.msra.mxu0 0.0
    %687 = vmatpush.msra.mxu0 0.0
    %688 = vmatpush.msra.mxu0 0.0
    %689 = vmatpush.msra.mxu0 0.0
    %690 = vmatpush.msra.mxu0 %v670
    %691 = vmatmul.f32.gmra.mxu0 %v673
    %v692 = vpop.f32.mrf.mxu0
    %v693 = vadd.f32 0.0, %v692
    %694 = vdwg.mxu0
    %695 = vrot.lane.b32.xlu0 %v258, 120
    %v696 = vpop.permute.xlu0 %695
    %697 = vrot.lane.b32.xlu0 %v258, 88
    %v698 = vpop.permute.xlu0 %697
    %v699 = vsel %vm268, %v696, 0
    %v701 = vsel %vm268, %v698, 0
    %703 = vmatpush.xpose.msra.mxu0 0.0
    %704 = vmatpush.xpose.msra.mxu0 0.0
    %705 = vmatpush.xpose.msra.mxu0 0.0
    %706 = vmatpush.xpose.msra.mxu0 0.0
    %707 = vmatpush.xpose.msra.mxu0 0.0
    %708 = vmatpush.xpose.msra.mxu0 0.0
    %709 = vmatpush.xpose.msra.mxu0 0.0
    %710 = vmatpush.xpose.msra.mxu0 0.0
    %711 = vmatpush.xpose.msra.mxu0 0.0
    %712 = vmatpush.xpose.msra.mxu0 0.0
    %713 = vmatpush.xpose.msra.mxu0 0.0
    %714 = vmatpush.xpose.msra.mxu0 0.0
    %715 = vmatpush.xpose.msra.mxu0 0.0
    %716 = vmatpush.xpose.msra.mxu0 0.0
    %717 = vmatpush.xpose.msra.mxu0 0.0
    %718 = vmatpush.xpose.msra.mxu0 %v701
    %719 = vmatmul.f32.gmra.mxu0 %v699
    %v720 = vpop.f32.mrf.mxu0
    %v721 = vadd.f32 0.0, %v720
    %722 = vdwg.mxu0
    %v723 = vmul.f32 %v721, 0.35355338
    %v724 = vadd.f32 %v723, %v656
    %v725 = vsel %vm268, %v724, -inf
    %726 = vmax.xlane.f32.xlu0 %v725
    %v727 = vpop.xlane.xlu0 %726
    %v728 = vsub.f32 %v724, %v727
    %v729 = vmul.f32 %v728, 1.442695
    %v730 = vpow.pop %v729
    %v731 = vsel %vm268, %v730, 0.0
    %732 = vadd.xlane.f32.xlu0 %v731
    %v733 = vpop.xlane.xlu0 %732
    %v734 = vrcp.pop %v733
    %v735 = vmul.f32 %v730, %v734
    %736 = vrot.lane.b32.xlu0 %v258, 56
    %v737 = vpop.permute.xlu0 %736
    %v740 = vsel %vm268, %v735, 0
    %742 = vmatpush.msra.mxu0 0.0
    %743 = vmatpush.msra.mxu0 0.0
    %744 = vmatpush.msra.mxu0 0.0
    %745 = vmatpush.msra.mxu0 0.0
    %746 = vmatpush.msra.mxu0 0.0
    %747 = vmatpush.msra.mxu0 0.0
    %748 = vmatpush.msra.mxu0 0.0
    %749 = vmatpush.msra.mxu0 0.0
    %750 = vmatpush.msra.mxu0 0.0
    %751 = vmatpush.msra.mxu0 0.0
    %752 = vmatpush.msra.mxu0 0.0
    %753 = vmatpush.msra.mxu0 0.0
    %754 = vmatpush.msra.mxu0 0.0
    %755 = vmatpush.msra.mxu0 0.0
    %756 = vmatpush.msra.mxu0 0.0
    %757 = vmatpush.msra.mxu0 %v737
    %758 = vmatmul.f32.gmra.mxu0 %v740
    %v759 = vpop.f32.mrf.mxu0
    %v760 = vadd.f32 0.0, %v759
    %761 = vdwg.mxu0
    %v763 = vsel %vm268, %v760, 0
    %765 = vmatpush.msra.mxu0 0.0
    %766 = vmatpush.msra.mxu0 0.0
    %767 = vmatpush.msra.mxu0 0.0
    %768 = vmatpush.msra.mxu0 0.0
    %769 = vmatpush.msra.mxu0 0.0
    %770 = vmatpush.msra.mxu0 0.0
    %771 = vmatpush.msra.mxu0 0.0
    %772 = vmatpush.msra.mxu0 0.0
    %773 = vmatpush.msra.mxu0 0.0
    %774 = vmatpush.msra.mxu0 0.0
    %775 = vmatpush.msra.mxu0 0.0
    %776 = vmatpush.msra.mxu0 0.0
    %777 = vmatpush.msra.mxu0 0.0
    %778 = vmatpush.msra.mxu0 0.0
    %779 = vmatpush.msra.mxu0 0.0
    %780 = vmatpush.msra.mxu0 %v261
    %781 = vmatmul.f32.gmra.mxu0 %v763
    %v782 = vpop.f32.mrf.mxu0
    %v783 = vadd.f32 0.0, %v782
    %784 = vdwg.mxu0
    %v786 = vsel %vm268, %v693, 0
    %788 = vmatpush.msra.mxu0 0.0
    %789 = vmatpush.msra.mxu0 0.0
    %790 = vmatpush.msra.mxu0 0.0
    %791 = vmatpush.msra.mxu0 0.0
    %792 = vmatpush.msra.mxu0 0.0
    %793 = vmatpush.msra.mxu0 0.0
    %794 = vmatpush.msra.mxu0 0.0
    %795 = vmatpush.msra.mxu0 0.0
    %796 = vmatpush.msra.mxu0 0.0
    %797 = vmatpush.msra.mxu0 0.0
    %798 = vmatpush.msra.mxu0 0.0
    %799 = vmatpush.msra.mxu0 0.0
    %800 = vmatpush.msra.mxu0 0.0
    %801 = vmatpush.msra.mxu0 0.0
    %802 = vmatpush.msra.mxu0 0.0
    %803 = vmatpush.msra.mxu0 %v260
    %804 = vmatmul.f32.gmra.mxu0 %v786
    %v805 = vpop.f32.mrf.mxu0
    %v806 = vadd.f32 %v783, %v805
    %807 = vdwg.mxu0
    %808 = vrot.lane.b32.xlu0 %v258, 112
    %v809 = vpop.permute.xlu0 %808
    %810 = vrot.lane.b32.xlu0 %v258, 80
    %v811 = vpop.permute.xlu0 %810
    %v812 = vsel %vm268, %v809, 0
    %v814 = vsel %vm268, %v811, 0
    %816 = vmatpush.xpose.msra.mxu0 0.0
    %817 = vmatpush.xpose.msra.mxu0 0.0
    %818 = vmatpush.xpose.msra.mxu0 0.0
    %819 = vmatpush.xpose.msra.mxu0 0.0
    %820 = vmatpush.xpose.msra.mxu0 0.0
    %821 = vmatpush.xpose.msra.mxu0 0.0
    %822 = vmatpush.xpose.msra.mxu0 0.0
    %823 = vmatpush.xpose.msra.mxu0 0.0
    %824 = vmatpush.xpose.msra.mxu0 0.0
    %825 = vmatpush.xpose.msra.mxu0 0.0
    %826 = vmatpush.xpose.msra.mxu0 0.0
    %827 = vmatpush.xpose.msra.mxu0 0.0
    %828 = vmatpush.xpose.msra.mxu0 0.0
    %829 = vmatpush.xpose.msra.mxu0 0.0
    %830 = vmatpush.xpose.msra.mxu0 0.0
    %831 = vmatpush.xpose.msra.mxu0 %v814
    %832 = vmatmul.f32.gmra.mxu0 %v812
    %v833 = vpop.f32.mrf.mxu0
    %v834 = vadd.f32 0.0, %v833
    %835 = vdwg.mxu0
    %v836 = vmul.f32 %v834, 0.35355338
    %v837 = vadd.f32 %v836, %v656
    %v838 = vsel %vm268, %v837, -inf
    %839 = vmax.xlane.f32.xlu0 %v838
    %v840 = vpop.xlane.xlu0 %839
    %v841 = vsub.f32 %v837, %v840
    %v842 = vmul.f32 %v841, 1.442695
    %v843 = vpow.pop %v842
    %v844 = vsel %vm268, %v843, 0.0
    %845 = vadd.xlane.f32.xlu0 %v844
    %v846 = vpop.xlane.xlu0 %845
    %v847 = vrcp.pop %v846
    %v848 = vmul.f32 %v843, %v847
    %849 = vrot.lane.b32.xlu0 %v258, 48
    %v850 = vpop.permute.xlu0 %849
    %v853 = vsel %vm268, %v848, 0
    %855 = vmatpush.msra.mxu0 0.0
    %856 = vmatpush.msra.mxu0 0.0
    %857 = vmatpush.msra.mxu0 0.0
    %858 = vmatpush.msra.mxu0 0.0
    %859 = vmatpush.msra.mxu0 0.0
    %860 = vmatpush.msra.mxu0 0.0
    %861 = vmatpush.msra.mxu0 0.0
    %862 = vmatpush.msra.mxu0 0.0
    %863 = vmatpush.msra.mxu0 0.0
    %864 = vmatpush.msra.mxu0 0.0
    %865 = vmatpush.msra.mxu0 0.0
    %866 = vmatpush.msra.mxu0 0.0
    %867 = vmatpush.msra.mxu0 0.0
    %868 = vmatpush.msra.mxu0 0.0
    %869 = vmatpush.msra.mxu0 0.0
    %870 = vmatpush.msra.mxu0 %v850
    %871 = vmatmul.f32.gmra.mxu0 %v853
    %v872 = vpop.f32.mrf.mxu0
    %v873 = vadd.f32 0.0, %v872
    %874 = vdwg.mxu0
    %v876 = vsel %vm268, %v873, 0
    %878 = vmatpush.msra.mxu0 0.0
    %879 = vmatpush.msra.mxu0 0.0
    %880 = vmatpush.msra.mxu0 0.0
    %881 = vmatpush.msra.mxu0 0.0
    %882 = vmatpush.msra.mxu0 0.0
    %883 = vmatpush.msra.mxu0 0.0
    %884 = vmatpush.msra.mxu0 0.0
    %885 = vmatpush.msra.mxu0 0.0
    %886 = vmatpush.msra.mxu0 0.0
    %887 = vmatpush.msra.mxu0 0.0
    %888 = vmatpush.msra.mxu0 0.0
    %889 = vmatpush.msra.mxu0 0.0
    %890 = vmatpush.msra.mxu0 0.0
    %891 = vmatpush.msra.mxu0 0.0
    %892 = vmatpush.msra.mxu0 0.0
    %893 = vmatpush.msra.mxu0 %v262
    %894 = vmatmul.f32.gmra.mxu0 %v876
    %v895 = vpop.f32.mrf.mxu0
    %v896 = vadd.f32 0.0, %v895
    %897 = vdwg.mxu0
    %v898 = vadd.f32 %v806, %v896
    %899 = vrot.lane.b32.xlu0 %v258, 104
    %v900 = vpop.permute.xlu0 %899
    %901 = vrot.lane.b32.xlu0 %v258, 72
    %v902 = vpop.permute.xlu0 %901
    %v903 = vsel %vm268, %v900, 0
    %v905 = vsel %vm268, %v902, 0
    %907 = vmatpush.xpose.msra.mxu0 0.0
    %908 = vmatpush.xpose.msra.mxu0 0.0
    %909 = vmatpush.xpose.msra.mxu0 0.0
    %910 = vmatpush.xpose.msra.mxu0 0.0
    %911 = vmatpush.xpose.msra.mxu0 0.0
    %912 = vmatpush.xpose.msra.mxu0 0.0
    %913 = vmatpush.xpose.msra.mxu0 0.0
    %914 = vmatpush.xpose.msra.mxu0 0.0
    %915 = vmatpush.xpose.msra.mxu0 0.0
    %916 = vmatpush.xpose.msra.mxu0 0.0
    %917 = vmatpush.xpose.msra.mxu0 0.0
    %918 = vmatpush.xpose.msra.mxu0 0.0
    %919 = vmatpush.xpose.msra.mxu0 0.0
    %920 = vmatpush.xpose.msra.mxu0 0.0
    %921 = vmatpush.xpose.msra.mxu0 0.0
    %922 = vmatpush.xpose.msra.mxu0 %v905
    %923 = vmatmul.f32.gmra.mxu0 %v903
    %v924 = vpop.f32.mrf.mxu0
    %v925 = vadd.f32 0.0, %v924
    %926 = vdwg.mxu0
    %v927 = vmul.f32 %v925, 0.35355338
    %v928 = vadd.f32 %v927, %v656
    %v929 = vsel %vm268, %v928, -inf
    %930 = vmax.xlane.f32.xlu0 %v929
    %v931 = vpop.xlane.xlu0 %930
    %v932 = vsub.f32 %v928, %v931
    %v933 = vmul.f32 %v932, 1.442695
    %v934 = vpow.pop %v933
    %v935 = vsel %vm268, %v934, 0.0
    %936 = vadd.xlane.f32.xlu0 %v935
    %v937 = vpop.xlane.xlu0 %936
    %v938 = vrcp.pop %v937
    %v939 = vmul.f32 %v934, %v938
    %940 = vrot.lane.b32.xlu0 %v258, 40
    %v941 = vpop.permute.xlu0 %940
    %v944 = vsel %vm268, %v939, 0
    %946 = vmatpush.msra.mxu0 0.0
    %947 = vmatpush.msra.mxu0 0.0
    %948 = vmatpush.msra.mxu0 0.0
    %949 = vmatpush.msra.mxu0 0.0
    %950 = vmatpush.msra.mxu0 0.0
    %951 = vmatpush.msra.mxu0 0.0
    %952 = vmatpush.msra.mxu0 0.0
    %953 = vmatpush.msra.mxu0 0.0
    %954 = vmatpush.msra.mxu0 0.0
    %955 = vmatpush.msra.mxu0 0.0
    %956 = vmatpush.msra.mxu0 0.0
    %957 = vmatpush.msra.mxu0 0.0
    %958 = vmatpush.msra.mxu0 0.0
    %959 = vmatpush.msra.mxu0 0.0
    %960 = vmatpush.msra.mxu0 0.0
    %961 = vmatpush.msra.mxu0 %v941
    %962 = vmatmul.f32.gmra.mxu0 %v944
    %v963 = vpop.f32.mrf.mxu0
    %v964 = vadd.f32 0.0, %v963
    %965 = vdwg.mxu0
    %v967 = vsel %vm268, %v964, 0
    %969 = vmatpush.msra.mxu0 0.0
    %970 = vmatpush.msra.mxu0 0.0
    %971 = vmatpush.msra.mxu0 0.0
    %972 = vmatpush.msra.mxu0 0.0
    %973 = vmatpush.msra.mxu0 0.0
    %974 = vmatpush.msra.mxu0 0.0
    %975 = vmatpush.msra.mxu0 0.0
    %976 = vmatpush.msra.mxu0 0.0
    %977 = vmatpush.msra.mxu0 0.0
    %978 = vmatpush.msra.mxu0 0.0
    %979 = vmatpush.msra.mxu0 0.0
    %980 = vmatpush.msra.mxu0 0.0
    %981 = vmatpush.msra.mxu0 0.0
    %982 = vmatpush.msra.mxu0 0.0
    %983 = vmatpush.msra.mxu0 0.0
    %984 = vmatpush.msra.mxu0 %v263
    %985 = vmatmul.f32.gmra.mxu0 %v967
    %v986 = vpop.f32.mrf.mxu0
    %v987 = vadd.f32 0.0, %v986
    %988 = vdwg.mxu0
    %v989 = vadd.f32 %v898, %v987
    %v991 = vperm.slane %v264, 0
    %v993 = vadd.f32 %v627, %v991
    %v994 = vadd.f32 %v989, %v991
    %v995 = vadd.f32 %v221, %v993
    %v996 = vadd.f32 %v222, %v994
    %v997 = vld [vmem:[%s23] sm:$0x3]
    %v998 = vsel %vm165, %v995, 0.0
    %999 = vadd.xlane.f32.xlu0 %v998
    %v1000 = vpop.xlane.xlu0 %999
    %v1001 = vsel %vm165, %v996, 0.0
    %1002 = vadd.xlane.f32.xlu0 %v1001
    %v1003 = vpop.xlane.xlu0 %1002
    %v1004 = vmul.f32 %v1000, %v178
    %v1005 = vmul.f32 %v1003, %v178
    %v1006 = vsub.f32 %v995, %v1004
    %v1007 = vsub.f32 %v996, %v1005
    %v1008 = vmul.f32 %v1006, %v1006
    %v1009 = vmul.f32 %v1007, %v1007
    %v1010 = vsel %vm165, %v1008, 0.0
    %1011 = vadd.xlane.f32.xlu0 %v1010
    %v1012 = vpop.xlane.xlu0 %1011
    %v1013 = vsel %vm165, %v1009, 0.0
    %1014 = vadd.xlane.f32.xlu0 %v1013
    %v1015 = vpop.xlane.xlu0 %1014
    %v1016 = vmul.f32 %v1012, %v178
    %v1017 = vmul.f32 %v1015, %v178
    %v1018 = vadd.f32 %v1016, 1e-05
    %v1019 = vadd.f32 %v1017, 1e-05
    %v1020 = vrsqrt.pop %v1018
    %v1021 = vmul.f32 %v1020, %v1018
    %v1022 = vmul.f32 %v1021, %v1020
    %v1023 = vmul.f32 0.5, %v1022
    %v1024 = vsub.f32 1.5, %v1023
    %v1025 = vmul.f32 %v1020, %v1024
    %vm1026 = vweird.f32 %v1018
    %vm1027 = vweird.f32 %v1020
    %vm1028 = vmor %vm1026, %vm1027
    %v1029 = vsel %vm1028, %v1020, %v1025
    %v1030 = vrsqrt.pop %v1019
    %v1031 = vmul.f32 %v1030, %v1019
    %v1032 = vmul.f32 %v1031, %v1030
    %v1033 = vmul.f32 0.5, %v1032
    %v1034 = vsub.f32 1.5, %v1033
    %v1035 = vmul.f32 %v1030, %v1034
    %vm1036 = vweird.f32 %v1019
    %vm1037 = vweird.f32 %v1030
    %vm1038 = vmor %vm1036, %vm1037
    %v1039 = vsel %vm1038, %v1030, %v1035
    %v1040 = vmul.f32 %v1006, %v1029
    %v1041 = vmul.f32 %v1007, %v1039
    %v1042 = vperm.slane %v997, 0
    %v1043 = vmul.f32 %v1040, %v1042
    %v1044 = vmul.f32 %v1041, %v1042
    %v1045 = vperm.slane %v997, 1
    %v1046 = vadd.f32 %v1043, %v1045
    %v1047 = vadd.f32 %v1044, %v1045
    %v1048 = vld [vmem:[%s25] sm:$0xff]
    %v1049 = vld [vmem:[%s25 + $0x8] sm:$0xff]
    %v1050 = vld [vmem:[%s25 + $0x10] sm:$0xff]
    %v1051 = vld [vmem:[%s25 + $0x18] sm:$0xff]
    %v1052 = vld [vmem:[%s27] sm:$0x1]
    %v1053 = vld [vmem:[%s29] sm:$0xff]
    %v1054 = vld [vmem:[%s29 + $0x8] sm:$0xff]
    %v1055 = vld [vmem:[%s29 + $0x10] sm:$0xff]
    %v1056 = vld [vmem:[%s29 + $0x18] sm:$0xff]
    %v1057 = vld [vmem:[%s29 + $0x20] sm:$0xff]
    %v1058 = vld [vmem:[%s29 + $0x28] sm:$0xff]
    %v1059 = vld [vmem:[%s29 + $0x30] sm:$0xff]
    %v1060 = vld [vmem:[%s29 + $0x38] sm:$0xff]
    %v1061 = vld [vmem:[%s31] sm:$0x1]
    %v1063 = vperm.slane %v1052, 0
    %v1066 = vsel %vm165, %v1046, 0
    %v1069 = vsel %vm165, %v1047, 0
    %1071 = vmatpush.msra.mxu0 0.0
    %1072 = vmatpush.msra.mxu0 0.0
    %1073 = vmatpush.msra.mxu0 0.0
    %1074 = vmatpush.msra.mxu0 0.0
    %1075 = vmatpush.msra.mxu0 0.0
    %1076 = vmatpush.msra.mxu0 0.0
    %1077 = vmatpush.msra.mxu0 0.0
    %1078 = vmatpush.msra.mxu0 0.0
    %1079 = vmatpush.msra.mxu0 0.0
    %1080 = vmatpush.msra.mxu0 0.0
    %1081 = vmatpush.msra.mxu0 0.0
    %1082 = vmatpush.msra.mxu0 0.0
    %1083 = vmatpush.msra.mxu0 %v1051
    %1084 = vmatpush.msra.mxu0 %v1050
    %1085 = vmatpush.msra.mxu0 %v1049
    %1086 = vmatpush.msra.mxu0 %v1048
    %1087 = vmatmul.f32.gmra.mxu0 %v1066
    %v1088 = vpop.f32.mrf.mxu0
    %v1089 = vadd.f32 %v1063, %v1088
    %1090 = vmatmul.f32.gmra.mxu0 %v1069
    %v1091 = vpop.f32.mrf.mxu0
    %v1092 = vadd.f32 %v1063, %v1091
    %1093 = vdwg.mxu0
    %v1094 = vmul.f32 %v1089, %v1089
    %v1095 = vmul.f32 %v1092, %v1092
    %v1096 = vmul.f32 %v1089, %v1094
    %v1097 = vmul.f32 %v1092, %v1095
    %v1098 = vmul.f32 %v1096, 0.044715
    %v1099 = vmul.f32 %v1097, 0.044715
    %v1100 = vadd.f32 %v1089, %v1098
    %v1101 = vadd.f32 %v1092, %v1099
    %v1102 = vmul.f32 %v1100, 0.7978846
    %v1103 = vmul.f32 %v1101, 0.7978846
    %v1104 = vtanh.pop %v1102
    %v1105 = vtanh.pop %v1103
    %v1106 = vadd.f32 %v1104, 1.0
    %v1107 = vadd.f32 %v1105, 1.0
    %v1108 = vmul.f32 %v1106, 0.5
    %v1109 = vmul.f32 %v1107, 0.5
    %v1110 = vmul.f32 %v1089, %v1108
    %v1111 = vmul.f32 %v1092, %v1109
    %v1113 = vperm.slane %v1061, 0
    %vm1115 = vcmask 523264
    %v1117 = vsel %vm1115, %v1110, 0
    %v1120 = vsel %vm1115, %v1111, 0
    %1122 = vmatpush.msra.mxu0 0.0
    %1123 = vmatpush.msra.mxu0 0.0
    %1124 = vmatpush.msra.mxu0 0.0
    %1125 = vmatpush.msra.mxu0 0.0
    %1126 = vmatpush.msra.mxu0 0.0
    %1127 = vmatpush.msra.mxu0 0.0
    %1128 = vmatpush.msra.mxu0 0.0
    %1129 = vmatpush.msra.mxu0 0.0
    %1130 = vmatpush.msra.mxu0 %v1060
    %1131 = vmatpush.msra.mxu0 %v1059
    %1132 = vmatpush.msra.mxu0 %v1058
    %1133 = vmatpush.msra.mxu0 %v1057
    %1134 = vmatpush.msra.mxu0 %v1056
    %1135 = vmatpush.msra.mxu0 %v1055
    %1136 = vmatpush.msra.mxu0 %v1054
    %1137 = vmatpush.msra.mxu0 %v1053
    %1138 = vmatmul.f32.gmra.mxu0 %v1117
    %v1139 = vpop.f32.mrf.mxu0
    %v1140 = vadd.f32 %v1113, %v1139
    %1141 = vmatmul.f32.gmra.mxu0 %v1120
    %v1142 = vpop.f32.mrf.mxu0
    %v1143 = vadd.f32 %v1113, %v1142
    %1144 = vdwg.mxu0
    %v1145 = vadd.f32 %v1046, %v1140
    %v1146 = vadd.f32 %v1047, %v1143
    %v1147 = vld [vmem:[%s33] sm:$0x3]
    %v1148 = vsel %vm165, %v1145, 0.0
    %1149 = vadd.xlane.f32.xlu0 %v1148
    %v1150 = vpop.xlane.xlu0 %1149
    %v1151 = vsel %vm165, %v1146, 0.0
    %1152 = vadd.xlane.f32.xlu0 %v1151
    %v1153 = vpop.xlane.xlu0 %1152
    %v1154 = vmul.f32 %v1150, %v178
    %v1155 = vmul.f32 %v1153, %v178
    %v1156 = vsub.f32 %v1145, %v1154
    %v1157 = vsub.f32 %v1146, %v1155
    %v1158 = vmul.f32 %v1156, %v1156
    %v1159 = vmul.f32 %v1157, %v1157
    %v1160 = vsel %vm165, %v1158, 0.0
    %1161 = vadd.xlane.f32.xlu0 %v1160
    %v1162 = vpop.xlane.xlu0 %1161
    %v1163 = vsel %vm165, %v1159, 0.0
    %1164 = vadd.xlane.f32.xlu0 %v1163
    %v1165 = vpop.xlane.xlu0 %1164
    %v1166 = vmul.f32 %v1162, %v178
    %v1167 = vmul.f32 %v1165, %v178
    %v1168 = vadd.f32 %v1166, 1e-05
    %v1169 = vadd.f32 %v1167, 1e-05
    %v1170 = vrsqrt.pop %v1168
    %v1171 = vmul.f32 %v1170, %v1168
    %v1172 = vmul.f32 %v1171, %v1170
    %v1173 = vmul.f32 0.5, %v1172
    %v1174 = vsub.f32 1.5, %v1173
    %v1175 = vmul.f32 %v1170, %v1174
    %vm1176 = vweird.f32 %v1168
    %vm1177 = vweird.f32 %v1170
    %vm1178 = vmor %vm1176, %vm1177
    %v1179 = vsel %vm1178, %v1170, %v1175
    %v1180 = vrsqrt.pop %v1169
    %v1181 = vmul.f32 %v1180, %v1169
    %v1182 = vmul.f32 %v1181, %v1180
    %v1183 = vmul.f32 0.5, %v1182
    %v1184 = vsub.f32 1.5, %v1183
    %v1185 = vmul.f32 %v1180, %v1184
    %vm1186 = vweird.f32 %v1169
    %vm1187 = vweird.f32 %v1180
    %vm1188 = vmor %vm1186, %vm1187
    %v1189 = vsel %vm1188, %v1180, %v1185
    %v1190 = vmul.f32 %v1156, %v1179
    %v1191 = vmul.f32 %v1157, %v1189
    %v1192 = vperm.slane %v1147, 0
    %v1193 = vmul.f32 %v1190, %v1192
    %v1194 = vmul.f32 %v1191, %v1192
    %v1195 = vperm.slane %v1147, 1
    %v1196 = vadd.f32 %v1193, %v1195
    %v1197 = vadd.f32 %v1194, %v1195
    %s1198 = scalar_lea.vmem %s15, 32
    %v1199 = vld [vmem:[%s1198] sm:$0xff]
    %v1200 = vld [vmem:[%s1198 + $0x8] sm:$0xff]
    %v1201 = vld [vmem:[%s1198 + $0x10] sm:$0xff]
    %v1202 = vld [vmem:[%s1198 + $0x18] sm:$0xff]
    %s1203 = scalar_lea.vmem %s17, 1
    %v1204 = vld [vmem:[%s1203] sm:$0x1]
    %v1206 = vperm.slane %v1204, 0
    %v1209 = vsel %vm165, %v1196, 0
    %v1212 = vsel %vm165, %v1197, 0
    %1214 = vmatpush.msra.mxu0 0.0
    %1215 = vmatpush.msra.mxu0 0.0
    %1216 = vmatpush.msra.mxu0 0.0
    %1217 = vmatpush.msra.mxu0 0.0
    %1218 = vmatpush.msra.mxu0 0.0
    %1219 = vmatpush.msra.mxu0 0.0
    %1220 = vmatpush.msra.mxu0 0.0
    %1221 = vmatpush.msra.mxu0 0.0
    %1222 = vmatpush.msra.mxu0 0.0
    %1223 = vmatpush.msra.mxu0 0.0
    %1224 = vmatpush.msra.mxu0 0.0
    %1225 = vmatpush.msra.mxu0 0.0
    %1226 = vmatpush.msra.mxu0 %v1202
    %1227 = vmatpush.msra.mxu0 %v1201
    %1228 = vmatpush.msra.mxu0 %v1200
    %1229 = vmatpush.msra.mxu0 %v1199
    %1230 = vmatmul.f32.gmra.mxu0 %v1209
    %v1231 = vpop.f32.mrf.mxu0
    %v1232 = vadd.f32 %v1206, %v1231
    %1233 = vmatmul.f32.gmra.mxu0 %v1212
    %v1234 = vpop.f32.mrf.mxu0
    %v1235 = vadd.f32 %v1206, %v1234
    %1236 = vdwg.mxu0
    %s1237 = scalar_lea.vmem %s19, 32
    %v1238 = vld [vmem:[%s1237] sm:$0xff]
    %v1239 = vld [vmem:[%s1237 + $0x8] sm:$0xff]
    %v1240 = vld [vmem:[%s1237 + $0x10] sm:$0xff]
    %v1241 = vld [vmem:[%s1237 + $0x18] sm:$0xff]
    %s1242 = scalar_lea.vmem %s21, 1
    %v1243 = vld [vmem:[%s1242] sm:$0x1]
    %1245 = vrot.lane.b32.xlu0 %v1232, 96
    %v1246 = vpop.permute.xlu0 %1245
    %v1247 = vsel %vm268, %v1232, 0
    %v1249 = vsel %vm268, %v1246, 0
    %1251 = vmatpush.xpose.msra.mxu0 0.0
    %1252 = vmatpush.xpose.msra.mxu0 0.0
    %1253 = vmatpush.xpose.msra.mxu0 0.0
    %1254 = vmatpush.xpose.msra.mxu0 0.0
    %1255 = vmatpush.xpose.msra.mxu0 0.0
    %1256 = vmatpush.xpose.msra.mxu0 0.0
    %1257 = vmatpush.xpose.msra.mxu0 0.0
    %1258 = vmatpush.xpose.msra.mxu0 0.0
    %1259 = vmatpush.xpose.msra.mxu0 0.0
    %1260 = vmatpush.xpose.msra.mxu0 0.0
    %1261 = vmatpush.xpose.msra.mxu0 0.0
    %1262 = vmatpush.xpose.msra.mxu0 0.0
    %1263 = vmatpush.xpose.msra.mxu0 0.0
    %1264 = vmatpush.xpose.msra.mxu0 0.0
    %1265 = vmatpush.xpose.msra.mxu0 0.0
    %1266 = vmatpush.xpose.msra.mxu0 %v1249
    %1267 = vmatmul.f32.gmra.mxu0 %v1247
    %v1268 = vpop.f32.mrf.mxu0
    %v1269 = vadd.f32 0.0, %v1268
    %1270 = vdwg.mxu0
    %v1271 = vmul.f32 %v1269, 0.35355338
    %v1272 = vadd.f32 %v1271, %v294
    %v1273 = vsel %vm268, %v1272, -inf
    %1274 = vmax.xlane.f32.xlu0 %v1273
    %v1275 = vpop.xlane.xlu0 %1274
    %v1276 = vsub.f32 %v1272, %v1275
    %v1277 = vmul.f32 %v1276, 1.442695
    %v1278 = vpow.pop %v1277
    %v1279 = vsel %vm268, %v1278, 0.0
    %1280 = vadd.xlane.f32.xlu0 %v1279
    %v1281 = vpop.xlane.xlu0 %1280
    %v1282 = vrcp.pop %v1281
    %v1283 = vmul.f32 %v1278, %v1282
    %1284 = vrot.lane.b32.xlu0 %v1232, 64
    %v1285 = vpop.permute.xlu0 %1284
    %v1288 = vsel %vm268, %v1283, 0
    %1290 = vmatpush.msra.mxu0 0.0
    %1291 = vmatpush.msra.mxu0 0.0
    %1292 = vmatpush.msra.mxu0 0.0
    %1293 = vmatpush.msra.mxu0 0.0
    %1294 = vmatpush.msra.mxu0 0.0
    %1295 = vmatpush.msra.mxu0 0.0
    %1296 = vmatpush.msra.mxu0 0.0
    %1297 = vmatpush.msra.mxu0 0.0
    %1298 = vmatpush.msra.mxu0 0.0
    %1299 = vmatpush.msra.mxu0 0.0
    %1300 = vmatpush.msra.mxu0 0.0
    %1301 = vmatpush.msra.mxu0 0.0
    %1302 = vmatpush.msra.mxu0 0.0
    %1303 = vmatpush.msra.mxu0 0.0
    %1304 = vmatpush.msra.mxu0 0.0
    %1305 = vmatpush.msra.mxu0 %v1285
    %1306 = vmatmul.f32.gmra.mxu0 %v1288
    %v1307 = vpop.f32.mrf.mxu0
    %v1308 = vadd.f32 0.0, %v1307
    %1309 = vdwg.mxu0
    %1310 = vrot.lane.b32.xlu0 %v1232, 120
    %v1311 = vpop.permute.xlu0 %1310
    %1312 = vrot.lane.b32.xlu0 %v1232, 88
    %v1313 = vpop.permute.xlu0 %1312
    %v1314 = vsel %vm268, %v1311, 0
    %v1316 = vsel %vm268, %v1313, 0
    %1318 = vmatpush.xpose.msra.mxu0 0.0
    %1319 = vmatpush.xpose.msra.mxu0 0.0
    %1320 = vmatpush.xpose.msra.mxu0 0.0
    %1321 = vmatpush.xpose.msra.mxu0 0.0
    %1322 = vmatpush.xpose.msra.mxu0 0.0
    %1323 = vmatpush.xpose.msra.mxu0 0.0
    %1324 = vmatpush.xpose.msra.mxu0 0.0
    %1325 = vmatpush.xpose.msra.mxu0 0.0
    %1326 = vmatpush.xpose.msra.mxu0 0.0
    %1327 = vmatpush.xpose.msra.mxu0 0.0
    %1328 = vmatpush.xpose.msra.mxu0 0.0
    %1329 = vmatpush.xpose.msra.mxu0 0.0
    %1330 = vmatpush.xpose.msra.mxu0 0.0
    %1331 = vmatpush.xpose.msra.mxu0 0.0
    %1332 = vmatpush.xpose.msra.mxu0 0.0
    %1333 = vmatpush.xpose.msra.mxu0 %v1316
    %1334 = vmatmul.f32.gmra.mxu0 %v1314
    %v1335 = vpop.f32.mrf.mxu0
    %v1336 = vadd.f32 0.0, %v1335
    %1337 = vdwg.mxu0
    %v1338 = vmul.f32 %v1336, 0.35355338
    %v1339 = vadd.f32 %v1338, %v294
    %v1340 = vsel %vm268, %v1339, -inf
    %1341 = vmax.xlane.f32.xlu0 %v1340
    %v1342 = vpop.xlane.xlu0 %1341
    %v1343 = vsub.f32 %v1339, %v1342
    %v1344 = vmul.f32 %v1343, 1.442695
    %v1345 = vpow.pop %v1344
    %v1346 = vsel %vm268, %v1345, 0.0
    %1347 = vadd.xlane.f32.xlu0 %v1346
    %v1348 = vpop.xlane.xlu0 %1347
    %v1349 = vrcp.pop %v1348
    %v1350 = vmul.f32 %v1345, %v1349
    %1351 = vrot.lane.b32.xlu0 %v1232, 56
    %v1352 = vpop.permute.xlu0 %1351
    %v1355 = vsel %vm268, %v1350, 0
    %1357 = vmatpush.msra.mxu0 0.0
    %1358 = vmatpush.msra.mxu0 0.0
    %1359 = vmatpush.msra.mxu0 0.0
    %1360 = vmatpush.msra.mxu0 0.0
    %1361 = vmatpush.msra.mxu0 0.0
    %1362 = vmatpush.msra.mxu0 0.0
    %1363 = vmatpush.msra.mxu0 0.0
    %1364 = vmatpush.msra.mxu0 0.0
    %1365 = vmatpush.msra.mxu0 0.0
    %1366 = vmatpush.msra.mxu0 0.0
    %1367 = vmatpush.msra.mxu0 0.0
    %1368 = vmatpush.msra.mxu0 0.0
    %1369 = vmatpush.msra.mxu0 0.0
    %1370 = vmatpush.msra.mxu0 0.0
    %1371 = vmatpush.msra.mxu0 0.0
    %1372 = vmatpush.msra.mxu0 %v1352
    %1373 = vmatmul.f32.gmra.mxu0 %v1355
    %v1374 = vpop.f32.mrf.mxu0
    %v1375 = vadd.f32 0.0, %v1374
    %1376 = vdwg.mxu0
    %v1378 = vsel %vm268, %v1375, 0
    %1380 = vmatpush.msra.mxu0 0.0
    %1381 = vmatpush.msra.mxu0 0.0
    %1382 = vmatpush.msra.mxu0 0.0
    %1383 = vmatpush.msra.mxu0 0.0
    %1384 = vmatpush.msra.mxu0 0.0
    %1385 = vmatpush.msra.mxu0 0.0
    %1386 = vmatpush.msra.mxu0 0.0
    %1387 = vmatpush.msra.mxu0 0.0
    %1388 = vmatpush.msra.mxu0 0.0
    %1389 = vmatpush.msra.mxu0 0.0
    %1390 = vmatpush.msra.mxu0 0.0
    %1391 = vmatpush.msra.mxu0 0.0
    %1392 = vmatpush.msra.mxu0 0.0
    %1393 = vmatpush.msra.mxu0 0.0
    %1394 = vmatpush.msra.mxu0 0.0
    %1395 = vmatpush.msra.mxu0 %v1239
    %1396 = vmatmul.f32.gmra.mxu0 %v1378
    %v1397 = vpop.f32.mrf.mxu0
    %v1398 = vadd.f32 0.0, %v1397
    %1399 = vdwg.mxu0
    %v1401 = vsel %vm268, %v1308, 0
    %1403 = vmatpush.msra.mxu0 0.0
    %1404 = vmatpush.msra.mxu0 0.0
    %1405 = vmatpush.msra.mxu0 0.0
    %1406 = vmatpush.msra.mxu0 0.0
    %1407 = vmatpush.msra.mxu0 0.0
    %1408 = vmatpush.msra.mxu0 0.0
    %1409 = vmatpush.msra.mxu0 0.0
    %1410 = vmatpush.msra.mxu0 0.0
    %1411 = vmatpush.msra.mxu0 0.0
    %1412 = vmatpush.msra.mxu0 0.0
    %1413 = vmatpush.msra.mxu0 0.0
    %1414 = vmatpush.msra.mxu0 0.0
    %1415 = vmatpush.msra.mxu0 0.0
    %1416 = vmatpush.msra.mxu0 0.0
    %1417 = vmatpush.msra.mxu0 0.0
    %1418 = vmatpush.msra.mxu0 %v1238
    %1419 = vmatmul.f32.gmra.mxu0 %v1401
    %v1420 = vpop.f32.mrf.mxu0
    %v1421 = vadd.f32 %v1398, %v1420
    %1422 = vdwg.mxu0
    %1423 = vrot.lane.b32.xlu0 %v1232, 112
    %v1424 = vpop.permute.xlu0 %1423
    %1425 = vrot.lane.b32.xlu0 %v1232, 80
    %v1426 = vpop.permute.xlu0 %1425
    %v1427 = vsel %vm268, %v1424, 0
    %v1429 = vsel %vm268, %v1426, 0
    %1431 = vmatpush.xpose.msra.mxu0 0.0
    %1432 = vmatpush.xpose.msra.mxu0 0.0
    %1433 = vmatpush.xpose.msra.mxu0 0.0
    %1434 = vmatpush.xpose.msra.mxu0 0.0
    %1435 = vmatpush.xpose.msra.mxu0 0.0
    %1436 = vmatpush.xpose.msra.mxu0 0.0
    %1437 = vmatpush.xpose.msra.mxu0 0.0
    %1438 = vmatpush.xpose.msra.mxu0 0.0
    %1439 = vmatpush.xpose.msra.mxu0 0.0
    %1440 = vmatpush.xpose.msra.mxu0 0.0
    %1441 = vmatpush.xpose.msra.mxu0 0.0
    %1442 = vmatpush.xpose.msra.mxu0 0.0
    %1443 = vmatpush.xpose.msra.mxu0 0.0
    %1444 = vmatpush.xpose.msra.mxu0 0.0
    %1445 = vmatpush.xpose.msra.mxu0 0.0
    %1446 = vmatpush.xpose.msra.mxu0 %v1429
    %1447 = vmatmul.f32.gmra.mxu0 %v1427
    %v1448 = vpop.f32.mrf.mxu0
    %v1449 = vadd.f32 0.0, %v1448
    %1450 = vdwg.mxu0
    %v1451 = vmul.f32 %v1449, 0.35355338
    %v1452 = vadd.f32 %v1451, %v294
    %v1453 = vsel %vm268, %v1452, -inf
    %1454 = vmax.xlane.f32.xlu0 %v1453
    %v1455 = vpop.xlane.xlu0 %1454
    %v1456 = vsub.f32 %v1452, %v1455
    %v1457 = vmul.f32 %v1456, 1.442695
    %v1458 = vpow.pop %v1457
    %v1459 = vsel %vm268, %v1458, 0.0
    %1460 = vadd.xlane.f32.xlu0 %v1459
    %v1461 = vpop.xlane.xlu0 %1460
    %v1462 = vrcp.pop %v1461
    %v1463 = vmul.f32 %v1458, %v1462
    %1464 = vrot.lane.b32.xlu0 %v1232, 48
    %v1465 = vpop.permute.xlu0 %1464
    %v1468 = vsel %vm268, %v1463, 0
    %1470 = vmatpush.msra.mxu0 0.0
    %1471 = vmatpush.msra.mxu0 0.0
    %1472 = vmatpush.msra.mxu0 0.0
    %1473 = vmatpush.msra.mxu0 0.0
    %1474 = vmatpush.msra.mxu0 0.0
    %1475 = vmatpush.msra.mxu0 0.0
    %1476 = vmatpush.msra.mxu0 0.0
    %1477 = vmatpush.msra.mxu0 0.0
    %1478 = vmatpush.msra.mxu0 0.0
    %1479 = vmatpush.msra.mxu0 0.0
    %1480 = vmatpush.msra.mxu0 0.0
    %1481 = vmatpush.msra.mxu0 0.0
    %1482 = vmatpush.msra.mxu0 0.0
    %1483 = vmatpush.msra.mxu0 0.0
    %1484 = vmatpush.msra.mxu0 0.0
    %1485 = vmatpush.msra.mxu0 %v1465
    %1486 = vmatmul.f32.gmra.mxu0 %v1468
    %v1487 = vpop.f32.mrf.mxu0
    %v1488 = vadd.f32 0.0, %v1487
    %1489 = vdwg.mxu0
    %v1491 = vsel %vm268, %v1488, 0
    %1493 = vmatpush.msra.mxu0 0.0
    %1494 = vmatpush.msra.mxu0 0.0
    %1495 = vmatpush.msra.mxu0 0.0
    %1496 = vmatpush.msra.mxu0 0.0
    %1497 = vmatpush.msra.mxu0 0.0
    %1498 = vmatpush.msra.mxu0 0.0
    %1499 = vmatpush.msra.mxu0 0.0
    %1500 = vmatpush.msra.mxu0 0.0
    %1501 = vmatpush.msra.mxu0 0.0
    %1502 = vmatpush.msra.mxu0 0.0
    %1503 = vmatpush.msra.mxu0 0.0
    %1504 = vmatpush.msra.mxu0 0.0
    %1505 = vmatpush.msra.mxu0 0.0
    %1506 = vmatpush.msra.mxu0 0.0
    %1507 = vmatpush.msra.mxu0 0.0
    %1508 = vmatpush.msra.mxu0 %v1240
    %1509 = vmatmul.f32.gmra.mxu0 %v1491
    %v1510 = vpop.f32.mrf.mxu0
    %v1511 = vadd.f32 0.0, %v1510
    %1512 = vdwg.mxu0
    %v1513 = vadd.f32 %v1421, %v1511
    %1514 = vrot.lane.b32.xlu0 %v1232, 104
    %v1515 = vpop.permute.xlu0 %1514
    %1516 = vrot.lane.b32.xlu0 %v1232, 72
    %v1517 = vpop.permute.xlu0 %1516
    %v1518 = vsel %vm268, %v1515, 0
    %v1520 = vsel %vm268, %v1517, 0
    %1522 = vmatpush.xpose.msra.mxu0 0.0
    %1523 = vmatpush.xpose.msra.mxu0 0.0
    %1524 = vmatpush.xpose.msra.mxu0 0.0
    %1525 = vmatpush.xpose.msra.mxu0 0.0
    %1526 = vmatpush.xpose.msra.mxu0 0.0
    %1527 = vmatpush.xpose.msra.mxu0 0.0
    %1528 = vmatpush.xpose.msra.mxu0 0.0
    %1529 = vmatpush.xpose.msra.mxu0 0.0
    %1530 = vmatpush.xpose.msra.mxu0 0.0
    %1531 = vmatpush.xpose.msra.mxu0 0.0
    %1532 = vmatpush.xpose.msra.mxu0 0.0
    %1533 = vmatpush.xpose.msra.mxu0 0.0
    %1534 = vmatpush.xpose.msra.mxu0 0.0
    %1535 = vmatpush.xpose.msra.mxu0 0.0
    %1536 = vmatpush.xpose.msra.mxu0 0.0
    %1537 = vmatpush.xpose.msra.mxu0 %v1520
    %1538 = vmatmul.f32.gmra.mxu0 %v1518
    %v1539 = vpop.f32.mrf.mxu0
    %v1540 = vadd.f32 0.0, %v1539
    %1541 = vdwg.mxu0
    %v1542 = vmul.f32 %v1540, 0.35355338
    %v1543 = vadd.f32 %v1542, %v294
    %v1544 = vsel %vm268, %v1543, -inf
    %1545 = vmax.xlane.f32.xlu0 %v1544
    %v1546 = vpop.xlane.xlu0 %1545
    %v1547 = vsub.f32 %v1543, %v1546
    %v1548 = vmul.f32 %v1547, 1.442695
    %v1549 = vpow.pop %v1548
    %v1550 = vsel %vm268, %v1549, 0.0
    %1551 = vadd.xlane.f32.xlu0 %v1550
    %v1552 = vpop.xlane.xlu0 %1551
    %v1553 = vrcp.pop %v1552
    %v1554 = vmul.f32 %v1549, %v1553
    %1555 = vrot.lane.b32.xlu0 %v1232, 40
    %v1556 = vpop.permute.xlu0 %1555
    %v1559 = vsel %vm268, %v1554, 0
    %1561 = vmatpush.msra.mxu0 0.0
    %1562 = vmatpush.msra.mxu0 0.0
    %1563 = vmatpush.msra.mxu0 0.0
    %1564 = vmatpush.msra.mxu0 0.0
    %1565 = vmatpush.msra.mxu0 0.0
    %1566 = vmatpush.msra.mxu0 0.0
    %1567 = vmatpush.msra.mxu0 0.0
    %1568 = vmatpush.msra.mxu0 0.0
    %1569 = vmatpush.msra.mxu0 0.0
    %1570 = vmatpush.msra.mxu0 0.0
    %1571 = vmatpush.msra.mxu0 0.0
    %1572 = vmatpush.msra.mxu0 0.0
    %1573 = vmatpush.msra.mxu0 0.0
    %1574 = vmatpush.msra.mxu0 0.0
    %1575 = vmatpush.msra.mxu0 0.0
    %1576 = vmatpush.msra.mxu0 %v1556
    %1577 = vmatmul.f32.gmra.mxu0 %v1559
    %v1578 = vpop.f32.mrf.mxu0
    %v1579 = vadd.f32 0.0, %v1578
    %1580 = vdwg.mxu0
    %v1582 = vsel %vm268, %v1579, 0
    %1584 = vmatpush.msra.mxu0 0.0
    %1585 = vmatpush.msra.mxu0 0.0
    %1586 = vmatpush.msra.mxu0 0.0
    %1587 = vmatpush.msra.mxu0 0.0
    %1588 = vmatpush.msra.mxu0 0.0
    %1589 = vmatpush.msra.mxu0 0.0
    %1590 = vmatpush.msra.mxu0 0.0
    %1591 = vmatpush.msra.mxu0 0.0
    %1592 = vmatpush.msra.mxu0 0.0
    %1593 = vmatpush.msra.mxu0 0.0
    %1594 = vmatpush.msra.mxu0 0.0
    %1595 = vmatpush.msra.mxu0 0.0
    %1596 = vmatpush.msra.mxu0 0.0
    %1597 = vmatpush.msra.mxu0 0.0
    %1598 = vmatpush.msra.mxu0 0.0
    %1599 = vmatpush.msra.mxu0 %v1241
    %1600 = vmatmul.f32.gmra.mxu0 %v1582
    %v1601 = vpop.f32.mrf.mxu0
    %v1602 = vadd.f32 0.0, %v1601
    %1603 = vdwg.mxu0
    %v1604 = vadd.f32 %v1513, %v1602
    %1606 = vrot.lane.b32.xlu0 %v1235, 96
    %v1607 = vpop.permute.xlu0 %1606
    %v1608 = vsel %vm268, %v1235, 0
    %v1610 = vsel %vm268, %v1607, 0
    %1612 = vmatpush.xpose.msra.mxu0 0.0
    %1613 = vmatpush.xpose.msra.mxu0 0.0
    %1614 = vmatpush.xpose.msra.mxu0 0.0
    %1615 = vmatpush.xpose.msra.mxu0 0.0
    %1616 = vmatpush.xpose.msra.mxu0 0.0
    %1617 = vmatpush.xpose.msra.mxu0 0.0
    %1618 = vmatpush.xpose.msra.mxu0 0.0
    %1619 = vmatpush.xpose.msra.mxu0 0.0
    %1620 = vmatpush.xpose.msra.mxu0 0.0
    %1621 = vmatpush.xpose.msra.mxu0 0.0
    %1622 = vmatpush.xpose.msra.mxu0 0.0
    %1623 = vmatpush.xpose.msra.mxu0 0.0
    %1624 = vmatpush.xpose.msra.mxu0 0.0
    %1625 = vmatpush.xpose.msra.mxu0 0.0
    %1626 = vmatpush.xpose.msra.mxu0 0.0
    %1627 = vmatpush.xpose.msra.mxu0 %v1610
    %1628 = vmatmul.f32.gmra.mxu0 %v1608
    %v1629 = vpop.f32.mrf.mxu0
    %v1630 = vadd.f32 0.0, %v1629
    %1631 = vdwg.mxu0
    %v1632 = vmul.f32 %v1630, 0.35355338
    %v1633 = vadd.f32 %v1632, %v656
    %v1634 = vsel %vm268, %v1633, -inf
    %1635 = vmax.xlane.f32.xlu0 %v1634
    %v1636 = vpop.xlane.xlu0 %1635
    %v1637 = vsub.f32 %v1633, %v1636
    %v1638 = vmul.f32 %v1637, 1.442695
    %v1639 = vpow.pop %v1638
    %v1640 = vsel %vm268, %v1639, 0.0
    %1641 = vadd.xlane.f32.xlu0 %v1640
    %v1642 = vpop.xlane.xlu0 %1641
    %v1643 = vrcp.pop %v1642
    %v1644 = vmul.f32 %v1639, %v1643
    %1645 = vrot.lane.b32.xlu0 %v1235, 64
    %v1646 = vpop.permute.xlu0 %1645
    %v1649 = vsel %vm268, %v1644, 0
    %1651 = vmatpush.msra.mxu0 0.0
    %1652 = vmatpush.msra.mxu0 0.0
    %1653 = vmatpush.msra.mxu0 0.0
    %1654 = vmatpush.msra.mxu0 0.0
    %1655 = vmatpush.msra.mxu0 0.0
    %1656 = vmatpush.msra.mxu0 0.0
    %1657 = vmatpush.msra.mxu0 0.0
    %1658 = vmatpush.msra.mxu0 0.0
    %1659 = vmatpush.msra.mxu0 0.0
    %1660 = vmatpush.msra.mxu0 0.0
    %1661 = vmatpush.msra.mxu0 0.0
    %1662 = vmatpush.msra.mxu0 0.0
    %1663 = vmatpush.msra.mxu0 0.0
    %1664 = vmatpush.msra.mxu0 0.0
    %1665 = vmatpush.msra.mxu0 0.0
    %1666 = vmatpush.msra.mxu0 %v1646
    %1667 = vmatmul.f32.gmra.mxu0 %v1649
    %v1668 = vpop.f32.mrf.mxu0
    %v1669 = vadd.f32 0.0, %v1668
    %1670 = vdwg.mxu0
    %1671 = vrot.lane.b32.xlu0 %v1235, 120
    %v1672 = vpop.permute.xlu0 %1671
    %1673 = vrot.lane.b32.xlu0 %v1235, 88
    %v1674 = vpop.permute.xlu0 %1673
    %v1675 = vsel %vm268, %v1672, 0
    %v1677 = vsel %vm268, %v1674, 0
    %1679 = vmatpush.xpose.msra.mxu0 0.0
    %1680 = vmatpush.xpose.msra.mxu0 0.0
    %1681 = vmatpush.xpose.msra.mxu0 0.0
    %1682 = vmatpush.xpose.msra.mxu0 0.0
    %1683 = vmatpush.xpose.msra.mxu0 0.0
    %1684 = vmatpush.xpose.msra.mxu0 0.0
    %1685 = vmatpush.xpose.msra.mxu0 0.0
    %1686 = vmatpush.xpose.msra.mxu0 0.0
    %1687 = vmatpush.xpose.msra.mxu0 0.0
    %1688 = vmatpush.xpose.msra.mxu0 0.0
    %1689 = vmatpush.xpose.msra.mxu0 0.0
    %1690 = vmatpush.xpose.msra.mxu0 0.0
    %1691 = vmatpush.xpose.msra.mxu0 0.0
    %1692 = vmatpush.xpose.msra.mxu0 0.0
    %1693 = vmatpush.xpose.msra.mxu0 0.0
    %1694 = vmatpush.xpose.msra.mxu0 %v1677
    %1695 = vmatmul.f32.gmra.mxu0 %v1675
    %v1696 = vpop.f32.mrf.mxu0
    %v1697 = vadd.f32 0.0, %v1696
    %1698 = vdwg.mxu0
    %v1699 = vmul.f32 %v1697, 0.35355338
    %v1700 = vadd.f32 %v1699, %v656
    %v1701 = vsel %vm268, %v1700, -inf
    %1702 = vmax.xlane.f32.xlu0 %v1701
    %v1703 = vpop.xlane.xlu0 %1702
    %v1704 = vsub.f32 %v1700, %v1703
    %v1705 = vmul.f32 %v1704, 1.442695
    %v1706 = vpow.pop %v1705
    %v1707 = vsel %vm268, %v1706, 0.0
    %1708 = vadd.xlane.f32.xlu0 %v1707
    %v1709 = vpop.xlane.xlu0 %1708
    %v1710 = vrcp.pop %v1709
    %v1711 = vmul.f32 %v1706, %v1710
    %1712 = vrot.lane.b32.xlu0 %v1235, 56
    %v1713 = vpop.permute.xlu0 %1712
    %v1716 = vsel %vm268, %v1711, 0
    %1718 = vmatpush.msra.mxu0 0.0
    %1719 = vmatpush.msra.mxu0 0.0
    %1720 = vmatpush.msra.mxu0 0.0
    %1721 = vmatpush.msra.mxu0 0.0
    %1722 = vmatpush.msra.mxu0 0.0
    %1723 = vmatpush.msra.mxu0 0.0
    %1724 = vmatpush.msra.mxu0 0.0
    %1725 = vmatpush.msra.mxu0 0.0
    %1726 = vmatpush.msra.mxu0 0.0
    %1727 = vmatpush.msra.mxu0 0.0
    %1728 = vmatpush.msra.mxu0 0.0
    %1729 = vmatpush.msra.mxu0 0.0
    %1730 = vmatpush.msra.mxu0 0.0
    %1731 = vmatpush.msra.mxu0 0.0
    %1732 = vmatpush.msra.mxu0 0.0
    %1733 = vmatpush.msra.mxu0 %v1713
    %1734 = vmatmul.f32.gmra.mxu0 %v1716
    %v1735 = vpop.f32.mrf.mxu0
    %v1736 = vadd.f32 0.0, %v1735
    %1737 = vdwg.mxu0
    %v1739 = vsel %vm268, %v1736, 0
    %1741 = vmatpush.msra.mxu0 0.0
    %1742 = vmatpush.msra.mxu0 0.0
    %1743 = vmatpush.msra.mxu0 0.0
    %1744 = vmatpush.msra.mxu0 0.0
    %1745 = vmatpush.msra.mxu0 0.0
    %1746 = vmatpush.msra.mxu0 0.0
    %1747 = vmatpush.msra.mxu0 0.0
    %1748 = vmatpush.msra.mxu0 0.0
    %1749 = vmatpush.msra.mxu0 0.0
    %1750 = vmatpush.msra.mxu0 0.0
    %1751 = vmatpush.msra.mxu0 0.0
    %1752 = vmatpush.msra.mxu0 0.0
    %1753 = vmatpush.msra.mxu0 0.0
    %1754 = vmatpush.msra.mxu0 0.0
    %1755 = vmatpush.msra.mxu0 0.0
    %1756 = vmatpush.msra.mxu0 %v1239
    %1757 = vmatmul.f32.gmra.mxu0 %v1739
    %v1758 = vpop.f32.mrf.mxu0
    %v1759 = vadd.f32 0.0, %v1758
    %1760 = vdwg.mxu0
    %v1762 = vsel %vm268, %v1669, 0
    %1764 = vmatpush.msra.mxu0 0.0
    %1765 = vmatpush.msra.mxu0 0.0
    %1766 = vmatpush.msra.mxu0 0.0
    %1767 = vmatpush.msra.mxu0 0.0
    %1768 = vmatpush.msra.mxu0 0.0
    %1769 = vmatpush.msra.mxu0 0.0
    %1770 = vmatpush.msra.mxu0 0.0
    %1771 = vmatpush.msra.mxu0 0.0
    %1772 = vmatpush.msra.mxu0 0.0
    %1773 = vmatpush.msra.mxu0 0.0
    %1774 = vmatpush.msra.mxu0 0.0
    %1775 = vmatpush.msra.mxu0 0.0
    %1776 = vmatpush.msra.mxu0 0.0
    %1777 = vmatpush.msra.mxu0 0.0
    %1778 = vmatpush.msra.mxu0 0.0
    %1779 = vmatpush.msra.mxu0 %v1238
    %1780 = vmatmul.f32.gmra.mxu0 %v1762
    %v1781 = vpop.f32.mrf.mxu0
    %v1782 = vadd.f32 %v1759, %v1781
    %1783 = vdwg.mxu0
    %1784 = vrot.lane.b32.xlu0 %v1235, 112
    %v1785 = vpop.permute.xlu0 %1784
    %1786 = vrot.lane.b32.xlu0 %v1235, 80
    %v1787 = vpop.permute.xlu0 %1786
    %v1788 = vsel %vm268, %v1785, 0
    %v1790 = vsel %vm268, %v1787, 0
    %1792 = vmatpush.xpose.msra.mxu0 0.0
    %1793 = vmatpush.xpose.msra.mxu0 0.0
    %1794 = vmatpush.xpose.msra.mxu0 0.0
    %1795 = vmatpush.xpose.msra.mxu0 0.0
    %1796 = vmatpush.xpose.msra.mxu0 0.0
    %1797 = vmatpush.xpose.msra.mxu0 0.0
    %1798 = vmatpush.xpose.msra.mxu0 0.0
    %1799 = vmatpush.xpose.msra.mxu0 0.0
    %1800 = vmatpush.xpose.msra.mxu0 0.0
    %1801 = vmatpush.xpose.msra.mxu0 0.0
    %1802 = vmatpush.xpose.msra.mxu0 0.0
    %1803 = vmatpush.xpose.msra.mxu0 0.0
    %1804 = vmatpush.xpose.msra.mxu0 0.0
    %1805 = vmatpush.xpose.msra.mxu0 0.0
    %1806 = vmatpush.xpose.msra.mxu0 0.0
    %1807 = vmatpush.xpose.msra.mxu0 %v1790
    %1808 = vmatmul.f32.gmra.mxu0 %v1788
    %v1809 = vpop.f32.mrf.mxu0
    %v1810 = vadd.f32 0.0, %v1809
    %1811 = vdwg.mxu0
    %v1812 = vmul.f32 %v1810, 0.35355338
    %v1813 = vadd.f32 %v1812, %v656
    %v1814 = vsel %vm268, %v1813, -inf
    %1815 = vmax.xlane.f32.xlu0 %v1814
    %v1816 = vpop.xlane.xlu0 %1815
    %v1817 = vsub.f32 %v1813, %v1816
    %v1818 = vmul.f32 %v1817, 1.442695
    %v1819 = vpow.pop %v1818
    %v1820 = vsel %vm268, %v1819, 0.0
    %1821 = vadd.xlane.f32.xlu0 %v1820
    %v1822 = vpop.xlane.xlu0 %1821
    %v1823 = vrcp.pop %v1822
    %v1824 = vmul.f32 %v1819, %v1823
    %1825 = vrot.lane.b32.xlu0 %v1235, 48
    %v1826 = vpop.permute.xlu0 %1825
    %v1829 = vsel %vm268, %v1824, 0
    %1831 = vmatpush.msra.mxu0 0.0
    %1832 = vmatpush.msra.mxu0 0.0
    %1833 = vmatpush.msra.mxu0 0.0
    %1834 = vmatpush.msra.mxu0 0.0
    %1835 = vmatpush.msra.mxu0 0.0
    %1836 = vmatpush.msra.mxu0 0.0
    %1837 = vmatpush.msra.mxu0 0.0
    %1838 = vmatpush.msra.mxu0 0.0
    %1839 = vmatpush.msra.mxu0 0.0
    %1840 = vmatpush.msra.mxu0 0.0
    %1841 = vmatpush.msra.mxu0 0.0
    %1842 = vmatpush.msra.mxu0 0.0
    %1843 = vmatpush.msra.mxu0 0.0
    %1844 = vmatpush.msra.mxu0 0.0
    %1845 = vmatpush.msra.mxu0 0.0
    %1846 = vmatpush.msra.mxu0 %v1826
    %1847 = vmatmul.f32.gmra.mxu0 %v1829
    %v1848 = vpop.f32.mrf.mxu0
    %v1849 = vadd.f32 0.0, %v1848
    %1850 = vdwg.mxu0
    %v1852 = vsel %vm268, %v1849, 0
    %1854 = vmatpush.msra.mxu0 0.0
    %1855 = vmatpush.msra.mxu0 0.0
    %1856 = vmatpush.msra.mxu0 0.0
    %1857 = vmatpush.msra.mxu0 0.0
    %1858 = vmatpush.msra.mxu0 0.0
    %1859 = vmatpush.msra.mxu0 0.0
    %1860 = vmatpush.msra.mxu0 0.0
    %1861 = vmatpush.msra.mxu0 0.0
    %1862 = vmatpush.msra.mxu0 0.0
    %1863 = vmatpush.msra.mxu0 0.0
    %1864 = vmatpush.msra.mxu0 0.0
    %1865 = vmatpush.msra.mxu0 0.0
    %1866 = vmatpush.msra.mxu0 0.0
    %1867 = vmatpush.msra.mxu0 0.0
    %1868 = vmatpush.msra.mxu0 0.0
    %1869 = vmatpush.msra.mxu0 %v1240
    %1870 = vmatmul.f32.gmra.mxu0 %v1852
    %v1871 = vpop.f32.mrf.mxu0
    %v1872 = vadd.f32 0.0, %v1871
    %1873 = vdwg.mxu0
    %v1874 = vadd.f32 %v1782, %v1872
    %1875 = vrot.lane.b32.xlu0 %v1235, 104
    %v1876 = vpop.permute.xlu0 %1875
    %1877 = vrot.lane.b32.xlu0 %v1235, 72
    %v1878 = vpop.permute.xlu0 %1877
    %v1879 = vsel %vm268, %v1876, 0
    %v1881 = vsel %vm268, %v1878, 0
    %1883 = vmatpush.xpose.msra.mxu0 0.0
    %1884 = vmatpush.xpose.msra.mxu0 0.0
    %1885 = vmatpush.xpose.msra.mxu0 0.0
    %1886 = vmatpush.xpose.msra.mxu0 0.0
    %1887 = vmatpush.xpose.msra.mxu0 0.0
    %1888 = vmatpush.xpose.msra.mxu0 0.0
    %1889 = vmatpush.xpose.msra.mxu0 0.0
    %1890 = vmatpush.xpose.msra.mxu0 0.0
    %1891 = vmatpush.xpose.msra.mxu0 0.0
    %1892 = vmatpush.xpose.msra.mxu0 0.0
    %1893 = vmatpush.xpose.msra.mxu0 0.0
    %1894 = vmatpush.xpose.msra.mxu0 0.0
    %1895 = vmatpush.xpose.msra.mxu0 0.0
    %1896 = vmatpush.xpose.msra.mxu0 0.0
    %1897 = vmatpush.xpose.msra.mxu0 0.0
    %1898 = vmatpush.xpose.msra.mxu0 %v1881
    %1899 = vmatmul.f32.gmra.mxu0 %v1879
    %v1900 = vpop.f32.mrf.mxu0
    %v1901 = vadd.f32 0.0, %v1900
    %1902 = vdwg.mxu0
    %v1903 = vmul.f32 %v1901, 0.35355338
    %v1904 = vadd.f32 %v1903, %v656
    %v1905 = vsel %vm268, %v1904, -inf
    %1906 = vmax.xlane.f32.xlu0 %v1905
    %v1907 = vpop.xlane.xlu0 %1906
    %v1908 = vsub.f32 %v1904, %v1907
    %v1909 = vmul.f32 %v1908, 1.442695
    %v1910 = vpow.pop %v1909
    %v1911 = vsel %vm268, %v1910, 0.0
    %1912 = vadd.xlane.f32.xlu0 %v1911
    %v1913 = vpop.xlane.xlu0 %1912
    %v1914 = vrcp.pop %v1913
    %v1915 = vmul.f32 %v1910, %v1914
    %1916 = vrot.lane.b32.xlu0 %v1235, 40
    %v1917 = vpop.permute.xlu0 %1916
    %v1920 = vsel %vm268, %v1915, 0
    %1922 = vmatpush.msra.mxu0 0.0
    %1923 = vmatpush.msra.mxu0 0.0
    %1924 = vmatpush.msra.mxu0 0.0
    %1925 = vmatpush.msra.mxu0 0.0
    %1926 = vmatpush.msra.mxu0 0.0
    %1927 = vmatpush.msra.mxu0 0.0
    %1928 = vmatpush.msra.mxu0 0.0
    %1929 = vmatpush.msra.mxu0 0.0
    %1930 = vmatpush.msra.mxu0 0.0
    %1931 = vmatpush.msra.mxu0 0.0
    %1932 = vmatpush.msra.mxu0 0.0
    %1933 = vmatpush.msra.mxu0 0.0
    %1934 = vmatpush.msra.mxu0 0.0
    %1935 = vmatpush.msra.mxu0 0.0
    %1936 = vmatpush.msra.mxu0 0.0
    %1937 = vmatpush.msra.mxu0 %v1917
    %1938 = vmatmul.f32.gmra.mxu0 %v1920
    %v1939 = vpop.f32.mrf.mxu0
    %v1940 = vadd.f32 0.0, %v1939
    %1941 = vdwg.mxu0
    %v1943 = vsel %vm268, %v1940, 0
    %1945 = vmatpush.msra.mxu0 0.0
    %1946 = vmatpush.msra.mxu0 0.0
    %1947 = vmatpush.msra.mxu0 0.0
    %1948 = vmatpush.msra.mxu0 0.0
    %1949 = vmatpush.msra.mxu0 0.0
    %1950 = vmatpush.msra.mxu0 0.0
    %1951 = vmatpush.msra.mxu0 0.0
    %1952 = vmatpush.msra.mxu0 0.0
    %1953 = vmatpush.msra.mxu0 0.0
    %1954 = vmatpush.msra.mxu0 0.0
    %1955 = vmatpush.msra.mxu0 0.0
    %1956 = vmatpush.msra.mxu0 0.0
    %1957 = vmatpush.msra.mxu0 0.0
    %1958 = vmatpush.msra.mxu0 0.0
    %1959 = vmatpush.msra.mxu0 0.0
    %1960 = vmatpush.msra.mxu0 %v1241
    %1961 = vmatmul.f32.gmra.mxu0 %v1943
    %v1962 = vpop.f32.mrf.mxu0
    %v1963 = vadd.f32 0.0, %v1962
    %1964 = vdwg.mxu0
    %v1965 = vadd.f32 %v1874, %v1963
    %v1967 = vperm.slane %v1243, 0
    %v1969 = vadd.f32 %v1604, %v1967
    %v1970 = vadd.f32 %v1965, %v1967
    %v1971 = vadd.f32 %v1196, %v1969
    %v1972 = vadd.f32 %v1197, %v1970
    %s1973 = scalar_lea.vmem %s23, 2
    %v1974 = vld [vmem:[%s1973] sm:$0x3]
    %v1975 = vsel %vm165, %v1971, 0.0
    %1976 = vadd.xlane.f32.xlu0 %v1975
    %v1977 = vpop.xlane.xlu0 %1976
    %v1978 = vsel %vm165, %v1972, 0.0
    %1979 = vadd.xlane.f32.xlu0 %v1978
    %v1980 = vpop.xlane.xlu0 %1979
    %v1981 = vmul.f32 %v1977, %v178
    %v1982 = vmul.f32 %v1980, %v178
    %v1983 = vsub.f32 %v1971, %v1981
    %v1984 = vsub.f32 %v1972, %v1982
    %v1985 = vmul.f32 %v1983, %v1983
    %v1986 = vmul.f32 %v1984, %v1984
    %v1987 = vsel %vm165, %v1985, 0.0
    %1988 = vadd.xlane.f32.xlu0 %v1987
    %v1989 = vpop.xlane.xlu0 %1988
    %v1990 = vsel %vm165, %v1986, 0.0
    %1991 = vadd.xlane.f32.xlu0 %v1990
    %v1992 = vpop.xlane.xlu0 %1991
    %v1993 = vmul.f32 %v1989, %v178
    %v1994 = vmul.f32 %v1992, %v178
    %v1995 = vadd.f32 %v1993, 1e-05
    %v1996 = vadd.f32 %v1994, 1e-05
    %v1997 = vrsqrt.pop %v1995
    %v1998 = vmul.f32 %v1997, %v1995
    %v1999 = vmul.f32 %v1998, %v1997
    %v2000 = vmul.f32 0.5, %v1999
    %v2001 = vsub.f32 1.5, %v2000
    %v2002 = vmul.f32 %v1997, %v2001
    %vm2003 = vweird.f32 %v1995
    %vm2004 = vweird.f32 %v1997
    %vm2005 = vmor %vm2003, %vm2004
    %v2006 = vsel %vm2005, %v1997, %v2002
    %v2007 = vrsqrt.pop %v1996
    %v2008 = vmul.f32 %v2007, %v1996
    %v2009 = vmul.f32 %v2008, %v2007
    %v2010 = vmul.f32 0.5, %v2009
    %v2011 = vsub.f32 1.5, %v2010
    %v2012 = vmul.f32 %v2007, %v2011
    %vm2013 = vweird.f32 %v1996
    %vm2014 = vweird.f32 %v2007
    %vm2015 = vmor %vm2013, %vm2014
    %v2016 = vsel %vm2015, %v2007, %v2012
    %v2017 = vmul.f32 %v1983, %v2006
    %v2018 = vmul.f32 %v1984, %v2016
    %v2019 = vperm.slane %v1974, 0
    %v2020 = vmul.f32 %v2017, %v2019
    %v2021 = vmul.f32 %v2018, %v2019
    %v2022 = vperm.slane %v1974, 1
    %v2023 = vadd.f32 %v2020, %v2022
    %v2024 = vadd.f32 %v2021, %v2022
    %s2025 = scalar_lea.vmem %s25, 32
    %v2026 = vld [vmem:[%s2025] sm:$0xff]
    %v2027 = vld [vmem:[%s2025 + $0x8] sm:$0xff]
    %v2028 = vld [vmem:[%s2025 + $0x10] sm:$0xff]
    %v2029 = vld [vmem:[%s2025 + $0x18] sm:$0xff]
    %s2030 = scalar_lea.vmem %s27, 1
    %v2031 = vld [vmem:[%s2030] sm:$0x1]
    %s2032 = scalar_lea.vmem %s29, 64
    %v2033 = vld [vmem:[%s2032] sm:$0xff]
    %v2034 = vld [vmem:[%s2032 + $0x8] sm:$0xff]
    %v2035 = vld [vmem:[%s2032 + $0x10] sm:$0xff]
    %v2036 = vld [vmem:[%s2032 + $0x18] sm:$0xff]
    %v2037 = vld [vmem:[%s2032 + $0x20] sm:$0xff]
    %v2038 = vld [vmem:[%s2032 + $0x28] sm:$0xff]
    %v2039 = vld [vmem:[%s2032 + $0x30] sm:$0xff]
    %v2040 = vld [vmem:[%s2032 + $0x38] sm:$0xff]
    %s2041 = scalar_lea.vmem %s31, 1
    %v2042 = vld [vmem:[%s2041] sm:$0x1]
    %v2044 = vperm.slane %v2031, 0
    %v2047 = vsel %vm165, %v2023, 0
    %v2050 = vsel %vm165, %v2024, 0
    %2052 = vmatpush.msra.mxu0 0.0
    %2053 = vmatpush.msra.mxu0 0.0
    %2054 = vmatpush.msra.mxu0 0.0
    %2055 = vmatpush.msra.mxu0 0.0
    %2056 = vmatpush.msra.mxu0 0.0
    %2057 = vmatpush.msra.mxu0 0.0
    %2058 = vmatpush.msra.mxu0 0.0
    %2059 = vmatpush.msra.mxu0 0.0
    %2060 = vmatpush.msra.mxu0 0.0
    %2061 = vmatpush.msra.mxu0 0.0
    %2062 = vmatpush.msra.mxu0 0.0
    %2063 = vmatpush.msra.mxu0 0.0
    %2064 = vmatpush.msra.mxu0 %v2029
    %2065 = vmatpush.msra.mxu0 %v2028
    %2066 = vmatpush.msra.mxu0 %v2027
    %2067 = vmatpush.msra.mxu0 %v2026
    %2068 = vmatmul.f32.gmra.mxu0 %v2047
    %v2069 = vpop.f32.mrf.mxu0
    %v2070 = vadd.f32 %v2044, %v2069
    %2071 = vmatmul.f32.gmra.mxu0 %v2050
    %v2072 = vpop.f32.mrf.mxu0
    %v2073 = vadd.f32 %v2044, %v2072
    %2074 = vdwg.mxu0
    %v2075 = vmul.f32 %v2070, %v2070
    %v2076 = vmul.f32 %v2073, %v2073
    %v2077 = vmul.f32 %v2070, %v2075
    %v2078 = vmul.f32 %v2073, %v2076
    %v2079 = vmul.f32 %v2077, 0.044715
    %v2080 = vmul.f32 %v2078, 0.044715
    %v2081 = vadd.f32 %v2070, %v2079
    %v2082 = vadd.f32 %v2073, %v2080
    %v2083 = vmul.f32 %v2081, 0.7978846
    %v2084 = vmul.f32 %v2082, 0.7978846
    %v2085 = vtanh.pop %v2083
    %v2086 = vtanh.pop %v2084
    %v2087 = vadd.f32 %v2085, 1.0
    %v2088 = vadd.f32 %v2086, 1.0
    %v2089 = vmul.f32 %v2087, 0.5
    %v2090 = vmul.f32 %v2088, 0.5
    %v2091 = vmul.f32 %v2070, %v2089
    %v2092 = vmul.f32 %v2073, %v2090
    %v2094 = vperm.slane %v2042, 0
    %v2097 = vsel %vm1115, %v2091, 0
    %v2100 = vsel %vm1115, %v2092, 0
    %2102 = vmatpush.msra.mxu0 0.0
    %2103 = vmatpush.msra.mxu0 0.0
    %2104 = vmatpush.msra.mxu0 0.0
    %2105 = vmatpush.msra.mxu0 0.0
    %2106 = vmatpush.msra.mxu0 0.0
    %2107 = vmatpush.msra.mxu0 0.0
    %2108 = vmatpush.msra.mxu0 0.0
    %2109 = vmatpush.msra.mxu0 0.0
    %2110 = vmatpush.msra.mxu0 %v2040
    %2111 = vmatpush.msra.mxu0 %v2039
    %2112 = vmatpush.msra.mxu0 %v2038
    %2113 = vmatpush.msra.mxu0 %v2037
    %2114 = vmatpush.msra.mxu0 %v2036
    %2115 = vmatpush.msra.mxu0 %v2035
    %2116 = vmatpush.msra.mxu0 %v2034
    %2117 = vmatpush.msra.mxu0 %v2033
    %2118 = vmatmul.f32.gmra.mxu0 %v2097
    %v2119 = vpop.f32.mrf.mxu0
    %v2120 = vadd.f32 %v2094, %v2119
    %2121 = vmatmul.f32.gmra.mxu0 %v2100
    %v2122 = vpop.f32.mrf.mxu0
    %v2123 = vadd.f32 %v2094, %v2122
    %2124 = vdwg.mxu0
    %v2125 = vadd.f32 %v2023, %v2120
    %v2126 = vadd.f32 %v2024, %v2123
    %s2127 = scalar_lea.vmem %s33, 2
    %v2128 = vld [vmem:[%s2127] sm:$0x3]
    %v2129 = vsel %vm165, %v2125, 0.0
    %2130 = vadd.xlane.f32.xlu0 %v2129
    %v2131 = vpop.xlane.xlu0 %2130
    %v2132 = vsel %vm165, %v2126, 0.0
    %2133 = vadd.xlane.f32.xlu0 %v2132
    %v2134 = vpop.xlane.xlu0 %2133
    %v2135 = vmul.f32 %v2131, %v178
    %v2136 = vmul.f32 %v2134, %v178
    %v2137 = vsub.f32 %v2125, %v2135
    %v2138 = vsub.f32 %v2126, %v2136
    %v2139 = vmul.f32 %v2137, %v2137
    %v2140 = vmul.f32 %v2138, %v2138
    %v2141 = vsel %vm165, %v2139, 0.0
    %2142 = vadd.xlane.f32.xlu0 %v2141
    %v2143 = vpop.xlane.xlu0 %2142
    %v2144 = vsel %vm165, %v2140, 0.0
    %2145 = vadd.xlane.f32.xlu0 %v2144
    %v2146 = vpop.xlane.xlu0 %2145
    %v2147 = vmul.f32 %v2143, %v178
    %v2148 = vmul.f32 %v2146, %v178
    %v2149 = vadd.f32 %v2147, 1e-05
    %v2150 = vadd.f32 %v2148, 1e-05
    %v2151 = vrsqrt.pop %v2149
    %v2152 = vmul.f32 %v2151, %v2149
    %v2153 = vmul.f32 %v2152, %v2151
    %v2154 = vmul.f32 0.5, %v2153
    %v2155 = vsub.f32 1.5, %v2154
    %v2156 = vmul.f32 %v2151, %v2155
    %vm2157 = vweird.f32 %v2149
    %vm2158 = vweird.f32 %v2151
    %vm2159 = vmor %vm2157, %vm2158
    %v2160 = vsel %vm2159, %v2151, %v2156
    %v2161 = vrsqrt.pop %v2150
    %v2162 = vmul.f32 %v2161, %v2150
    %v2163 = vmul.f32 %v2162, %v2161
    %v2164 = vmul.f32 0.5, %v2163
    %v2165 = vsub.f32 1.5, %v2164
    %v2166 = vmul.f32 %v2161, %v2165
    %vm2167 = vweird.f32 %v2150
    %vm2168 = vweird.f32 %v2161
    %vm2169 = vmor %vm2167, %vm2168
    %v2170 = vsel %vm2169, %v2161, %v2166
    %v2171 = vmul.f32 %v2137, %v2160
    %v2172 = vmul.f32 %v2138, %v2170
    %v2173 = vperm.slane %v2128, 0
    %v2174 = vmul.f32 %v2171, %v2173
    %v2175 = vmul.f32 %v2172, %v2173
    %v2176 = vperm.slane %v2128, 1
    %v2177 = vadd.f32 %v2174, %v2176
    %v2178 = vadd.f32 %v2175, %v2176
    %v2179 = vld [vmem:[%s3] sm:$0xff]
    %v2180 = vld [vmem:[%s3 + $0x8] sm:$0xff]
    %v2181 = vld [vmem:[%s13] sm:$0x3]
    %v2182 = vsel %vm165, %v2179, 0.0
    %2183 = vadd.xlane.f32.xlu0 %v2182
    %v2184 = vpop.xlane.xlu0 %2183
    %v2185 = vsel %vm165, %v2180, 0.0
    %2186 = vadd.xlane.f32.xlu0 %v2185
    %v2187 = vpop.xlane.xlu0 %2186
    %v2188 = vmul.f32 %v2184, %v178
    %v2189 = vmul.f32 %v2187, %v178
    %v2190 = vsub.f32 %v2179, %v2188
    %v2191 = vsub.f32 %v2180, %v2189
    %v2192 = vmul.f32 %v2190, %v2190
    %v2193 = vmul.f32 %v2191, %v2191
    %v2194 = vsel %vm165, %v2192, 0.0
    %2195 = vadd.xlane.f32.xlu0 %v2194
    %v2196 = vpop.xlane.xlu0 %2195
    %v2197 = vsel %vm165, %v2193, 0.0
    %2198 = vadd.xlane.f32.xlu0 %v2197
    %v2199 = vpop.xlane.xlu0 %2198
    %v2200 = vmul.f32 %v2196, %v178
    %v2201 = vmul.f32 %v2199, %v178
    %v2202 = vadd.f32 %v2200, 1e-05
    %v2203 = vadd.f32 %v2201, 1e-05
    %v2204 = vrsqrt.pop %v2202
    %v2205 = vmul.f32 %v2204, %v2202
    %v2206 = vmul.f32 %v2205, %v2204
    %v2207 = vmul.f32 0.5, %v2206
    %v2208 = vsub.f32 1.5, %v2207
    %v2209 = vmul.f32 %v2204, %v2208
    %vm2210 = vweird.f32 %v2202
    %vm2211 = vweird.f32 %v2204
    %vm2212 = vmor %vm2210, %vm2211
    %v2213 = vsel %vm2212, %v2204, %v2209
    %v2214 = vrsqrt.pop %v2203
    %v2215 = vmul.f32 %v2214, %v2203
    %v2216 = vmul.f32 %v2215, %v2214
    %v2217 = vmul.f32 0.5, %v2216
    %v2218 = vsub.f32 1.5, %v2217
    %v2219 = vmul.f32 %v2214, %v2218
    %vm2220 = vweird.f32 %v2203
    %vm2221 = vweird.f32 %v2214
    %vm2222 = vmor %vm2220, %vm2221
    %v2223 = vsel %vm2222, %v2214, %v2219
    %v2224 = vmul.f32 %v2190, %v2213
    %v2225 = vmul.f32 %v2191, %v2223
    %v2226 = vperm.slane %v2181, 0
    %v2227 = vmul.f32 %v2224, %v2226
    %v2228 = vmul.f32 %v2225, %v2226
    %v2229 = vperm.slane %v2181, 1
    %v2230 = vadd.f32 %v2227, %v2229
    %v2231 = vadd.f32 %v2228, %v2229
    %v2232 = vld [vmem:[%s35] sm:$0xff]
    %v2233 = vld [vmem:[%s35 + $0x8] sm:$0xff]
    %v2234 = vld [vmem:[%s35 + $0x10] sm:$0xff]
    %v2235 = vld [vmem:[%s35 + $0x18] sm:$0xff]
    %v2236 = vld [vmem:[%s37] sm:$0x1]
    %v2238 = vperm.slane %v2236, 0
    %v2241 = vsel %vm165, %v2230, 0
    %v2244 = vsel %vm165, %v2231, 0
    %2246 = vmatpush.msra.mxu0 0.0
    %2247 = vmatpush.msra.mxu0 0.0
    %2248 = vmatpush.msra.mxu0 0.0
    %2249 = vmatpush.msra.mxu0 0.0
    %2250 = vmatpush.msra.mxu0 0.0
    %2251 = vmatpush.msra.mxu0 0.0
    %2252 = vmatpush.msra.mxu0 0.0
    %2253 = vmatpush.msra.mxu0 0.0
    %2254 = vmatpush.msra.mxu0 0.0
    %2255 = vmatpush.msra.mxu0 0.0
    %2256 = vmatpush.msra.mxu0 0.0
    %2257 = vmatpush.msra.mxu0 0.0
    %2258 = vmatpush.msra.mxu0 %v2235
    %2259 = vmatpush.msra.mxu0 %v2234
    %2260 = vmatpush.msra.mxu0 %v2233
    %2261 = vmatpush.msra.mxu0 %v2232
    %2262 = vmatmul.f32.gmra.mxu0 %v2241
    %v2263 = vpop.f32.mrf.mxu0
    %v2264 = vadd.f32 %v2238, %v2263
    %2265 = vmatmul.f32.gmra.mxu0 %v2244
    %v2266 = vpop.f32.mrf.mxu0
    %v2267 = vadd.f32 %v2238, %v2266
    %2268 = vdwg.mxu0
    %v2269 = vld [vmem:[%s39] sm:$0xff]
    %v2270 = vld [vmem:[%s39 + $0x8] sm:$0xff]
    %v2271 = vld [vmem:[%s39 + $0x10] sm:$0xff]
    %v2272 = vld [vmem:[%s39 + $0x18] sm:$0xff]
    %v2273 = vld [vmem:[%s41] sm:$0x1]
    %2275 = vrot.lane.b32.xlu0 %v2264, 96
    %v2276 = vpop.permute.xlu0 %2275
    %v2277 = vsel %vm268, %v2264, 0
    %v2279 = vsel %vm268, %v2276, 0
    %2281 = vmatpush.xpose.msra.mxu0 0.0
    %2282 = vmatpush.xpose.msra.mxu0 0.0
    %2283 = vmatpush.xpose.msra.mxu0 0.0
    %2284 = vmatpush.xpose.msra.mxu0 0.0
    %2285 = vmatpush.xpose.msra.mxu0 0.0
    %2286 = vmatpush.xpose.msra.mxu0 0.0
    %2287 = vmatpush.xpose.msra.mxu0 0.0
    %2288 = vmatpush.xpose.msra.mxu0 0.0
    %2289 = vmatpush.xpose.msra.mxu0 0.0
    %2290 = vmatpush.xpose.msra.mxu0 0.0
    %2291 = vmatpush.xpose.msra.mxu0 0.0
    %2292 = vmatpush.xpose.msra.mxu0 0.0
    %2293 = vmatpush.xpose.msra.mxu0 0.0
    %2294 = vmatpush.xpose.msra.mxu0 0.0
    %2295 = vmatpush.xpose.msra.mxu0 0.0
    %2296 = vmatpush.xpose.msra.mxu0 %v2279
    %2297 = vmatmul.f32.gmra.mxu0 %v2277
    %v2298 = vpop.f32.mrf.mxu0
    %v2299 = vadd.f32 0.0, %v2298
    %2300 = vdwg.mxu0
    %v2301 = vmul.f32 %v2299, 0.35355338
    %v2302 = vadd.f32 %v2301, %v160
    %v2303 = vsel %vm268, %v2302, -inf
    %2304 = vmax.xlane.f32.xlu0 %v2303
    %v2305 = vpop.xlane.xlu0 %2304
    %v2306 = vsub.f32 %v2302, %v2305
    %v2307 = vmul.f32 %v2306, 1.442695
    %v2308 = vpow.pop %v2307
    %v2309 = vsel %vm268, %v2308, 0.0
    %2310 = vadd.xlane.f32.xlu0 %v2309
    %v2311 = vpop.xlane.xlu0 %2310
    %v2312 = vrcp.pop %v2311
    %v2313 = vmul.f32 %v2308, %v2312
    %2314 = vrot.lane.b32.xlu0 %v2264, 64
    %v2315 = vpop.permute.xlu0 %2314
    %v2318 = vsel %vm268, %v2313, 0
    %2320 = vmatpush.msra.mxu0 0.0
    %2321 = vmatpush.msra.mxu0 0.0
    %2322 = vmatpush.msra.mxu0 0.0
    %2323 = vmatpush.msra.mxu0 0.0
    %2324 = vmatpush.msra.mxu0 0.0
    %2325 = vmatpush.msra.mxu0 0.0
    %2326 = vmatpush.msra.mxu0 0.0
    %2327 = vmatpush.msra.mxu0 0.0
    %2328 = vmatpush.msra.mxu0 0.0
    %2329 = vmatpush.msra.mxu0 0.0
    %2330 = vmatpush.msra.mxu0 0.0
    %2331 = vmatpush.msra.mxu0 0.0
    %2332 = vmatpush.msra.mxu0 0.0
    %2333 = vmatpush.msra.mxu0 0.0
    %2334 = vmatpush.msra.mxu0 0.0
    %2335 = vmatpush.msra.mxu0 %v2315
    %2336 = vmatmul.f32.gmra.mxu0 %v2318
    %v2337 = vpop.f32.mrf.mxu0
    %v2338 = vadd.f32 0.0, %v2337
    %2339 = vdwg.mxu0
    %2340 = vrot.lane.b32.xlu0 %v2264, 120
    %v2341 = vpop.permute.xlu0 %2340
    %2342 = vrot.lane.b32.xlu0 %v2264, 88
    %v2343 = vpop.permute.xlu0 %2342
    %v2344 = vsel %vm268, %v2341, 0
    %v2346 = vsel %vm268, %v2343, 0
    %2348 = vmatpush.xpose.msra.mxu0 0.0
    %2349 = vmatpush.xpose.msra.mxu0 0.0
    %2350 = vmatpush.xpose.msra.mxu0 0.0
    %2351 = vmatpush.xpose.msra.mxu0 0.0
    %2352 = vmatpush.xpose.msra.mxu0 0.0
    %2353 = vmatpush.xpose.msra.mxu0 0.0
    %2354 = vmatpush.xpose.msra.mxu0 0.0
    %2355 = vmatpush.xpose.msra.mxu0 0.0
    %2356 = vmatpush.xpose.msra.mxu0 0.0
    %2357 = vmatpush.xpose.msra.mxu0 0.0
    %2358 = vmatpush.xpose.msra.mxu0 0.0
    %2359 = vmatpush.xpose.msra.mxu0 0.0
    %2360 = vmatpush.xpose.msra.mxu0 0.0
    %2361 = vmatpush.xpose.msra.mxu0 0.0
    %2362 = vmatpush.xpose.msra.mxu0 0.0
    %2363 = vmatpush.xpose.msra.mxu0 %v2346
    %2364 = vmatmul.f32.gmra.mxu0 %v2344
    %v2365 = vpop.f32.mrf.mxu0
    %v2366 = vadd.f32 0.0, %v2365
    %2367 = vdwg.mxu0
    %v2368 = vmul.f32 %v2366, 0.35355338
    %v2369 = vadd.f32 %v2368, %v160
    %v2370 = vsel %vm268, %v2369, -inf
    %2371 = vmax.xlane.f32.xlu0 %v2370
    %v2372 = vpop.xlane.xlu0 %2371
    %v2373 = vsub.f32 %v2369, %v2372
    %v2374 = vmul.f32 %v2373, 1.442695
    %v2375 = vpow.pop %v2374
    %v2376 = vsel %vm268, %v2375, 0.0
    %2377 = vadd.xlane.f32.xlu0 %v2376
    %v2378 = vpop.xlane.xlu0 %2377
    %v2379 = vrcp.pop %v2378
    %v2380 = vmul.f32 %v2375, %v2379
    %2381 = vrot.lane.b32.xlu0 %v2264, 56
    %v2382 = vpop.permute.xlu0 %2381
    %v2385 = vsel %vm268, %v2380, 0
    %2387 = vmatpush.msra.mxu0 0.0
    %2388 = vmatpush.msra.mxu0 0.0
    %2389 = vmatpush.msra.mxu0 0.0
    %2390 = vmatpush.msra.mxu0 0.0
    %2391 = vmatpush.msra.mxu0 0.0
    %2392 = vmatpush.msra.mxu0 0.0
    %2393 = vmatpush.msra.mxu0 0.0
    %2394 = vmatpush.msra.mxu0 0.0
    %2395 = vmatpush.msra.mxu0 0.0
    %2396 = vmatpush.msra.mxu0 0.0
    %2397 = vmatpush.msra.mxu0 0.0
    %2398 = vmatpush.msra.mxu0 0.0
    %2399 = vmatpush.msra.mxu0 0.0
    %2400 = vmatpush.msra.mxu0 0.0
    %2401 = vmatpush.msra.mxu0 0.0
    %2402 = vmatpush.msra.mxu0 %v2382
    %2403 = vmatmul.f32.gmra.mxu0 %v2385
    %v2404 = vpop.f32.mrf.mxu0
    %v2405 = vadd.f32 0.0, %v2404
    %2406 = vdwg.mxu0
    %v2408 = vsel %vm268, %v2405, 0
    %2410 = vmatpush.msra.mxu0 0.0
    %2411 = vmatpush.msra.mxu0 0.0
    %2412 = vmatpush.msra.mxu0 0.0
    %2413 = vmatpush.msra.mxu0 0.0
    %2414 = vmatpush.msra.mxu0 0.0
    %2415 = vmatpush.msra.mxu0 0.0
    %2416 = vmatpush.msra.mxu0 0.0
    %2417 = vmatpush.msra.mxu0 0.0
    %2418 = vmatpush.msra.mxu0 0.0
    %2419 = vmatpush.msra.mxu0 0.0
    %2420 = vmatpush.msra.mxu0 0.0
    %2421 = vmatpush.msra.mxu0 0.0
    %2422 = vmatpush.msra.mxu0 0.0
    %2423 = vmatpush.msra.mxu0 0.0
    %2424 = vmatpush.msra.mxu0 0.0
    %2425 = vmatpush.msra.mxu0 %v2270
    %2426 = vmatmul.f32.gmra.mxu0 %v2408
    %v2427 = vpop.f32.mrf.mxu0
    %v2428 = vadd.f32 0.0, %v2427
    %2429 = vdwg.mxu0
    %v2431 = vsel %vm268, %v2338, 0
    %2433 = vmatpush.msra.mxu0 0.0
    %2434 = vmatpush.msra.mxu0 0.0
    %2435 = vmatpush.msra.mxu0 0.0
    %2436 = vmatpush.msra.mxu0 0.0
    %2437 = vmatpush.msra.mxu0 0.0
    %2438 = vmatpush.msra.mxu0 0.0
    %2439 = vmatpush.msra.mxu0 0.0
    %2440 = vmatpush.msra.mxu0 0.0
    %2441 = vmatpush.msra.mxu0 0.0
    %2442 = vmatpush.msra.mxu0 0.0
    %2443 = vmatpush.msra.mxu0 0.0
    %2444 = vmatpush.msra.mxu0 0.0
    %2445 = vmatpush.msra.mxu0 0.0
    %2446 = vmatpush.msra.mxu0 0.0
    %2447 = vmatpush.msra.mxu0 0.0
    %2448 = vmatpush.msra.mxu0 %v2269
    %2449 = vmatmul.f32.gmra.mxu0 %v2431
    %v2450 = vpop.f32.mrf.mxu0
    %v2451 = vadd.f32 %v2428, %v2450
    %2452 = vdwg.mxu0
    %2453 = vrot.lane.b32.xlu0 %v2264, 112
    %v2454 = vpop.permute.xlu0 %2453
    %2455 = vrot.lane.b32.xlu0 %v2264, 80
    %v2456 = vpop.permute.xlu0 %2455
    %v2457 = vsel %vm268, %v2454, 0
    %v2459 = vsel %vm268, %v2456, 0
    %2461 = vmatpush.xpose.msra.mxu0 0.0
    %2462 = vmatpush.xpose.msra.mxu0 0.0
    %2463 = vmatpush.xpose.msra.mxu0 0.0
    %2464 = vmatpush.xpose.msra.mxu0 0.0
    %2465 = vmatpush.xpose.msra.mxu0 0.0
    %2466 = vmatpush.xpose.msra.mxu0 0.0
    %2467 = vmatpush.xpose.msra.mxu0 0.0
    %2468 = vmatpush.xpose.msra.mxu0 0.0
    %2469 = vmatpush.xpose.msra.mxu0 0.0
    %2470 = vmatpush.xpose.msra.mxu0 0.0
    %2471 = vmatpush.xpose.msra.mxu0 0.0
    %2472 = vmatpush.xpose.msra.mxu0 0.0
    %2473 = vmatpush.xpose.msra.mxu0 0.0
    %2474 = vmatpush.xpose.msra.mxu0 0.0
    %2475 = vmatpush.xpose.msra.mxu0 0.0
    %2476 = vmatpush.xpose.msra.mxu0 %v2459
    %2477 = vmatmul.f32.gmra.mxu0 %v2457
    %v2478 = vpop.f32.mrf.mxu0
    %v2479 = vadd.f32 0.0, %v2478
    %2480 = vdwg.mxu0
    %v2481 = vmul.f32 %v2479, 0.35355338
    %v2482 = vadd.f32 %v2481, %v160
    %v2483 = vsel %vm268, %v2482, -inf
    %2484 = vmax.xlane.f32.xlu0 %v2483
    %v2485 = vpop.xlane.xlu0 %2484
    %v2486 = vsub.f32 %v2482, %v2485
    %v2487 = vmul.f32 %v2486, 1.442695
    %v2488 = vpow.pop %v2487
    %v2489 = vsel %vm268, %v2488, 0.0
    %2490 = vadd.xlane.f32.xlu0 %v2489
    %v2491 = vpop.xlane.xlu0 %2490
    %v2492 = vrcp.pop %v2491
    %v2493 = vmul.f32 %v2488, %v2492
    %2494 = vrot.lane.b32.xlu0 %v2264, 48
    %v2495 = vpop.permute.xlu0 %2494
    %v2498 = vsel %vm268, %v2493, 0
    %2500 = vmatpush.msra.mxu0 0.0
    %2501 = vmatpush.msra.mxu0 0.0
    %2502 = vmatpush.msra.mxu0 0.0
    %2503 = vmatpush.msra.mxu0 0.0
    %2504 = vmatpush.msra.mxu0 0.0
    %2505 = vmatpush.msra.mxu0 0.0
    %2506 = vmatpush.msra.mxu0 0.0
    %2507 = vmatpush.msra.mxu0 0.0
    %2508 = vmatpush.msra.mxu0 0.0
    %2509 = vmatpush.msra.mxu0 0.0
    %2510 = vmatpush.msra.mxu0 0.0
    %2511 = vmatpush.msra.mxu0 0.0
    %2512 = vmatpush.msra.mxu0 0.0
    %2513 = vmatpush.msra.mxu0 0.0
    %2514 = vmatpush.msra.mxu0 0.0
    %2515 = vmatpush.msra.mxu0 %v2495
    %2516 = vmatmul.f32.gmra.mxu0 %v2498
    %v2517 = vpop.f32.mrf.mxu0
    %v2518 = vadd.f32 0.0, %v2517
    %2519 = vdwg.mxu0
    %v2521 = vsel %vm268, %v2518, 0
    %2523 = vmatpush.msra.mxu0 0.0
    %2524 = vmatpush.msra.mxu0 0.0
    %2525 = vmatpush.msra.mxu0 0.0
    %2526 = vmatpush.msra.mxu0 0.0
    %2527 = vmatpush.msra.mxu0 0.0
    %2528 = vmatpush.msra.mxu0 0.0
    %2529 = vmatpush.msra.mxu0 0.0
    %2530 = vmatpush.msra.mxu0 0.0
    %2531 = vmatpush.msra.mxu0 0.0
    %2532 = vmatpush.msra.mxu0 0.0
    %2533 = vmatpush.msra.mxu0 0.0
    %2534 = vmatpush.msra.mxu0 0.0
    %2535 = vmatpush.msra.mxu0 0.0
    %2536 = vmatpush.msra.mxu0 0.0
    %2537 = vmatpush.msra.mxu0 0.0
    %2538 = vmatpush.msra.mxu0 %v2271
    %2539 = vmatmul.f32.gmra.mxu0 %v2521
    %v2540 = vpop.f32.mrf.mxu0
    %v2541 = vadd.f32 0.0, %v2540
    %2542 = vdwg.mxu0
    %v2543 = vadd.f32 %v2451, %v2541
    %2544 = vrot.lane.b32.xlu0 %v2264, 104
    %v2545 = vpop.permute.xlu0 %2544
    %2546 = vrot.lane.b32.xlu0 %v2264, 72
    %v2547 = vpop.permute.xlu0 %2546
    %v2548 = vsel %vm268, %v2545, 0
    %v2550 = vsel %vm268, %v2547, 0
    %2552 = vmatpush.xpose.msra.mxu0 0.0
    %2553 = vmatpush.xpose.msra.mxu0 0.0
    %2554 = vmatpush.xpose.msra.mxu0 0.0
    %2555 = vmatpush.xpose.msra.mxu0 0.0
    %2556 = vmatpush.xpose.msra.mxu0 0.0
    %2557 = vmatpush.xpose.msra.mxu0 0.0
    %2558 = vmatpush.xpose.msra.mxu0 0.0
    %2559 = vmatpush.xpose.msra.mxu0 0.0
    %2560 = vmatpush.xpose.msra.mxu0 0.0
    %2561 = vmatpush.xpose.msra.mxu0 0.0
    %2562 = vmatpush.xpose.msra.mxu0 0.0
    %2563 = vmatpush.xpose.msra.mxu0 0.0
    %2564 = vmatpush.xpose.msra.mxu0 0.0
    %2565 = vmatpush.xpose.msra.mxu0 0.0
    %2566 = vmatpush.xpose.msra.mxu0 0.0
    %2567 = vmatpush.xpose.msra.mxu0 %v2550
    %2568 = vmatmul.f32.gmra.mxu0 %v2548
    %v2569 = vpop.f32.mrf.mxu0
    %v2570 = vadd.f32 0.0, %v2569
    %2571 = vdwg.mxu0
    %v2572 = vmul.f32 %v2570, 0.35355338
    %v2573 = vadd.f32 %v2572, %v160
    %v2574 = vsel %vm268, %v2573, -inf
    %2575 = vmax.xlane.f32.xlu0 %v2574
    %v2576 = vpop.xlane.xlu0 %2575
    %v2577 = vsub.f32 %v2573, %v2576
    %v2578 = vmul.f32 %v2577, 1.442695
    %v2579 = vpow.pop %v2578
    %v2580 = vsel %vm268, %v2579, 0.0
    %2581 = vadd.xlane.f32.xlu0 %v2580
    %v2582 = vpop.xlane.xlu0 %2581
    %v2583 = vrcp.pop %v2582
    %v2584 = vmul.f32 %v2579, %v2583
    %2585 = vrot.lane.b32.xlu0 %v2264, 40
    %v2586 = vpop.permute.xlu0 %2585
    %v2589 = vsel %vm268, %v2584, 0
    %2591 = vmatpush.msra.mxu0 0.0
    %2592 = vmatpush.msra.mxu0 0.0
    %2593 = vmatpush.msra.mxu0 0.0
    %2594 = vmatpush.msra.mxu0 0.0
    %2595 = vmatpush.msra.mxu0 0.0
    %2596 = vmatpush.msra.mxu0 0.0
    %2597 = vmatpush.msra.mxu0 0.0
    %2598 = vmatpush.msra.mxu0 0.0
    %2599 = vmatpush.msra.mxu0 0.0
    %2600 = vmatpush.msra.mxu0 0.0
    %2601 = vmatpush.msra.mxu0 0.0
    %2602 = vmatpush.msra.mxu0 0.0
    %2603 = vmatpush.msra.mxu0 0.0
    %2604 = vmatpush.msra.mxu0 0.0
    %2605 = vmatpush.msra.mxu0 0.0
    %2606 = vmatpush.msra.mxu0 %v2586
    %2607 = vmatmul.f32.gmra.mxu0 %v2589
    %v2608 = vpop.f32.mrf.mxu0
    %v2609 = vadd.f32 0.0, %v2608
    %2610 = vdwg.mxu0
    %v2612 = vsel %vm268, %v2609, 0
    %2614 = vmatpush.msra.mxu0 0.0
    %2615 = vmatpush.msra.mxu0 0.0
    %2616 = vmatpush.msra.mxu0 0.0
    %2617 = vmatpush.msra.mxu0 0.0
    %2618 = vmatpush.msra.mxu0 0.0
    %2619 = vmatpush.msra.mxu0 0.0
    %2620 = vmatpush.msra.mxu0 0.0
    %2621 = vmatpush.msra.mxu0 0.0
    %2622 = vmatpush.msra.mxu0 0.0
    %2623 = vmatpush.msra.mxu0 0.0
    %2624 = vmatpush.msra.mxu0 0.0
    %2625 = vmatpush.msra.mxu0 0.0
    %2626 = vmatpush.msra.mxu0 0.0
    %2627 = vmatpush.msra.mxu0 0.0
    %2628 = vmatpush.msra.mxu0 0.0
    %2629 = vmatpush.msra.mxu0 %v2272
    %2630 = vmatmul.f32.gmra.mxu0 %v2612
    %v2631 = vpop.f32.mrf.mxu0
    %v2632 = vadd.f32 0.0, %v2631
    %2633 = vdwg.mxu0
    %v2634 = vadd.f32 %v2543, %v2632
    %2636 = vrot.lane.b32.xlu0 %v2267, 96
    %v2637 = vpop.permute.xlu0 %2636
    %v2638 = vsel %vm268, %v2267, 0
    %v2640 = vsel %vm268, %v2637, 0
    %2642 = vmatpush.xpose.msra.mxu0 0.0
    %2643 = vmatpush.xpose.msra.mxu0 0.0
    %2644 = vmatpush.xpose.msra.mxu0 0.0
    %2645 = vmatpush.xpose.msra.mxu0 0.0
    %2646 = vmatpush.xpose.msra.mxu0 0.0
    %2647 = vmatpush.xpose.msra.mxu0 0.0
    %2648 = vmatpush.xpose.msra.mxu0 0.0
    %2649 = vmatpush.xpose.msra.mxu0 0.0
    %2650 = vmatpush.xpose.msra.mxu0 0.0
    %2651 = vmatpush.xpose.msra.mxu0 0.0
    %2652 = vmatpush.xpose.msra.mxu0 0.0
    %2653 = vmatpush.xpose.msra.mxu0 0.0
    %2654 = vmatpush.xpose.msra.mxu0 0.0
    %2655 = vmatpush.xpose.msra.mxu0 0.0
    %2656 = vmatpush.xpose.msra.mxu0 0.0
    %2657 = vmatpush.xpose.msra.mxu0 %v2640
    %2658 = vmatmul.f32.gmra.mxu0 %v2638
    %v2659 = vpop.f32.mrf.mxu0
    %v2660 = vadd.f32 0.0, %v2659
    %2661 = vdwg.mxu0
    %v2662 = vmul.f32 %v2660, 0.35355338
    %v2663 = vadd.f32 %v2662, %v161
    %v2664 = vsel %vm268, %v2663, -inf
    %2665 = vmax.xlane.f32.xlu0 %v2664
    %v2666 = vpop.xlane.xlu0 %2665
    %v2667 = vsub.f32 %v2663, %v2666
    %v2668 = vmul.f32 %v2667, 1.442695
    %v2669 = vpow.pop %v2668
    %v2670 = vsel %vm268, %v2669, 0.0
    %2671 = vadd.xlane.f32.xlu0 %v2670
    %v2672 = vpop.xlane.xlu0 %2671
    %v2673 = vrcp.pop %v2672
    %v2674 = vmul.f32 %v2669, %v2673
    %2675 = vrot.lane.b32.xlu0 %v2267, 64
    %v2676 = vpop.permute.xlu0 %2675
    %v2679 = vsel %vm268, %v2674, 0
    %2681 = vmatpush.msra.mxu0 0.0
    %2682 = vmatpush.msra.mxu0 0.0
    %2683 = vmatpush.msra.mxu0 0.0
    %2684 = vmatpush.msra.mxu0 0.0
    %2685 = vmatpush.msra.mxu0 0.0
    %2686 = vmatpush.msra.mxu0 0.0
    %2687 = vmatpush.msra.mxu0 0.0
    %2688 = vmatpush.msra.mxu0 0.0
    %2689 = vmatpush.msra.mxu0 0.0
    %2690 = vmatpush.msra.mxu0 0.0
    %2691 = vmatpush.msra.mxu0 0.0
    %2692 = vmatpush.msra.mxu0 0.0
    %2693 = vmatpush.msra.mxu0 0.0
    %2694 = vmatpush.msra.mxu0 0.0
    %2695 = vmatpush.msra.mxu0 0.0
    %2696 = vmatpush.msra.mxu0 %v2676
    %2697 = vmatmul.f32.gmra.mxu0 %v2679
    %v2698 = vpop.f32.mrf.mxu0
    %v2699 = vadd.f32 0.0, %v2698
    %2700 = vdwg.mxu0
    %2701 = vrot.lane.b32.xlu0 %v2267, 120
    %v2702 = vpop.permute.xlu0 %2701
    %2703 = vrot.lane.b32.xlu0 %v2267, 88
    %v2704 = vpop.permute.xlu0 %2703
    %v2705 = vsel %vm268, %v2702, 0
    %v2707 = vsel %vm268, %v2704, 0
    %2709 = vmatpush.xpose.msra.mxu0 0.0
    %2710 = vmatpush.xpose.msra.mxu0 0.0
    %2711 = vmatpush.xpose.msra.mxu0 0.0
    %2712 = vmatpush.xpose.msra.mxu0 0.0
    %2713 = vmatpush.xpose.msra.mxu0 0.0
    %2714 = vmatpush.xpose.msra.mxu0 0.0
    %2715 = vmatpush.xpose.msra.mxu0 0.0
    %2716 = vmatpush.xpose.msra.mxu0 0.0
    %2717 = vmatpush.xpose.msra.mxu0 0.0
    %2718 = vmatpush.xpose.msra.mxu0 0.0
    %2719 = vmatpush.xpose.msra.mxu0 0.0
    %2720 = vmatpush.xpose.msra.mxu0 0.0
    %2721 = vmatpush.xpose.msra.mxu0 0.0
    %2722 = vmatpush.xpose.msra.mxu0 0.0
    %2723 = vmatpush.xpose.msra.mxu0 0.0
    %2724 = vmatpush.xpose.msra.mxu0 %v2707
    %2725 = vmatmul.f32.gmra.mxu0 %v2705
    %v2726 = vpop.f32.mrf.mxu0
    %v2727 = vadd.f32 0.0, %v2726
    %2728 = vdwg.mxu0
    %v2729 = vmul.f32 %v2727, 0.35355338
    %v2730 = vadd.f32 %v2729, %v161
    %v2731 = vsel %vm268, %v2730, -inf
    %2732 = vmax.xlane.f32.xlu0 %v2731
    %v2733 = vpop.xlane.xlu0 %2732
    %v2734 = vsub.f32 %v2730, %v2733
    %v2735 = vmul.f32 %v2734, 1.442695
    %v2736 = vpow.pop %v2735
    %v2737 = vsel %vm268, %v2736, 0.0
    %2738 = vadd.xlane.f32.xlu0 %v2737
    %v2739 = vpop.xlane.xlu0 %2738
    %v2740 = vrcp.pop %v2739
    %v2741 = vmul.f32 %v2736, %v2740
    %2742 = vrot.lane.b32.xlu0 %v2267, 56
    %v2743 = vpop.permute.xlu0 %2742
    %v2746 = vsel %vm268, %v2741, 0
    %2748 = vmatpush.msra.mxu0 0.0
    %2749 = vmatpush.msra.mxu0 0.0
    %2750 = vmatpush.msra.mxu0 0.0
    %2751 = vmatpush.msra.mxu0 0.0
    %2752 = vmatpush.msra.mxu0 0.0
    %2753 = vmatpush.msra.mxu0 0.0
    %2754 = vmatpush.msra.mxu0 0.0
    %2755 = vmatpush.msra.mxu0 0.0
    %2756 = vmatpush.msra.mxu0 0.0
    %2757 = vmatpush.msra.mxu0 0.0
    %2758 = vmatpush.msra.mxu0 0.0
    %2759 = vmatpush.msra.mxu0 0.0
    %2760 = vmatpush.msra.mxu0 0.0
    %2761 = vmatpush.msra.mxu0 0.0
    %2762 = vmatpush.msra.mxu0 0.0
    %2763 = vmatpush.msra.mxu0 %v2743
    %2764 = vmatmul.f32.gmra.mxu0 %v2746
    %v2765 = vpop.f32.mrf.mxu0
    %v2766 = vadd.f32 0.0, %v2765
    %2767 = vdwg.mxu0
    %v2769 = vsel %vm268, %v2766, 0
    %2771 = vmatpush.msra.mxu0 0.0
    %2772 = vmatpush.msra.mxu0 0.0
    %2773 = vmatpush.msra.mxu0 0.0
    %2774 = vmatpush.msra.mxu0 0.0
    %2775 = vmatpush.msra.mxu0 0.0
    %2776 = vmatpush.msra.mxu0 0.0
    %2777 = vmatpush.msra.mxu0 0.0
    %2778 = vmatpush.msra.mxu0 0.0
    %2779 = vmatpush.msra.mxu0 0.0
    %2780 = vmatpush.msra.mxu0 0.0
    %2781 = vmatpush.msra.mxu0 0.0
    %2782 = vmatpush.msra.mxu0 0.0
    %2783 = vmatpush.msra.mxu0 0.0
    %2784 = vmatpush.msra.mxu0 0.0
    %2785 = vmatpush.msra.mxu0 0.0
    %2786 = vmatpush.msra.mxu0 %v2270
    %2787 = vmatmul.f32.gmra.mxu0 %v2769
    %v2788 = vpop.f32.mrf.mxu0
    %v2789 = vadd.f32 0.0, %v2788
    %2790 = vdwg.mxu0
    %v2792 = vsel %vm268, %v2699, 0
    %2794 = vmatpush.msra.mxu0 0.0
    %2795 = vmatpush.msra.mxu0 0.0
    %2796 = vmatpush.msra.mxu0 0.0
    %2797 = vmatpush.msra.mxu0 0.0
    %2798 = vmatpush.msra.mxu0 0.0
    %2799 = vmatpush.msra.mxu0 0.0
    %2800 = vmatpush.msra.mxu0 0.0
    %2801 = vmatpush.msra.mxu0 0.0
    %2802 = vmatpush.msra.mxu0 0.0
    %2803 = vmatpush.msra.mxu0 0.0
    %2804 = vmatpush.msra.mxu0 0.0
    %2805 = vmatpush.msra.mxu0 0.0
    %2806 = vmatpush.msra.mxu0 0.0
    %2807 = vmatpush.msra.mxu0 0.0
    %2808 = vmatpush.msra.mxu0 0.0
    %2809 = vmatpush.msra.mxu0 %v2269
    %2810 = vmatmul.f32.gmra.mxu0 %v2792
    %v2811 = vpop.f32.mrf.mxu0
    %v2812 = vadd.f32 %v2789, %v2811
    %2813 = vdwg.mxu0
    %2814 = vrot.lane.b32.xlu0 %v2267, 112
    %v2815 = vpop.permute.xlu0 %2814
    %2816 = vrot.lane.b32.xlu0 %v2267, 80
    %v2817 = vpop.permute.xlu0 %2816
    %v2818 = vsel %vm268, %v2815, 0
    %v2820 = vsel %vm268, %v2817, 0
    %2822 = vmatpush.xpose.msra.mxu0 0.0
    %2823 = vmatpush.xpose.msra.mxu0 0.0
    %2824 = vmatpush.xpose.msra.mxu0 0.0
    %2825 = vmatpush.xpose.msra.mxu0 0.0
    %2826 = vmatpush.xpose.msra.mxu0 0.0
    %2827 = vmatpush.xpose.msra.mxu0 0.0
    %2828 = vmatpush.xpose.msra.mxu0 0.0
    %2829 = vmatpush.xpose.msra.mxu0 0.0
    %2830 = vmatpush.xpose.msra.mxu0 0.0
    %2831 = vmatpush.xpose.msra.mxu0 0.0
    %2832 = vmatpush.xpose.msra.mxu0 0.0
    %2833 = vmatpush.xpose.msra.mxu0 0.0
    %2834 = vmatpush.xpose.msra.mxu0 0.0
    %2835 = vmatpush.xpose.msra.mxu0 0.0
    %2836 = vmatpush.xpose.msra.mxu0 0.0
    %2837 = vmatpush.xpose.msra.mxu0 %v2820
    %2838 = vmatmul.f32.gmra.mxu0 %v2818
    %v2839 = vpop.f32.mrf.mxu0
    %v2840 = vadd.f32 0.0, %v2839
    %2841 = vdwg.mxu0
    %v2842 = vmul.f32 %v2840, 0.35355338
    %v2843 = vadd.f32 %v2842, %v161
    %v2844 = vsel %vm268, %v2843, -inf
    %2845 = vmax.xlane.f32.xlu0 %v2844
    %v2846 = vpop.xlane.xlu0 %2845
    %v2847 = vsub.f32 %v2843, %v2846
    %v2848 = vmul.f32 %v2847, 1.442695
    %v2849 = vpow.pop %v2848
    %v2850 = vsel %vm268, %v2849, 0.0
    %2851 = vadd.xlane.f32.xlu0 %v2850
    %v2852 = vpop.xlane.xlu0 %2851
    %v2853 = vrcp.pop %v2852
    %v2854 = vmul.f32 %v2849, %v2853
    %2855 = vrot.lane.b32.xlu0 %v2267, 48
    %v2856 = vpop.permute.xlu0 %2855
    %v2859 = vsel %vm268, %v2854, 0
    %2861 = vmatpush.msra.mxu0 0.0
    %2862 = vmatpush.msra.mxu0 0.0
    %2863 = vmatpush.msra.mxu0 0.0
    %2864 = vmatpush.msra.mxu0 0.0
    %2865 = vmatpush.msra.mxu0 0.0
    %2866 = vmatpush.msra.mxu0 0.0
    %2867 = vmatpush.msra.mxu0 0.0
    %2868 = vmatpush.msra.mxu0 0.0
    %2869 = vmatpush.msra.mxu0 0.0
    %2870 = vmatpush.msra.mxu0 0.0
    %2871 = vmatpush.msra.mxu0 0.0
    %2872 = vmatpush.msra.mxu0 0.0
    %2873 = vmatpush.msra.mxu0 0.0
    %2874 = vmatpush.msra.mxu0 0.0
    %2875 = vmatpush.msra.mxu0 0.0
    %2876 = vmatpush.msra.mxu0 %v2856
    %2877 = vmatmul.f32.gmra.mxu0 %v2859
    %v2878 = vpop.f32.mrf.mxu0
    %v2879 = vadd.f32 0.0, %v2878
    %2880 = vdwg.mxu0
    %v2882 = vsel %vm268, %v2879, 0
    %2884 = vmatpush.msra.mxu0 0.0
    %2885 = vmatpush.msra.mxu0 0.0
    %2886 = vmatpush.msra.mxu0 0.0
    %2887 = vmatpush.msra.mxu0 0.0
    %2888 = vmatpush.msra.mxu0 0.0
    %2889 = vmatpush.msra.mxu0 0.0
    %2890 = vmatpush.msra.mxu0 0.0
    %2891 = vmatpush.msra.mxu0 0.0
    %2892 = vmatpush.msra.mxu0 0.0
    %2893 = vmatpush.msra.mxu0 0.0
    %2894 = vmatpush.msra.mxu0 0.0
    %2895 = vmatpush.msra.mxu0 0.0
    %2896 = vmatpush.msra.mxu0 0.0
    %2897 = vmatpush.msra.mxu0 0.0
    %2898 = vmatpush.msra.mxu0 0.0
    %2899 = vmatpush.msra.mxu0 %v2271
    %2900 = vmatmul.f32.gmra.mxu0 %v2882
    %v2901 = vpop.f32.mrf.mxu0
    %v2902 = vadd.f32 0.0, %v2901
    %2903 = vdwg.mxu0
    %v2904 = vadd.f32 %v2812, %v2902
    %2905 = vrot.lane.b32.xlu0 %v2267, 104
    %v2906 = vpop.permute.xlu0 %2905
    %2907 = vrot.lane.b32.xlu0 %v2267, 72
    %v2908 = vpop.permute.xlu0 %2907
    %v2909 = vsel %vm268, %v2906, 0
    %v2911 = vsel %vm268, %v2908, 0
    %2913 = vmatpush.xpose.msra.mxu0 0.0
    %2914 = vmatpush.xpose.msra.mxu0 0.0
    %2915 = vmatpush.xpose.msra.mxu0 0.0
    %2916 = vmatpush.xpose.msra.mxu0 0.0
    %2917 = vmatpush.xpose.msra.mxu0 0.0
    %2918 = vmatpush.xpose.msra.mxu0 0.0
    %2919 = vmatpush.xpose.msra.mxu0 0.0
    %2920 = vmatpush.xpose.msra.mxu0 0.0
    %2921 = vmatpush.xpose.msra.mxu0 0.0
    %2922 = vmatpush.xpose.msra.mxu0 0.0
    %2923 = vmatpush.xpose.msra.mxu0 0.0
    %2924 = vmatpush.xpose.msra.mxu0 0.0
    %2925 = vmatpush.xpose.msra.mxu0 0.0
    %2926 = vmatpush.xpose.msra.mxu0 0.0
    %2927 = vmatpush.xpose.msra.mxu0 0.0
    %2928 = vmatpush.xpose.msra.mxu0 %v2911
    %2929 = vmatmul.f32.gmra.mxu0 %v2909
    %v2930 = vpop.f32.mrf.mxu0
    %v2931 = vadd.f32 0.0, %v2930
    %2932 = vdwg.mxu0
    %v2933 = vmul.f32 %v2931, 0.35355338
    %v2934 = vadd.f32 %v2933, %v161
    %v2935 = vsel %vm268, %v2934, -inf
    %2936 = vmax.xlane.f32.xlu0 %v2935
    %v2937 = vpop.xlane.xlu0 %2936
    %v2938 = vsub.f32 %v2934, %v2937
    %v2939 = vmul.f32 %v2938, 1.442695
    %v2940 = vpow.pop %v2939
    %v2941 = vsel %vm268, %v2940, 0.0
    %2942 = vadd.xlane.f32.xlu0 %v2941
    %v2943 = vpop.xlane.xlu0 %2942
    %v2944 = vrcp.pop %v2943
    %v2945 = vmul.f32 %v2940, %v2944
    %2946 = vrot.lane.b32.xlu0 %v2267, 40
    %v2947 = vpop.permute.xlu0 %2946
    %v2950 = vsel %vm268, %v2945, 0
    %2952 = vmatpush.msra.mxu0 0.0
    %2953 = vmatpush.msra.mxu0 0.0
    %2954 = vmatpush.msra.mxu0 0.0
    %2955 = vmatpush.msra.mxu0 0.0
    %2956 = vmatpush.msra.mxu0 0.0
    %2957 = vmatpush.msra.mxu0 0.0
    %2958 = vmatpush.msra.mxu0 0.0
    %2959 = vmatpush.msra.mxu0 0.0
    %2960 = vmatpush.msra.mxu0 0.0
    %2961 = vmatpush.msra.mxu0 0.0
    %2962 = vmatpush.msra.mxu0 0.0
    %2963 = vmatpush.msra.mxu0 0.0
    %2964 = vmatpush.msra.mxu0 0.0
    %2965 = vmatpush.msra.mxu0 0.0
    %2966 = vmatpush.msra.mxu0 0.0
    %2967 = vmatpush.msra.mxu0 %v2947
    %2968 = vmatmul.f32.gmra.mxu0 %v2950
    %v2969 = vpop.f32.mrf.mxu0
    %v2970 = vadd.f32 0.0, %v2969
    %2971 = vdwg.mxu0
    %v2973 = vsel %vm268, %v2970, 0
    %2975 = vmatpush.msra.mxu0 0.0
    %2976 = vmatpush.msra.mxu0 0.0
    %2977 = vmatpush.msra.mxu0 0.0
    %2978 = vmatpush.msra.mxu0 0.0
    %2979 = vmatpush.msra.mxu0 0.0
    %2980 = vmatpush.msra.mxu0 0.0
    %2981 = vmatpush.msra.mxu0 0.0
    %2982 = vmatpush.msra.mxu0 0.0
    %2983 = vmatpush.msra.mxu0 0.0
    %2984 = vmatpush.msra.mxu0 0.0
    %2985 = vmatpush.msra.mxu0 0.0
    %2986 = vmatpush.msra.mxu0 0.0
    %2987 = vmatpush.msra.mxu0 0.0
    %2988 = vmatpush.msra.mxu0 0.0
    %2989 = vmatpush.msra.mxu0 0.0
    %2990 = vmatpush.msra.mxu0 %v2272
    %2991 = vmatmul.f32.gmra.mxu0 %v2973
    %v2992 = vpop.f32.mrf.mxu0
    %v2993 = vadd.f32 0.0, %v2992
    %2994 = vdwg.mxu0
    %v2995 = vadd.f32 %v2904, %v2993
    %v2997 = vperm.slane %v2273, 0
    %v2999 = vadd.f32 %v2634, %v2997
    %v3000 = vadd.f32 %v2995, %v2997
    %v3001 = vadd.f32 %v2230, %v2999
    %v3002 = vadd.f32 %v2231, %v3000
    %v3003 = vld [vmem:[%s43] sm:$0x3]
    %v3004 = vsel %vm165, %v3001, 0.0
    %3005 = vadd.xlane.f32.xlu0 %v3004
    %v3006 = vpop.xlane.xlu0 %3005
    %v3007 = vsel %vm165, %v3002, 0.0
    %3008 = vadd.xlane.f32.xlu0 %v3007
    %v3009 = vpop.xlane.xlu0 %3008
    %v3010 = vmul.f32 %v3006, %v178
    %v3011 = vmul.f32 %v3009, %v178
    %v3012 = vsub.f32 %v3001, %v3010
    %v3013 = vsub.f32 %v3002, %v3011
    %v3014 = vmul.f32 %v3012, %v3012
    %v3015 = vmul.f32 %v3013, %v3013
    %v3016 = vsel %vm165, %v3014, 0.0
    %3017 = vadd.xlane.f32.xlu0 %v3016
    %v3018 = vpop.xlane.xlu0 %3017
    %v3019 = vsel %vm165, %v3015, 0.0
    %3020 = vadd.xlane.f32.xlu0 %v3019
    %v3021 = vpop.xlane.xlu0 %3020
    %v3022 = vmul.f32 %v3018, %v178
    %v3023 = vmul.f32 %v3021, %v178
    %v3024 = vadd.f32 %v3022, 1e-05
    %v3025 = vadd.f32 %v3023, 1e-05
    %v3026 = vrsqrt.pop %v3024
    %v3027 = vmul.f32 %v3026, %v3024
    %v3028 = vmul.f32 %v3027, %v3026
    %v3029 = vmul.f32 0.5, %v3028
    %v3030 = vsub.f32 1.5, %v3029
    %v3031 = vmul.f32 %v3026, %v3030
    %vm3032 = vweird.f32 %v3024
    %vm3033 = vweird.f32 %v3026
    %vm3034 = vmor %vm3032, %vm3033
    %v3035 = vsel %vm3034, %v3026, %v3031
    %v3036 = vrsqrt.pop %v3025
    %v3037 = vmul.f32 %v3036, %v3025
    %v3038 = vmul.f32 %v3037, %v3036
    %v3039 = vmul.f32 0.5, %v3038
    %v3040 = vsub.f32 1.5, %v3039
    %v3041 = vmul.f32 %v3036, %v3040
    %vm3042 = vweird.f32 %v3025
    %vm3043 = vweird.f32 %v3036
    %vm3044 = vmor %vm3042, %vm3043
    %v3045 = vsel %vm3044, %v3036, %v3041
    %v3046 = vmul.f32 %v3012, %v3035
    %v3047 = vmul.f32 %v3013, %v3045
    %v3048 = vperm.slane %v3003, 0
    %v3049 = vmul.f32 %v3046, %v3048
    %v3050 = vmul.f32 %v3047, %v3048
    %v3051 = vperm.slane %v3003, 1
    %v3052 = vadd.f32 %v3049, %v3051
    %v3053 = vadd.f32 %v3050, %v3051
    %v3054 = vld [vmem:[%s45] sm:$0xff]
    %v3055 = vld [vmem:[%s45 + $0x8] sm:$0xff]
    %v3056 = vld [vmem:[%s45 + $0x10] sm:$0xff]
    %v3057 = vld [vmem:[%s45 + $0x18] sm:$0xff]
    %v3058 = vld [vmem:[%s47] sm:$0x1]
    %v3060 = vperm.slane %v3058, 0
    %v3063 = vsel %vm165, %v3052, 0
    %v3066 = vsel %vm165, %v3053, 0
    %3068 = vmatpush.msra.mxu0 0.0
    %3069 = vmatpush.msra.mxu0 0.0
    %3070 = vmatpush.msra.mxu0 0.0
    %3071 = vmatpush.msra.mxu0 0.0
    %3072 = vmatpush.msra.mxu0 0.0
    %3073 = vmatpush.msra.mxu0 0.0
    %3074 = vmatpush.msra.mxu0 0.0
    %3075 = vmatpush.msra.mxu0 0.0
    %3076 = vmatpush.msra.mxu0 0.0
    %3077 = vmatpush.msra.mxu0 0.0
    %3078 = vmatpush.msra.mxu0 0.0
    %3079 = vmatpush.msra.mxu0 0.0
    %3080 = vmatpush.msra.mxu0 %v3057
    %3081 = vmatpush.msra.mxu0 %v3056
    %3082 = vmatpush.msra.mxu0 %v3055
    %3083 = vmatpush.msra.mxu0 %v3054
    %3084 = vmatmul.f32.gmra.mxu0 %v3063
    %v3085 = vpop.f32.mrf.mxu0
    %v3086 = vadd.f32 %v3060, %v3085
    %3087 = vmatmul.f32.gmra.mxu0 %v3066
    %v3088 = vpop.f32.mrf.mxu0
    %v3089 = vadd.f32 %v3060, %v3088
    %3090 = vdwg.mxu0
    %v3091 = vld [vmem:[%s49] sm:$0xff]
    %v3092 = vld [vmem:[%s49 + $0x8] sm:$0xff]
    %v3093 = vld [vmem:[%s49 + $0x10] sm:$0xff]
    %v3094 = vld [vmem:[%s49 + $0x18] sm:$0xff]
    %v3095 = vld [vmem:[%s51] sm:$0x1]
    %v3097 = vperm.slane %v3095, 0
    %v3100 = vsel %vm165, %v2177, 0
    %v3103 = vsel %vm165, %v2178, 0
    %3105 = vmatpush.msra.mxu0 0.0
    %3106 = vmatpush.msra.mxu0 0.0
    %3107 = vmatpush.msra.mxu0 0.0
    %3108 = vmatpush.msra.mxu0 0.0
    %3109 = vmatpush.msra.mxu0 0.0
    %3110 = vmatpush.msra.mxu0 0.0
    %3111 = vmatpush.msra.mxu0 0.0
    %3112 = vmatpush.msra.mxu0 0.0
    %3113 = vmatpush.msra.mxu0 0.0
    %3114 = vmatpush.msra.mxu0 0.0
    %3115 = vmatpush.msra.mxu0 0.0
    %3116 = vmatpush.msra.mxu0 0.0
    %3117 = vmatpush.msra.mxu0 %v3094
    %3118 = vmatpush.msra.mxu0 %v3093
    %3119 = vmatpush.msra.mxu0 %v3092
    %3120 = vmatpush.msra.mxu0 %v3091
    %3121 = vmatmul.f32.gmra.mxu0 %v3100
    %v3122 = vpop.f32.mrf.mxu0
    %v3123 = vadd.f32 %v3097, %v3122
    %3124 = vmatmul.f32.gmra.mxu0 %v3103
    %v3125 = vpop.f32.mrf.mxu0
    %v3126 = vadd.f32 %v3097, %v3125
    %3127 = vdwg.mxu0
    %v3128 = vld [vmem:[%s53] sm:$0xff]
    %v3129 = vld [vmem:[%s53 + $0x8] sm:$0xff]
    %v3130 = vld [vmem:[%s53 + $0x10] sm:$0xff]
    %v3131 = vld [vmem:[%s53 + $0x18] sm:$0xff]
    %v3132 = vld [vmem:[%s55] sm:$0x1]
    %v3134 = vsel %vm268, %v3086, 0
    %v3137 = vsel %vm268, %v3123, 0
    %3139 = vmatpush.xpose.msra.mxu0 0.0
    %3140 = vmatpush.xpose.msra.mxu0 0.0
    %3141 = vmatpush.xpose.msra.mxu0 0.0
    %3142 = vmatpush.xpose.msra.mxu0 0.0
    %3143 = vmatpush.xpose.msra.mxu0 0.0
    %3144 = vmatpush.xpose.msra.mxu0 0.0
    %3145 = vmatpush.xpose.msra.mxu0 0.0
    %3146 = vmatpush.xpose.msra.mxu0 0.0
    %3147 = vmatpush.xpose.msra.mxu0 0.0
    %3148 = vmatpush.xpose.msra.mxu0 0.0
    %3149 = vmatpush.xpose.msra.mxu0 0.0
    %3150 = vmatpush.xpose.msra.mxu0 0.0
    %3151 = vmatpush.xpose.msra.mxu0 0.0
    %3152 = vmatpush.xpose.msra.mxu0 0.0
    %3153 = vmatpush.xpose.msra.mxu0 0.0
    %3154 = vmatpush.xpose.msra.mxu0 %v3137
    %3155 = vmatmul.f32.gmra.mxu0 %v3134
    %v3156 = vpop.f32.mrf.mxu0
    %v3157 = vadd.f32 0.0, %v3156
    %3158 = vdwg.mxu0
    %v3159 = vmul.f32 %v3157, 0.35355338
    %v3160 = vadd.f32 %v3159, %v294
    %v3161 = vsel %vm268, %v3160, -inf
    %3162 = vmax.xlane.f32.xlu0 %v3161
    %v3163 = vpop.xlane.xlu0 %3162
    %v3164 = vsub.f32 %v3160, %v3163
    %v3165 = vmul.f32 %v3164, 1.442695
    %v3166 = vpow.pop %v3165
    %v3167 = vsel %vm268, %v3166, 0.0
    %3168 = vadd.xlane.f32.xlu0 %v3167
    %v3169 = vpop.xlane.xlu0 %3168
    %v3170 = vrcp.pop %v3169
    %v3171 = vmul.f32 %v3166, %v3170
    %3172 = vrot.lane.b32.xlu0 %v3123, 96
    %v3173 = vpop.permute.xlu0 %3172
    %v3176 = vsel %vm268, %v3171, 0
    %3178 = vmatpush.msra.mxu0 0.0
    %3179 = vmatpush.msra.mxu0 0.0
    %3180 = vmatpush.msra.mxu0 0.0
    %3181 = vmatpush.msra.mxu0 0.0
    %3182 = vmatpush.msra.mxu0 0.0
    %3183 = vmatpush.msra.mxu0 0.0
    %3184 = vmatpush.msra.mxu0 0.0
    %3185 = vmatpush.msra.mxu0 0.0
    %3186 = vmatpush.msra.mxu0 0.0
    %3187 = vmatpush.msra.mxu0 0.0
    %3188 = vmatpush.msra.mxu0 0.0
    %3189 = vmatpush.msra.mxu0 0.0
    %3190 = vmatpush.msra.mxu0 0.0
    %3191 = vmatpush.msra.mxu0 0.0
    %3192 = vmatpush.msra.mxu0 0.0
    %3193 = vmatpush.msra.mxu0 %v3173
    %3194 = vmatmul.f32.gmra.mxu0 %v3176
    %v3195 = vpop.f32.mrf.mxu0
    %v3196 = vadd.f32 0.0, %v3195
    %3197 = vdwg.mxu0
    %3198 = vrot.lane.b32.xlu0 %v3086, 120
    %v3199 = vpop.permute.xlu0 %3198
    %3200 = vrot.lane.b32.xlu0 %v3123, 120
    %v3201 = vpop.permute.xlu0 %3200
    %v3202 = vsel %vm268, %v3199, 0
    %v3204 = vsel %vm268, %v3201, 0
    %3206 = vmatpush.xpose.msra.mxu0 0.0
    %3207 = vmatpush.xpose.msra.mxu0 0.0
    %3208 = vmatpush.xpose.msra.mxu0 0.0
    %3209 = vmatpush.xpose.msra.mxu0 0.0
    %3210 = vmatpush.xpose.msra.mxu0 0.0
    %3211 = vmatpush.xpose.msra.mxu0 0.0
    %3212 = vmatpush.xpose.msra.mxu0 0.0
    %3213 = vmatpush.xpose.msra.mxu0 0.0
    %3214 = vmatpush.xpose.msra.mxu0 0.0
    %3215 = vmatpush.xpose.msra.mxu0 0.0
    %3216 = vmatpush.xpose.msra.mxu0 0.0
    %3217 = vmatpush.xpose.msra.mxu0 0.0
    %3218 = vmatpush.xpose.msra.mxu0 0.0
    %3219 = vmatpush.xpose.msra.mxu0 0.0
    %3220 = vmatpush.xpose.msra.mxu0 0.0
    %3221 = vmatpush.xpose.msra.mxu0 %v3204
    %3222 = vmatmul.f32.gmra.mxu0 %v3202
    %v3223 = vpop.f32.mrf.mxu0
    %v3224 = vadd.f32 0.0, %v3223
    %3225 = vdwg.mxu0
    %v3226 = vmul.f32 %v3224, 0.35355338
    %v3227 = vadd.f32 %v3226, %v294
    %v3228 = vsel %vm268, %v3227, -inf
    %3229 = vmax.xlane.f32.xlu0 %v3228
    %v3230 = vpop.xlane.xlu0 %3229
    %v3231 = vsub.f32 %v3227, %v3230
    %v3232 = vmul.f32 %v3231, 1.442695
    %v3233 = vpow.pop %v3232
    %v3234 = vsel %vm268, %v3233, 0.0
    %3235 = vadd.xlane.f32.xlu0 %v3234
    %v3236 = vpop.xlane.xlu0 %3235
    %v3237 = vrcp.pop %v3236
    %v3238 = vmul.f32 %v3233, %v3237
    %3239 = vrot.lane.b32.xlu0 %v3123, 88
    %v3240 = vpop.permute.xlu0 %3239
    %v3243 = vsel %vm268, %v3238, 0
    %3245 = vmatpush.msra.mxu0 0.0
    %3246 = vmatpush.msra.mxu0 0.0
    %3247 = vmatpush.msra.mxu0 0.0
    %3248 = vmatpush.msra.mxu0 0.0
    %3249 = vmatpush.msra.mxu0 0.0
    %3250 = vmatpush.msra.mxu0 0.0
    %3251 = vmatpush.msra.mxu0 0.0
    %3252 = vmatpush.msra.mxu0 0.0
    %3253 = vmatpush.msra.mxu0 0.0
    %3254 = vmatpush.msra.mxu0 0.0
    %3255 = vmatpush.msra.mxu0 0.0
    %3256 = vmatpush.msra.mxu0 0.0
    %3257 = vmatpush.msra.mxu0 0.0
    %3258 = vmatpush.msra.mxu0 0.0
    %3259 = vmatpush.msra.mxu0 0.0
    %3260 = vmatpush.msra.mxu0 %v3240
    %3261 = vmatmul.f32.gmra.mxu0 %v3243
    %v3262 = vpop.f32.mrf.mxu0
    %v3263 = vadd.f32 0.0, %v3262
    %3264 = vdwg.mxu0
    %v3266 = vsel %vm268, %v3263, 0
    %3268 = vmatpush.msra.mxu0 0.0
    %3269 = vmatpush.msra.mxu0 0.0
    %3270 = vmatpush.msra.mxu0 0.0
    %3271 = vmatpush.msra.mxu0 0.0
    %3272 = vmatpush.msra.mxu0 0.0
    %3273 = vmatpush.msra.mxu0 0.0
    %3274 = vmatpush.msra.mxu0 0.0
    %3275 = vmatpush.msra.mxu0 0.0
    %3276 = vmatpush.msra.mxu0 0.0
    %3277 = vmatpush.msra.mxu0 0.0
    %3278 = vmatpush.msra.mxu0 0.0
    %3279 = vmatpush.msra.mxu0 0.0
    %3280 = vmatpush.msra.mxu0 0.0
    %3281 = vmatpush.msra.mxu0 0.0
    %3282 = vmatpush.msra.mxu0 0.0
    %3283 = vmatpush.msra.mxu0 %v3129
    %3284 = vmatmul.f32.gmra.mxu0 %v3266
    %v3285 = vpop.f32.mrf.mxu0
    %v3286 = vadd.f32 0.0, %v3285
    %3287 = vdwg.mxu0
    %v3289 = vsel %vm268, %v3196, 0
    %3291 = vmatpush.msra.mxu0 0.0
    %3292 = vmatpush.msra.mxu0 0.0
    %3293 = vmatpush.msra.mxu0 0.0
    %3294 = vmatpush.msra.mxu0 0.0
    %3295 = vmatpush.msra.mxu0 0.0
    %3296 = vmatpush.msra.mxu0 0.0
    %3297 = vmatpush.msra.mxu0 0.0
    %3298 = vmatpush.msra.mxu0 0.0
    %3299 = vmatpush.msra.mxu0 0.0
    %3300 = vmatpush.msra.mxu0 0.0
    %3301 = vmatpush.msra.mxu0 0.0
    %3302 = vmatpush.msra.mxu0 0.0
    %3303 = vmatpush.msra.mxu0 0.0
    %3304 = vmatpush.msra.mxu0 0.0
    %3305 = vmatpush.msra.mxu0 0.0
    %3306 = vmatpush.msra.mxu0 %v3128
    %3307 = vmatmul.f32.gmra.mxu0 %v3289
    %v3308 = vpop.f32.mrf.mxu0
    %v3309 = vadd.f32 %v3286, %v3308
    %3310 = vdwg.mxu0
    %3311 = vrot.lane.b32.xlu0 %v3086, 112
    %v3312 = vpop.permute.xlu0 %3311
    %3313 = vrot.lane.b32.xlu0 %v3123, 112
    %v3314 = vpop.permute.xlu0 %3313
    %v3315 = vsel %vm268, %v3312, 0
    %v3317 = vsel %vm268, %v3314, 0
    %3319 = vmatpush.xpose.msra.mxu0 0.0
    %3320 = vmatpush.xpose.msra.mxu0 0.0
    %3321 = vmatpush.xpose.msra.mxu0 0.0
    %3322 = vmatpush.xpose.msra.mxu0 0.0
    %3323 = vmatpush.xpose.msra.mxu0 0.0
    %3324 = vmatpush.xpose.msra.mxu0 0.0
    %3325 = vmatpush.xpose.msra.mxu0 0.0
    %3326 = vmatpush.xpose.msra.mxu0 0.0
    %3327 = vmatpush.xpose.msra.mxu0 0.0
    %3328 = vmatpush.xpose.msra.mxu0 0.0
    %3329 = vmatpush.xpose.msra.mxu0 0.0
    %3330 = vmatpush.xpose.msra.mxu0 0.0
    %3331 = vmatpush.xpose.msra.mxu0 0.0
    %3332 = vmatpush.xpose.msra.mxu0 0.0
    %3333 = vmatpush.xpose.msra.mxu0 0.0
    %3334 = vmatpush.xpose.msra.mxu0 %v3317
    %3335 = vmatmul.f32.gmra.mxu0 %v3315
    %v3336 = vpop.f32.mrf.mxu0
    %v3337 = vadd.f32 0.0, %v3336
    %3338 = vdwg.mxu0
    %v3339 = vmul.f32 %v3337, 0.35355338
    %v3340 = vadd.f32 %v3339, %v294
    %v3341 = vsel %vm268, %v3340, -inf
    %3342 = vmax.xlane.f32.xlu0 %v3341
    %v3343 = vpop.xlane.xlu0 %3342
    %v3344 = vsub.f32 %v3340, %v3343
    %v3345 = vmul.f32 %v3344, 1.442695
    %v3346 = vpow.pop %v3345
    %v3347 = vsel %vm268, %v3346, 0.0
    %3348 = vadd.xlane.f32.xlu0 %v3347
    %v3349 = vpop.xlane.xlu0 %3348
    %v3350 = vrcp.pop %v3349
    %v3351 = vmul.f32 %v3346, %v3350
    %3352 = vrot.lane.b32.xlu0 %v3123, 80
    %v3353 = vpop.permute.xlu0 %3352
    %v3356 = vsel %vm268, %v3351, 0
    %3358 = vmatpush.msra.mxu0 0.0
    %3359 = vmatpush.msra.mxu0 0.0
    %3360 = vmatpush.msra.mxu0 0.0
    %3361 = vmatpush.msra.mxu0 0.0
    %3362 = vmatpush.msra.mxu0 0.0
    %3363 = vmatpush.msra.mxu0 0.0
    %3364 = vmatpush.msra.mxu0 0.0
    %3365 = vmatpush.msra.mxu0 0.0
    %3366 = vmatpush.msra.mxu0 0.0
    %3367 = vmatpush.msra.mxu0 0.0
    %3368 = vmatpush.msra.mxu0 0.0
    %3369 = vmatpush.msra.mxu0 0.0
    %3370 = vmatpush.msra.mxu0 0.0
    %3371 = vmatpush.msra.mxu0 0.0
    %3372 = vmatpush.msra.mxu0 0.0
    %3373 = vmatpush.msra.mxu0 %v3353
    %3374 = vmatmul.f32.gmra.mxu0 %v3356
    %v3375 = vpop.f32.mrf.mxu0
    %v3376 = vadd.f32 0.0, %v3375
    %3377 = vdwg.mxu0
    %v3379 = vsel %vm268, %v3376, 0
    %3381 = vmatpush.msra.mxu0 0.0
    %3382 = vmatpush.msra.mxu0 0.0
    %3383 = vmatpush.msra.mxu0 0.0
    %3384 = vmatpush.msra.mxu0 0.0
    %3385 = vmatpush.msra.mxu0 0.0
    %3386 = vmatpush.msra.mxu0 0.0
    %3387 = vmatpush.msra.mxu0 0.0
    %3388 = vmatpush.msra.mxu0 0.0
    %3389 = vmatpush.msra.mxu0 0.0
    %3390 = vmatpush.msra.mxu0 0.0
    %3391 = vmatpush.msra.mxu0 0.0
    %3392 = vmatpush.msra.mxu0 0.0
    %3393 = vmatpush.msra.mxu0 0.0
    %3394 = vmatpush.msra.mxu0 0.0
    %3395 = vmatpush.msra.mxu0 0.0
    %3396 = vmatpush.msra.mxu0 %v3130
    %3397 = vmatmul.f32.gmra.mxu0 %v3379
    %v3398 = vpop.f32.mrf.mxu0
    %v3399 = vadd.f32 0.0, %v3398
    %3400 = vdwg.mxu0
    %v3401 = vadd.f32 %v3309, %v3399
    %3402 = vrot.lane.b32.xlu0 %v3086, 104
    %v3403 = vpop.permute.xlu0 %3402
    %3404 = vrot.lane.b32.xlu0 %v3123, 104
    %v3405 = vpop.permute.xlu0 %3404
    %v3406 = vsel %vm268, %v3403, 0
    %v3408 = vsel %vm268, %v3405, 0
    %3410 = vmatpush.xpose.msra.mxu0 0.0
    %3411 = vmatpush.xpose.msra.mxu0 0.0
    %3412 = vmatpush.xpose.msra.mxu0 0.0
    %3413 = vmatpush.xpose.msra.mxu0 0.0
    %3414 = vmatpush.xpose.msra.mxu0 0.0
    %3415 = vmatpush.xpose.msra.mxu0 0.0
    %3416 = vmatpush.xpose.msra.mxu0 0.0
    %3417 = vmatpush.xpose.msra.mxu0 0.0
    %3418 = vmatpush.xpose.msra.mxu0 0.0
    %3419 = vmatpush.xpose.msra.mxu0 0.0
    %3420 = vmatpush.xpose.msra.mxu0 0.0
    %3421 = vmatpush.xpose.msra.mxu0 0.0
    %3422 = vmatpush.xpose.msra.mxu0 0.0
    %3423 = vmatpush.xpose.msra.mxu0 0.0
    %3424 = vmatpush.xpose.msra.mxu0 0.0
    %3425 = vmatpush.xpose.msra.mxu0 %v3408
    %3426 = vmatmul.f32.gmra.mxu0 %v3406
    %v3427 = vpop.f32.mrf.mxu0
    %v3428 = vadd.f32 0.0, %v3427
    %3429 = vdwg.mxu0
    %v3430 = vmul.f32 %v3428, 0.35355338
    %v3431 = vadd.f32 %v3430, %v294
    %v3432 = vsel %vm268, %v3431, -inf
    %3433 = vmax.xlane.f32.xlu0 %v3432
    %v3434 = vpop.xlane.xlu0 %3433
    %v3435 = vsub.f32 %v3431, %v3434
    %v3436 = vmul.f32 %v3435, 1.442695
    %v3437 = vpow.pop %v3436
    %v3438 = vsel %vm268, %v3437, 0.0
    %3439 = vadd.xlane.f32.xlu0 %v3438
    %v3440 = vpop.xlane.xlu0 %3439
    %v3441 = vrcp.pop %v3440
    %v3442 = vmul.f32 %v3437, %v3441
    %3443 = vrot.lane.b32.xlu0 %v3123, 72
    %v3444 = vpop.permute.xlu0 %3443
    %v3447 = vsel %vm268, %v3442, 0
    %3449 = vmatpush.msra.mxu0 0.0
    %3450 = vmatpush.msra.mxu0 0.0
    %3451 = vmatpush.msra.mxu0 0.0
    %3452 = vmatpush.msra.mxu0 0.0
    %3453 = vmatpush.msra.mxu0 0.0
    %3454 = vmatpush.msra.mxu0 0.0
    %3455 = vmatpush.msra.mxu0 0.0
    %3456 = vmatpush.msra.mxu0 0.0
    %3457 = vmatpush.msra.mxu0 0.0
    %3458 = vmatpush.msra.mxu0 0.0
    %3459 = vmatpush.msra.mxu0 0.0
    %3460 = vmatpush.msra.mxu0 0.0
    %3461 = vmatpush.msra.mxu0 0.0
    %3462 = vmatpush.msra.mxu0 0.0
    %3463 = vmatpush.msra.mxu0 0.0
    %3464 = vmatpush.msra.mxu0 %v3444
    %3465 = vmatmul.f32.gmra.mxu0 %v3447
    %v3466 = vpop.f32.mrf.mxu0
    %v3467 = vadd.f32 0.0, %v3466
    %3468 = vdwg.mxu0
    %v3470 = vsel %vm268, %v3467, 0
    %3472 = vmatpush.msra.mxu0 0.0
    %3473 = vmatpush.msra.mxu0 0.0
    %3474 = vmatpush.msra.mxu0 0.0
    %3475 = vmatpush.msra.mxu0 0.0
    %3476 = vmatpush.msra.mxu0 0.0
    %3477 = vmatpush.msra.mxu0 0.0
    %3478 = vmatpush.msra.mxu0 0.0
    %3479 = vmatpush.msra.mxu0 0.0
    %3480 = vmatpush.msra.mxu0 0.0
    %3481 = vmatpush.msra.mxu0 0.0
    %3482 = vmatpush.msra.mxu0 0.0
    %3483 = vmatpush.msra.mxu0 0.0
    %3484 = vmatpush.msra.mxu0 0.0
    %3485 = vmatpush.msra.mxu0 0.0
    %3486 = vmatpush.msra.mxu0 0.0
    %3487 = vmatpush.msra.mxu0 %v3131
    %3488 = vmatmul.f32.gmra.mxu0 %v3470
    %v3489 = vpop.f32.mrf.mxu0
    %v3490 = vadd.f32 0.0, %v3489
    %3491 = vdwg.mxu0
    %v3492 = vadd.f32 %v3401, %v3490
    %v3494 = vsel %vm268, %v3089, 0
    %v3497 = vsel %vm268, %v3126, 0
    %3499 = vmatpush.xpose.msra.mxu0 0.0
    %3500 = vmatpush.xpose.msra.mxu0 0.0
    %3501 = vmatpush.xpose.msra.mxu0 0.0
    %3502 = vmatpush.xpose.msra.mxu0 0.0
    %3503 = vmatpush.xpose.msra.mxu0 0.0
    %3504 = vmatpush.xpose.msra.mxu0 0.0
    %3505 = vmatpush.xpose.msra.mxu0 0.0
    %3506 = vmatpush.xpose.msra.mxu0 0.0
    %3507 = vmatpush.xpose.msra.mxu0 0.0
    %3508 = vmatpush.xpose.msra.mxu0 0.0
    %3509 = vmatpush.xpose.msra.mxu0 0.0
    %3510 = vmatpush.xpose.msra.mxu0 0.0
    %3511 = vmatpush.xpose.msra.mxu0 0.0
    %3512 = vmatpush.xpose.msra.mxu0 0.0
    %3513 = vmatpush.xpose.msra.mxu0 0.0
    %3514 = vmatpush.xpose.msra.mxu0 %v3497
    %3515 = vmatmul.f32.gmra.mxu0 %v3494
    %v3516 = vpop.f32.mrf.mxu0
    %v3517 = vadd.f32 0.0, %v3516
    %3518 = vdwg.mxu0
    %v3519 = vmul.f32 %v3517, 0.35355338
    %v3520 = vadd.f32 %v3519, %v656
    %v3521 = vsel %vm268, %v3520, -inf
    %3522 = vmax.xlane.f32.xlu0 %v3521
    %v3523 = vpop.xlane.xlu0 %3522
    %v3524 = vsub.f32 %v3520, %v3523
    %v3525 = vmul.f32 %v3524, 1.442695
    %v3526 = vpow.pop %v3525
    %v3527 = vsel %vm268, %v3526, 0.0
    %3528 = vadd.xlane.f32.xlu0 %v3527
    %v3529 = vpop.xlane.xlu0 %3528
    %v3530 = vrcp.pop %v3529
    %v3531 = vmul.f32 %v3526, %v3530
    %3532 = vrot.lane.b32.xlu0 %v3126, 96
    %v3533 = vpop.permute.xlu0 %3532
    %v3536 = vsel %vm268, %v3531, 0
    %3538 = vmatpush.msra.mxu0 0.0
    %3539 = vmatpush.msra.mxu0 0.0
    %3540 = vmatpush.msra.mxu0 0.0
    %3541 = vmatpush.msra.mxu0 0.0
    %3542 = vmatpush.msra.mxu0 0.0
    %3543 = vmatpush.msra.mxu0 0.0
    %3544 = vmatpush.msra.mxu0 0.0
    %3545 = vmatpush.msra.mxu0 0.0
    %3546 = vmatpush.msra.mxu0 0.0
    %3547 = vmatpush.msra.mxu0 0.0
    %3548 = vmatpush.msra.mxu0 0.0
    %3549 = vmatpush.msra.mxu0 0.0
    %3550 = vmatpush.msra.mxu0 0.0
    %3551 = vmatpush.msra.mxu0 0.0
    %3552 = vmatpush.msra.mxu0 0.0
    %3553 = vmatpush.msra.mxu0 %v3533
    %3554 = vmatmul.f32.gmra.mxu0 %v3536
    %v3555 = vpop.f32.mrf.mxu0
    %v3556 = vadd.f32 0.0, %v3555
    %3557 = vdwg.mxu0
    %3558 = vrot.lane.b32.xlu0 %v3089, 120
    %v3559 = vpop.permute.xlu0 %3558
    %3560 = vrot.lane.b32.xlu0 %v3126, 120
    %v3561 = vpop.permute.xlu0 %3560
    %v3562 = vsel %vm268, %v3559, 0
    %v3564 = vsel %vm268, %v3561, 0
    %3566 = vmatpush.xpose.msra.mxu0 0.0
    %3567 = vmatpush.xpose.msra.mxu0 0.0
    %3568 = vmatpush.xpose.msra.mxu0 0.0
    %3569 = vmatpush.xpose.msra.mxu0 0.0
    %3570 = vmatpush.xpose.msra.mxu0 0.0
    %3571 = vmatpush.xpose.msra.mxu0 0.0
    %3572 = vmatpush.xpose.msra.mxu0 0.0
    %3573 = vmatpush.xpose.msra.mxu0 0.0
    %3574 = vmatpush.xpose.msra.mxu0 0.0
    %3575 = vmatpush.xpose.msra.mxu0 0.0
    %3576 = vmatpush.xpose.msra.mxu0 0.0
    %3577 = vmatpush.xpose.msra.mxu0 0.0
    %3578 = vmatpush.xpose.msra.mxu0 0.0
    %3579 = vmatpush.xpose.msra.mxu0 0.0
    %3580 = vmatpush.xpose.msra.mxu0 0.0
    %3581 = vmatpush.xpose.msra.mxu0 %v3564
    %3582 = vmatmul.f32.gmra.mxu0 %v3562
    %v3583 = vpop.f32.mrf.mxu0
    %v3584 = vadd.f32 0.0, %v3583
    %3585 = vdwg.mxu0
    %v3586 = vmul.f32 %v3584, 0.35355338
    %v3587 = vadd.f32 %v3586, %v656
    %v3588 = vsel %vm268, %v3587, -inf
    %3589 = vmax.xlane.f32.xlu0 %v3588
    %v3590 = vpop.xlane.xlu0 %3589
    %v3591 = vsub.f32 %v3587, %v3590
    %v3592 = vmul.f32 %v3591, 1.442695
    %v3593 = vpow.pop %v3592
    %v3594 = vsel %vm268, %v3593, 0.0
    %3595 = vadd.xlane.f32.xlu0 %v3594
    %v3596 = vpop.xlane.xlu0 %3595
    %v3597 = vrcp.pop %v3596
    %v3598 = vmul.f32 %v3593, %v3597
    %3599 = vrot.lane.b32.xlu0 %v3126, 88
    %v3600 = vpop.permute.xlu0 %3599
    %v3603 = vsel %vm268, %v3598, 0
    %3605 = vmatpush.msra.mxu0 0.0
    %3606 = vmatpush.msra.mxu0 0.0
    %3607 = vmatpush.msra.mxu0 0.0
    %3608 = vmatpush.msra.mxu0 0.0
    %3609 = vmatpush.msra.mxu0 0.0
    %3610 = vmatpush.msra.mxu0 0.0
    %3611 = vmatpush.msra.mxu0 0.0
    %3612 = vmatpush.msra.mxu0 0.0
    %3613 = vmatpush.msra.mxu0 0.0
    %3614 = vmatpush.msra.mxu0 0.0
    %3615 = vmatpush.msra.mxu0 0.0
    %3616 = vmatpush.msra.mxu0 0.0
    %3617 = vmatpush.msra.mxu0 0.0
    %3618 = vmatpush.msra.mxu0 0.0
    %3619 = vmatpush.msra.mxu0 0.0
    %3620 = vmatpush.msra.mxu0 %v3600
    %3621 = vmatmul.f32.gmra.mxu0 %v3603
    %v3622 = vpop.f32.mrf.mxu0
    %v3623 = vadd.f32 0.0, %v3622
    %3624 = vdwg.mxu0
    %v3626 = vsel %vm268, %v3623, 0
    %3628 = vmatpush.msra.mxu0 0.0
    %3629 = vmatpush.msra.mxu0 0.0
    %3630 = vmatpush.msra.mxu0 0.0
    %3631 = vmatpush.msra.mxu0 0.0
    %3632 = vmatpush.msra.mxu0 0.0
    %3633 = vmatpush.msra.mxu0 0.0
    %3634 = vmatpush.msra.mxu0 0.0
    %3635 = vmatpush.msra.mxu0 0.0
    %3636 = vmatpush.msra.mxu0 0.0
    %3637 = vmatpush.msra.mxu0 0.0
    %3638 = vmatpush.msra.mxu0 0.0
    %3639 = vmatpush.msra.mxu0 0.0
    %3640 = vmatpush.msra.mxu0 0.0
    %3641 = vmatpush.msra.mxu0 0.0
    %3642 = vmatpush.msra.mxu0 0.0
    %3643 = vmatpush.msra.mxu0 %v3129
    %3644 = vmatmul.f32.gmra.mxu0 %v3626
    %v3645 = vpop.f32.mrf.mxu0
    %v3646 = vadd.f32 0.0, %v3645
    %3647 = vdwg.mxu0
    %v3649 = vsel %vm268, %v3556, 0
    %3651 = vmatpush.msra.mxu0 0.0
    %3652 = vmatpush.msra.mxu0 0.0
    %3653 = vmatpush.msra.mxu0 0.0
    %3654 = vmatpush.msra.mxu0 0.0
    %3655 = vmatpush.msra.mxu0 0.0
    %3656 = vmatpush.msra.mxu0 0.0
    %3657 = vmatpush.msra.mxu0 0.0
    %3658 = vmatpush.msra.mxu0 0.0
    %3659 = vmatpush.msra.mxu0 0.0
    %3660 = vmatpush.msra.mxu0 0.0
    %3661 = vmatpush.msra.mxu0 0.0
    %3662 = vmatpush.msra.mxu0 0.0
    %3663 = vmatpush.msra.mxu0 0.0
    %3664 = vmatpush.msra.mxu0 0.0
    %3665 = vmatpush.msra.mxu0 0.0
    %3666 = vmatpush.msra.mxu0 %v3128
    %3667 = vmatmul.f32.gmra.mxu0 %v3649
    %v3668 = vpop.f32.mrf.mxu0
    %v3669 = vadd.f32 %v3646, %v3668
    %3670 = vdwg.mxu0
    %3671 = vrot.lane.b32.xlu0 %v3089, 112
    %v3672 = vpop.permute.xlu0 %3671
    %3673 = vrot.lane.b32.xlu0 %v3126, 112
    %v3674 = vpop.permute.xlu0 %3673
    %v3675 = vsel %vm268, %v3672, 0
    %v3677 = vsel %vm268, %v3674, 0
    %3679 = vmatpush.xpose.msra.mxu0 0.0
    %3680 = vmatpush.xpose.msra.mxu0 0.0
    %3681 = vmatpush.xpose.msra.mxu0 0.0
    %3682 = vmatpush.xpose.msra.mxu0 0.0
    %3683 = vmatpush.xpose.msra.mxu0 0.0
    %3684 = vmatpush.xpose.msra.mxu0 0.0
    %3685 = vmatpush.xpose.msra.mxu0 0.0
    %3686 = vmatpush.xpose.msra.mxu0 0.0
    %3687 = vmatpush.xpose.msra.mxu0 0.0
    %3688 = vmatpush.xpose.msra.mxu0 0.0
    %3689 = vmatpush.xpose.msra.mxu0 0.0
    %3690 = vmatpush.xpose.msra.mxu0 0.0
    %3691 = vmatpush.xpose.msra.mxu0 0.0
    %3692 = vmatpush.xpose.msra.mxu0 0.0
    %3693 = vmatpush.xpose.msra.mxu0 0.0
    %3694 = vmatpush.xpose.msra.mxu0 %v3677
    %3695 = vmatmul.f32.gmra.mxu0 %v3675
    %v3696 = vpop.f32.mrf.mxu0
    %v3697 = vadd.f32 0.0, %v3696
    %3698 = vdwg.mxu0
    %v3699 = vmul.f32 %v3697, 0.35355338
    %v3700 = vadd.f32 %v3699, %v656
    %v3701 = vsel %vm268, %v3700, -inf
    %3702 = vmax.xlane.f32.xlu0 %v3701
    %v3703 = vpop.xlane.xlu0 %3702
    %v3704 = vsub.f32 %v3700, %v3703
    %v3705 = vmul.f32 %v3704, 1.442695
    %v3706 = vpow.pop %v3705
    %v3707 = vsel %vm268, %v3706, 0.0
    %3708 = vadd.xlane.f32.xlu0 %v3707
    %v3709 = vpop.xlane.xlu0 %3708
    %v3710 = vrcp.pop %v3709
    %v3711 = vmul.f32 %v3706, %v3710
    %3712 = vrot.lane.b32.xlu0 %v3126, 80
    %v3713 = vpop.permute.xlu0 %3712
    %v3716 = vsel %vm268, %v3711, 0
    %3718 = vmatpush.msra.mxu0 0.0
    %3719 = vmatpush.msra.mxu0 0.0
    %3720 = vmatpush.msra.mxu0 0.0
    %3721 = vmatpush.msra.mxu0 0.0
    %3722 = vmatpush.msra.mxu0 0.0
    %3723 = vmatpush.msra.mxu0 0.0
    %3724 = vmatpush.msra.mxu0 0.0
    %3725 = vmatpush.msra.mxu0 0.0
    %3726 = vmatpush.msra.mxu0 0.0
    %3727 = vmatpush.msra.mxu0 0.0
    %3728 = vmatpush.msra.mxu0 0.0
    %3729 = vmatpush.msra.mxu0 0.0
    %3730 = vmatpush.msra.mxu0 0.0
    %3731 = vmatpush.msra.mxu0 0.0
    %3732 = vmatpush.msra.mxu0 0.0
    %3733 = vmatpush.msra.mxu0 %v3713
    %3734 = vmatmul.f32.gmra.mxu0 %v3716
    %v3735 = vpop.f32.mrf.mxu0
    %v3736 = vadd.f32 0.0, %v3735
    %3737 = vdwg.mxu0
    %v3739 = vsel %vm268, %v3736, 0
    %3741 = vmatpush.msra.mxu0 0.0
    %3742 = vmatpush.msra.mxu0 0.0
    %3743 = vmatpush.msra.mxu0 0.0
    %3744 = vmatpush.msra.mxu0 0.0
    %3745 = vmatpush.msra.mxu0 0.0
    %3746 = vmatpush.msra.mxu0 0.0
    %3747 = vmatpush.msra.mxu0 0.0
    %3748 = vmatpush.msra.mxu0 0.0
    %3749 = vmatpush.msra.mxu0 0.0
    %3750 = vmatpush.msra.mxu0 0.0
    %3751 = vmatpush.msra.mxu0 0.0
    %3752 = vmatpush.msra.mxu0 0.0
    %3753 = vmatpush.msra.mxu0 0.0
    %3754 = vmatpush.msra.mxu0 0.0
    %3755 = vmatpush.msra.mxu0 0.0
    %3756 = vmatpush.msra.mxu0 %v3130
    %3757 = vmatmul.f32.gmra.mxu0 %v3739
    %v3758 = vpop.f32.mrf.mxu0
    %v3759 = vadd.f32 0.0, %v3758
    %3760 = vdwg.mxu0
    %v3761 = vadd.f32 %v3669, %v3759
    %3762 = vrot.lane.b32.xlu0 %v3089, 104
    %v3763 = vpop.permute.xlu0 %3762
    %3764 = vrot.lane.b32.xlu0 %v3126, 104
    %v3765 = vpop.permute.xlu0 %3764
    %v3766 = vsel %vm268, %v3763, 0
    %v3768 = vsel %vm268, %v3765, 0
    %3770 = vmatpush.xpose.msra.mxu0 0.0
    %3771 = vmatpush.xpose.msra.mxu0 0.0
    %3772 = vmatpush.xpose.msra.mxu0 0.0
    %3773 = vmatpush.xpose.msra.mxu0 0.0
    %3774 = vmatpush.xpose.msra.mxu0 0.0
    %3775 = vmatpush.xpose.msra.mxu0 0.0
    %3776 = vmatpush.xpose.msra.mxu0 0.0
    %3777 = vmatpush.xpose.msra.mxu0 0.0
    %3778 = vmatpush.xpose.msra.mxu0 0.0
    %3779 = vmatpush.xpose.msra.mxu0 0.0
    %3780 = vmatpush.xpose.msra.mxu0 0.0
    %3781 = vmatpush.xpose.msra.mxu0 0.0
    %3782 = vmatpush.xpose.msra.mxu0 0.0
    %3783 = vmatpush.xpose.msra.mxu0 0.0
    %3784 = vmatpush.xpose.msra.mxu0 0.0
    %3785 = vmatpush.xpose.msra.mxu0 %v3768
    %3786 = vmatmul.f32.gmra.mxu0 %v3766
    %v3787 = vpop.f32.mrf.mxu0
    %v3788 = vadd.f32 0.0, %v3787
    %3789 = vdwg.mxu0
    %v3790 = vmul.f32 %v3788, 0.35355338
    %v3791 = vadd.f32 %v3790, %v656
    %v3792 = vsel %vm268, %v3791, -inf
    %3793 = vmax.xlane.f32.xlu0 %v3792
    %v3794 = vpop.xlane.xlu0 %3793
    %v3795 = vsub.f32 %v3791, %v3794
    %v3796 = vmul.f32 %v3795, 1.442695
    %v3797 = vpow.pop %v3796
    %v3798 = vsel %vm268, %v3797, 0.0
    %3799 = vadd.xlane.f32.xlu0 %v3798
    %v3800 = vpop.xlane.xlu0 %3799
    %v3801 = vrcp.pop %v3800
    %v3802 = vmul.f32 %v3797, %v3801
    %3803 = vrot.lane.b32.xlu0 %v3126, 72
    %v3804 = vpop.permute.xlu0 %3803
    %v3807 = vsel %vm268, %v3802, 0
    %3809 = vmatpush.msra.mxu0 0.0
    %3810 = vmatpush.msra.mxu0 0.0
    %3811 = vmatpush.msra.mxu0 0.0
    %3812 = vmatpush.msra.mxu0 0.0
    %3813 = vmatpush.msra.mxu0 0.0
    %3814 = vmatpush.msra.mxu0 0.0
    %3815 = vmatpush.msra.mxu0 0.0
    %3816 = vmatpush.msra.mxu0 0.0
    %3817 = vmatpush.msra.mxu0 0.0
    %3818 = vmatpush.msra.mxu0 0.0
    %3819 = vmatpush.msra.mxu0 0.0
    %3820 = vmatpush.msra.mxu0 0.0
    %3821 = vmatpush.msra.mxu0 0.0
    %3822 = vmatpush.msra.mxu0 0.0
    %3823 = vmatpush.msra.mxu0 0.0
    %3824 = vmatpush.msra.mxu0 %v3804
    %3825 = vmatmul.f32.gmra.mxu0 %v3807
    %v3826 = vpop.f32.mrf.mxu0
    %v3827 = vadd.f32 0.0, %v3826
    %3828 = vdwg.mxu0
    %v3830 = vsel %vm268, %v3827, 0
    %3832 = vmatpush.msra.mxu0 0.0
    %3833 = vmatpush.msra.mxu0 0.0
    %3834 = vmatpush.msra.mxu0 0.0
    %3835 = vmatpush.msra.mxu0 0.0
    %3836 = vmatpush.msra.mxu0 0.0
    %3837 = vmatpush.msra.mxu0 0.0
    %3838 = vmatpush.msra.mxu0 0.0
    %3839 = vmatpush.msra.mxu0 0.0
    %3840 = vmatpush.msra.mxu0 0.0
    %3841 = vmatpush.msra.mxu0 0.0
    %3842 = vmatpush.msra.mxu0 0.0
    %3843 = vmatpush.msra.mxu0 0.0
    %3844 = vmatpush.msra.mxu0 0.0
    %3845 = vmatpush.msra.mxu0 0.0
    %3846 = vmatpush.msra.mxu0 0.0
    %3847 = vmatpush.msra.mxu0 %v3131
    %3848 = vmatmul.f32.gmra.mxu0 %v3830
    %v3849 = vpop.f32.mrf.mxu0
    %v3850 = vadd.f32 0.0, %v3849
    %3851 = vdwg.mxu0
    %v3852 = vadd.f32 %v3761, %v3850
    %v3854 = vperm.slane %v3132, 0
    %v3856 = vadd.f32 %v3492, %v3854
    %v3857 = vadd.f32 %v3852, %v3854
    %v3858 = vadd.f32 %v3052, %v3856
    %v3859 = vadd.f32 %v3053, %v3857
    %v3860 = vld [vmem:[%s57] sm:$0x3]
    %v3861 = vsel %vm165, %v3858, 0.0
    %3862 = vadd.xlane.f32.xlu0 %v3861
    %v3863 = vpop.xlane.xlu0 %3862
    %v3864 = vsel %vm165, %v3859, 0.0
    %3865 = vadd.xlane.f32.xlu0 %v3864
    %v3866 = vpop.xlane.xlu0 %3865
    %v3867 = vmul.f32 %v3863, %v178
    %v3868 = vmul.f32 %v3866, %v178
    %v3869 = vsub.f32 %v3858, %v3867
    %v3870 = vsub.f32 %v3859, %v3868
    %v3871 = vmul.f32 %v3869, %v3869
    %v3872 = vmul.f32 %v3870, %v3870
    %v3873 = vsel %vm165, %v3871, 0.0
    %3874 = vadd.xlane.f32.xlu0 %v3873
    %v3875 = vpop.xlane.xlu0 %3874
    %v3876 = vsel %vm165, %v3872, 0.0
    %3877 = vadd.xlane.f32.xlu0 %v3876
    %v3878 = vpop.xlane.xlu0 %3877
    %v3879 = vmul.f32 %v3875, %v178
    %v3880 = vmul.f32 %v3878, %v178
    %v3881 = vadd.f32 %v3879, 1e-05
    %v3882 = vadd.f32 %v3880, 1e-05
    %v3883 = vrsqrt.pop %v3881
    %v3884 = vmul.f32 %v3883, %v3881
    %v3885 = vmul.f32 %v3884, %v3883
    %v3886 = vmul.f32 0.5, %v3885
    %v3887 = vsub.f32 1.5, %v3886
    %v3888 = vmul.f32 %v3883, %v3887
    %vm3889 = vweird.f32 %v3881
    %vm3890 = vweird.f32 %v3883
    %vm3891 = vmor %vm3889, %vm3890
    %v3892 = vsel %vm3891, %v3883, %v3888
    %v3893 = vrsqrt.pop %v3882
    %v3894 = vmul.f32 %v3893, %v3882
    %v3895 = vmul.f32 %v3894, %v3893
    %v3896 = vmul.f32 0.5, %v3895
    %v3897 = vsub.f32 1.5, %v3896
    %v3898 = vmul.f32 %v3893, %v3897
    %vm3899 = vweird.f32 %v3882
    %vm3900 = vweird.f32 %v3893
    %vm3901 = vmor %vm3899, %vm3900
    %v3902 = vsel %vm3901, %v3893, %v3898
    %v3903 = vmul.f32 %v3869, %v3892
    %v3904 = vmul.f32 %v3870, %v3902
    %v3905 = vperm.slane %v3860, 0
    %v3906 = vmul.f32 %v3903, %v3905
    %v3907 = vmul.f32 %v3904, %v3905
    %v3908 = vperm.slane %v3860, 1
    %v3909 = vadd.f32 %v3906, %v3908
    %v3910 = vadd.f32 %v3907, %v3908
    %v3911 = vld [vmem:[%s59] sm:$0xff]
    %v3912 = vld [vmem:[%s59 + $0x8] sm:$0xff]
    %v3913 = vld [vmem:[%s59 + $0x10] sm:$0xff]
    %v3914 = vld [vmem:[%s59 + $0x18] sm:$0xff]
    %v3915 = vld [vmem:[%s61] sm:$0x1]
    %v3916 = vld [vmem:[%s63] sm:$0xff]
    %v3917 = vld [vmem:[%s63 + $0x8] sm:$0xff]
    %v3918 = vld [vmem:[%s63 + $0x10] sm:$0xff]
    %v3919 = vld [vmem:[%s63 + $0x18] sm:$0xff]
    %v3920 = vld [vmem:[%s63 + $0x20] sm:$0xff]
    %v3921 = vld [vmem:[%s63 + $0x28] sm:$0xff]
    %v3922 = vld [vmem:[%s63 + $0x30] sm:$0xff]
    %v3923 = vld [vmem:[%s63 + $0x38] sm:$0xff]
    %v3924 = vld [vmem:[%s65] sm:$0x1]
    %v3926 = vperm.slane %v3915, 0
    %v3929 = vsel %vm165, %v3909, 0
    %v3932 = vsel %vm165, %v3910, 0
    %3934 = vmatpush.msra.mxu0 0.0
    %3935 = vmatpush.msra.mxu0 0.0
    %3936 = vmatpush.msra.mxu0 0.0
    %3937 = vmatpush.msra.mxu0 0.0
    %3938 = vmatpush.msra.mxu0 0.0
    %3939 = vmatpush.msra.mxu0 0.0
    %3940 = vmatpush.msra.mxu0 0.0
    %3941 = vmatpush.msra.mxu0 0.0
    %3942 = vmatpush.msra.mxu0 0.0
    %3943 = vmatpush.msra.mxu0 0.0
    %3944 = vmatpush.msra.mxu0 0.0
    %3945 = vmatpush.msra.mxu0 0.0
    %3946 = vmatpush.msra.mxu0 %v3914
    %3947 = vmatpush.msra.mxu0 %v3913
    %3948 = vmatpush.msra.mxu0 %v3912
    %3949 = vmatpush.msra.mxu0 %v3911
    %3950 = vmatmul.f32.gmra.mxu0 %v3929
    %v3951 = vpop.f32.mrf.mxu0
    %v3952 = vadd.f32 %v3926, %v3951
    %3953 = vmatmul.f32.gmra.mxu0 %v3932
    %v3954 = vpop.f32.mrf.mxu0
    %v3955 = vadd.f32 %v3926, %v3954
    %3956 = vdwg.mxu0
    %v3957 = vmul.f32 %v3952, %v3952
    %v3958 = vmul.f32 %v3955, %v3955
    %v3959 = vmul.f32 %v3952, %v3957
    %v3960 = vmul.f32 %v3955, %v3958
    %v3961 = vmul.f32 %v3959, 0.044715
    %v3962 = vmul.f32 %v3960, 0.044715
    %v3963 = vadd.f32 %v3952, %v3961
    %v3964 = vadd.f32 %v3955, %v3962
    %v3965 = vmul.f32 %v3963, 0.7978846
    %v3966 = vmul.f32 %v3964, 0.7978846
    %v3967 = vtanh.pop %v3965
    %v3968 = vtanh.pop %v3966
    %v3969 = vadd.f32 %v3967, 1.0
    %v3970 = vadd.f32 %v3968, 1.0
    %v3971 = vmul.f32 %v3969, 0.5
    %v3972 = vmul.f32 %v3970, 0.5
    %v3973 = vmul.f32 %v3952, %v3971
    %v3974 = vmul.f32 %v3955, %v3972
    %v3976 = vperm.slane %v3924, 0
    %v3979 = vsel %vm1115, %v3973, 0
    %v3982 = vsel %vm1115, %v3974, 0
    %3984 = vmatpush.msra.mxu0 0.0
    %3985 = vmatpush.msra.mxu0 0.0
    %3986 = vmatpush.msra.mxu0 0.0
    %3987 = vmatpush.msra.mxu0 0.0
    %3988 = vmatpush.msra.mxu0 0.0
    %3989 = vmatpush.msra.mxu0 0.0
    %3990 = vmatpush.msra.mxu0 0.0
    %3991 = vmatpush.msra.mxu0 0.0
    %3992 = vmatpush.msra.mxu0 %v3923
    %3993 = vmatpush.msra.mxu0 %v3922
    %3994 = vmatpush.msra.mxu0 %v3921
    %3995 = vmatpush.msra.mxu0 %v3920
    %3996 = vmatpush.msra.mxu0 %v3919
    %3997 = vmatpush.msra.mxu0 %v3918
    %3998 = vmatpush.msra.mxu0 %v3917
    %3999 = vmatpush.msra.mxu0 %v3916
    %4000 = vmatmul.f32.gmra.mxu0 %v3979
    %v4001 = vpop.f32.mrf.mxu0
    %v4002 = vadd.f32 %v3976, %v4001
    %4003 = vmatmul.f32.gmra.mxu0 %v3982
    %v4004 = vpop.f32.mrf.mxu0
    %v4005 = vadd.f32 %v3976, %v4004
    %4006 = vdwg.mxu0
    %v4007 = vadd.f32 %v3909, %v4002
    %v4008 = vadd.f32 %v3910, %v4005
    %v4009 = vld [vmem:[%s67] sm:$0x3]
    %v4010 = vsel %vm165, %v4007, 0.0
    %4011 = vadd.xlane.f32.xlu0 %v4010
    %v4012 = vpop.xlane.xlu0 %4011
    %v4013 = vsel %vm165, %v4008, 0.0
    %4014 = vadd.xlane.f32.xlu0 %v4013
    %v4015 = vpop.xlane.xlu0 %4014
    %v4016 = vmul.f32 %v4012, %v178
    %v4017 = vmul.f32 %v4015, %v178
    %v4018 = vsub.f32 %v4007, %v4016
    %v4019 = vsub.f32 %v4008, %v4017
    %v4020 = vmul.f32 %v4018, %v4018
    %v4021 = vmul.f32 %v4019, %v4019
    %v4022 = vsel %vm165, %v4020, 0.0
    %4023 = vadd.xlane.f32.xlu0 %v4022
    %v4024 = vpop.xlane.xlu0 %4023
    %v4025 = vsel %vm165, %v4021, 0.0
    %4026 = vadd.xlane.f32.xlu0 %v4025
    %v4027 = vpop.xlane.xlu0 %4026
    %v4028 = vmul.f32 %v4024, %v178
    %v4029 = vmul.f32 %v4027, %v178
    %v4030 = vadd.f32 %v4028, 1e-05
    %v4031 = vadd.f32 %v4029, 1e-05
    %v4032 = vrsqrt.pop %v4030
    %v4033 = vmul.f32 %v4032, %v4030
    %v4034 = vmul.f32 %v4033, %v4032
    %v4035 = vmul.f32 0.5, %v4034
    %v4036 = vsub.f32 1.5, %v4035
    %v4037 = vmul.f32 %v4032, %v4036
    %vm4038 = vweird.f32 %v4030
    %vm4039 = vweird.f32 %v4032
    %vm4040 = vmor %vm4038, %vm4039
    %v4041 = vsel %vm4040, %v4032, %v4037
    %v4042 = vrsqrt.pop %v4031
    %v4043 = vmul.f32 %v4042, %v4031
    %v4044 = vmul.f32 %v4043, %v4042
    %v4045 = vmul.f32 0.5, %v4044
    %v4046 = vsub.f32 1.5, %v4045
    %v4047 = vmul.f32 %v4042, %v4046
    %vm4048 = vweird.f32 %v4031
    %vm4049 = vweird.f32 %v4042
    %vm4050 = vmor %vm4048, %vm4049
    %v4051 = vsel %vm4050, %v4042, %v4047
    %v4052 = vmul.f32 %v4018, %v4041
    %v4053 = vmul.f32 %v4019, %v4051
    %v4054 = vperm.slane %v4009, 0
    %v4055 = vmul.f32 %v4052, %v4054
    %v4056 = vmul.f32 %v4053, %v4054
    %v4057 = vperm.slane %v4009, 1
    %v4058 = vadd.f32 %v4055, %v4057
    %v4059 = vadd.f32 %v4056, %v4057
    %s4060 = scalar_lea.vmem %s35, 32
    %v4061 = vld [vmem:[%s4060] sm:$0xff]
    %v4062 = vld [vmem:[%s4060 + $0x8] sm:$0xff]
    %v4063 = vld [vmem:[%s4060 + $0x10] sm:$0xff]
    %v4064 = vld [vmem:[%s4060 + $0x18] sm:$0xff]
    %s4065 = scalar_lea.vmem %s37, 1
    %v4066 = vld [vmem:[%s4065] sm:$0x1]
    %v4068 = vperm.slane %v4066, 0
    %v4071 = vsel %vm165, %v4058, 0
    %v4074 = vsel %vm165, %v4059, 0
    %4076 = vmatpush.msra.mxu0 0.0
    %4077 = vmatpush.msra.mxu0 0.0
    %4078 = vmatpush.msra.mxu0 0.0
    %4079 = vmatpush.msra.mxu0 0.0
    %4080 = vmatpush.msra.mxu0 0.0
    %4081 = vmatpush.msra.mxu0 0.0
    %4082 = vmatpush.msra.mxu0 0.0
    %4083 = vmatpush.msra.mxu0 0.0
    %4084 = vmatpush.msra.mxu0 0.0
    %4085 = vmatpush.msra.mxu0 0.0
    %4086 = vmatpush.msra.mxu0 0.0
    %4087 = vmatpush.msra.mxu0 0.0
    %4088 = vmatpush.msra.mxu0 %v4064
    %4089 = vmatpush.msra.mxu0 %v4063
    %4090 = vmatpush.msra.mxu0 %v4062
    %4091 = vmatpush.msra.mxu0 %v4061
    %4092 = vmatmul.f32.gmra.mxu0 %v4071
    %v4093 = vpop.f32.mrf.mxu0
    %v4094 = vadd.f32 %v4068, %v4093
    %4095 = vmatmul.f32.gmra.mxu0 %v4074
    %v4096 = vpop.f32.mrf.mxu0
    %v4097 = vadd.f32 %v4068, %v4096
    %4098 = vdwg.mxu0
    %s4099 = scalar_lea.vmem %s39, 32
    %v4100 = vld [vmem:[%s4099] sm:$0xff]
    %v4101 = vld [vmem:[%s4099 + $0x8] sm:$0xff]
    %v4102 = vld [vmem:[%s4099 + $0x10] sm:$0xff]
    %v4103 = vld [vmem:[%s4099 + $0x18] sm:$0xff]
    %s4104 = scalar_lea.vmem %s41, 1
    %v4105 = vld [vmem:[%s4104] sm:$0x1]
    %4107 = vrot.lane.b32.xlu0 %v4094, 96
    %v4108 = vpop.permute.xlu0 %4107
    %v4109 = vsel %vm268, %v4094, 0
    %v4111 = vsel %vm268, %v4108, 0
    %4113 = vmatpush.xpose.msra.mxu0 0.0
    %4114 = vmatpush.xpose.msra.mxu0 0.0
    %4115 = vmatpush.xpose.msra.mxu0 0.0
    %4116 = vmatpush.xpose.msra.mxu0 0.0
    %4117 = vmatpush.xpose.msra.mxu0 0.0
    %4118 = vmatpush.xpose.msra.mxu0 0.0
    %4119 = vmatpush.xpose.msra.mxu0 0.0
    %4120 = vmatpush.xpose.msra.mxu0 0.0
    %4121 = vmatpush.xpose.msra.mxu0 0.0
    %4122 = vmatpush.xpose.msra.mxu0 0.0
    %4123 = vmatpush.xpose.msra.mxu0 0.0
    %4124 = vmatpush.xpose.msra.mxu0 0.0
    %4125 = vmatpush.xpose.msra.mxu0 0.0
    %4126 = vmatpush.xpose.msra.mxu0 0.0
    %4127 = vmatpush.xpose.msra.mxu0 0.0
    %4128 = vmatpush.xpose.msra.mxu0 %v4111
    %4129 = vmatmul.f32.gmra.mxu0 %v4109
    %v4130 = vpop.f32.mrf.mxu0
    %v4131 = vadd.f32 0.0, %v4130
    %4132 = vdwg.mxu0
    %v4133 = vmul.f32 %v4131, 0.35355338
    %v4134 = vadd.f32 %v4133, %v160
    %v4135 = vsel %vm268, %v4134, -inf
    %4136 = vmax.xlane.f32.xlu0 %v4135
    %v4137 = vpop.xlane.xlu0 %4136
    %v4138 = vsub.f32 %v4134, %v4137
    %v4139 = vmul.f32 %v4138, 1.442695
    %v4140 = vpow.pop %v4139
    %v4141 = vsel %vm268, %v4140, 0.0
    %4142 = vadd.xlane.f32.xlu0 %v4141
    %v4143 = vpop.xlane.xlu0 %4142
    %v4144 = vrcp.pop %v4143
    %v4145 = vmul.f32 %v4140, %v4144
    %4146 = vrot.lane.b32.xlu0 %v4094, 64
    %v4147 = vpop.permute.xlu0 %4146
    %v4150 = vsel %vm268, %v4145, 0
    %4152 = vmatpush.msra.mxu0 0.0
    %4153 = vmatpush.msra.mxu0 0.0
    %4154 = vmatpush.msra.mxu0 0.0
    %4155 = vmatpush.msra.mxu0 0.0
    %4156 = vmatpush.msra.mxu0 0.0
    %4157 = vmatpush.msra.mxu0 0.0
    %4158 = vmatpush.msra.mxu0 0.0
    %4159 = vmatpush.msra.mxu0 0.0
    %4160 = vmatpush.msra.mxu0 0.0
    %4161 = vmatpush.msra.mxu0 0.0
    %4162 = vmatpush.msra.mxu0 0.0
    %4163 = vmatpush.msra.mxu0 0.0
    %4164 = vmatpush.msra.mxu0 0.0
    %4165 = vmatpush.msra.mxu0 0.0
    %4166 = vmatpush.msra.mxu0 0.0
    %4167 = vmatpush.msra.mxu0 %v4147
    %4168 = vmatmul.f32.gmra.mxu0 %v4150
    %v4169 = vpop.f32.mrf.mxu0
    %v4170 = vadd.f32 0.0, %v4169
    %4171 = vdwg.mxu0
    %4172 = vrot.lane.b32.xlu0 %v4094, 120
    %v4173 = vpop.permute.xlu0 %4172
    %4174 = vrot.lane.b32.xlu0 %v4094, 88
    %v4175 = vpop.permute.xlu0 %4174
    %v4176 = vsel %vm268, %v4173, 0
    %v4178 = vsel %vm268, %v4175, 0
    %4180 = vmatpush.xpose.msra.mxu0 0.0
    %4181 = vmatpush.xpose.msra.mxu0 0.0
    %4182 = vmatpush.xpose.msra.mxu0 0.0
    %4183 = vmatpush.xpose.msra.mxu0 0.0
    %4184 = vmatpush.xpose.msra.mxu0 0.0
    %4185 = vmatpush.xpose.msra.mxu0 0.0
    %4186 = vmatpush.xpose.msra.mxu0 0.0
    %4187 = vmatpush.xpose.msra.mxu0 0.0
    %4188 = vmatpush.xpose.msra.mxu0 0.0
    %4189 = vmatpush.xpose.msra.mxu0 0.0
    %4190 = vmatpush.xpose.msra.mxu0 0.0
    %4191 = vmatpush.xpose.msra.mxu0 0.0
    %4192 = vmatpush.xpose.msra.mxu0 0.0
    %4193 = vmatpush.xpose.msra.mxu0 0.0
    %4194 = vmatpush.xpose.msra.mxu0 0.0
    %4195 = vmatpush.xpose.msra.mxu0 %v4178
    %4196 = vmatmul.f32.gmra.mxu0 %v4176
    %v4197 = vpop.f32.mrf.mxu0
    %v4198 = vadd.f32 0.0, %v4197
    %4199 = vdwg.mxu0
    %v4200 = vmul.f32 %v4198, 0.35355338
    %v4201 = vadd.f32 %v4200, %v160
    %v4202 = vsel %vm268, %v4201, -inf
    %4203 = vmax.xlane.f32.xlu0 %v4202
    %v4204 = vpop.xlane.xlu0 %4203
    %v4205 = vsub.f32 %v4201, %v4204
    %v4206 = vmul.f32 %v4205, 1.442695
    %v4207 = vpow.pop %v4206
    %v4208 = vsel %vm268, %v4207, 0.0
    %4209 = vadd.xlane.f32.xlu0 %v4208
    %v4210 = vpop.xlane.xlu0 %4209
    %v4211 = vrcp.pop %v4210
    %v4212 = vmul.f32 %v4207, %v4211
    %4213 = vrot.lane.b32.xlu0 %v4094, 56
    %v4214 = vpop.permute.xlu0 %4213
    %v4217 = vsel %vm268, %v4212, 0
    %4219 = vmatpush.msra.mxu0 0.0
    %4220 = vmatpush.msra.mxu0 0.0
    %4221 = vmatpush.msra.mxu0 0.0
    %4222 = vmatpush.msra.mxu0 0.0
    %4223 = vmatpush.msra.mxu0 0.0
    %4224 = vmatpush.msra.mxu0 0.0
    %4225 = vmatpush.msra.mxu0 0.0
    %4226 = vmatpush.msra.mxu0 0.0
    %4227 = vmatpush.msra.mxu0 0.0
    %4228 = vmatpush.msra.mxu0 0.0
    %4229 = vmatpush.msra.mxu0 0.0
    %4230 = vmatpush.msra.mxu0 0.0
    %4231 = vmatpush.msra.mxu0 0.0
    %4232 = vmatpush.msra.mxu0 0.0
    %4233 = vmatpush.msra.mxu0 0.0
    %4234 = vmatpush.msra.mxu0 %v4214
    %4235 = vmatmul.f32.gmra.mxu0 %v4217
    %v4236 = vpop.f32.mrf.mxu0
    %v4237 = vadd.f32 0.0, %v4236
    %4238 = vdwg.mxu0
    %v4240 = vsel %vm268, %v4237, 0
    %4242 = vmatpush.msra.mxu0 0.0
    %4243 = vmatpush.msra.mxu0 0.0
    %4244 = vmatpush.msra.mxu0 0.0
    %4245 = vmatpush.msra.mxu0 0.0
    %4246 = vmatpush.msra.mxu0 0.0
    %4247 = vmatpush.msra.mxu0 0.0
    %4248 = vmatpush.msra.mxu0 0.0
    %4249 = vmatpush.msra.mxu0 0.0
    %4250 = vmatpush.msra.mxu0 0.0
    %4251 = vmatpush.msra.mxu0 0.0
    %4252 = vmatpush.msra.mxu0 0.0
    %4253 = vmatpush.msra.mxu0 0.0
    %4254 = vmatpush.msra.mxu0 0.0
    %4255 = vmatpush.msra.mxu0 0.0
    %4256 = vmatpush.msra.mxu0 0.0
    %4257 = vmatpush.msra.mxu0 %v4101
    %4258 = vmatmul.f32.gmra.mxu0 %v4240
    %v4259 = vpop.f32.mrf.mxu0
    %v4260 = vadd.f32 0.0, %v4259
    %4261 = vdwg.mxu0
    %v4263 = vsel %vm268, %v4170, 0
    %4265 = vmatpush.msra.mxu0 0.0
    %4266 = vmatpush.msra.mxu0 0.0
    %4267 = vmatpush.msra.mxu0 0.0
    %4268 = vmatpush.msra.mxu0 0.0
    %4269 = vmatpush.msra.mxu0 0.0
    %4270 = vmatpush.msra.mxu0 0.0
    %4271 = vmatpush.msra.mxu0 0.0
    %4272 = vmatpush.msra.mxu0 0.0
    %4273 = vmatpush.msra.mxu0 0.0
    %4274 = vmatpush.msra.mxu0 0.0
    %4275 = vmatpush.msra.mxu0 0.0
    %4276 = vmatpush.msra.mxu0 0.0
    %4277 = vmatpush.msra.mxu0 0.0
    %4278 = vmatpush.msra.mxu0 0.0
    %4279 = vmatpush.msra.mxu0 0.0
    %4280 = vmatpush.msra.mxu0 %v4100
    %4281 = vmatmul.f32.gmra.mxu0 %v4263
    %v4282 = vpop.f32.mrf.mxu0
    %v4283 = vadd.f32 %v4260, %v4282
    %4284 = vdwg.mxu0
    %4285 = vrot.lane.b32.xlu0 %v4094, 112
    %v4286 = vpop.permute.xlu0 %4285
    %4287 = vrot.lane.b32.xlu0 %v4094, 80
    %v4288 = vpop.permute.xlu0 %4287
    %v4289 = vsel %vm268, %v4286, 0
    %v4291 = vsel %vm268, %v4288, 0
    %4293 = vmatpush.xpose.msra.mxu0 0.0
    %4294 = vmatpush.xpose.msra.mxu0 0.0
    %4295 = vmatpush.xpose.msra.mxu0 0.0
    %4296 = vmatpush.xpose.msra.mxu0 0.0
    %4297 = vmatpush.xpose.msra.mxu0 0.0
    %4298 = vmatpush.xpose.msra.mxu0 0.0
    %4299 = vmatpush.xpose.msra.mxu0 0.0
    %4300 = vmatpush.xpose.msra.mxu0 0.0
    %4301 = vmatpush.xpose.msra.mxu0 0.0
    %4302 = vmatpush.xpose.msra.mxu0 0.0
    %4303 = vmatpush.xpose.msra.mxu0 0.0
    %4304 = vmatpush.xpose.msra.mxu0 0.0
    %4305 = vmatpush.xpose.msra.mxu0 0.0
    %4306 = vmatpush.xpose.msra.mxu0 0.0
    %4307 = vmatpush.xpose.msra.mxu0 0.0
    %4308 = vmatpush.xpose.msra.mxu0 %v4291
    %4309 = vmatmul.f32.gmra.mxu0 %v4289
    %v4310 = vpop.f32.mrf.mxu0
    %v4311 = vadd.f32 0.0, %v4310
    %4312 = vdwg.mxu0
    %v4313 = vmul.f32 %v4311, 0.35355338
    %v4314 = vadd.f32 %v4313, %v160
    %v4315 = vsel %vm268, %v4314, -inf
    %4316 = vmax.xlane.f32.xlu0 %v4315
    %v4317 = vpop.xlane.xlu0 %4316
    %v4318 = vsub.f32 %v4314, %v4317
    %v4319 = vmul.f32 %v4318, 1.442695
    %v4320 = vpow.pop %v4319
    %v4321 = vsel %vm268, %v4320, 0.0
    %4322 = vadd.xlane.f32.xlu0 %v4321
    %v4323 = vpop.xlane.xlu0 %4322
    %v4324 = vrcp.pop %v4323
    %v4325 = vmul.f32 %v4320, %v4324
    %4326 = vrot.lane.b32.xlu0 %v4094, 48
    %v4327 = vpop.permute.xlu0 %4326
    %v4330 = vsel %vm268, %v4325, 0
    %4332 = vmatpush.msra.mxu0 0.0
    %4333 = vmatpush.msra.mxu0 0.0
    %4334 = vmatpush.msra.mxu0 0.0
    %4335 = vmatpush.msra.mxu0 0.0
    %4336 = vmatpush.msra.mxu0 0.0
    %4337 = vmatpush.msra.mxu0 0.0
    %4338 = vmatpush.msra.mxu0 0.0
    %4339 = vmatpush.msra.mxu0 0.0
    %4340 = vmatpush.msra.mxu0 0.0
    %4341 = vmatpush.msra.mxu0 0.0
    %4342 = vmatpush.msra.mxu0 0.0
    %4343 = vmatpush.msra.mxu0 0.0
    %4344 = vmatpush.msra.mxu0 0.0
    %4345 = vmatpush.msra.mxu0 0.0
    %4346 = vmatpush.msra.mxu0 0.0
    %4347 = vmatpush.msra.mxu0 %v4327
    %4348 = vmatmul.f32.gmra.mxu0 %v4330
    %v4349 = vpop.f32.mrf.mxu0
    %v4350 = vadd.f32 0.0, %v4349
    %4351 = vdwg.mxu0
    %v4353 = vsel %vm268, %v4350, 0
    %4355 = vmatpush.msra.mxu0 0.0
    %4356 = vmatpush.msra.mxu0 0.0
    %4357 = vmatpush.msra.mxu0 0.0
    %4358 = vmatpush.msra.mxu0 0.0
    %4359 = vmatpush.msra.mxu0 0.0
    %4360 = vmatpush.msra.mxu0 0.0
    %4361 = vmatpush.msra.mxu0 0.0
    %4362 = vmatpush.msra.mxu0 0.0
    %4363 = vmatpush.msra.mxu0 0.0
    %4364 = vmatpush.msra.mxu0 0.0
    %4365 = vmatpush.msra.mxu0 0.0
    %4366 = vmatpush.msra.mxu0 0.0
    %4367 = vmatpush.msra.mxu0 0.0
    %4368 = vmatpush.msra.mxu0 0.0
    %4369 = vmatpush.msra.mxu0 0.0
    %4370 = vmatpush.msra.mxu0 %v4102
    %4371 = vmatmul.f32.gmra.mxu0 %v4353
    %v4372 = vpop.f32.mrf.mxu0
    %v4373 = vadd.f32 0.0, %v4372
    %4374 = vdwg.mxu0
    %v4375 = vadd.f32 %v4283, %v4373
    %4376 = vrot.lane.b32.xlu0 %v4094, 104
    %v4377 = vpop.permute.xlu0 %4376
    %4378 = vrot.lane.b32.xlu0 %v4094, 72
    %v4379 = vpop.permute.xlu0 %4378
    %v4380 = vsel %vm268, %v4377, 0
    %v4382 = vsel %vm268, %v4379, 0
    %4384 = vmatpush.xpose.msra.mxu0 0.0
    %4385 = vmatpush.xpose.msra.mxu0 0.0
    %4386 = vmatpush.xpose.msra.mxu0 0.0
    %4387 = vmatpush.xpose.msra.mxu0 0.0
    %4388 = vmatpush.xpose.msra.mxu0 0.0
    %4389 = vmatpush.xpose.msra.mxu0 0.0
    %4390 = vmatpush.xpose.msra.mxu0 0.0
    %4391 = vmatpush.xpose.msra.mxu0 0.0
    %4392 = vmatpush.xpose.msra.mxu0 0.0
    %4393 = vmatpush.xpose.msra.mxu0 0.0
    %4394 = vmatpush.xpose.msra.mxu0 0.0
    %4395 = vmatpush.xpose.msra.mxu0 0.0
    %4396 = vmatpush.xpose.msra.mxu0 0.0
    %4397 = vmatpush.xpose.msra.mxu0 0.0
    %4398 = vmatpush.xpose.msra.mxu0 0.0
    %4399 = vmatpush.xpose.msra.mxu0 %v4382
    %4400 = vmatmul.f32.gmra.mxu0 %v4380
    %v4401 = vpop.f32.mrf.mxu0
    %v4402 = vadd.f32 0.0, %v4401
    %4403 = vdwg.mxu0
    %v4404 = vmul.f32 %v4402, 0.35355338
    %v4405 = vadd.f32 %v4404, %v160
    %v4406 = vsel %vm268, %v4405, -inf
    %4407 = vmax.xlane.f32.xlu0 %v4406
    %v4408 = vpop.xlane.xlu0 %4407
    %v4409 = vsub.f32 %v4405, %v4408
    %v4410 = vmul.f32 %v4409, 1.442695
    %v4411 = vpow.pop %v4410
    %v4412 = vsel %vm268, %v4411, 0.0
    %4413 = vadd.xlane.f32.xlu0 %v4412
    %v4414 = vpop.xlane.xlu0 %4413
    %v4415 = vrcp.pop %v4414
    %v4416 = vmul.f32 %v4411, %v4415
    %4417 = vrot.lane.b32.xlu0 %v4094, 40
    %v4418 = vpop.permute.xlu0 %4417
    %v4421 = vsel %vm268, %v4416, 0
    %4423 = vmatpush.msra.mxu0 0.0
    %4424 = vmatpush.msra.mxu0 0.0
    %4425 = vmatpush.msra.mxu0 0.0
    %4426 = vmatpush.msra.mxu0 0.0
    %4427 = vmatpush.msra.mxu0 0.0
    %4428 = vmatpush.msra.mxu0 0.0
    %4429 = vmatpush.msra.mxu0 0.0
    %4430 = vmatpush.msra.mxu0 0.0
    %4431 = vmatpush.msra.mxu0 0.0
    %4432 = vmatpush.msra.mxu0 0.0
    %4433 = vmatpush.msra.mxu0 0.0
    %4434 = vmatpush.msra.mxu0 0.0
    %4435 = vmatpush.msra.mxu0 0.0
    %4436 = vmatpush.msra.mxu0 0.0
    %4437 = vmatpush.msra.mxu0 0.0
    %4438 = vmatpush.msra.mxu0 %v4418
    %4439 = vmatmul.f32.gmra.mxu0 %v4421
    %v4440 = vpop.f32.mrf.mxu0
    %v4441 = vadd.f32 0.0, %v4440
    %4442 = vdwg.mxu0
    %v4444 = vsel %vm268, %v4441, 0
    %4446 = vmatpush.msra.mxu0 0.0
    %4447 = vmatpush.msra.mxu0 0.0
    %4448 = vmatpush.msra.mxu0 0.0
    %4449 = vmatpush.msra.mxu0 0.0
    %4450 = vmatpush.msra.mxu0 0.0
    %4451 = vmatpush.msra.mxu0 0.0
    %4452 = vmatpush.msra.mxu0 0.0
    %4453 = vmatpush.msra.mxu0 0.0
    %4454 = vmatpush.msra.mxu0 0.0
    %4455 = vmatpush.msra.mxu0 0.0
    %4456 = vmatpush.msra.mxu0 0.0
    %4457 = vmatpush.msra.mxu0 0.0
    %4458 = vmatpush.msra.mxu0 0.0
    %4459 = vmatpush.msra.mxu0 0.0
    %4460 = vmatpush.msra.mxu0 0.0
    %4461 = vmatpush.msra.mxu0 %v4103
    %4462 = vmatmul.f32.gmra.mxu0 %v4444
    %v4463 = vpop.f32.mrf.mxu0
    %v4464 = vadd.f32 0.0, %v4463
    %4465 = vdwg.mxu0
    %v4466 = vadd.f32 %v4375, %v4464
    %4468 = vrot.lane.b32.xlu0 %v4097, 96
    %v4469 = vpop.permute.xlu0 %4468
    %v4470 = vsel %vm268, %v4097, 0
    %v4472 = vsel %vm268, %v4469, 0
    %4474 = vmatpush.xpose.msra.mxu0 0.0
    %4475 = vmatpush.xpose.msra.mxu0 0.0
    %4476 = vmatpush.xpose.msra.mxu0 0.0
    %4477 = vmatpush.xpose.msra.mxu0 0.0
    %4478 = vmatpush.xpose.msra.mxu0 0.0
    %4479 = vmatpush.xpose.msra.mxu0 0.0
    %4480 = vmatpush.xpose.msra.mxu0 0.0
    %4481 = vmatpush.xpose.msra.mxu0 0.0
    %4482 = vmatpush.xpose.msra.mxu0 0.0
    %4483 = vmatpush.xpose.msra.mxu0 0.0
    %4484 = vmatpush.xpose.msra.mxu0 0.0
    %4485 = vmatpush.xpose.msra.mxu0 0.0
    %4486 = vmatpush.xpose.msra.mxu0 0.0
    %4487 = vmatpush.xpose.msra.mxu0 0.0
    %4488 = vmatpush.xpose.msra.mxu0 0.0
    %4489 = vmatpush.xpose.msra.mxu0 %v4472
    %4490 = vmatmul.f32.gmra.mxu0 %v4470
    %v4491 = vpop.f32.mrf.mxu0
    %v4492 = vadd.f32 0.0, %v4491
    %4493 = vdwg.mxu0
    %v4494 = vmul.f32 %v4492, 0.35355338
    %v4495 = vadd.f32 %v4494, %v161
    %v4496 = vsel %vm268, %v4495, -inf
    %4497 = vmax.xlane.f32.xlu0 %v4496
    %v4498 = vpop.xlane.xlu0 %4497
    %v4499 = vsub.f32 %v4495, %v4498
    %v4500 = vmul.f32 %v4499, 1.442695
    %v4501 = vpow.pop %v4500
    %v4502 = vsel %vm268, %v4501, 0.0
    %4503 = vadd.xlane.f32.xlu0 %v4502
    %v4504 = vpop.xlane.xlu0 %4503
    %v4505 = vrcp.pop %v4504
    %v4506 = vmul.f32 %v4501, %v4505
    %4507 = vrot.lane.b32.xlu0 %v4097, 64
    %v4508 = vpop.permute.xlu0 %4507
    %v4511 = vsel %vm268, %v4506, 0
    %4513 = vmatpush.msra.mxu0 0.0
    %4514 = vmatpush.msra.mxu0 0.0
    %4515 = vmatpush.msra.mxu0 0.0
    %4516 = vmatpush.msra.mxu0 0.0
    %4517 = vmatpush.msra.mxu0 0.0
    %4518 = vmatpush.msra.mxu0 0.0
    %4519 = vmatpush.msra.mxu0 0.0
    %4520 = vmatpush.msra.mxu0 0.0
    %4521 = vmatpush.msra.mxu0 0.0
    %4522 = vmatpush.msra.mxu0 0.0
    %4523 = vmatpush.msra.mxu0 0.0
    %4524 = vmatpush.msra.mxu0 0.0
    %4525 = vmatpush.msra.mxu0 0.0
    %4526 = vmatpush.msra.mxu0 0.0
    %4527 = vmatpush.msra.mxu0 0.0
    %4528 = vmatpush.msra.mxu0 %v4508
    %4529 = vmatmul.f32.gmra.mxu0 %v4511
    %v4530 = vpop.f32.mrf.mxu0
    %v4531 = vadd.f32 0.0, %v4530
    %4532 = vdwg.mxu0
    %4533 = vrot.lane.b32.xlu0 %v4097, 120
    %v4534 = vpop.permute.xlu0 %4533
    %4535 = vrot.lane.b32.xlu0 %v4097, 88
    %v4536 = vpop.permute.xlu0 %4535
    %v4537 = vsel %vm268, %v4534, 0
    %v4539 = vsel %vm268, %v4536, 0
    %4541 = vmatpush.xpose.msra.mxu0 0.0
    %4542 = vmatpush.xpose.msra.mxu0 0.0
    %4543 = vmatpush.xpose.msra.mxu0 0.0
    %4544 = vmatpush.xpose.msra.mxu0 0.0
    %4545 = vmatpush.xpose.msra.mxu0 0.0
    %4546 = vmatpush.xpose.msra.mxu0 0.0
    %4547 = vmatpush.xpose.msra.mxu0 0.0
    %4548 = vmatpush.xpose.msra.mxu0 0.0
    %4549 = vmatpush.xpose.msra.mxu0 0.0
    %4550 = vmatpush.xpose.msra.mxu0 0.0
    %4551 = vmatpush.xpose.msra.mxu0 0.0
    %4552 = vmatpush.xpose.msra.mxu0 0.0
    %4553 = vmatpush.xpose.msra.mxu0 0.0
    %4554 = vmatpush.xpose.msra.mxu0 0.0
    %4555 = vmatpush.xpose.msra.mxu0 0.0
    %4556 = vmatpush.xpose.msra.mxu0 %v4539
    %4557 = vmatmul.f32.gmra.mxu0 %v4537
    %v4558 = vpop.f32.mrf.mxu0
    %v4559 = vadd.f32 0.0, %v4558
    %4560 = vdwg.mxu0
    %v4561 = vmul.f32 %v4559, 0.35355338
    %v4562 = vadd.f32 %v4561, %v161
    %v4563 = vsel %vm268, %v4562, -inf
    %4564 = vmax.xlane.f32.xlu0 %v4563
    %v4565 = vpop.xlane.xlu0 %4564
    %v4566 = vsub.f32 %v4562, %v4565
    %v4567 = vmul.f32 %v4566, 1.442695
    %v4568 = vpow.pop %v4567
    %v4569 = vsel %vm268, %v4568, 0.0
    %4570 = vadd.xlane.f32.xlu0 %v4569
    %v4571 = vpop.xlane.xlu0 %4570
    %v4572 = vrcp.pop %v4571
    %v4573 = vmul.f32 %v4568, %v4572
    %4574 = vrot.lane.b32.xlu0 %v4097, 56
    %v4575 = vpop.permute.xlu0 %4574
    %v4578 = vsel %vm268, %v4573, 0
    %4580 = vmatpush.msra.mxu0 0.0
    %4581 = vmatpush.msra.mxu0 0.0
    %4582 = vmatpush.msra.mxu0 0.0
    %4583 = vmatpush.msra.mxu0 0.0
    %4584 = vmatpush.msra.mxu0 0.0
    %4585 = vmatpush.msra.mxu0 0.0
    %4586 = vmatpush.msra.mxu0 0.0
    %4587 = vmatpush.msra.mxu0 0.0
    %4588 = vmatpush.msra.mxu0 0.0
    %4589 = vmatpush.msra.mxu0 0.0
    %4590 = vmatpush.msra.mxu0 0.0
    %4591 = vmatpush.msra.mxu0 0.0
    %4592 = vmatpush.msra.mxu0 0.0
    %4593 = vmatpush.msra.mxu0 0.0
    %4594 = vmatpush.msra.mxu0 0.0
    %4595 = vmatpush.msra.mxu0 %v4575
    %4596 = vmatmul.f32.gmra.mxu0 %v4578
    %v4597 = vpop.f32.mrf.mxu0
    %v4598 = vadd.f32 0.0, %v4597
    %4599 = vdwg.mxu0
    %v4601 = vsel %vm268, %v4598, 0
    %4603 = vmatpush.msra.mxu0 0.0
    %4604 = vmatpush.msra.mxu0 0.0
    %4605 = vmatpush.msra.mxu0 0.0
    %4606 = vmatpush.msra.mxu0 0.0
    %4607 = vmatpush.msra.mxu0 0.0
    %4608 = vmatpush.msra.mxu0 0.0
    %4609 = vmatpush.msra.mxu0 0.0
    %4610 = vmatpush.msra.mxu0 0.0
    %4611 = vmatpush.msra.mxu0 0.0
    %4612 = vmatpush.msra.mxu0 0.0
    %4613 = vmatpush.msra.mxu0 0.0
    %4614 = vmatpush.msra.mxu0 0.0
    %4615 = vmatpush.msra.mxu0 0.0
    %4616 = vmatpush.msra.mxu0 0.0
    %4617 = vmatpush.msra.mxu0 0.0
    %4618 = vmatpush.msra.mxu0 %v4101
    %4619 = vmatmul.f32.gmra.mxu0 %v4601
    %v4620 = vpop.f32.mrf.mxu0
    %v4621 = vadd.f32 0.0, %v4620
    %4622 = vdwg.mxu0
    %v4624 = vsel %vm268, %v4531, 0
    %4626 = vmatpush.msra.mxu0 0.0
    %4627 = vmatpush.msra.mxu0 0.0
    %4628 = vmatpush.msra.mxu0 0.0
    %4629 = vmatpush.msra.mxu0 0.0
    %4630 = vmatpush.msra.mxu0 0.0
    %4631 = vmatpush.msra.mxu0 0.0
    %4632 = vmatpush.msra.mxu0 0.0
    %4633 = vmatpush.msra.mxu0 0.0
    %4634 = vmatpush.msra.mxu0 0.0
    %4635 = vmatpush.msra.mxu0 0.0
    %4636 = vmatpush.msra.mxu0 0.0
    %4637 = vmatpush.msra.mxu0 0.0
    %4638 = vmatpush.msra.mxu0 0.0
    %4639 = vmatpush.msra.mxu0 0.0
    %4640 = vmatpush.msra.mxu0 0.0
    %4641 = vmatpush.msra.mxu0 %v4100
    %4642 = vmatmul.f32.gmra.mxu0 %v4624
    %v4643 = vpop.f32.mrf.mxu0
    %v4644 = vadd.f32 %v4621, %v4643
    %4645 = vdwg.mxu0
    %4646 = vrot.lane.b32.xlu0 %v4097, 112
    %v4647 = vpop.permute.xlu0 %4646
    %4648 = vrot.lane.b32.xlu0 %v4097, 80
    %v4649 = vpop.permute.xlu0 %4648
    %v4650 = vsel %vm268, %v4647, 0
    %v4652 = vsel %vm268, %v4649, 0
    %4654 = vmatpush.xpose.msra.mxu0 0.0
    %4655 = vmatpush.xpose.msra.mxu0 0.0
    %4656 = vmatpush.xpose.msra.mxu0 0.0
    %4657 = vmatpush.xpose.msra.mxu0 0.0
    %4658 = vmatpush.xpose.msra.mxu0 0.0
    %4659 = vmatpush.xpose.msra.mxu0 0.0
    %4660 = vmatpush.xpose.msra.mxu0 0.0
    %4661 = vmatpush.xpose.msra.mxu0 0.0
    %4662 = vmatpush.xpose.msra.mxu0 0.0
    %4663 = vmatpush.xpose.msra.mxu0 0.0
    %4664 = vmatpush.xpose.msra.mxu0 0.0
    %4665 = vmatpush.xpose.msra.mxu0 0.0
    %4666 = vmatpush.xpose.msra.mxu0 0.0
    %4667 = vmatpush.xpose.msra.mxu0 0.0
    %4668 = vmatpush.xpose.msra.mxu0 0.0
    %4669 = vmatpush.xpose.msra.mxu0 %v4652
    %4670 = vmatmul.f32.gmra.mxu0 %v4650
    %v4671 = vpop.f32.mrf.mxu0
    %v4672 = vadd.f32 0.0, %v4671
    %4673 = vdwg.mxu0
    %v4674 = vmul.f32 %v4672, 0.35355338
    %v4675 = vadd.f32 %v4674, %v161
    %v4676 = vsel %vm268, %v4675, -inf
    %4677 = vmax.xlane.f32.xlu0 %v4676
    %v4678 = vpop.xlane.xlu0 %4677
    %v4679 = vsub.f32 %v4675, %v4678
    %v4680 = vmul.f32 %v4679, 1.442695
    %v4681 = vpow.pop %v4680
    %v4682 = vsel %vm268, %v4681, 0.0
    %4683 = vadd.xlane.f32.xlu0 %v4682
    %v4684 = vpop.xlane.xlu0 %4683
    %v4685 = vrcp.pop %v4684
    %v4686 = vmul.f32 %v4681, %v4685
    %4687 = vrot.lane.b32.xlu0 %v4097, 48
    %v4688 = vpop.permute.xlu0 %4687
    %v4691 = vsel %vm268, %v4686, 0
    %4693 = vmatpush.msra.mxu0 0.0
    %4694 = vmatpush.msra.mxu0 0.0
    %4695 = vmatpush.msra.mxu0 0.0
    %4696 = vmatpush.msra.mxu0 0.0
    %4697 = vmatpush.msra.mxu0 0.0
    %4698 = vmatpush.msra.mxu0 0.0
    %4699 = vmatpush.msra.mxu0 0.0
    %4700 = vmatpush.msra.mxu0 0.0
    %4701 = vmatpush.msra.mxu0 0.0
    %4702 = vmatpush.msra.mxu0 0.0
    %4703 = vmatpush.msra.mxu0 0.0
    %4704 = vmatpush.msra.mxu0 0.0
    %4705 = vmatpush.msra.mxu0 0.0
    %4706 = vmatpush.msra.mxu0 0.0
    %4707 = vmatpush.msra.mxu0 0.0
    %4708 = vmatpush.msra.mxu0 %v4688
    %4709 = vmatmul.f32.gmra.mxu0 %v4691
    %v4710 = vpop.f32.mrf.mxu0
    %v4711 = vadd.f32 0.0, %v4710
    %4712 = vdwg.mxu0
    %v4714 = vsel %vm268, %v4711, 0
    %4716 = vmatpush.msra.mxu0 0.0
    %4717 = vmatpush.msra.mxu0 0.0
    %4718 = vmatpush.msra.mxu0 0.0
    %4719 = vmatpush.msra.mxu0 0.0
    %4720 = vmatpush.msra.mxu0 0.0
    %4721 = vmatpush.msra.mxu0 0.0
    %4722 = vmatpush.msra.mxu0 0.0
    %4723 = vmatpush.msra.mxu0 0.0
    %4724 = vmatpush.msra.mxu0 0.0
    %4725 = vmatpush.msra.mxu0 0.0
    %4726 = vmatpush.msra.mxu0 0.0
    %4727 = vmatpush.msra.mxu0 0.0
    %4728 = vmatpush.msra.mxu0 0.0
    %4729 = vmatpush.msra.mxu0 0.0
    %4730 = vmatpush.msra.mxu0 0.0
    %4731 = vmatpush.msra.mxu0 %v4102
    %4732 = vmatmul.f32.gmra.mxu0 %v4714
    %v4733 = vpop.f32.mrf.mxu0
    %v4734 = vadd.f32 0.0, %v4733
    %4735 = vdwg.mxu0
    %v4736 = vadd.f32 %v4644, %v4734
    %4737 = vrot.lane.b32.xlu0 %v4097, 104
    %v4738 = vpop.permute.xlu0 %4737
    %4739 = vrot.lane.b32.xlu0 %v4097, 72
    %v4740 = vpop.permute.xlu0 %4739
    %v4741 = vsel %vm268, %v4738, 0
    %v4743 = vsel %vm268, %v4740, 0
    %4745 = vmatpush.xpose.msra.mxu0 0.0
    %4746 = vmatpush.xpose.msra.mxu0 0.0
    %4747 = vmatpush.xpose.msra.mxu0 0.0
    %4748 = vmatpush.xpose.msra.mxu0 0.0
    %4749 = vmatpush.xpose.msra.mxu0 0.0
    %4750 = vmatpush.xpose.msra.mxu0 0.0
    %4751 = vmatpush.xpose.msra.mxu0 0.0
    %4752 = vmatpush.xpose.msra.mxu0 0.0
    %4753 = vmatpush.xpose.msra.mxu0 0.0
    %4754 = vmatpush.xpose.msra.mxu0 0.0
    %4755 = vmatpush.xpose.msra.mxu0 0.0
    %4756 = vmatpush.xpose.msra.mxu0 0.0
    %4757 = vmatpush.xpose.msra.mxu0 0.0
    %4758 = vmatpush.xpose.msra.mxu0 0.0
    %4759 = vmatpush.xpose.msra.mxu0 0.0
    %4760 = vmatpush.xpose.msra.mxu0 %v4743
    %4761 = vmatmul.f32.gmra.mxu0 %v4741
    %v4762 = vpop.f32.mrf.mxu0
    %v4763 = vadd.f32 0.0, %v4762
    %4764 = vdwg.mxu0
    %v4765 = vmul.f32 %v4763, 0.35355338
    %v4766 = vadd.f32 %v4765, %v161
    %v4767 = vsel %vm268, %v4766, -inf
    %4768 = vmax.xlane.f32.xlu0 %v4767
    %v4769 = vpop.xlane.xlu0 %4768
    %v4770 = vsub.f32 %v4766, %v4769
    %v4771 = vmul.f32 %v4770, 1.442695
    %v4772 = vpow.pop %v4771
    %v4773 = vsel %vm268, %v4772, 0.0
    %4774 = vadd.xlane.f32.xlu0 %v4773
    %v4775 = vpop.xlane.xlu0 %4774
    %v4776 = vrcp.pop %v4775
    %v4777 = vmul.f32 %v4772, %v4776
    %4778 = vrot.lane.b32.xlu0 %v4097, 40
    %v4779 = vpop.permute.xlu0 %4778
    %v4782 = vsel %vm268, %v4777, 0
    %4784 = vmatpush.msra.mxu0 0.0
    %4785 = vmatpush.msra.mxu0 0.0
    %4786 = vmatpush.msra.mxu0 0.0
    %4787 = vmatpush.msra.mxu0 0.0
    %4788 = vmatpush.msra.mxu0 0.0
    %4789 = vmatpush.msra.mxu0 0.0
    %4790 = vmatpush.msra.mxu0 0.0
    %4791 = vmatpush.msra.mxu0 0.0
    %4792 = vmatpush.msra.mxu0 0.0
    %4793 = vmatpush.msra.mxu0 0.0
    %4794 = vmatpush.msra.mxu0 0.0
    %4795 = vmatpush.msra.mxu0 0.0
    %4796 = vmatpush.msra.mxu0 0.0
    %4797 = vmatpush.msra.mxu0 0.0
    %4798 = vmatpush.msra.mxu0 0.0
    %4799 = vmatpush.msra.mxu0 %v4779
    %4800 = vmatmul.f32.gmra.mxu0 %v4782
    %v4801 = vpop.f32.mrf.mxu0
    %v4802 = vadd.f32 0.0, %v4801
    %4803 = vdwg.mxu0
    %v4805 = vsel %vm268, %v4802, 0
    %4807 = vmatpush.msra.mxu0 0.0
    %4808 = vmatpush.msra.mxu0 0.0
    %4809 = vmatpush.msra.mxu0 0.0
    %4810 = vmatpush.msra.mxu0 0.0
    %4811 = vmatpush.msra.mxu0 0.0
    %4812 = vmatpush.msra.mxu0 0.0
    %4813 = vmatpush.msra.mxu0 0.0
    %4814 = vmatpush.msra.mxu0 0.0
    %4815 = vmatpush.msra.mxu0 0.0
    %4816 = vmatpush.msra.mxu0 0.0
    %4817 = vmatpush.msra.mxu0 0.0
    %4818 = vmatpush.msra.mxu0 0.0
    %4819 = vmatpush.msra.mxu0 0.0
    %4820 = vmatpush.msra.mxu0 0.0
    %4821 = vmatpush.msra.mxu0 0.0
    %4822 = vmatpush.msra.mxu0 %v4103
    %4823 = vmatmul.f32.gmra.mxu0 %v4805
    %v4824 = vpop.f32.mrf.mxu0
    %v4825 = vadd.f32 0.0, %v4824
    %4826 = vdwg.mxu0
    %v4827 = vadd.f32 %v4736, %v4825
    %v4829 = vperm.slane %v4105, 0
    %v4831 = vadd.f32 %v4466, %v4829
    %v4832 = vadd.f32 %v4827, %v4829
    %v4833 = vadd.f32 %v4058, %v4831
    %v4834 = vadd.f32 %v4059, %v4832
    %s4835 = scalar_lea.vmem %s43, 2
    %v4836 = vld [vmem:[%s4835] sm:$0x3]
    %v4837 = vsel %vm165, %v4833, 0.0
    %4838 = vadd.xlane.f32.xlu0 %v4837
    %v4839 = vpop.xlane.xlu0 %4838
    %v4840 = vsel %vm165, %v4834, 0.0
    %4841 = vadd.xlane.f32.xlu0 %v4840
    %v4842 = vpop.xlane.xlu0 %4841
    %v4843 = vmul.f32 %v4839, %v178
    %v4844 = vmul.f32 %v4842, %v178
    %v4845 = vsub.f32 %v4833, %v4843
    %v4846 = vsub.f32 %v4834, %v4844
    %v4847 = vmul.f32 %v4845, %v4845
    %v4848 = vmul.f32 %v4846, %v4846
    %v4849 = vsel %vm165, %v4847, 0.0
    %4850 = vadd.xlane.f32.xlu0 %v4849
    %v4851 = vpop.xlane.xlu0 %4850
    %v4852 = vsel %vm165, %v4848, 0.0
    %4853 = vadd.xlane.f32.xlu0 %v4852
    %v4854 = vpop.xlane.xlu0 %4853
    %v4855 = vmul.f32 %v4851, %v178
    %v4856 = vmul.f32 %v4854, %v178
    %v4857 = vadd.f32 %v4855, 1e-05
    %v4858 = vadd.f32 %v4856, 1e-05
    %v4859 = vrsqrt.pop %v4857
    %v4860 = vmul.f32 %v4859, %v4857
    %v4861 = vmul.f32 %v4860, %v4859
    %v4862 = vmul.f32 0.5, %v4861
    %v4863 = vsub.f32 1.5, %v4862
    %v4864 = vmul.f32 %v4859, %v4863
    %vm4865 = vweird.f32 %v4857
    %vm4866 = vweird.f32 %v4859
    %vm4867 = vmor %vm4865, %vm4866
    %v4868 = vsel %vm4867, %v4859, %v4864
    %v4869 = vrsqrt.pop %v4858
    %v4870 = vmul.f32 %v4869, %v4858
    %v4871 = vmul.f32 %v4870, %v4869
    %v4872 = vmul.f32 0.5, %v4871
    %v4873 = vsub.f32 1.5, %v4872
    %v4874 = vmul.f32 %v4869, %v4873
    %vm4875 = vweird.f32 %v4858
    %vm4876 = vweird.f32 %v4869
    %vm4877 = vmor %vm4875, %vm4876
    %v4878 = vsel %vm4877, %v4869, %v4874
    %v4879 = vmul.f32 %v4845, %v4868
    %v4880 = vmul.f32 %v4846, %v4878
    %v4881 = vperm.slane %v4836, 0
    %v4882 = vmul.f32 %v4879, %v4881
    %v4883 = vmul.f32 %v4880, %v4881
    %v4884 = vperm.slane %v4836, 1
    %v4885 = vadd.f32 %v4882, %v4884
    %v4886 = vadd.f32 %v4883, %v4884
    %s4887 = scalar_lea.vmem %s45, 32
    %v4888 = vld [vmem:[%s4887] sm:$0xff]
    %v4889 = vld [vmem:[%s4887 + $0x8] sm:$0xff]
    %v4890 = vld [vmem:[%s4887 + $0x10] sm:$0xff]
    %v4891 = vld [vmem:[%s4887 + $0x18] sm:$0xff]
    %s4892 = scalar_lea.vmem %s47, 1
    %v4893 = vld [vmem:[%s4892] sm:$0x1]
    %v4895 = vperm.slane %v4893, 0
    %v4898 = vsel %vm165, %v4885, 0
    %v4901 = vsel %vm165, %v4886, 0
    %4903 = vmatpush.msra.mxu0 0.0
    %4904 = vmatpush.msra.mxu0 0.0
    %4905 = vmatpush.msra.mxu0 0.0
    %4906 = vmatpush.msra.mxu0 0.0
    %4907 = vmatpush.msra.mxu0 0.0
    %4908 = vmatpush.msra.mxu0 0.0
    %4909 = vmatpush.msra.mxu0 0.0
    %4910 = vmatpush.msra.mxu0 0.0
    %4911 = vmatpush.msra.mxu0 0.0
    %4912 = vmatpush.msra.mxu0 0.0
    %4913 = vmatpush.msra.mxu0 0.0
    %4914 = vmatpush.msra.mxu0 0.0
    %4915 = vmatpush.msra.mxu0 %v4891
    %4916 = vmatpush.msra.mxu0 %v4890
    %4917 = vmatpush.msra.mxu0 %v4889
    %4918 = vmatpush.msra.mxu0 %v4888
    %4919 = vmatmul.f32.gmra.mxu0 %v4898
    %v4920 = vpop.f32.mrf.mxu0
    %v4921 = vadd.f32 %v4895, %v4920
    %4922 = vmatmul.f32.gmra.mxu0 %v4901
    %v4923 = vpop.f32.mrf.mxu0
    %v4924 = vadd.f32 %v4895, %v4923
    %4925 = vdwg.mxu0
    %s4926 = scalar_lea.vmem %s49, 32
    %v4927 = vld [vmem:[%s4926] sm:$0xff]
    %v4928 = vld [vmem:[%s4926 + $0x8] sm:$0xff]
    %v4929 = vld [vmem:[%s4926 + $0x10] sm:$0xff]
    %v4930 = vld [vmem:[%s4926 + $0x18] sm:$0xff]
    %s4931 = scalar_lea.vmem %s51, 1
    %v4932 = vld [vmem:[%s4931] sm:$0x1]
    %v4934 = vperm.slane %v4932, 0
    %4936 = vmatpush.msra.mxu0 0.0
    %4937 = vmatpush.msra.mxu0 0.0
    %4938 = vmatpush.msra.mxu0 0.0
    %4939 = vmatpush.msra.mxu0 0.0
    %4940 = vmatpush.msra.mxu0 0.0
    %4941 = vmatpush.msra.mxu0 0.0
    %4942 = vmatpush.msra.mxu0 0.0
    %4943 = vmatpush.msra.mxu0 0.0
    %4944 = vmatpush.msra.mxu0 0.0
    %4945 = vmatpush.msra.mxu0 0.0
    %4946 = vmatpush.msra.mxu0 0.0
    %4947 = vmatpush.msra.mxu0 0.0
    %4948 = vmatpush.msra.mxu0 %v4930
    %4949 = vmatpush.msra.mxu0 %v4929
    %4950 = vmatpush.msra.mxu0 %v4928
    %4951 = vmatpush.msra.mxu0 %v4927
    %4952 = vmatmul.f32.gmra.mxu0 %v3100
    %v4953 = vpop.f32.mrf.mxu0
    %v4954 = vadd.f32 %v4934, %v4953
    %4955 = vmatmul.f32.gmra.mxu0 %v3103
    %v4956 = vpop.f32.mrf.mxu0
    %v4957 = vadd.f32 %v4934, %v4956
    %4958 = vdwg.mxu0
    %s4959 = scalar_lea.vmem %s53, 32
    %v4960 = vld [vmem:[%s4959] sm:$0xff]
    %v4961 = vld [vmem:[%s4959 + $0x8] sm:$0xff]
    %v4962 = vld [vmem:[%s4959 + $0x10] sm:$0xff]
    %v4963 = vld [vmem:[%s4959 + $0x18] sm:$0xff]
    %s4964 = scalar_lea.vmem %s55, 1
    %v4965 = vld [vmem:[%s4964] sm:$0x1]
    %v4967 = vsel %vm268, %v4921, 0
    %v4970 = vsel %vm268, %v4954, 0
    %4972 = vmatpush.xpose.msra.mxu0 0.0
    %4973 = vmatpush.xpose.msra.mxu0 0.0
    %4974 = vmatpush.xpose.msra.mxu0 0.0
    %4975 = vmatpush.xpose.msra.mxu0 0.0
    %4976 = vmatpush.xpose.msra.mxu0 0.0
    %4977 = vmatpush.xpose.msra.mxu0 0.0
    %4978 = vmatpush.xpose.msra.mxu0 0.0
    %4979 = vmatpush.xpose.msra.mxu0 0.0
    %4980 = vmatpush.xpose.msra.mxu0 0.0
    %4981 = vmatpush.xpose.msra.mxu0 0.0
    %4982 = vmatpush.xpose.msra.mxu0 0.0
    %4983 = vmatpush.xpose.msra.mxu0 0.0
    %4984 = vmatpush.xpose.msra.mxu0 0.0
    %4985 = vmatpush.xpose.msra.mxu0 0.0
    %4986 = vmatpush.xpose.msra.mxu0 0.0
    %4987 = vmatpush.xpose.msra.mxu0 %v4970
    %4988 = vmatmul.f32.gmra.mxu0 %v4967
    %v4989 = vpop.f32.mrf.mxu0
    %v4990 = vadd.f32 0.0, %v4989
    %4991 = vdwg.mxu0
    %v4992 = vmul.f32 %v4990, 0.35355338
    %v4993 = vadd.f32 %v4992, %v294
    %v4994 = vsel %vm268, %v4993, -inf
    %4995 = vmax.xlane.f32.xlu0 %v4994
    %v4996 = vpop.xlane.xlu0 %4995
    %v4997 = vsub.f32 %v4993, %v4996
    %v4998 = vmul.f32 %v4997, 1.442695
    %v4999 = vpow.pop %v4998
    %v5000 = vsel %vm268, %v4999, 0.0
    %5001 = vadd.xlane.f32.xlu0 %v5000
    %v5002 = vpop.xlane.xlu0 %5001
    %v5003 = vrcp.pop %v5002
    %v5004 = vmul.f32 %v4999, %v5003
    %5005 = vrot.lane.b32.xlu0 %v4954, 96
    %v5006 = vpop.permute.xlu0 %5005
    %v5009 = vsel %vm268, %v5004, 0
    %5011 = vmatpush.msra.mxu0 0.0
    %5012 = vmatpush.msra.mxu0 0.0
    %5013 = vmatpush.msra.mxu0 0.0
    %5014 = vmatpush.msra.mxu0 0.0
    %5015 = vmatpush.msra.mxu0 0.0
    %5016 = vmatpush.msra.mxu0 0.0
    %5017 = vmatpush.msra.mxu0 0.0
    %5018 = vmatpush.msra.mxu0 0.0
    %5019 = vmatpush.msra.mxu0 0.0
    %5020 = vmatpush.msra.mxu0 0.0
    %5021 = vmatpush.msra.mxu0 0.0
    %5022 = vmatpush.msra.mxu0 0.0
    %5023 = vmatpush.msra.mxu0 0.0
    %5024 = vmatpush.msra.mxu0 0.0
    %5025 = vmatpush.msra.mxu0 0.0
    %5026 = vmatpush.msra.mxu0 %v5006
    %5027 = vmatmul.f32.gmra.mxu0 %v5009
    %v5028 = vpop.f32.mrf.mxu0
    %v5029 = vadd.f32 0.0, %v5028
    %5030 = vdwg.mxu0
    %5031 = vrot.lane.b32.xlu0 %v4921, 120
    %v5032 = vpop.permute.xlu0 %5031
    %5033 = vrot.lane.b32.xlu0 %v4954, 120
    %v5034 = vpop.permute.xlu0 %5033
    %v5035 = vsel %vm268, %v5032, 0
    %v5037 = vsel %vm268, %v5034, 0
    %5039 = vmatpush.xpose.msra.mxu0 0.0
    %5040 = vmatpush.xpose.msra.mxu0 0.0
    %5041 = vmatpush.xpose.msra.mxu0 0.0
    %5042 = vmatpush.xpose.msra.mxu0 0.0
    %5043 = vmatpush.xpose.msra.mxu0 0.0
    %5044 = vmatpush.xpose.msra.mxu0 0.0
    %5045 = vmatpush.xpose.msra.mxu0 0.0
    %5046 = vmatpush.xpose.msra.mxu0 0.0
    %5047 = vmatpush.xpose.msra.mxu0 0.0
    %5048 = vmatpush.xpose.msra.mxu0 0.0
    %5049 = vmatpush.xpose.msra.mxu0 0.0
    %5050 = vmatpush.xpose.msra.mxu0 0.0
    %5051 = vmatpush.xpose.msra.mxu0 0.0
    %5052 = vmatpush.xpose.msra.mxu0 0.0
    %5053 = vmatpush.xpose.msra.mxu0 0.0
    %5054 = vmatpush.xpose.msra.mxu0 %v5037
    %5055 = vmatmul.f32.gmra.mxu0 %v5035
    %v5056 = vpop.f32.mrf.mxu0
    %v5057 = vadd.f32 0.0, %v5056
    %5058 = vdwg.mxu0
    %v5059 = vmul.f32 %v5057, 0.35355338
    %v5060 = vadd.f32 %v5059, %v294
    %v5061 = vsel %vm268, %v5060, -inf
    %5062 = vmax.xlane.f32.xlu0 %v5061
    %v5063 = vpop.xlane.xlu0 %5062
    %v5064 = vsub.f32 %v5060, %v5063
    %v5065 = vmul.f32 %v5064, 1.442695
    %v5066 = vpow.pop %v5065
    %v5067 = vsel %vm268, %v5066, 0.0
    %5068 = vadd.xlane.f32.xlu0 %v5067
    %v5069 = vpop.xlane.xlu0 %5068
    %v5070 = vrcp.pop %v5069
    %v5071 = vmul.f32 %v5066, %v5070
    %5072 = vrot.lane.b32.xlu0 %v4954, 88
    %v5073 = vpop.permute.xlu0 %5072
    %v5076 = vsel %vm268, %v5071, 0
    %5078 = vmatpush.msra.mxu0 0.0
    %5079 = vmatpush.msra.mxu0 0.0
    %5080 = vmatpush.msra.mxu0 0.0
    %5081 = vmatpush.msra.mxu0 0.0
    %5082 = vmatpush.msra.mxu0 0.0
    %5083 = vmatpush.msra.mxu0 0.0
    %5084 = vmatpush.msra.mxu0 0.0
    %5085 = vmatpush.msra.mxu0 0.0
    %5086 = vmatpush.msra.mxu0 0.0
    %5087 = vmatpush.msra.mxu0 0.0
    %5088 = vmatpush.msra.mxu0 0.0
    %5089 = vmatpush.msra.mxu0 0.0
    %5090 = vmatpush.msra.mxu0 0.0
    %5091 = vmatpush.msra.mxu0 0.0
    %5092 = vmatpush.msra.mxu0 0.0
    %5093 = vmatpush.msra.mxu0 %v5073
    %5094 = vmatmul.f32.gmra.mxu0 %v5076
    %v5095 = vpop.f32.mrf.mxu0
    %v5096 = vadd.f32 0.0, %v5095
    %5097 = vdwg.mxu0
    %v5099 = vsel %vm268, %v5096, 0
    %5101 = vmatpush.msra.mxu0 0.0
    %5102 = vmatpush.msra.mxu0 0.0
    %5103 = vmatpush.msra.mxu0 0.0
    %5104 = vmatpush.msra.mxu0 0.0
    %5105 = vmatpush.msra.mxu0 0.0
    %5106 = vmatpush.msra.mxu0 0.0
    %5107 = vmatpush.msra.mxu0 0.0
    %5108 = vmatpush.msra.mxu0 0.0
    %5109 = vmatpush.msra.mxu0 0.0
    %5110 = vmatpush.msra.mxu0 0.0
    %5111 = vmatpush.msra.mxu0 0.0
    %5112 = vmatpush.msra.mxu0 0.0
    %5113 = vmatpush.msra.mxu0 0.0
    %5114 = vmatpush.msra.mxu0 0.0
    %5115 = vmatpush.msra.mxu0 0.0
    %5116 = vmatpush.msra.mxu0 %v4961
    %5117 = vmatmul.f32.gmra.mxu0 %v5099
    %v5118 = vpop.f32.mrf.mxu0
    %v5119 = vadd.f32 0.0, %v5118
    %5120 = vdwg.mxu0
    %v5122 = vsel %vm268, %v5029, 0
    %5124 = vmatpush.msra.mxu0 0.0
    %5125 = vmatpush.msra.mxu0 0.0
    %5126 = vmatpush.msra.mxu0 0.0
    %5127 = vmatpush.msra.mxu0 0.0
    %5128 = vmatpush.msra.mxu0 0.0
    %5129 = vmatpush.msra.mxu0 0.0
    %5130 = vmatpush.msra.mxu0 0.0
    %5131 = vmatpush.msra.mxu0 0.0
    %5132 = vmatpush.msra.mxu0 0.0
    %5133 = vmatpush.msra.mxu0 0.0
    %5134 = vmatpush.msra.mxu0 0.0
    %5135 = vmatpush.msra.mxu0 0.0
    %5136 = vmatpush.msra.mxu0 0.0
    %5137 = vmatpush.msra.mxu0 0.0
    %5138 = vmatpush.msra.mxu0 0.0
    %5139 = vmatpush.msra.mxu0 %v4960
    %5140 = vmatmul.f32.gmra.mxu0 %v5122
    %v5141 = vpop.f32.mrf.mxu0
    %v5142 = vadd.f32 %v5119, %v5141
    %5143 = vdwg.mxu0
    %5144 = vrot.lane.b32.xlu0 %v4921, 112
    %v5145 = vpop.permute.xlu0 %5144
    %5146 = vrot.lane.b32.xlu0 %v4954, 112
    %v5147 = vpop.permute.xlu0 %5146
    %v5148 = vsel %vm268, %v5145, 0
    %v5150 = vsel %vm268, %v5147, 0
    %5152 = vmatpush.xpose.msra.mxu0 0.0
    %5153 = vmatpush.xpose.msra.mxu0 0.0
    %5154 = vmatpush.xpose.msra.mxu0 0.0
    %5155 = vmatpush.xpose.msra.mxu0 0.0
    %5156 = vmatpush.xpose.msra.mxu0 0.0
    %5157 = vmatpush.xpose.msra.mxu0 0.0
    %5158 = vmatpush.xpose.msra.mxu0 0.0
    %5159 = vmatpush.xpose.msra.mxu0 0.0
    %5160 = vmatpush.xpose.msra.mxu0 0.0
    %5161 = vmatpush.xpose.msra.mxu0 0.0
    %5162 = vmatpush.xpose.msra.mxu0 0.0
    %5163 = vmatpush.xpose.msra.mxu0 0.0
    %5164 = vmatpush.xpose.msra.mxu0 0.0
    %5165 = vmatpush.xpose.msra.mxu0 0.0
    %5166 = vmatpush.xpose.msra.mxu0 0.0
    %5167 = vmatpush.xpose.msra.mxu0 %v5150
    %5168 = vmatmul.f32.gmra.mxu0 %v5148
    %v5169 = vpop.f32.mrf.mxu0
    %v5170 = vadd.f32 0.0, %v5169
    %5171 = vdwg.mxu0
    %v5172 = vmul.f32 %v5170, 0.35355338
    %v5173 = vadd.f32 %v5172, %v294
    %v5174 = vsel %vm268, %v5173, -inf
    %5175 = vmax.xlane.f32.xlu0 %v5174
    %v5176 = vpop.xlane.xlu0 %5175
    %v5177 = vsub.f32 %v5173, %v5176
    %v5178 = vmul.f32 %v5177, 1.442695
    %v5179 = vpow.pop %v5178
    %v5180 = vsel %vm268, %v5179, 0.0
    %5181 = vadd.xlane.f32.xlu0 %v5180
    %v5182 = vpop.xlane.xlu0 %5181
    %v5183 = vrcp.pop %v5182
    %v5184 = vmul.f32 %v5179, %v5183
    %5185 = vrot.lane.b32.xlu0 %v4954, 80
    %v5186 = vpop.permute.xlu0 %5185
    %v5189 = vsel %vm268, %v5184, 0
    %5191 = vmatpush.msra.mxu0 0.0
    %5192 = vmatpush.msra.mxu0 0.0
    %5193 = vmatpush.msra.mxu0 0.0
    %5194 = vmatpush.msra.mxu0 0.0
    %5195 = vmatpush.msra.mxu0 0.0
    %5196 = vmatpush.msra.mxu0 0.0
    %5197 = vmatpush.msra.mxu0 0.0
    %5198 = vmatpush.msra.mxu0 0.0
    %5199 = vmatpush.msra.mxu0 0.0
    %5200 = vmatpush.msra.mxu0 0.0
    %5201 = vmatpush.msra.mxu0 0.0
    %5202 = vmatpush.msra.mxu0 0.0
    %5203 = vmatpush.msra.mxu0 0.0
    %5204 = vmatpush.msra.mxu0 0.0
    %5205 = vmatpush.msra.mxu0 0.0
    %5206 = vmatpush.msra.mxu0 %v5186
    %5207 = vmatmul.f32.gmra.mxu0 %v5189
    %v5208 = vpop.f32.mrf.mxu0
    %v5209 = vadd.f32 0.0, %v5208
    %5210 = vdwg.mxu0
    %v5212 = vsel %vm268, %v5209, 0
    %5214 = vmatpush.msra.mxu0 0.0
    %5215 = vmatpush.msra.mxu0 0.0
    %5216 = vmatpush.msra.mxu0 0.0
    %5217 = vmatpush.msra.mxu0 0.0
    %5218 = vmatpush.msra.mxu0 0.0
    %5219 = vmatpush.msra.mxu0 0.0
    %5220 = vmatpush.msra.mxu0 0.0
    %5221 = vmatpush.msra.mxu0 0.0
    %5222 = vmatpush.msra.mxu0 0.0
    %5223 = vmatpush.msra.mxu0 0.0
    %5224 = vmatpush.msra.mxu0 0.0
    %5225 = vmatpush.msra.mxu0 0.0
    %5226 = vmatpush.msra.mxu0 0.0
    %5227 = vmatpush.msra.mxu0 0.0
    %5228 = vmatpush.msra.mxu0 0.0
    %5229 = vmatpush.msra.mxu0 %v4962
    %5230 = vmatmul.f32.gmra.mxu0 %v5212
    %v5231 = vpop.f32.mrf.mxu0
    %v5232 = vadd.f32 0.0, %v5231
    %5233 = vdwg.mxu0
    %v5234 = vadd.f32 %v5142, %v5232
    %5235 = vrot.lane.b32.xlu0 %v4921, 104
    %v5236 = vpop.permute.xlu0 %5235
    %5237 = vrot.lane.b32.xlu0 %v4954, 104
    %v5238 = vpop.permute.xlu0 %5237
    %v5239 = vsel %vm268, %v5236, 0
    %v5241 = vsel %vm268, %v5238, 0
    %5243 = vmatpush.xpose.msra.mxu0 0.0
    %5244 = vmatpush.xpose.msra.mxu0 0.0
    %5245 = vmatpush.xpose.msra.mxu0 0.0
    %5246 = vmatpush.xpose.msra.mxu0 0.0
    %5247 = vmatpush.xpose.msra.mxu0 0.0
    %5248 = vmatpush.xpose.msra.mxu0 0.0
    %5249 = vmatpush.xpose.msra.mxu0 0.0
    %5250 = vmatpush.xpose.msra.mxu0 0.0
    %5251 = vmatpush.xpose.msra.mxu0 0.0
    %5252 = vmatpush.xpose.msra.mxu0 0.0
    %5253 = vmatpush.xpose.msra.mxu0 0.0
    %5254 = vmatpush.xpose.msra.mxu0 0.0
    %5255 = vmatpush.xpose.msra.mxu0 0.0
    %5256 = vmatpush.xpose.msra.mxu0 0.0
    %5257 = vmatpush.xpose.msra.mxu0 0.0
    %5258 = vmatpush.xpose.msra.mxu0 %v5241
    %5259 = vmatmul.f32.gmra.mxu0 %v5239
    %v5260 = vpop.f32.mrf.mxu0
    %v5261 = vadd.f32 0.0, %v5260
    %5262 = vdwg.mxu0
    %v5263 = vmul.f32 %v5261, 0.35355338
    %v5264 = vadd.f32 %v5263, %v294
    %v5265 = vsel %vm268, %v5264, -inf
    %5266 = vmax.xlane.f32.xlu0 %v5265
    %v5267 = vpop.xlane.xlu0 %5266
    %v5268 = vsub.f32 %v5264, %v5267
    %v5269 = vmul.f32 %v5268, 1.442695
    %v5270 = vpow.pop %v5269
    %v5271 = vsel %vm268, %v5270, 0.0
    %5272 = vadd.xlane.f32.xlu0 %v5271
    %v5273 = vpop.xlane.xlu0 %5272
    %v5274 = vrcp.pop %v5273
    %v5275 = vmul.f32 %v5270, %v5274
    %5276 = vrot.lane.b32.xlu0 %v4954, 72
    %v5277 = vpop.permute.xlu0 %5276
    %v5280 = vsel %vm268, %v5275, 0
    %5282 = vmatpush.msra.mxu0 0.0
    %5283 = vmatpush.msra.mxu0 0.0
    %5284 = vmatpush.msra.mxu0 0.0
    %5285 = vmatpush.msra.mxu0 0.0
    %5286 = vmatpush.msra.mxu0 0.0
    %5287 = vmatpush.msra.mxu0 0.0
    %5288 = vmatpush.msra.mxu0 0.0
    %5289 = vmatpush.msra.mxu0 0.0
    %5290 = vmatpush.msra.mxu0 0.0
    %5291 = vmatpush.msra.mxu0 0.0
    %5292 = vmatpush.msra.mxu0 0.0
    %5293 = vmatpush.msra.mxu0 0.0
    %5294 = vmatpush.msra.mxu0 0.0
    %5295 = vmatpush.msra.mxu0 0.0
    %5296 = vmatpush.msra.mxu0 0.0
    %5297 = vmatpush.msra.mxu0 %v5277
    %5298 = vmatmul.f32.gmra.mxu0 %v5280
    %v5299 = vpop.f32.mrf.mxu0
    %v5300 = vadd.f32 0.0, %v5299
    %5301 = vdwg.mxu0
    %v5303 = vsel %vm268, %v5300, 0
    %5305 = vmatpush.msra.mxu0 0.0
    %5306 = vmatpush.msra.mxu0 0.0
    %5307 = vmatpush.msra.mxu0 0.0
    %5308 = vmatpush.msra.mxu0 0.0
    %5309 = vmatpush.msra.mxu0 0.0
    %5310 = vmatpush.msra.mxu0 0.0
    %5311 = vmatpush.msra.mxu0 0.0
    %5312 = vmatpush.msra.mxu0 0.0
    %5313 = vmatpush.msra.mxu0 0.0
    %5314 = vmatpush.msra.mxu0 0.0
    %5315 = vmatpush.msra.mxu0 0.0
    %5316 = vmatpush.msra.mxu0 0.0
    %5317 = vmatpush.msra.mxu0 0.0
    %5318 = vmatpush.msra.mxu0 0.0
    %5319 = vmatpush.msra.mxu0 0.0
    %5320 = vmatpush.msra.mxu0 %v4963
    %5321 = vmatmul.f32.gmra.mxu0 %v5303
    %v5322 = vpop.f32.mrf.mxu0
    %v5323 = vadd.f32 0.0, %v5322
    %5324 = vdwg.mxu0
    %v5325 = vadd.f32 %v5234, %v5323
    %v5327 = vsel %vm268, %v4924, 0
    %v5330 = vsel %vm268, %v4957, 0
    %5332 = vmatpush.xpose.msra.mxu0 0.0
    %5333 = vmatpush.xpose.msra.mxu0 0.0
    %5334 = vmatpush.xpose.msra.mxu0 0.0
    %5335 = vmatpush.xpose.msra.mxu0 0.0
    %5336 = vmatpush.xpose.msra.mxu0 0.0
    %5337 = vmatpush.xpose.msra.mxu0 0.0
    %5338 = vmatpush.xpose.msra.mxu0 0.0
    %5339 = vmatpush.xpose.msra.mxu0 0.0
    %5340 = vmatpush.xpose.msra.mxu0 0.0
    %5341 = vmatpush.xpose.msra.mxu0 0.0
    %5342 = vmatpush.xpose.msra.mxu0 0.0
    %5343 = vmatpush.xpose.msra.mxu0 0.0
    %5344 = vmatpush.xpose.msra.mxu0 0.0
    %5345 = vmatpush.xpose.msra.mxu0 0.0
    %5346 = vmatpush.xpose.msra.mxu0 0.0
    %5347 = vmatpush.xpose.msra.mxu0 %v5330
    %5348 = vmatmul.f32.gmra.mxu0 %v5327
    %v5349 = vpop.f32.mrf.mxu0
    %v5350 = vadd.f32 0.0, %v5349
    %5351 = vdwg.mxu0
    %v5352 = vmul.f32 %v5350, 0.35355338
    %v5353 = vadd.f32 %v5352, %v656
    %v5354 = vsel %vm268, %v5353, -inf
    %5355 = vmax.xlane.f32.xlu0 %v5354
    %v5356 = vpop.xlane.xlu0 %5355
    %v5357 = vsub.f32 %v5353, %v5356
    %v5358 = vmul.f32 %v5357, 1.442695
    %v5359 = vpow.pop %v5358
    %v5360 = vsel %vm268, %v5359, 0.0
    %5361 = vadd.xlane.f32.xlu0 %v5360
    %v5362 = vpop.xlane.xlu0 %5361
    %v5363 = vrcp.pop %v5362
    %v5364 = vmul.f32 %v5359, %v5363
    %5365 = vrot.lane.b32.xlu0 %v4957, 96
    %v5366 = vpop.permute.xlu0 %5365
    %v5369 = vsel %vm268, %v5364, 0
    %5371 = vmatpush.msra.mxu0 0.0
    %5372 = vmatpush.msra.mxu0 0.0
    %5373 = vmatpush.msra.mxu0 0.0
    %5374 = vmatpush.msra.mxu0 0.0
    %5375 = vmatpush.msra.mxu0 0.0
    %5376 = vmatpush.msra.mxu0 0.0
    %5377 = vmatpush.msra.mxu0 0.0
    %5378 = vmatpush.msra.mxu0 0.0
    %5379 = vmatpush.msra.mxu0 0.0
    %5380 = vmatpush.msra.mxu0 0.0
    %5381 = vmatpush.msra.mxu0 0.0
    %5382 = vmatpush.msra.mxu0 0.0
    %5383 = vmatpush.msra.mxu0 0.0
    %5384 = vmatpush.msra.mxu0 0.0
    %5385 = vmatpush.msra.mxu0 0.0
    %5386 = vmatpush.msra.mxu0 %v5366
    %5387 = vmatmul.f32.gmra.mxu0 %v5369
    %v5388 = vpop.f32.mrf.mxu0
    %v5389 = vadd.f32 0.0, %v5388
    %5390 = vdwg.mxu0
    %5391 = vrot.lane.b32.xlu0 %v4924, 120
    %v5392 = vpop.permute.xlu0 %5391
    %5393 = vrot.lane.b32.xlu0 %v4957, 120
    %v5394 = vpop.permute.xlu0 %5393
    %v5395 = vsel %vm268, %v5392, 0
    %v5397 = vsel %vm268, %v5394, 0
    %5399 = vmatpush.xpose.msra.mxu0 0.0
    %5400 = vmatpush.xpose.msra.mxu0 0.0
    %5401 = vmatpush.xpose.msra.mxu0 0.0
    %5402 = vmatpush.xpose.msra.mxu0 0.0
    %5403 = vmatpush.xpose.msra.mxu0 0.0
    %5404 = vmatpush.xpose.msra.mxu0 0.0
    %5405 = vmatpush.xpose.msra.mxu0 0.0
    %5406 = vmatpush.xpose.msra.mxu0 0.0
    %5407 = vmatpush.xpose.msra.mxu0 0.0
    %5408 = vmatpush.xpose.msra.mxu0 0.0
    %5409 = vmatpush.xpose.msra.mxu0 0.0
    %5410 = vmatpush.xpose.msra.mxu0 0.0
    %5411 = vmatpush.xpose.msra.mxu0 0.0
    %5412 = vmatpush.xpose.msra.mxu0 0.0
    %5413 = vmatpush.xpose.msra.mxu0 0.0
    %5414 = vmatpush.xpose.msra.mxu0 %v5397
    %5415 = vmatmul.f32.gmra.mxu0 %v5395
    %v5416 = vpop.f32.mrf.mxu0
    %v5417 = vadd.f32 0.0, %v5416
    %5418 = vdwg.mxu0
    %v5419 = vmul.f32 %v5417, 0.35355338
    %v5420 = vadd.f32 %v5419, %v656
    %v5421 = vsel %vm268, %v5420, -inf
    %5422 = vmax.xlane.f32.xlu0 %v5421
    %v5423 = vpop.xlane.xlu0 %5422
    %v5424 = vsub.f32 %v5420, %v5423
    %v5425 = vmul.f32 %v5424, 1.442695
    %v5426 = vpow.pop %v5425
    %v5427 = vsel %vm268, %v5426, 0.0
    %5428 = vadd.xlane.f32.xlu0 %v5427
    %v5429 = vpop.xlane.xlu0 %5428
    %v5430 = vrcp.pop %v5429
    %v5431 = vmul.f32 %v5426, %v5430
    %5432 = vrot.lane.b32.xlu0 %v4957, 88
    %v5433 = vpop.permute.xlu0 %5432
    %v5436 = vsel %vm268, %v5431, 0
    %5438 = vmatpush.msra.mxu0 0.0
    %5439 = vmatpush.msra.mxu0 0.0
    %5440 = vmatpush.msra.mxu0 0.0
    %5441 = vmatpush.msra.mxu0 0.0
    %5442 = vmatpush.msra.mxu0 0.0
    %5443 = vmatpush.msra.mxu0 0.0
    %5444 = vmatpush.msra.mxu0 0.0
    %5445 = vmatpush.msra.mxu0 0.0
    %5446 = vmatpush.msra.mxu0 0.0
    %5447 = vmatpush.msra.mxu0 0.0
    %5448 = vmatpush.msra.mxu0 0.0
    %5449 = vmatpush.msra.mxu0 0.0
    %5450 = vmatpush.msra.mxu0 0.0
    %5451 = vmatpush.msra.mxu0 0.0
    %5452 = vmatpush.msra.mxu0 0.0
    %5453 = vmatpush.msra.mxu0 %v5433
    %5454 = vmatmul.f32.gmra.mxu0 %v5436
    %v5455 = vpop.f32.mrf.mxu0
    %v5456 = vadd.f32 0.0, %v5455
    %5457 = vdwg.mxu0
    %v5459 = vsel %vm268, %v5456, 0
    %5461 = vmatpush.msra.mxu0 0.0
    %5462 = vmatpush.msra.mxu0 0.0
    %5463 = vmatpush.msra.mxu0 0.0
    %5464 = vmatpush.msra.mxu0 0.0
    %5465 = vmatpush.msra.mxu0 0.0
    %5466 = vmatpush.msra.mxu0 0.0
    %5467 = vmatpush.msra.mxu0 0.0
    %5468 = vmatpush.msra.mxu0 0.0
    %5469 = vmatpush.msra.mxu0 0.0
    %5470 = vmatpush.msra.mxu0 0.0
    %5471 = vmatpush.msra.mxu0 0.0
    %5472 = vmatpush.msra.mxu0 0.0
    %5473 = vmatpush.msra.mxu0 0.0
    %5474 = vmatpush.msra.mxu0 0.0
    %5475 = vmatpush.msra.mxu0 0.0
    %5476 = vmatpush.msra.mxu0 %v4961
    %5477 = vmatmul.f32.gmra.mxu0 %v5459
    %v5478 = vpop.f32.mrf.mxu0
    %v5479 = vadd.f32 0.0, %v5478
    %5480 = vdwg.mxu0
    %v5482 = vsel %vm268, %v5389, 0
    %5484 = vmatpush.msra.mxu0 0.0
    %5485 = vmatpush.msra.mxu0 0.0
    %5486 = vmatpush.msra.mxu0 0.0
    %5487 = vmatpush.msra.mxu0 0.0
    %5488 = vmatpush.msra.mxu0 0.0
    %5489 = vmatpush.msra.mxu0 0.0
    %5490 = vmatpush.msra.mxu0 0.0
    %5491 = vmatpush.msra.mxu0 0.0
    %5492 = vmatpush.msra.mxu0 0.0
    %5493 = vmatpush.msra.mxu0 0.0
    %5494 = vmatpush.msra.mxu0 0.0
    %5495 = vmatpush.msra.mxu0 0.0
    %5496 = vmatpush.msra.mxu0 0.0
    %5497 = vmatpush.msra.mxu0 0.0
    %5498 = vmatpush.msra.mxu0 0.0
    %5499 = vmatpush.msra.mxu0 %v4960
    %5500 = vmatmul.f32.gmra.mxu0 %v5482
    %v5501 = vpop.f32.mrf.mxu0
    %v5502 = vadd.f32 %v5479, %v5501
    %5503 = vdwg.mxu0
    %5504 = vrot.lane.b32.xlu0 %v4924, 112
    %v5505 = vpop.permute.xlu0 %5504
    %5506 = vrot.lane.b32.xlu0 %v4957, 112
    %v5507 = vpop.permute.xlu0 %5506
    %v5508 = vsel %vm268, %v5505, 0
    %v5510 = vsel %vm268, %v5507, 0
    %5512 = vmatpush.xpose.msra.mxu0 0.0
    %5513 = vmatpush.xpose.msra.mxu0 0.0
    %5514 = vmatpush.xpose.msra.mxu0 0.0
    %5515 = vmatpush.xpose.msra.mxu0 0.0
    %5516 = vmatpush.xpose.msra.mxu0 0.0
    %5517 = vmatpush.xpose.msra.mxu0 0.0
    %5518 = vmatpush.xpose.msra.mxu0 0.0
    %5519 = vmatpush.xpose.msra.mxu0 0.0
    %5520 = vmatpush.xpose.msra.mxu0 0.0
    %5521 = vmatpush.xpose.msra.mxu0 0.0
    %5522 = vmatpush.xpose.msra.mxu0 0.0
    %5523 = vmatpush.xpose.msra.mxu0 0.0
    %5524 = vmatpush.xpose.msra.mxu0 0.0
    %5525 = vmatpush.xpose.msra.mxu0 0.0
    %5526 = vmatpush.xpose.msra.mxu0 0.0
    %5527 = vmatpush.xpose.msra.mxu0 %v5510
    %5528 = vmatmul.f32.gmra.mxu0 %v5508
    %v5529 = vpop.f32.mrf.mxu0
    %v5530 = vadd.f32 0.0, %v5529
    %5531 = vdwg.mxu0
    %v5532 = vmul.f32 %v5530, 0.35355338
    %v5533 = vadd.f32 %v5532, %v656
    %v5534 = vsel %vm268, %v5533, -inf
    %5535 = vmax.xlane.f32.xlu0 %v5534
    %v5536 = vpop.xlane.xlu0 %5535
    %v5537 = vsub.f32 %v5533, %v5536
    %v5538 = vmul.f32 %v5537, 1.442695
    %v5539 = vpow.pop %v5538
    %v5540 = vsel %vm268, %v5539, 0.0
    %5541 = vadd.xlane.f32.xlu0 %v5540
    %v5542 = vpop.xlane.xlu0 %5541
    %v5543 = vrcp.pop %v5542
    %v5544 = vmul.f32 %v5539, %v5543
    %5545 = vrot.lane.b32.xlu0 %v4957, 80
    %v5546 = vpop.permute.xlu0 %5545
    %v5549 = vsel %vm268, %v5544, 0
    %5551 = vmatpush.msra.mxu0 0.0
    %5552 = vmatpush.msra.mxu0 0.0
    %5553 = vmatpush.msra.mxu0 0.0
    %5554 = vmatpush.msra.mxu0 0.0
    %5555 = vmatpush.msra.mxu0 0.0
    %5556 = vmatpush.msra.mxu0 0.0
    %5557 = vmatpush.msra.mxu0 0.0
    %5558 = vmatpush.msra.mxu0 0.0
    %5559 = vmatpush.msra.mxu0 0.0
    %5560 = vmatpush.msra.mxu0 0.0
    %5561 = vmatpush.msra.mxu0 0.0
    %5562 = vmatpush.msra.mxu0 0.0
    %5563 = vmatpush.msra.mxu0 0.0
    %5564 = vmatpush.msra.mxu0 0.0
    %5565 = vmatpush.msra.mxu0 0.0
    %5566 = vmatpush.msra.mxu0 %v5546
    %5567 = vmatmul.f32.gmra.mxu0 %v5549
    %v5568 = vpop.f32.mrf.mxu0
    %v5569 = vadd.f32 0.0, %v5568
    %5570 = vdwg.mxu0
    %v5572 = vsel %vm268, %v5569, 0
    %5574 = vmatpush.msra.mxu0 0.0
    %5575 = vmatpush.msra.mxu0 0.0
    %5576 = vmatpush.msra.mxu0 0.0
    %5577 = vmatpush.msra.mxu0 0.0
    %5578 = vmatpush.msra.mxu0 0.0
    %5579 = vmatpush.msra.mxu0 0.0
    %5580 = vmatpush.msra.mxu0 0.0
    %5581 = vmatpush.msra.mxu0 0.0
    %5582 = vmatpush.msra.mxu0 0.0
    %5583 = vmatpush.msra.mxu0 0.0
    %5584 = vmatpush.msra.mxu0 0.0
    %5585 = vmatpush.msra.mxu0 0.0
    %5586 = vmatpush.msra.mxu0 0.0
    %5587 = vmatpush.msra.mxu0 0.0
    %5588 = vmatpush.msra.mxu0 0.0
    %5589 = vmatpush.msra.mxu0 %v4962
    %5590 = vmatmul.f32.gmra.mxu0 %v5572
    %v5591 = vpop.f32.mrf.mxu0
    %v5592 = vadd.f32 0.0, %v5591
    %5593 = vdwg.mxu0
    %v5594 = vadd.f32 %v5502, %v5592
    %5595 = vrot.lane.b32.xlu0 %v4924, 104
    %v5596 = vpop.permute.xlu0 %5595
    %5597 = vrot.lane.b32.xlu0 %v4957, 104
    %v5598 = vpop.permute.xlu0 %5597
    %v5599 = vsel %vm268, %v5596, 0
    %v5601 = vsel %vm268, %v5598, 0
    %5603 = vmatpush.xpose.msra.mxu0 0.0
    %5604 = vmatpush.xpose.msra.mxu0 0.0
    %5605 = vmatpush.xpose.msra.mxu0 0.0
    %5606 = vmatpush.xpose.msra.mxu0 0.0
    %5607 = vmatpush.xpose.msra.mxu0 0.0
    %5608 = vmatpush.xpose.msra.mxu0 0.0
    %5609 = vmatpush.xpose.msra.mxu0 0.0
    %5610 = vmatpush.xpose.msra.mxu0 0.0
    %5611 = vmatpush.xpose.msra.mxu0 0.0
    %5612 = vmatpush.xpose.msra.mxu0 0.0
    %5613 = vmatpush.xpose.msra.mxu0 0.0
    %5614 = vmatpush.xpose.msra.mxu0 0.0
    %5615 = vmatpush.xpose.msra.mxu0 0.0
    %5616 = vmatpush.xpose.msra.mxu0 0.0
    %5617 = vmatpush.xpose.msra.mxu0 0.0
    %5618 = vmatpush.xpose.msra.mxu0 %v5601
    %5619 = vmatmul.f32.gmra.mxu0 %v5599
    %v5620 = vpop.f32.mrf.mxu0
    %v5621 = vadd.f32 0.0, %v5620
    %5622 = vdwg.mxu0
    %v5623 = vmul.f32 %v5621, 0.35355338
    %v5624 = vadd.f32 %v5623, %v656
    %v5625 = vsel %vm268, %v5624, -inf
    %5626 = vmax.xlane.f32.xlu0 %v5625
    %v5627 = vpop.xlane.xlu0 %5626
    %v5628 = vsub.f32 %v5624, %v5627
    %v5629 = vmul.f32 %v5628, 1.442695
    %v5630 = vpow.pop %v5629
    %v5631 = vsel %vm268, %v5630, 0.0
    %5632 = vadd.xlane.f32.xlu0 %v5631
    %v5633 = vpop.xlane.xlu0 %5632
    %v5634 = vrcp.pop %v5633
    %v5635 = vmul.f32 %v5630, %v5634
    %5636 = vrot.lane.b32.xlu0 %v4957, 72
    %v5637 = vpop.permute.xlu0 %5636
    %v5640 = vsel %vm268, %v5635, 0
    %5642 = vmatpush.msra.mxu0 0.0
    %5643 = vmatpush.msra.mxu0 0.0
    %5644 = vmatpush.msra.mxu0 0.0
    %5645 = vmatpush.msra.mxu0 0.0
    %5646 = vmatpush.msra.mxu0 0.0
    %5647 = vmatpush.msra.mxu0 0.0
    %5648 = vmatpush.msra.mxu0 0.0
    %5649 = vmatpush.msra.mxu0 0.0
    %5650 = vmatpush.msra.mxu0 0.0
    %5651 = vmatpush.msra.mxu0 0.0
    %5652 = vmatpush.msra.mxu0 0.0
    %5653 = vmatpush.msra.mxu0 0.0
    %5654 = vmatpush.msra.mxu0 0.0
    %5655 = vmatpush.msra.mxu0 0.0
    %5656 = vmatpush.msra.mxu0 0.0
    %5657 = vmatpush.msra.mxu0 %v5637
    %5658 = vmatmul.f32.gmra.mxu0 %v5640
    %v5659 = vpop.f32.mrf.mxu0
    %v5660 = vadd.f32 0.0, %v5659
    %5661 = vdwg.mxu0
    %v5663 = vsel %vm268, %v5660, 0
    %5665 = vmatpush.msra.mxu0 0.0
    %5666 = vmatpush.msra.mxu0 0.0
    %5667 = vmatpush.msra.mxu0 0.0
    %5668 = vmatpush.msra.mxu0 0.0
    %5669 = vmatpush.msra.mxu0 0.0
    %5670 = vmatpush.msra.mxu0 0.0
    %5671 = vmatpush.msra.mxu0 0.0
    %5672 = vmatpush.msra.mxu0 0.0
    %5673 = vmatpush.msra.mxu0 0.0
    %5674 = vmatpush.msra.mxu0 0.0
    %5675 = vmatpush.msra.mxu0 0.0
    %5676 = vmatpush.msra.mxu0 0.0
    %5677 = vmatpush.msra.mxu0 0.0
    %5678 = vmatpush.msra.mxu0 0.0
    %5679 = vmatpush.msra.mxu0 0.0
    %5680 = vmatpush.msra.mxu0 %v4963
    %5681 = vmatmul.f32.gmra.mxu0 %v5663
    %v5682 = vpop.f32.mrf.mxu0
    %v5683 = vadd.f32 0.0, %v5682
    %5684 = vdwg.mxu0
    %v5685 = vadd.f32 %v5594, %v5683
    %v5687 = vperm.slane %v4965, 0
    %v5689 = vadd.f32 %v5325, %v5687
    %v5690 = vadd.f32 %v5685, %v5687
    %v5691 = vadd.f32 %v4885, %v5689
    %v5692 = vadd.f32 %v4886, %v5690
    %s5693 = scalar_lea.vmem %s57, 2
    %v5694 = vld [vmem:[%s5693] sm:$0x3]
    %v5695 = vsel %vm165, %v5691, 0.0
    %5696 = vadd.xlane.f32.xlu0 %v5695
    %v5697 = vpop.xlane.xlu0 %5696
    %v5698 = vsel %vm165, %v5692, 0.0
    %5699 = vadd.xlane.f32.xlu0 %v5698
    %v5700 = vpop.xlane.xlu0 %5699
    %v5701 = vmul.f32 %v5697, %v178
    %v5702 = vmul.f32 %v5700, %v178
    %v5703 = vsub.f32 %v5691, %v5701
    %v5704 = vsub.f32 %v5692, %v5702
    %v5705 = vmul.f32 %v5703, %v5703
    %v5706 = vmul.f32 %v5704, %v5704
    %v5707 = vsel %vm165, %v5705, 0.0
    %5708 = vadd.xlane.f32.xlu0 %v5707
    %v5709 = vpop.xlane.xlu0 %5708
    %v5710 = vsel %vm165, %v5706, 0.0
    %5711 = vadd.xlane.f32.xlu0 %v5710
    %v5712 = vpop.xlane.xlu0 %5711
    %v5713 = vmul.f32 %v5709, %v178
    %v5714 = vmul.f32 %v5712, %v178
    %v5715 = vadd.f32 %v5713, 1e-05
    %v5716 = vadd.f32 %v5714, 1e-05
    %v5717 = vrsqrt.pop %v5715
    %v5718 = vmul.f32 %v5717, %v5715
    %v5719 = vmul.f32 %v5718, %v5717
    %v5720 = vmul.f32 0.5, %v5719
    %v5721 = vsub.f32 1.5, %v5720
    %v5722 = vmul.f32 %v5717, %v5721
    %vm5723 = vweird.f32 %v5715
    %vm5724 = vweird.f32 %v5717
    %vm5725 = vmor %vm5723, %vm5724
    %v5726 = vsel %vm5725, %v5717, %v5722
    %v5727 = vrsqrt.pop %v5716
    %v5728 = vmul.f32 %v5727, %v5716
    %v5729 = vmul.f32 %v5728, %v5727
    %v5730 = vmul.f32 0.5, %v5729
    %v5731 = vsub.f32 1.5, %v5730
    %v5732 = vmul.f32 %v5727, %v5731
    %vm5733 = vweird.f32 %v5716
    %vm5734 = vweird.f32 %v5727
    %vm5735 = vmor %vm5733, %vm5734
    %v5736 = vsel %vm5735, %v5727, %v5732
    %v5737 = vmul.f32 %v5703, %v5726
    %v5738 = vmul.f32 %v5704, %v5736
    %v5739 = vperm.slane %v5694, 0
    %v5740 = vmul.f32 %v5737, %v5739
    %v5741 = vmul.f32 %v5738, %v5739
    %v5742 = vperm.slane %v5694, 1
    %v5743 = vadd.f32 %v5740, %v5742
    %v5744 = vadd.f32 %v5741, %v5742
    %s5745 = scalar_lea.vmem %s59, 32
    %v5746 = vld [vmem:[%s5745] sm:$0xff]
    %v5747 = vld [vmem:[%s5745 + $0x8] sm:$0xff]
    %v5748 = vld [vmem:[%s5745 + $0x10] sm:$0xff]
    %v5749 = vld [vmem:[%s5745 + $0x18] sm:$0xff]
    %s5750 = scalar_lea.vmem %s61, 1
    %v5751 = vld [vmem:[%s5750] sm:$0x1]
    %s5752 = scalar_lea.vmem %s63, 64
    %v5753 = vld [vmem:[%s5752] sm:$0xff]
    %v5754 = vld [vmem:[%s5752 + $0x8] sm:$0xff]
    %v5755 = vld [vmem:[%s5752 + $0x10] sm:$0xff]
    %v5756 = vld [vmem:[%s5752 + $0x18] sm:$0xff]
    %v5757 = vld [vmem:[%s5752 + $0x20] sm:$0xff]
    %v5758 = vld [vmem:[%s5752 + $0x28] sm:$0xff]
    %v5759 = vld [vmem:[%s5752 + $0x30] sm:$0xff]
    %v5760 = vld [vmem:[%s5752 + $0x38] sm:$0xff]
    %s5761 = scalar_lea.vmem %s65, 1
    %v5762 = vld [vmem:[%s5761] sm:$0x1]
    %v5764 = vperm.slane %v5751, 0
    %v5767 = vsel %vm165, %v5743, 0
    %v5770 = vsel %vm165, %v5744, 0
    %5772 = vmatpush.msra.mxu0 0.0
    %5773 = vmatpush.msra.mxu0 0.0
    %5774 = vmatpush.msra.mxu0 0.0
    %5775 = vmatpush.msra.mxu0 0.0
    %5776 = vmatpush.msra.mxu0 0.0
    %5777 = vmatpush.msra.mxu0 0.0
    %5778 = vmatpush.msra.mxu0 0.0
    %5779 = vmatpush.msra.mxu0 0.0
    %5780 = vmatpush.msra.mxu0 0.0
    %5781 = vmatpush.msra.mxu0 0.0
    %5782 = vmatpush.msra.mxu0 0.0
    %5783 = vmatpush.msra.mxu0 0.0
    %5784 = vmatpush.msra.mxu0 %v5749
    %5785 = vmatpush.msra.mxu0 %v5748
    %5786 = vmatpush.msra.mxu0 %v5747
    %5787 = vmatpush.msra.mxu0 %v5746
    %5788 = vmatmul.f32.gmra.mxu0 %v5767
    %v5789 = vpop.f32.mrf.mxu0
    %v5790 = vadd.f32 %v5764, %v5789
    %5791 = vmatmul.f32.gmra.mxu0 %v5770
    %v5792 = vpop.f32.mrf.mxu0
    %v5793 = vadd.f32 %v5764, %v5792
    %5794 = vdwg.mxu0
    %v5795 = vmul.f32 %v5790, %v5790
    %v5796 = vmul.f32 %v5793, %v5793
    %v5797 = vmul.f32 %v5790, %v5795
    %v5798 = vmul.f32 %v5793, %v5796
    %v5799 = vmul.f32 %v5797, 0.044715
    %v5800 = vmul.f32 %v5798, 0.044715
    %v5801 = vadd.f32 %v5790, %v5799
    %v5802 = vadd.f32 %v5793, %v5800
    %v5803 = vmul.f32 %v5801, 0.7978846
    %v5804 = vmul.f32 %v5802, 0.7978846
    %v5805 = vtanh.pop %v5803
    %v5806 = vtanh.pop %v5804
    %v5807 = vadd.f32 %v5805, 1.0
    %v5808 = vadd.f32 %v5806, 1.0
    %v5809 = vmul.f32 %v5807, 0.5
    %v5810 = vmul.f32 %v5808, 0.5
    %v5811 = vmul.f32 %v5790, %v5809
    %v5812 = vmul.f32 %v5793, %v5810
    %v5814 = vperm.slane %v5762, 0
    %v5817 = vsel %vm1115, %v5811, 0
    %v5820 = vsel %vm1115, %v5812, 0
    %5822 = vmatpush.msra.mxu0 0.0
    %5823 = vmatpush.msra.mxu0 0.0
    %5824 = vmatpush.msra.mxu0 0.0
    %5825 = vmatpush.msra.mxu0 0.0
    %5826 = vmatpush.msra.mxu0 0.0
    %5827 = vmatpush.msra.mxu0 0.0
    %5828 = vmatpush.msra.mxu0 0.0
    %5829 = vmatpush.msra.mxu0 0.0
    %5830 = vmatpush.msra.mxu0 %v5760
    %5831 = vmatpush.msra.mxu0 %v5759
    %5832 = vmatpush.msra.mxu0 %v5758
    %5833 = vmatpush.msra.mxu0 %v5757
    %5834 = vmatpush.msra.mxu0 %v5756
    %5835 = vmatpush.msra.mxu0 %v5755
    %5836 = vmatpush.msra.mxu0 %v5754
    %5837 = vmatpush.msra.mxu0 %v5753
    %5838 = vmatmul.f32.gmra.mxu0 %v5817
    %v5839 = vpop.f32.mrf.mxu0
    %v5840 = vadd.f32 %v5814, %v5839
    %5841 = vmatmul.f32.gmra.mxu0 %v5820
    %v5842 = vpop.f32.mrf.mxu0
    %v5843 = vadd.f32 %v5814, %v5842
    %5844 = vdwg.mxu0
    %v5845 = vadd.f32 %v5743, %v5840
    %v5846 = vadd.f32 %v5744, %v5843
    %s5847 = scalar_lea.vmem %s67, 2
    %v5848 = vld [vmem:[%s5847] sm:$0x3]
    %v5849 = vsel %vm165, %v5845, 0.0
    %5850 = vadd.xlane.f32.xlu0 %v5849
    %v5851 = vpop.xlane.xlu0 %5850
    %v5852 = vsel %vm165, %v5846, 0.0
    %5853 = vadd.xlane.f32.xlu0 %v5852
    %v5854 = vpop.xlane.xlu0 %5853
    %v5855 = vmul.f32 %v5851, %v178
    %v5856 = vmul.f32 %v5854, %v178
    %v5857 = vsub.f32 %v5845, %v5855
    %v5858 = vsub.f32 %v5846, %v5856
    %v5859 = vmul.f32 %v5857, %v5857
    %v5860 = vmul.f32 %v5858, %v5858
    %v5861 = vsel %vm165, %v5859, 0.0
    %5862 = vadd.xlane.f32.xlu0 %v5861
    %v5863 = vpop.xlane.xlu0 %5862
    %v5864 = vsel %vm165, %v5860, 0.0
    %5865 = vadd.xlane.f32.xlu0 %v5864
    %v5866 = vpop.xlane.xlu0 %5865
    %v5867 = vmul.f32 %v5863, %v178
    %v5868 = vmul.f32 %v5866, %v178
    %v5869 = vadd.f32 %v5867, 1e-05
    %v5870 = vadd.f32 %v5868, 1e-05
    %v5871 = vrsqrt.pop %v5869
    %v5872 = vmul.f32 %v5871, %v5869
    %v5873 = vmul.f32 %v5872, %v5871
    %v5874 = vmul.f32 0.5, %v5873
    %v5875 = vsub.f32 1.5, %v5874
    %v5876 = vmul.f32 %v5871, %v5875
    %vm5877 = vweird.f32 %v5869
    %vm5878 = vweird.f32 %v5871
    %vm5879 = vmor %vm5877, %vm5878
    %v5880 = vsel %vm5879, %v5871, %v5876
    %v5881 = vrsqrt.pop %v5870
    %v5882 = vmul.f32 %v5881, %v5870
    %v5883 = vmul.f32 %v5882, %v5881
    %v5884 = vmul.f32 0.5, %v5883
    %v5885 = vsub.f32 1.5, %v5884
    %v5886 = vmul.f32 %v5881, %v5885
    %vm5887 = vweird.f32 %v5870
    %vm5888 = vweird.f32 %v5881
    %vm5889 = vmor %vm5887, %vm5888
    %v5890 = vsel %vm5889, %v5881, %v5886
    %v5891 = vmul.f32 %v5857, %v5880
    %v5892 = vmul.f32 %v5858, %v5890
    %v5893 = vperm.slane %v5848, 0
    %v5894 = vmul.f32 %v5891, %v5893
    %v5895 = vmul.f32 %v5892, %v5893
    %v5896 = vperm.slane %v5848, 1
    %v5897 = vadd.f32 %v5894, %v5896
    %v5898 = vadd.f32 %v5895, %v5896
    %v5899 = vld [vmem:[%s9] sm:$0x3]
    %vm5900 = vcmask 130048
    %v5902 = vsel %vm5900, %v5899, 0
    %5904 = vmatpush.msra.mxu0 0.0
    %5905 = vmatpush.msra.mxu0 0.0
    %5906 = vmatpush.msra.mxu0 0.0
    %5907 = vmatpush.msra.mxu0 0.0
    %5908 = vmatpush.msra.mxu0 0.0
    %5909 = vmatpush.msra.mxu0 0.0
    %5910 = vmatpush.msra.mxu0 0.0
    %5911 = vmatpush.msra.mxu0 0.0
    %5912 = vmatpush.msra.mxu0 0.0
    %5913 = vmatpush.msra.mxu0 0.0
    %5914 = vmatpush.msra.mxu0 0.0
    %5915 = vmatpush.msra.mxu0 0.0
    %5916 = vmatpush.msra.mxu0 0.0
    %5917 = vmatpush.msra.mxu0 0.0
    %5918 = vmatpush.msra.mxu0 %v5898
    %5919 = vmatpush.msra.mxu0 %v5897
    %5920 = vmatmul.f32.gmra.mxu0 %v5902
    %v5921 = vpop.f32.mrf.mxu0
    %v5922 = vadd.f32 0.0, %v5921
    %5923 = vdwg.mxu0
    %v5924 = vld [vmem:[%s69] sm:$0xff]
    %v5925 = vld [vmem:[%s69 + $0x8] sm:$0xff]
    %v5926 = vld [vmem:[%s69 + $0x10] sm:$0xff]
    %v5927 = vld [vmem:[%s69 + $0x18] sm:$0xff]
    %v5928 = vld [vmem:[%s71] sm:$0x1]
    %v5930 = vperm.slane %v5928, 0
    %v5933 = vsel %vm165, %v5922, 0
    %5935 = vmatpush.msra.mxu0 0.0
    %5936 = vmatpush.msra.mxu0 0.0
    %5937 = vmatpush.msra.mxu0 0.0
    %5938 = vmatpush.msra.mxu0 0.0
    %5939 = vmatpush.msra.mxu0 0.0
    %5940 = vmatpush.msra.mxu0 0.0
    %5941 = vmatpush.msra.mxu0 0.0
    %5942 = vmatpush.msra.mxu0 0.0
    %5943 = vmatpush.msra.mxu0 0.0
    %5944 = vmatpush.msra.mxu0 0.0
    %5945 = vmatpush.msra.mxu0 0.0
    %5946 = vmatpush.msra.mxu0 0.0
    %5947 = vmatpush.msra.mxu0 %v5927
    %5948 = vmatpush.msra.mxu0 %v5926
    %5949 = vmatpush.msra.mxu0 %v5925
    %5950 = vmatpush.msra.mxu0 %v5924
    %5951 = vmatmul.f32.gmra.mxu0 %v5933
    %v5952 = vpop.f32.mrf.mxu0
    %v5953 = vadd.f32 %v5930, %v5952
    %5954 = vdwg.mxu0
    %v5955 = vtanh.pop %v5953
    %v5956 = vld [vmem:[%s73] sm:$0xff]
    %v5957 = vld [vmem:[%s73 + $0x8] sm:$0xff]
    %v5958 = vld [vmem:[%s73 + $0x10] sm:$0xff]
    %v5959 = vld [vmem:[%s73 + $0x18] sm:$0xff]
    %v5960 = vld [vmem:[%s75] sm:$0x1]
    %v5962 = vperm.slane %v5960, 0
    %v5965 = vsel %vm165, %v5955, 0
    %5967 = vmatpush.msra.mxu0 0.0
    %5968 = vmatpush.msra.mxu0 0.0
    %5969 = vmatpush.msra.mxu0 0.0
    %5970 = vmatpush.msra.mxu0 0.0
    %5971 = vmatpush.msra.mxu0 0.0
    %5972 = vmatpush.msra.mxu0 0.0
    %5973 = vmatpush.msra.mxu0 0.0
    %5974 = vmatpush.msra.mxu0 0.0
    %5975 = vmatpush.msra.mxu0 0.0
    %5976 = vmatpush.msra.mxu0 0.0
    %5977 = vmatpush.msra.mxu0 0.0
    %5978 = vmatpush.msra.mxu0 0.0
    %5979 = vmatpush.msra.mxu0 %v5959
    %5980 = vmatpush.msra.mxu0 %v5958
    %5981 = vmatpush.msra.mxu0 %v5957
    %5982 = vmatpush.msra.mxu0 %v5956
    %5983 = vmatmul.f32.gmra.mxu0 %v5965
    %v5984 = vpop.f32.mrf.mxu0
    %v5985 = vadd.f32 %v5962, %v5984
    %5986 = vdwg.mxu0
    %5987 = vst [vmem:[#allocation2] sm:$0x3] %v5985
    // Predicated region
    $region154: #{bart_classify.1} parent=1 // pred_check
      _
    $region155: #{bart_classify.1} parent=1 // pred_check_branch
      %5989 = sbr.rel (0) target = $region157
    $region156: #{bart_classify.1} parent=1 // pred_region
      %5991 = vsyncadd [#allocation3], 0
      %s5993 = sshll.u32 [#allocation2], 4
      %s5994 = int_to_ptr.vmem [resolvable:$true] %s5993
      %s5995 = sshll.u32 %s77, 4
      %s5996 = int_to_ptr.hbm [resolvable:$true] %s5995
      %5998 = dma.vmem_to_hbm [thread:$0]  %s5994, 32, %s5996, [#allocation3]
    $region157: #{bart_classify.1} parent=1 // pred_fallthru
      _
    // Predicated region
    $region158: #{bart_classify.1} parent=1 // pred_check
      _
    $region159: #{bart_classify.1} parent=1 // pred_check_branch
      %6000 = sbr.rel (0) target = $region161
    $region160: #{bart_classify.1} parent=1 // pred_region
      %6002 = dma.done [#allocation3], 32
    $region161: #{bart_classify.1} parent=1 // pred_fallthru
      _
    %6003 = vsyncpa [#allocation3], 1

</llo_original>
